<compile_context>
chip_gen: v5e
topology: v5e:2x2
jax: 0.10.0
libtpu: 0.0.40
codegen_flags: <defaults>
</compile_context>

<pallas_src>
import functools
import math

import jax
import jax.numpy as jnp
import numpy as np
from jax.experimental import pallas as pl
from jax.experimental.pallas import tpu as pltpu


# 3x3 tap offsets (di, dj), row-major — must match torch Conv2d weight layout.
_TAPS = tuple((di, dj) for di in (-1, 0, 1) for dj in (-1, 0, 1))


# ----------------------------------------------------------------------------
# Window partition glue (exact PyTorch .view/.permute semantics, HBM-side)
# ----------------------------------------------------------------------------
def window_partition(x, ws):
    # x: (B, C, H, W). torch views the NCHW-contiguous buffer (raw memory
    # reinterpretation) -> jnp.reshape, then permutes.
    B, C, H, W = x.shape
    x = x.reshape(B, H // ws, ws, W // ws, ws, C)
    x = jnp.transpose(x, (0, 1, 3, 2, 4, 5))
    return x.reshape(-1, ws * ws, C)


def reverse_window_partition(x, ws, h, w):
    # x: (N_windows, ws*ws, C). The two torch .view calls compose into one
    # reshape of the contiguous buffer.
    b = x.shape[0] // ((w // ws) * (h // ws))
    x = x.reshape(b, h // ws, w // ws, ws, ws, -1)
    x = jnp.transpose(x, (0, 1, 3, 2, 4, 5))
    return x.reshape(b, -1, h, w)


# ----------------------------------------------------------------------------
# Fused ViTBlock kernel
# ----------------------------------------------------------------------------
def _vit_block_kernel(x_ref, wqkv_ref, bqkv_ref, wa_ref, wb_ref, bmap_ref,
                      wout_ref, bout_ref, o_ref, *, nt, l, c, ws,
                      approx_recip, dense_store):
    """One grid step = `nt` windows, everything VMEM resident.

    LePE note: the module reinterprets v's (L, C) per-window memory as a
    (C, ws, ws) image (NO transpose).  A 3x3 tap (di, dj) on that image is a
    shift of the flat per-window stream by off = di*ws + dj.  In (L, C) layout
    that flat shift is a lane roll by `off`; lanes whose shift wraps an L-row
    take their value from the +/-1 sublane-rolled stream.  Zero padding, conv
    weights and the in-row/carry masks are folded into the precomputed maps
    wmap_a (in-row part) and wmap_b (carry part, pre-rolled along L).
    """
    mxu = x_ref.dtype

    # ---- fused Q/K/V projection: one (nt*L, C) x (C, 3C) matmul ------------
    # (SDPA's 1/sqrt(C) scale is pre-folded into the Q columns of w_qkv/b_qkv.)
    x2 = x_ref[...].reshape(nt * l, c)
    qkv = jnp.dot(x2, wqkv_ref[...],
                  preferred_element_type=jnp.float32) + bqkv_ref[...]
    q = qkv[:, :c].reshape(nt, l, c)
    k = qkv[:, c:2 * c].reshape(nt, l, c)
    v = qkv[:, 2 * c:].reshape(nt, l, c)          # f32, reused by LePE below

    # ---- single-head attention, flash-style post-PV normalization ----------
    s = jnp.einsum('nld,nmd->nlm', q.astype(mxu), k.astype(mxu),
                   preferred_element_type=jnp.float32)
    m = jnp.max(s, axis=-1, keepdims=True)
    e = jnp.exp(s - m)                                           # EUP
    denom = jnp.sum(e, axis=-1, keepdims=True)                   # XLU
    attn_un = jnp.einsum('nlm,nmd->nld', e.astype(mxu), v.astype(mxu),
                         preferred_element_type=jnp.float32)
    if approx_recip:
        attn = attn_un * pl.reciprocal(denom, approx=True)       # EUP slot
    else:
        attn = attn_un / denom                                   # exact (f32)

    # ---- LePE depthwise 3x3 conv on the reinterpreted (C, ws, ws) image ----
    wa = wa_ref[...]                               # (9, L, C) in-row weights
    wb = wb_ref[...]                               # (9, L, C) carry weights
    acc = v * wa[4]                                # center tap (off == 0)
    hp = jnp.zeros((nt, l, c), jnp.float32)        # carries from next L-row
    hm = jnp.zeros((nt, l, c), jnp.float32)        # carries from prev L-row
    for t, (di, dj) in enumerate(_TAPS):
        off = di * ws + dj
        if off == 0:
            continue
        rolled = jnp.roll(v, -off, axis=2)         # flat shift (lane roll)
        acc = acc + rolled * wa[t]
        if off > 0:
            hp = hp + rolled * wb[t]
        else:
            hm = hm + rolled * wb[t]
    # Carry maps were pre-rolled along L at prepare time, so a single +/-1
    # sublane roll per sign finishes all 8 carry taps at once.
    lepe = (acc + jnp.roll(hp, -1, axis=1) + jnp.roll(hm, 1, axis=1)
            + bmap_ref[...])

    # ---- output projection --------------------------------------------------
    y = attn + lepe
    out = jnp.dot(y.reshape(nt * l, c).astype(mxu), wout_ref[...],
                  preferred_element_type=jnp.float32) + bout_ref[...]
    if dense_store:
        # Lane-dense store: full 128-lane vst instead of 32/128 masked stores.
        o_ref[...] = out.reshape(1, nt, l * c)
    else:
        o_ref[...] = out.reshape(nt, l, c)


def _build_call(N, L, C, nt, prep, dense_store):
    kern = functools.partial(
        _vit_block_kernel, nt=nt, l=L, c=C, ws=prep['ws'],
        approx_recip=prep['approx_recip'], dense_store=dense_store)
    in_specs = [
        pl.BlockSpec((nt, L, C), lambda i: (i, 0, 0)),       # x windows
        pl.BlockSpec((C, 3 * C), lambda i: (0, 0)),          # fused W_qkv^T
        pl.BlockSpec((1, 3 * C), lambda i: (0, 0)),          # fused b_qkv
        pl.BlockSpec((9, L, C), lambda i: (0, 0, 0)),        # LePE in-row maps
        pl.BlockSpec((9, L, C), lambda i: (0, 0, 0)),        # LePE carry maps
        pl.BlockSpec((L, C), lambda i: (0, 0)),              # LePE bias map
        pl.BlockSpec((C, C), lambda i: (0, 0)),              # W_out^T
        pl.BlockSpec((1, C), lambda i: (0, 0)),              # b_out
    ]
    if dense_store:
        # (G, nt, L*C): block last two dims == full dims / 128-multiple, so the
        # (8,128) rule holds for any nt; memory order matches (N, L, C).
        out_shape = jax.ShapeDtypeStruct((N // nt, nt, L * C), jnp.float32)
        out_spec = pl.BlockSpec((1, nt, L * C), lambda i: (i, 0, 0))
    else:
        out_shape = jax.ShapeDtypeStruct((N, L, C), jnp.float32)
        out_spec = pl.BlockSpec((nt, L, C), lambda i: (i, 0, 0))
    return pl.pallas_call(
        kern,
        out_shape=out_shape,
        grid=(N // nt,),
        in_specs=in_specs,
        out_specs=out_spec,
        compiler_params=pltpu.CompilerParams(
            dimension_semantics=("parallel",)),              # megacore-able
    )


def _is_tracer(x):
    try:
        return isinstance(x, jax.core.Tracer)
    except AttributeError:
        return False


# Per-(shape, nt, dtype) decision: lane-dense stores if they lower & validate.
_DENSE_STORE_DECISION = {}


def _fused_vit_block(xw, prep, nt):
    N, L, C = xw.shape
    args = (xw, prep['w_qkv'], prep['b_qkv'], prep['wmap_a'], prep['wmap_b'],
            prep['bmap'], prep['w_out'], prep['b_out'])
    key = (N, L, C, nt, str(xw.dtype))

    if _is_tracer(xw):
        # Under an outer jit we cannot probe; use a previously validated
        # decision or the proven masked-store path.
        use_dense = _DENSE_STORE_DECISION.get(key, False)
    else:
        use_dense = _DENSE_STORE_DECISION.get(key)
        if use_dense is None:
            # One-time probe: the lane-dense store needs a minor-dim-growing
            # in-kernel reshape whose Mosaic lowering support varies; try it,
            # validate numerically against the proven path, else fall back.
            safe = jax.block_until_ready(_build_call(N, L, C, nt, prep,
                                                     False)(*args))
            try:
                dense = jax.block_until_ready(_build_call(N, L, C, nt, prep,
                                                          True)(*args))
                dense = jnp.reshape(dense, (N, L, C))
                ok = np.allclose(np.asarray(dense), np.asarray(safe),
                                 rtol=1e-5, atol=1e-5)
            except Exception:   # lowering / compile failure -> masked stores
                ok = False
            _DENSE_STORE_DECISION[key] = bool(ok)
            return dense if ok else safe

    if use_dense:
        out = _build_call(N, L, C, nt, prep, True)(*args)
        return jnp.reshape(out, (N, L, C))       # free: contiguous buffer
    return _build_call(N, L, C, nt, prep, False)(*args)


# ----------------------------------------------------------------------------
# One-time parameter preparation (outside the hot path)
# ----------------------------------------------------------------------------
def _lepe_maps(w_pe, b_pe, ws, C):
    """Fold depthwise-conv weights, zero-padding masks and the flat-shift
    in-row/carry lane masks into per-(l, c) weight maps.  Carry maps are
    pre-rolled along L so the kernel needs only one sublane roll per sign."""
    L = ws * ws
    f = np.arange(L * C)
    ch = f // L                       # conv channel of flat position f
    s = f % L
    i, j = s // ws, s % ws
    lane = f % C                      # lane (channel-axis) index in (L, C)
    wmap_a = np.zeros((9, L, C), np.float32)
    wmap_b = np.zeros((9, L, C), np.float32)
    for t, (di, dj) in enumerate(_TAPS):
        off = di * ws + dj
        valid = (i + di >= 0) & (i + di < ws) & (j + dj >= 0) & (j + dj < ws)
        w_full = np.where(valid, w_pe[ch, di + 1, dj + 1], 0.0)
        if off == 0:
            wmap_a[t] = w_full.reshape(L, C)
            continue
        in_row = (lane + off >= 0) & (lane + off < C)   # shift stays in row l
        wmap_a[t] = np.where(in_row, w_full, 0.0).reshape(L, C)
        w_carry = np.where(in_row, 0.0, w_full).reshape(L, C)
        wmap_b[t] = np.roll(w_carry, 1 if off > 0 else -1, axis=0)
    bmap = b_pe[ch].reshape(L, C).astype(np.float32)
    return wmap_a, wmap_b, bmap


def prepare_params(params, window_size, mxu_dtype=jnp.float32,
                   approx_recip=None):
    """Convert torch-layout weights into kernel-ready arrays, once.

    bf16 MXU operands are valid on v5e/v6e/v7x (all MXUs are full-rate bf16);
    softmax, LePE and all accumulation stay f32 inside the kernel regardless.
    `approx_recip` (final attention normalization only) is decoupled from the
    operand dtype; default: exact for f32 operands, approx for bf16.
    """
    ws = window_size
    w_qkv = np.asarray(params['w_qkv'], np.float32).copy()   # (3C, C) torch
    b_qkv = np.asarray(params['b_qkv'], np.float32).copy()
    w_out = np.asarray(params['w_out'], np.float32)           # (C, C)
    b_out = np.asarray(params['b_out'], np.float32)
    w_pe = np.asarray(params['w_pe'], np.float32)             # (C, 1, 3, 3)
    b_pe = np.asarray(params['b_pe'], np.float32)
    C = w_out.shape[0]
    # The flat-shift LePE path assumes a tap offset never spans >1 L-row.
    assert C > ws + 1, "LePE flat-shift path assumes dim > window_size + 1"
    if approx_recip is None:
        approx_recip = np.dtype(mxu_dtype) != np.dtype(np.float32)
    # Fold the SDPA 1/sqrt(C) scale into the Q third of the fused projection.
    scale = 1.0 / math.sqrt(C)
    w_qkv[:C, :] *= scale
    b_qkv[:C] *= scale
    wmap_a, wmap_b, bmap = _lepe_maps(w_pe.reshape(C, 3, 3), b_pe, ws, C)
    return {
        'ws': ws,
        'mxu_dtype': mxu_dtype,
        'approx_recip': bool(approx_recip),
        'w_qkv': jnp.asarray(w_qkv.T, dtype=mxu_dtype),    # (C, 3C)
        'b_qkv': jnp.asarray(b_qkv.reshape(1, 3 * C), jnp.float32),
        'w_out': jnp.asarray(w_out.T, dtype=mxu_dtype),    # (C, C)
        'b_out': jnp.asarray(b_out.reshape(1, C), jnp.float32),
        'wmap_a': jnp.asarray(wmap_a),
        'wmap_b': jnp.asarray(wmap_b),
        'bmap': jnp.asarray(bmap),
    }


def _min_grid_steps():
    """>=2 grid steps on multi-TensorCore-per-device parts (megacore sharding
    of the 'parallel' grid axis); a single big step on v5e/v6e (one TC)."""
    try:
        kind = jax.devices()[0].device_kind.lower()
    except Exception:
        return 1
    if any(tag in kind for tag in ("v4", "v5p", "v7", "7x")):
        return 2
    return 1


def _pick_nt(n_windows, l, c, in_itemsize, vmem_budget=20 << 20, min_steps=1):
    """Largest divisor of N fitting a lane-padding- and double-buffer-aware
    per-step VMEM estimate (C-minor f32 temps are padded to 128 lanes)."""
    lanes_c = 128 * pl.cdiv(c, 128)        # lane padding of (L, C) temps
    lanes_l = 128 * pl.cdiv(l, 128)        # lane padding of (L, L) temps
    per_win = (2 * l * lanes_c * in_itemsize      # x block, double buffered
               + 2 * l * lanes_c * 4              # out block, double buffered
               + 12 * l * lanes_c * 4             # f32 (L, C) temps
               + 2 * l * lanes_l * 4)             # f32 (L, L) temps (s, e)
    fixed = 2 * 20 * l * lanes_c * 4 + (2 << 20)  # weight blocks + slack
    budget = max(vmem_budget - fixed, per_win)
    best = 1
    for d in range(1, n_windows + 1):
        if n_windows % d or d * per_win > budget:
            continue
        if (n_windows // d) >= min_steps or n_windows == 1:
            best = d
    return best


# ----------------------------------------------------------------------------
# Public forward
# ----------------------------------------------------------------------------
def vit_block_forward(x, prep, nt=None):
    B, C, H, W = x.shape
    ws = prep['ws']
    xw = window_partition(x, ws).astype(prep['mxu_dtype'])
    N, L, _ = xw.shape
    if nt is None:
        nt = _pick_nt(N, L, C, np.dtype(prep['mxu_dtype']).itemsize,
                      min_steps=_min_grid_steps())
    assert N % nt == 0
    out_win = _fused_vit_block(xw, prep, nt)       # (N, L, C) f32
    return reverse_window_partition(out_win, ws, H, W)


# ----------------------------------------------------------------------------
# Pure-JAX reference (mirrors the PyTorch module exactly, full-precision)
# ----------------------------------------------------------------------------
def vit_block_reference(x, params, window_size):
    hi = jax.lax.Precision.HIGHEST
    B, C, H, W = x.shape
    ws = window_size
    xw = window_partition(x, ws)
    N, L, _ = xw.shape
    qkv = jnp.einsum('nlc,dc->nld', xw, params['w_qkv'],
                     precision=hi) + params['b_qkv']
    q, k, v = jnp.split(qkv, 3, axis=-1)
    # NOTE: the module reshapes with NO transpose (raw reinterpretation).
    v_img = v.reshape(N, C, ws, ws)
    lepe = jax.lax.conv_general_dilated(
        v_img, params['w_pe'], (1, 1), ((1, 1), (1, 1)),
        dimension_numbers=('NCHW', 'OIHW', 'NCHW'),
        feature_group_count=C, precision=hi)
    lepe = (lepe + params['b_pe'].reshape(1, C, 1, 1)).reshape(N, L, C)
    s = jnp.einsum('nld,nmd->nlm', q, k, precision=hi) / math.sqrt(C)
    a = jax.nn.softmax(s, axis=-1)
    attn = jnp.einsum('nlm,nmd->nld', a, v, precision=hi)
    out = jnp.einsum('nlc,dc->nld', attn + lepe, params['w_out'],
                     precision=hi) + params['b_out']
    return reverse_window_partition(out, ws, H, W)


if __name__ == "__main__":
    B, dim, H, W = 2, 32, 16, 16
    window_size = 8

    key = jax.random.PRNGKey(0)
    ks = jax.random.split(key, 7)
    params = {
        'w_qkv': jax.random.normal(ks[0], (3 * dim, dim), jnp.float32) * 0.05,
        'b_qkv': jax.random.normal(ks[1], (3 * dim,), jnp.float32) * 0.05,
        'w_pe':  jax.random.normal(ks[2], (dim, 1, 3, 3), jnp.float32) * 0.1,
        'b_pe':  jax.random.normal(ks[3], (dim,), jnp.float32) * 0.05,
        'w_out': jax.random.normal(ks[4], (dim, dim), jnp.float32) * 0.05,
        'b_out': jax.random.normal(ks[5], (dim,), jnp.float32) * 0.05,
    }
    x = jax.random.normal(ks[6], (B, dim, H, W), jnp.float32)

    ref = jax.block_until_ready(vit_block_reference(x, params, window_size))

    # f32-everywhere path: tight tolerance (catches any indexing/layout bug).
    prep_f32 = prepare_params(params, window_size, mxu_dtype=jnp.float32)
    out_f32 = jax.block_until_ready(vit_block_forward(x, prep_f32))
    np.testing.assert_allclose(np.asarray(out_f32), np.asarray(ref),
                               rtol=1e-4, atol=1e-4)

    # bf16-MXU-operand fast path (valid on v5e/v6e/v7x): softmax / LePE / all
    # accumulation stay f32 inside the kernel.
    prep_bf16 = prepare_params(params, window_size, mxu_dtype=jnp.bfloat16)
    out_bf16 = jax.block_until_ready(vit_block_forward(x, prep_bf16))
    np.testing.assert_allclose(np.asarray(out_bf16), np.asarray(ref),
                               rtol=2e-2, atol=2e-2)

    print("KERNEL_OK")
</pallas_src>

<mosaic_0001>
module attributes {stable_mosaic.version = 11 : i64} {
  func.func @_vit_block_kernel(%arg0: i32, %arg1: memref<8x64x32xf32, #tpu.memory_space<vmem>>, %arg2: memref<32x96xf32, #tpu.memory_space<vmem>>, %arg3: memref<1x96xf32, #tpu.memory_space<vmem>>, %arg4: memref<9x64x32xf32, #tpu.memory_space<vmem>>, %arg5: memref<9x64x32xf32, #tpu.memory_space<vmem>>, %arg6: memref<64x32xf32, #tpu.memory_space<vmem>>, %arg7: memref<32x32xf32, #tpu.memory_space<vmem>>, %arg8: memref<1x32xf32, #tpu.memory_space<vmem>>, %arg9: memref<8x64x32xf32, #tpu.memory_space<vmem>>) attributes {dimension_semantics = [#tpu.dimension_semantics<parallel>], iteration_bounds = array<i64: 1>, scalar_prefetch = 0 : i64, scratch_operands = 0 : i64, tpu.core_type = #tpu.core_type<tc>, window_params = [{transform_indices = @transform_0, window_bounds = array<i64: 8, 64, 32>}, {pipeline_mode = #tpu.pipeline_mode<synchronous>, transform_indices = @transform_1, window_bounds = array<i64: 32, 96>}, {pipeline_mode = #tpu.pipeline_mode<synchronous>, transform_indices = @transform_2, window_bounds = array<i64: 1, 96>}, {pipeline_mode = #tpu.pipeline_mode<synchronous>, transform_indices = @transform_3, window_bounds = array<i64: 9, 64, 32>}, {pipeline_mode = #tpu.pipeline_mode<synchronous>, transform_indices = @transform_4, window_bounds = array<i64: 9, 64, 32>}, {pipeline_mode = #tpu.pipeline_mode<synchronous>, transform_indices = @transform_5, window_bounds = array<i64: 64, 32>}, {pipeline_mode = #tpu.pipeline_mode<synchronous>, transform_indices = @transform_6, window_bounds = array<i64: 32, 32>}, {pipeline_mode = #tpu.pipeline_mode<synchronous>, transform_indices = @transform_7, window_bounds = array<i64: 1, 32>}, {transform_indices = @transform_8, window_bounds = array<i64: 8, 64, 32>}]} {
    %c0 = arith.constant 0 : index
    %c0_0 = arith.constant 0 : index
    %c0_1 = arith.constant 0 : index
    %0 = vector.load %arg1[%c0, %c0_0, %c0_1] : memref<8x64x32xf32, #tpu.memory_space<vmem>>, vector<8x64x32xf32>
    %1 = vector.shape_cast %0 : vector<8x64x32xf32> to vector<512x32xf32>
    %c0_2 = arith.constant 0 : index
    %c0_3 = arith.constant 0 : index
    %2 = vector.load %arg2[%c0_2, %c0_3] : memref<32x96xf32, #tpu.memory_space<vmem>>, vector<32x96xf32>
    %cst = arith.constant dense<0.000000e+00> : vector<512x96xf32>
    %3 = tpu.matmul %1, %2, %cst {dimension_numbers = #tpu.dot_dimension_numbers<[1], [0], [0], [1], [0, 0, 1, 1], [], []>} : vector<512x32xf32>, vector<32x96xf32>, vector<512x96xf32> -> vector<512x96xf32>
    %c0_4 = arith.constant 0 : index
    %c0_5 = arith.constant 0 : index
    %4 = vector.load %arg3[%c0_4, %c0_5] : memref<1x96xf32, #tpu.memory_space<vmem>>, vector<1x96xf32>
    %5 = vector.broadcast %4 : vector<1x96xf32> to vector<512x96xf32>
    %6 = arith.addf %3, %5 : vector<512x96xf32>
    %7 = vector.extract_strided_slice %6 {offsets = [0, 0], sizes = [512, 32], strides = [1, 1]} : vector<512x96xf32> to vector<512x32xf32>
    %8 = vector.shape_cast %7 : vector<512x32xf32> to vector<8x64x32xf32>
    %9 = vector.extract_strided_slice %6 {offsets = [0, 32], sizes = [512, 32], strides = [1, 1]} : vector<512x96xf32> to vector<512x32xf32>
    %10 = vector.shape_cast %9 : vector<512x32xf32> to vector<8x64x32xf32>
    %11 = vector.extract_strided_slice %6 {offsets = [0, 64], sizes = [512, 32], strides = [1, 1]} : vector<512x96xf32> to vector<512x32xf32>
    %12 = vector.shape_cast %11 : vector<512x32xf32> to vector<8x64x32xf32>
    "tpu.trace_start"() <{level = 10 : i32, message = "nld,nmd->nlm"}> : () -> ()
    %cst_6 = arith.constant dense<0.000000e+00> : vector<8x64x64xf32>
    %13 = tpu.matmul %8, %10, %cst_6 {dimension_numbers = #tpu.dot_dimension_numbers<[2], [2], [1], [1], [0, 0, 0, 1, 1, 1], [0], [0]>} : vector<8x64x32xf32>, vector<8x64x32xf32>, vector<8x64x64xf32> -> vector<8x64x64xf32>
    "tpu.trace_stop"() : () -> ()
    %cst_7 = arith.constant dense<0xFF800000> : vector<8x64xf32>
    %14 = vector.multi_reduction <maximumf>, %13, %cst_7 [2] : vector<8x64x64xf32> to vector<8x64xf32>
    %15 = vector.shape_cast %14 : vector<8x64xf32> to vector<8x64x1xf32>
    %16 = vector.broadcast %15 : vector<8x64x1xf32> to vector<8x64x64xf32>
    %17 = arith.subf %13, %16 : vector<8x64x64xf32>
    %18 = math.exp %17 : vector<8x64x64xf32>
    %cst_8 = arith.constant dense<0.000000e+00> : vector<8x64xf32>
    %19 = vector.multi_reduction <add>, %18, %cst_8 [2] : vector<8x64x64xf32> to vector<8x64xf32>
    %20 = vector.shape_cast %19 : vector<8x64xf32> to vector<8x64x1xf32>
    "tpu.trace_start"() <{level = 10 : i32, message = "nlm,nmd->nld"}> : () -> ()
    %cst_9 = arith.constant dense<0.000000e+00> : vector<8x64x32xf32>
    %21 = tpu.matmul %18, %12, %cst_9 {dimension_numbers = #tpu.dot_dimension_numbers<[2], [1], [1], [2], [0, 0, 0, 1, 1, 2], [0], [0]>} : vector<8x64x64xf32>, vector<8x64x32xf32>, vector<8x64x32xf32> -> vector<8x64x32xf32>
    "tpu.trace_stop"() : () -> ()
    %22 = vector.broadcast %20 : vector<8x64x1xf32> to vector<8x64x32xf32>
    %23 = arith.divf %21, %22 : vector<8x64x32xf32>
    %c0_10 = arith.constant 0 : index
    %c0_11 = arith.constant 0 : index
    %c0_12 = arith.constant 0 : index
    %24 = vector.load %arg4[%c0_10, %c0_11, %c0_12] : memref<9x64x32xf32, #tpu.memory_space<vmem>>, vector<9x64x32xf32>
    %c0_13 = arith.constant 0 : index
    %c0_14 = arith.constant 0 : index
    %c0_15 = arith.constant 0 : index
    %25 = vector.load %arg5[%c0_13, %c0_14, %c0_15] : memref<9x64x32xf32, #tpu.memory_space<vmem>>, vector<9x64x32xf32>
    %26 = vector.extract_strided_slice %24 {offsets = [4, 0, 0], sizes = [1, 64, 32], strides = [1, 1, 1]} : vector<9x64x32xf32> to vector<1x64x32xf32>
    %27 = vector.shape_cast %26 : vector<1x64x32xf32> to vector<64x32xf32>
    %28 = vector.shape_cast %27 : vector<64x32xf32> to vector<1x64x32xf32>
    %29 = vector.broadcast %28 : vector<1x64x32xf32> to vector<8x64x32xf32>
    %30 = arith.mulf %12, %29 : vector<8x64x32xf32>
    %cst_16 = arith.constant 0.000000e+00 : f32
    %31 = vector.broadcast %cst_16 : f32 to vector<8x64x32xf32>
    %cst_17 = arith.constant 0.000000e+00 : f32
    %32 = vector.broadcast %cst_17 : f32 to vector<8x64x32xf32>
    %33 = vector.extract_strided_slice %12 {offsets = [0, 0, 23], sizes = [8, 64, 9], strides = [1, 1, 1]} : vector<8x64x32xf32> to vector<8x64x9xf32>
    %34 = vector.extract_strided_slice %12 {offsets = [0, 0, 0], sizes = [8, 64, 23], strides = [1, 1, 1]} : vector<8x64x32xf32> to vector<8x64x23xf32>
    %35 = tpu.concatenate %33, %34 in 2 : vector<8x64x9xf32>, vector<8x64x23xf32> -> vector<8x64x32xf32>
    %36 = vector.extract_strided_slice %24 {offsets = [0, 0, 0], sizes = [1, 64, 32], strides = [1, 1, 1]} : vector<9x64x32xf32> to vector<1x64x32xf32>
    %37 = vector.shape_cast %36 : vector<1x64x32xf32> to vector<64x32xf32>
    %38 = vector.shape_cast %37 : vector<64x32xf32> to vector<1x64x32xf32>
    %39 = vector.broadcast %38 : vector<1x64x32xf32> to vector<8x64x32xf32>
    %40 = arith.mulf %35, %39 : vector<8x64x32xf32>
    %41 = arith.addf %30, %40 : vector<8x64x32xf32>
    %42 = vector.extract_strided_slice %25 {offsets = [0, 0, 0], sizes = [1, 64, 32], strides = [1, 1, 1]} : vector<9x64x32xf32> to vector<1x64x32xf32>
    %43 = vector.shape_cast %42 : vector<1x64x32xf32> to vector<64x32xf32>
    %44 = vector.shape_cast %43 : vector<64x32xf32> to vector<1x64x32xf32>
    %45 = vector.broadcast %44 : vector<1x64x32xf32> to vector<8x64x32xf32>
    %46 = arith.mulf %35, %45 : vector<8x64x32xf32>
    %47 = arith.addf %32, %46 : vector<8x64x32xf32>
    %48 = vector.extract_strided_slice %12 {offsets = [0, 0, 24], sizes = [8, 64, 8], strides = [1, 1, 1]} : vector<8x64x32xf32> to vector<8x64x8xf32>
    %49 = vector.extract_strided_slice %12 {offsets = [0, 0, 0], sizes = [8, 64, 24], strides = [1, 1, 1]} : vector<8x64x32xf32> to vector<8x64x24xf32>
    %50 = tpu.concatenate %48, %49 in 2 : vector<8x64x8xf32>, vector<8x64x24xf32> -> vector<8x64x32xf32>
    %51 = vector.extract_strided_slice %24 {offsets = [1, 0, 0], sizes = [1, 64, 32], strides = [1, 1, 1]} : vector<9x64x32xf32> to vector<1x64x32xf32>
    %52 = vector.shape_cast %51 : vector<1x64x32xf32> to vector<64x32xf32>
    %53 = vector.shape_cast %52 : vector<64x32xf32> to vector<1x64x32xf32>
    %54 = vector.broadcast %53 : vector<1x64x32xf32> to vector<8x64x32xf32>
    %55 = arith.mulf %50, %54 : vector<8x64x32xf32>
    %56 = arith.addf %41, %55 : vector<8x64x32xf32>
    %57 = vector.extract_strided_slice %25 {offsets = [1, 0, 0], sizes = [1, 64, 32], strides = [1, 1, 1]} : vector<9x64x32xf32> to vector<1x64x32xf32>
    %58 = vector.shape_cast %57 : vector<1x64x32xf32> to vector<64x32xf32>
    %59 = vector.shape_cast %58 : vector<64x32xf32> to vector<1x64x32xf32>
    %60 = vector.broadcast %59 : vector<1x64x32xf32> to vector<8x64x32xf32>
    %61 = arith.mulf %50, %60 : vector<8x64x32xf32>
    %62 = arith.addf %47, %61 : vector<8x64x32xf32>
    %63 = vector.extract_strided_slice %12 {offsets = [0, 0, 25], sizes = [8, 64, 7], strides = [1, 1, 1]} : vector<8x64x32xf32> to vector<8x64x7xf32>
    %64 = vector.extract_strided_slice %12 {offsets = [0, 0, 0], sizes = [8, 64, 25], strides = [1, 1, 1]} : vector<8x64x32xf32> to vector<8x64x25xf32>
    %65 = tpu.concatenate %63, %64 in 2 : vector<8x64x7xf32>, vector<8x64x25xf32> -> vector<8x64x32xf32>
    %66 = vector.extract_strided_slice %24 {offsets = [2, 0, 0], sizes = [1, 64, 32], strides = [1, 1, 1]} : vector<9x64x32xf32> to vector<1x64x32xf32>
    %67 = vector.shape_cast %66 : vector<1x64x32xf32> to vector<64x32xf32>
    %68 = vector.shape_cast %67 : vector<64x32xf32> to vector<1x64x32xf32>
    %69 = vector.broadcast %68 : vector<1x64x32xf32> to vector<8x64x32xf32>
    %70 = arith.mulf %65, %69 : vector<8x64x32xf32>
    %71 = arith.addf %56, %70 : vector<8x64x32xf32>
    %72 = vector.extract_strided_slice %25 {offsets = [2, 0, 0], sizes = [1, 64, 32], strides = [1, 1, 1]} : vector<9x64x32xf32> to vector<1x64x32xf32>
    %73 = vector.shape_cast %72 : vector<1x64x32xf32> to vector<64x32xf32>
    %74 = vector.shape_cast %73 : vector<64x32xf32> to vector<1x64x32xf32>
    %75 = vector.broadcast %74 : vector<1x64x32xf32> to vector<8x64x32xf32>
    %76 = arith.mulf %65, %75 : vector<8x64x32xf32>
    %77 = arith.addf %62, %76 : vector<8x64x32xf32>
    %78 = vector.extract_strided_slice %12 {offsets = [0, 0, 31], sizes = [8, 64, 1], strides = [1, 1, 1]} : vector<8x64x32xf32> to vector<8x64x1xf32>
    %79 = vector.extract_strided_slice %12 {offsets = [0, 0, 0], sizes = [8, 64, 31], strides = [1, 1, 1]} : vector<8x64x32xf32> to vector<8x64x31xf32>
    %80 = tpu.concatenate %78, %79 in 2 : vector<8x64x1xf32>, vector<8x64x31xf32> -> vector<8x64x32xf32>
    %81 = vector.extract_strided_slice %24 {offsets = [3, 0, 0], sizes = [1, 64, 32], strides = [1, 1, 1]} : vector<9x64x32xf32> to vector<1x64x32xf32>
    %82 = vector.shape_cast %81 : vector<1x64x32xf32> to vector<64x32xf32>
    %83 = vector.shape_cast %82 : vector<64x32xf32> to vector<1x64x32xf32>
    %84 = vector.broadcast %83 : vector<1x64x32xf32> to vector<8x64x32xf32>
    %85 = arith.mulf %80, %84 : vector<8x64x32xf32>
    %86 = arith.addf %71, %85 : vector<8x64x32xf32>
    %87 = vector.extract_strided_slice %25 {offsets = [3, 0, 0], sizes = [1, 64, 32], strides = [1, 1, 1]} : vector<9x64x32xf32> to vector<1x64x32xf32>
    %88 = vector.shape_cast %87 : vector<1x64x32xf32> to vector<64x32xf32>
    %89 = vector.shape_cast %88 : vector<64x32xf32> to vector<1x64x32xf32>
    %90 = vector.broadcast %89 : vector<1x64x32xf32> to vector<8x64x32xf32>
    %91 = arith.mulf %80, %90 : vector<8x64x32xf32>
    %92 = arith.addf %77, %91 : vector<8x64x32xf32>
    %93 = vector.extract_strided_slice %12 {offsets = [0, 0, 1], sizes = [8, 64, 31], strides = [1, 1, 1]} : vector<8x64x32xf32> to vector<8x64x31xf32>
    %94 = vector.extract_strided_slice %12 {offsets = [0, 0, 0], sizes = [8, 64, 1], strides = [1, 1, 1]} : vector<8x64x32xf32> to vector<8x64x1xf32>
    %95 = tpu.concatenate %93, %94 in 2 : vector<8x64x31xf32>, vector<8x64x1xf32> -> vector<8x64x32xf32>
    %96 = vector.extract_strided_slice %24 {offsets = [5, 0, 0], sizes = [1, 64, 32], strides = [1, 1, 1]} : vector<9x64x32xf32> to vector<1x64x32xf32>
    %97 = vector.shape_cast %96 : vector<1x64x32xf32> to vector<64x32xf32>
    %98 = vector.shape_cast %97 : vector<64x32xf32> to vector<1x64x32xf32>
    %99 = vector.broadcast %98 : vector<1x64x32xf32> to vector<8x64x32xf32>
    %100 = arith.mulf %95, %99 : vector<8x64x32xf32>
    %101 = arith.addf %86, %100 : vector<8x64x32xf32>
    %102 = vector.extract_strided_slice %25 {offsets = [5, 0, 0], sizes = [1, 64, 32], strides = [1, 1, 1]} : vector<9x64x32xf32> to vector<1x64x32xf32>
    %103 = vector.shape_cast %102 : vector<1x64x32xf32> to vector<64x32xf32>
    %104 = vector.shape_cast %103 : vector<64x32xf32> to vector<1x64x32xf32>
    %105 = vector.broadcast %104 : vector<1x64x32xf32> to vector<8x64x32xf32>
    %106 = arith.mulf %95, %105 : vector<8x64x32xf32>
    %107 = arith.addf %31, %106 : vector<8x64x32xf32>
    %108 = vector.extract_strided_slice %12 {offsets = [0, 0, 7], sizes = [8, 64, 25], strides = [1, 1, 1]} : vector<8x64x32xf32> to vector<8x64x25xf32>
    %109 = vector.extract_strided_slice %12 {offsets = [0, 0, 0], sizes = [8, 64, 7], strides = [1, 1, 1]} : vector<8x64x32xf32> to vector<8x64x7xf32>
    %110 = tpu.concatenate %108, %109 in 2 : vector<8x64x25xf32>, vector<8x64x7xf32> -> vector<8x64x32xf32>
    %111 = vector.extract_strided_slice %24 {offsets = [6, 0, 0], sizes = [1, 64, 32], strides = [1, 1, 1]} : vector<9x64x32xf32> to vector<1x64x32xf32>
    %112 = vector.shape_cast %111 : vector<1x64x32xf32> to vector<64x32xf32>
    %113 = vector.shape_cast %112 : vector<64x32xf32> to vector<1x64x32xf32>
    %114 = vector.broadcast %113 : vector<1x64x32xf32> to vector<8x64x32xf32>
    %115 = arith.mulf %110, %114 : vector<8x64x32xf32>
    %116 = arith.addf %101, %115 : vector<8x64x32xf32>
    %117 = vector.extract_strided_slice %25 {offsets = [6, 0, 0], sizes = [1, 64, 32], strides = [1, 1, 1]} : vector<9x64x32xf32> to vector<1x64x32xf32>
    %118 = vector.shape_cast %117 : vector<1x64x32xf32> to vector<64x32xf32>
    %119 = vector.shape_cast %118 : vector<64x32xf32> to vector<1x64x32xf32>
    %120 = vector.broadcast %119 : vector<1x64x32xf32> to vector<8x64x32xf32>
    %121 = arith.mulf %110, %120 : vector<8x64x32xf32>
    %122 = arith.addf %107, %121 : vector<8x64x32xf32>
    %123 = vector.extract_strided_slice %12 {offsets = [0, 0, 8], sizes = [8, 64, 24], strides = [1, 1, 1]} : vector<8x64x32xf32> to vector<8x64x24xf32>
    %124 = vector.extract_strided_slice %12 {offsets = [0, 0, 0], sizes = [8, 64, 8], strides = [1, 1, 1]} : vector<8x64x32xf32> to vector<8x64x8xf32>
    %125 = tpu.concatenate %123, %124 in 2 : vector<8x64x24xf32>, vector<8x64x8xf32> -> vector<8x64x32xf32>
    %126 = vector.extract_strided_slice %24 {offsets = [7, 0, 0], sizes = [1, 64, 32], strides = [1, 1, 1]} : vector<9x64x32xf32> to vector<1x64x32xf32>
    %127 = vector.shape_cast %126 : vector<1x64x32xf32> to vector<64x32xf32>
    %128 = vector.shape_cast %127 : vector<64x32xf32> to vector<1x64x32xf32>
    %129 = vector.broadcast %128 : vector<1x64x32xf32> to vector<8x64x32xf32>
    %130 = arith.mulf %125, %129 : vector<8x64x32xf32>
    %131 = arith.addf %116, %130 : vector<8x64x32xf32>
    %132 = vector.extract_strided_slice %25 {offsets = [7, 0, 0], sizes = [1, 64, 32], strides = [1, 1, 1]} : vector<9x64x32xf32> to vector<1x64x32xf32>
    %133 = vector.shape_cast %132 : vector<1x64x32xf32> to vector<64x32xf32>
    %134 = vector.shape_cast %133 : vector<64x32xf32> to vector<1x64x32xf32>
    %135 = vector.broadcast %134 : vector<1x64x32xf32> to vector<8x64x32xf32>
    %136 = arith.mulf %125, %135 : vector<8x64x32xf32>
    %137 = arith.addf %122, %136 : vector<8x64x32xf32>
    %138 = vector.extract_strided_slice %12 {offsets = [0, 0, 9], sizes = [8, 64, 23], strides = [1, 1, 1]} : vector<8x64x32xf32> to vector<8x64x23xf32>
    %139 = vector.extract_strided_slice %12 {offsets = [0, 0, 0], sizes = [8, 64, 9], strides = [1, 1, 1]} : vector<8x64x32xf32> to vector<8x64x9xf32>
    %140 = tpu.concatenate %138, %139 in 2 : vector<8x64x23xf32>, vector<8x64x9xf32> -> vector<8x64x32xf32>
    %141 = vector.extract_strided_slice %24 {offsets = [8, 0, 0], sizes = [1, 64, 32], strides = [1, 1, 1]} : vector<9x64x32xf32> to vector<1x64x32xf32>
    %142 = vector.shape_cast %141 : vector<1x64x32xf32> to vector<64x32xf32>
    %143 = vector.shape_cast %142 : vector<64x32xf32> to vector<1x64x32xf32>
    %144 = vector.broadcast %143 : vector<1x64x32xf32> to vector<8x64x32xf32>
    %145 = arith.mulf %140, %144 : vector<8x64x32xf32>
    %146 = arith.addf %131, %145 : vector<8x64x32xf32>
    %147 = vector.extract_strided_slice %25 {offsets = [8, 0, 0], sizes = [1, 64, 32], strides = [1, 1, 1]} : vector<9x64x32xf32> to vector<1x64x32xf32>
    %148 = vector.shape_cast %147 : vector<1x64x32xf32> to vector<64x32xf32>
    %149 = vector.shape_cast %148 : vector<64x32xf32> to vector<1x64x32xf32>
    %150 = vector.broadcast %149 : vector<1x64x32xf32> to vector<8x64x32xf32>
    %151 = arith.mulf %140, %150 : vector<8x64x32xf32>
    %152 = arith.addf %137, %151 : vector<8x64x32xf32>
    %153 = vector.extract_strided_slice %152 {offsets = [0, 1, 0], sizes = [8, 63, 32], strides = [1, 1, 1]} : vector<8x64x32xf32> to vector<8x63x32xf32>
    %154 = vector.extract_strided_slice %152 {offsets = [0, 0, 0], sizes = [8, 1, 32], strides = [1, 1, 1]} : vector<8x64x32xf32> to vector<8x1x32xf32>
    %155 = tpu.concatenate %153, %154 in 1 : vector<8x63x32xf32>, vector<8x1x32xf32> -> vector<8x64x32xf32>
    %156 = arith.addf %146, %155 : vector<8x64x32xf32>
    %157 = vector.extract_strided_slice %92 {offsets = [0, 63, 0], sizes = [8, 1, 32], strides = [1, 1, 1]} : vector<8x64x32xf32> to vector<8x1x32xf32>
    %158 = vector.extract_strided_slice %92 {offsets = [0, 0, 0], sizes = [8, 63, 32], strides = [1, 1, 1]} : vector<8x64x32xf32> to vector<8x63x32xf32>
    %159 = tpu.concatenate %157, %158 in 1 : vector<8x1x32xf32>, vector<8x63x32xf32> -> vector<8x64x32xf32>
    %160 = arith.addf %156, %159 : vector<8x64x32xf32>
    %c0_18 = arith.constant 0 : index
    %c0_19 = arith.constant 0 : index
    %161 = vector.load %arg6[%c0_18, %c0_19] : memref<64x32xf32, #tpu.memory_space<vmem>>, vector<64x32xf32>
    %162 = vector.shape_cast %161 : vector<64x32xf32> to vector<1x64x32xf32>
    %163 = vector.broadcast %162 : vector<1x64x32xf32> to vector<8x64x32xf32>
    %164 = arith.addf %160, %163 : vector<8x64x32xf32>
    %165 = arith.addf %23, %164 : vector<8x64x32xf32>
    %166 = vector.shape_cast %165 : vector<8x64x32xf32> to vector<512x32xf32>
    %c0_20 = arith.constant 0 : index
    %c0_21 = arith.constant 0 : index
    %167 = vector.load %arg7[%c0_20, %c0_21] : memref<32x32xf32, #tpu.memory_space<vmem>>, vector<32x32xf32>
    %cst_22 = arith.constant dense<0.000000e+00> : vector<512x32xf32>
    %168 = tpu.matmul %166, %167, %cst_22 {dimension_numbers = #tpu.dot_dimension_numbers<[1], [0], [0], [1], [0, 0, 1, 1], [], []>} : vector<512x32xf32>, vector<32x32xf32>, vector<512x32xf32> -> vector<512x32xf32>
    %c0_23 = arith.constant 0 : index
    %c0_24 = arith.constant 0 : index
    %169 = vector.load %arg8[%c0_23, %c0_24] : memref<1x32xf32, #tpu.memory_space<vmem>>, vector<1x32xf32>
    %170 = vector.broadcast %169 : vector<1x32xf32> to vector<512x32xf32>
    %171 = arith.addf %168, %170 : vector<512x32xf32>
    %172 = vector.shape_cast %171 : vector<512x32xf32> to vector<8x64x32xf32>
    %c0_25 = arith.constant 0 : index
    %c0_26 = arith.constant 0 : index
    %c0_27 = arith.constant 0 : index
    %173 = vector.load %arg9[%c0_25, %c0_26, %c0_27] : memref<8x64x32xf32, #tpu.memory_space<vmem>>, vector<8x64x32xf32>
    tpu.vector_store %arg9[%c0_25, %c0_26, %c0_27], %172 {strides = array<i32>} : memref<8x64x32xf32, #tpu.memory_space<vmem>>, vector<8x64x32xf32>,
    return
  }
  func.func @transform_0(%arg0: i32) -> (i32, i32, i32) {
    %c0_i32 = arith.constant 0 : i32
    %c0_i32_0 = arith.constant 0 : i32
    %c0_i32_1 = arith.constant 0 : i32
    return %arg0, %c0_i32, %c0_i32_0 : i32, i32, i32
  }
  func.func @transform_1(%arg0: i32) -> (i32, i32) {
    %c0_i32 = arith.constant 0 : i32
    %c0_i32_0 = arith.constant 0 : i32
    %c0_i32_1 = arith.constant 0 : i32
    return %c0_i32, %c0_i32_0 : i32, i32
  }
  func.func @transform_2(%arg0: i32) -> (i32, i32) {
    %c0_i32 = arith.constant 0 : i32
    %c0_i32_0 = arith.constant 0 : i32
    %c0_i32_1 = arith.constant 0 : i32
    return %c0_i32, %c0_i32_0 : i32, i32
  }
  func.func @transform_3(%arg0: i32) -> (i32, i32, i32) {
    %c0_i32 = arith.constant 0 : i32
    %c0_i32_0 = arith.constant 0 : i32
    %c0_i32_1 = arith.constant 0 : i32
    %c0_i32_2 = arith.constant 0 : i32
    return %c0_i32, %c0_i32_0, %c0_i32_1 : i32, i32, i32
  }
  func.func @transform_4(%arg0: i32) -> (i32, i32, i32) {
    %c0_i32 = arith.constant 0 : i32
    %c0_i32_0 = arith.constant 0 : i32
    %c0_i32_1 = arith.constant 0 : i32
    %c0_i32_2 = arith.constant 0 : i32
    return %c0_i32, %c0_i32_0, %c0_i32_1 : i32, i32, i32
  }
  func.func @transform_5(%arg0: i32) -> (i32, i32) {
    %c0_i32 = arith.constant 0 : i32
    %c0_i32_0 = arith.constant 0 : i32
    %c0_i32_1 = arith.constant 0 : i32
    return %c0_i32, %c0_i32_0 : i32, i32
  }
  func.func @transform_6(%arg0: i32) -> (i32, i32) {
    %c0_i32 = arith.constant 0 : i32
    %c0_i32_0 = arith.constant 0 : i32
    %c0_i32_1 = arith.constant 0 : i32
    return %c0_i32, %c0_i32_0 : i32, i32
  }
  func.func @transform_7(%arg0: i32) -> (i32, i32) {
    %c0_i32 = arith.constant 0 : i32
    %c0_i32_0 = arith.constant 0 : i32
    %c0_i32_1 = arith.constant 0 : i32
    return %c0_i32, %c0_i32_0 : i32, i32
  }
  func.func @transform_8(%arg0: i32) -> (i32, i32, i32) {
    %c0_i32 = arith.constant 0 : i32
    %c0_i32_0 = arith.constant 0 : i32
    %c0_i32_1 = arith.constant 0 : i32
    return %arg0, %c0_i32, %c0_i32_0 : i32, i32, i32
  }
}

</mosaic_0001>

<llo_original>
// kernel: tpu_custom_call.1
$region0: #{tpu_custom_call.1}
  #allocation0 [shape = 'u32[]', space=smem, size = 0x4, offset = 0x4, fixed_abs, tag = 'smem constant byte address 0x4 - core index']
  #allocation1 [shape = 'u32[72,128]{1,0:T(1,128)}', space=vmem, size = 0x9000, scoped, tag = 'internal scratch']
  %s0 = inlined_call_operand.vmem [shape: f32[8,64,32], index: 0, kind: input, shape index: {}]
  %s1 = inlined_call_operand.vmem [shape: f32[32,96], index: 1, kind: input, shape index: {}]
  %s2 = inlined_call_operand.vmem [shape: f32[1,96], index: 2, kind: input, shape index: {}]
  %s3 = inlined_call_operand.vmem [shape: f32[9,64,32], index: 3, kind: input, shape index: {}]
  %s4 = inlined_call_operand.vmem [shape: f32[9,64,32], index: 4, kind: input, shape index: {}]
  %s5 = inlined_call_operand.vmem [shape: f32[64,32], index: 5, kind: input, shape index: {}]
  %s6 = inlined_call_operand.vmem [shape: f32[32,32], index: 6, kind: input, shape index: {}]
  %s7 = inlined_call_operand.vmem [shape: f32[1,32], index: 7, kind: input, shape index: {}]
  %s8 = inlined_call_operand.vmem [shape: f32[8,64,32], index: 8, kind: output, shape index: {}]
  %s9 = sld [smem:[#allocation0]]
  $region42: #{tpu_custom_call.1} parent=0
    _
  %s11 = ssub.s32 1, %s9
  %s12 = scalar_select 0, %s11, %s9
  // Predicated region
  $region2: #{tpu_custom_call.1} parent=0 // pred_check
    _
  $region3: #{tpu_custom_call.1} parent=0 // pred_check_branch
    %14 = sbr.rel (0) target = $region5
  $region4: #{tpu_custom_call.1} parent=0 // pred_region
    _
  $region5: #{tpu_custom_call.1} parent=0 // pred_fallthru
    _
  // Predicated region
  $region6: #{tpu_custom_call.1} parent=0 // pred_check
    _
  $region7: #{tpu_custom_call.1} parent=0 // pred_check_branch
    %16 = sbr.rel (0) target = $region9
  $region8: #{tpu_custom_call.1} parent=0 // pred_region
    _
  $region9: #{tpu_custom_call.1} parent=0 // pred_fallthru
    _
  // Predicated region
  $region10: #{tpu_custom_call.1} parent=0 // pred_check
    _
  $region11: #{tpu_custom_call.1} parent=0 // pred_check_branch
    %18 = sbr.rel (0) target = $region13
  $region12: #{tpu_custom_call.1} parent=0 // pred_region
    _
  $region13: #{tpu_custom_call.1} parent=0 // pred_fallthru
    _
  // Predicated region
  $region14: #{tpu_custom_call.1} parent=0 // pred_check
    _
  $region15: #{tpu_custom_call.1} parent=0 // pred_check_branch
    %20 = sbr.rel (0) target = $region17
  $region16: #{tpu_custom_call.1} parent=0 // pred_region
    _
  $region17: #{tpu_custom_call.1} parent=0 // pred_fallthru
    _
  // Predicated region
  $region18: #{tpu_custom_call.1} parent=0 // pred_check
    _
  $region19: #{tpu_custom_call.1} parent=0 // pred_check_branch
    %22 = sbr.rel (0) target = $region21
  $region20: #{tpu_custom_call.1} parent=0 // pred_region
    _
  $region21: #{tpu_custom_call.1} parent=0 // pred_fallthru
    _
  // Predicated region
  $region22: #{tpu_custom_call.1} parent=0 // pred_check
    _
  $region23: #{tpu_custom_call.1} parent=0 // pred_check_branch
    %24 = sbr.rel (0) target = $region25
  $region24: #{tpu_custom_call.1} parent=0 // pred_region
    _
  $region25: #{tpu_custom_call.1} parent=0 // pred_fallthru
    _
  // Predicated region
  $region26: #{tpu_custom_call.1} parent=0 // pred_check
    _
  $region27: #{tpu_custom_call.1} parent=0 // pred_check_branch
    %26 = sbr.rel (0) target = $region29
  $region28: #{tpu_custom_call.1} parent=0 // pred_region
    _
  $region29: #{tpu_custom_call.1} parent=0 // pred_fallthru
    _
  // Predicated region
  $region30: #{tpu_custom_call.1} parent=0 // pred_check
    _
  $region31: #{tpu_custom_call.1} parent=0 // pred_check_branch
    %28 = sbr.rel (0) target = $region33
  $region32: #{tpu_custom_call.1} parent=0 // pred_region
    _
  $region33: #{tpu_custom_call.1} parent=0 // pred_fallthru
    _
  %v29 = vld [vmem:[%s0] sm:$0xff]
  %v30 = vld [vmem:[%s0 + $0x8] sm:$0xff]
  %v31 = vld [vmem:[%s0 + $0x10] sm:$0xff]
  %v32 = vld [vmem:[%s0 + $0x18] sm:$0xff]
  %v33 = vld [vmem:[%s0 + $0x20] sm:$0xff]
  %v34 = vld [vmem:[%s0 + $0x28] sm:$0xff]
  %v35 = vld [vmem:[%s0 + $0x30] sm:$0xff]
  %v36 = vld [vmem:[%s0 + $0x38] sm:$0xff]
  %v37 = vld [vmem:[%s0 + $0x40] sm:$0xff]
  %v38 = vld [vmem:[%s0 + $0x48] sm:$0xff]
  %v39 = vld [vmem:[%s0 + $0x50] sm:$0xff]
  %v40 = vld [vmem:[%s0 + $0x58] sm:$0xff]
  %v41 = vld [vmem:[%s0 + $0x60] sm:$0xff]
  %v42 = vld [vmem:[%s0 + $0x68] sm:$0xff]
  %v43 = vld [vmem:[%s0 + $0x70] sm:$0xff]
  %v44 = vld [vmem:[%s0 + $0x78] sm:$0xff]
  %v45 = vld [vmem:[%s0 + $0x80] sm:$0xff]
  %v46 = vld [vmem:[%s0 + $0x88] sm:$0xff]
  %v47 = vld [vmem:[%s0 + $0x90] sm:$0xff]
  %v48 = vld [vmem:[%s0 + $0x98] sm:$0xff]
  %v49 = vld [vmem:[%s0 + $0xa0] sm:$0xff]
  %v50 = vld [vmem:[%s0 + $0xa8] sm:$0xff]
  %v51 = vld [vmem:[%s0 + $0xb0] sm:$0xff]
  %v52 = vld [vmem:[%s0 + $0xb8] sm:$0xff]
  %v53 = vld [vmem:[%s0 + $0xc0] sm:$0xff]
  %v54 = vld [vmem:[%s0 + $0xc8] sm:$0xff]
  %v55 = vld [vmem:[%s0 + $0xd0] sm:$0xff]
  %v56 = vld [vmem:[%s0 + $0xd8] sm:$0xff]
  %v57 = vld [vmem:[%s0 + $0xe0] sm:$0xff]
  %v58 = vld [vmem:[%s0 + $0xe8] sm:$0xff]
  %v59 = vld [vmem:[%s0 + $0xf0] sm:$0xff]
  %v60 = vld [vmem:[%s0 + $0xf8] sm:$0xff]
  %v61 = vld [vmem:[%s0 + $0x100] sm:$0xff]
  %v62 = vld [vmem:[%s0 + $0x108] sm:$0xff]
  %v63 = vld [vmem:[%s0 + $0x110] sm:$0xff]
  %v64 = vld [vmem:[%s0 + $0x118] sm:$0xff]
  %v65 = vld [vmem:[%s0 + $0x120] sm:$0xff]
  %v66 = vld [vmem:[%s0 + $0x128] sm:$0xff]
  %v67 = vld [vmem:[%s0 + $0x130] sm:$0xff]
  %v68 = vld [vmem:[%s0 + $0x138] sm:$0xff]
  %v69 = vld [vmem:[%s0 + $0x140] sm:$0xff]
  %v70 = vld [vmem:[%s0 + $0x148] sm:$0xff]
  %v71 = vld [vmem:[%s0 + $0x150] sm:$0xff]
  %v72 = vld [vmem:[%s0 + $0x158] sm:$0xff]
  %v73 = vld [vmem:[%s0 + $0x160] sm:$0xff]
  %v74 = vld [vmem:[%s0 + $0x168] sm:$0xff]
  %v75 = vld [vmem:[%s0 + $0x170] sm:$0xff]
  %v76 = vld [vmem:[%s0 + $0x178] sm:$0xff]
  %v77 = vld [vmem:[%s0 + $0x180] sm:$0xff]
  %v78 = vld [vmem:[%s0 + $0x188] sm:$0xff]
  %v79 = vld [vmem:[%s0 + $0x190] sm:$0xff]
  %v80 = vld [vmem:[%s0 + $0x198] sm:$0xff]
  %v81 = vld [vmem:[%s0 + $0x1a0] sm:$0xff]
  %v82 = vld [vmem:[%s0 + $0x1a8] sm:$0xff]
  %v83 = vld [vmem:[%s0 + $0x1b0] sm:$0xff]
  %v84 = vld [vmem:[%s0 + $0x1b8] sm:$0xff]
  %v85 = vld [vmem:[%s0 + $0x1c0] sm:$0xff]
  %v86 = vld [vmem:[%s0 + $0x1c8] sm:$0xff]
  %v87 = vld [vmem:[%s0 + $0x1d0] sm:$0xff]
  %v88 = vld [vmem:[%s0 + $0x1d8] sm:$0xff]
  %v89 = vld [vmem:[%s0 + $0x1e0] sm:$0xff]
  %v90 = vld [vmem:[%s0 + $0x1e8] sm:$0xff]
  %v91 = vld [vmem:[%s0 + $0x1f0] sm:$0xff]
  %v92 = vld [vmem:[%s0 + $0x1f8] sm:$0xff]
  %v93 = vld [vmem:[%s1] sm:$0xff]
  %v94 = vld [vmem:[%s1 + $0x8] sm:$0xff]
  %v95 = vld [vmem:[%s1 + $0x10] sm:$0xff]
  %v96 = vld [vmem:[%s1 + $0x18] sm:$0xff]
  %v97 = vld [vmem:[%s2] sm:$0x1]
  %v99 = vperm.slane %v97, 0
  %vm101 = vcmask 261120
  %v103 = vsel %vm101, %v29, 0
  %v106 = vsel %vm101, %v30, 0
  %v109 = vsel %vm101, %v31, 0
  %v112 = vsel %vm101, %v32, 0
  %v115 = vsel %vm101, %v33, 0
  %v118 = vsel %vm101, %v34, 0
  %v121 = vsel %vm101, %v35, 0
  %v124 = vsel %vm101, %v36, 0
  %v127 = vsel %vm101, %v37, 0
  %v130 = vsel %vm101, %v38, 0
  %v133 = vsel %vm101, %v39, 0
  %v136 = vsel %vm101, %v40, 0
  %v139 = vsel %vm101, %v41, 0
  %v142 = vsel %vm101, %v42, 0
  %v145 = vsel %vm101, %v43, 0
  %v148 = vsel %vm101, %v44, 0
  %v151 = vsel %vm101, %v45, 0
  %v154 = vsel %vm101, %v46, 0
  %v157 = vsel %vm101, %v47, 0
  %v160 = vsel %vm101, %v48, 0
  %v163 = vsel %vm101, %v49, 0
  %v166 = vsel %vm101, %v50, 0
  %v169 = vsel %vm101, %v51, 0
  %v172 = vsel %vm101, %v52, 0
  %v175 = vsel %vm101, %v53, 0
  %v178 = vsel %vm101, %v54, 0
  %v181 = vsel %vm101, %v55, 0
  %v184 = vsel %vm101, %v56, 0
  %v187 = vsel %vm101, %v57, 0
  %v190 = vsel %vm101, %v58, 0
  %v193 = vsel %vm101, %v59, 0
  %v196 = vsel %vm101, %v60, 0
  %v199 = vsel %vm101, %v61, 0
  %v202 = vsel %vm101, %v62, 0
  %v205 = vsel %vm101, %v63, 0
  %v208 = vsel %vm101, %v64, 0
  %v211 = vsel %vm101, %v65, 0
  %v214 = vsel %vm101, %v66, 0
  %v217 = vsel %vm101, %v67, 0
  %v220 = vsel %vm101, %v68, 0
  %v223 = vsel %vm101, %v69, 0
  %v226 = vsel %vm101, %v70, 0
  %v229 = vsel %vm101, %v71, 0
  %v232 = vsel %vm101, %v72, 0
  %v235 = vsel %vm101, %v73, 0
  %v238 = vsel %vm101, %v74, 0
  %v241 = vsel %vm101, %v75, 0
  %v244 = vsel %vm101, %v76, 0
  %v247 = vsel %vm101, %v77, 0
  %v250 = vsel %vm101, %v78, 0
  %v253 = vsel %vm101, %v79, 0
  %v256 = vsel %vm101, %v80, 0
  %v259 = vsel %vm101, %v81, 0
  %v262 = vsel %vm101, %v82, 0
  %v265 = vsel %vm101, %v83, 0
  %v268 = vsel %vm101, %v84, 0
  %v271 = vsel %vm101, %v85, 0
  %v274 = vsel %vm101, %v86, 0
  %v277 = vsel %vm101, %v87, 0
  %v280 = vsel %vm101, %v88, 0
  %v283 = vsel %vm101, %v89, 0
  %v286 = vsel %vm101, %v90, 0
  %v289 = vsel %vm101, %v91, 0
  %v292 = vsel %vm101, %v92, 0
  %294 = vmatpush.msra.mxu0 0.0
  %295 = vmatpush.msra.mxu0 0.0
  %296 = vmatpush.msra.mxu0 0.0
  %297 = vmatpush.msra.mxu0 0.0
  %298 = vmatpush.msra.mxu0 0.0
  %299 = vmatpush.msra.mxu0 0.0
  %300 = vmatpush.msra.mxu0 0.0
  %301 = vmatpush.msra.mxu0 0.0
  %302 = vmatpush.msra.mxu0 0.0
  %303 = vmatpush.msra.mxu0 0.0
  %304 = vmatpush.msra.mxu0 0.0
  %305 = vmatpush.msra.mxu0 0.0
  %306 = vmatpush.msra.mxu0 %v96
  %307 = vmatpush.msra.mxu0 %v95
  %308 = vmatpush.msra.mxu0 %v94
  %309 = vmatpush.msra.mxu0 %v93
  %310 = vmatmul.f32.gmra.mxu0 %v103
  %v311 = vpop.f32.mrf.mxu0
  %v312 = vadd.f32 %v99, %v311
  %313 = vmatmul.f32.gmra.mxu0 %v106
  %v314 = vpop.f32.mrf.mxu0
  %v315 = vadd.f32 %v99, %v314
  %316 = vmatmul.f32.gmra.mxu0 %v109
  %v317 = vpop.f32.mrf.mxu0
  %v318 = vadd.f32 %v99, %v317
  %319 = vmatmul.f32.gmra.mxu0 %v112
  %v320 = vpop.f32.mrf.mxu0
  %v321 = vadd.f32 %v99, %v320
  %322 = vmatmul.f32.gmra.mxu0 %v115
  %v323 = vpop.f32.mrf.mxu0
  %v324 = vadd.f32 %v99, %v323
  %325 = vmatmul.f32.gmra.mxu0 %v118
  %v326 = vpop.f32.mrf.mxu0
  %v327 = vadd.f32 %v99, %v326
  %328 = vmatmul.f32.gmra.mxu0 %v121
  %v329 = vpop.f32.mrf.mxu0
  %v330 = vadd.f32 %v99, %v329
  %331 = vmatmul.f32.gmra.mxu0 %v124
  %v332 = vpop.f32.mrf.mxu0
  %v333 = vadd.f32 %v99, %v332
  %334 = vmatmul.f32.gmra.mxu0 %v127
  %v335 = vpop.f32.mrf.mxu0
  %v336 = vadd.f32 %v99, %v335
  %337 = vmatmul.f32.gmra.mxu0 %v130
  %v338 = vpop.f32.mrf.mxu0
  %v339 = vadd.f32 %v99, %v338
  %340 = vmatmul.f32.gmra.mxu0 %v133
  %v341 = vpop.f32.mrf.mxu0
  %v342 = vadd.f32 %v99, %v341
  %343 = vmatmul.f32.gmra.mxu0 %v136
  %v344 = vpop.f32.mrf.mxu0
  %v345 = vadd.f32 %v99, %v344
  %346 = vmatmul.f32.gmra.mxu0 %v139
  %v347 = vpop.f32.mrf.mxu0
  %v348 = vadd.f32 %v99, %v347
  %349 = vmatmul.f32.gmra.mxu0 %v142
  %v350 = vpop.f32.mrf.mxu0
  %v351 = vadd.f32 %v99, %v350
  %352 = vmatmul.f32.gmra.mxu0 %v145
  %v353 = vpop.f32.mrf.mxu0
  %v354 = vadd.f32 %v99, %v353
  %355 = vmatmul.f32.gmra.mxu0 %v148
  %v356 = vpop.f32.mrf.mxu0
  %v357 = vadd.f32 %v99, %v356
  %358 = vmatmul.f32.gmra.mxu0 %v151
  %v359 = vpop.f32.mrf.mxu0
  %v360 = vadd.f32 %v99, %v359
  %361 = vmatmul.f32.gmra.mxu0 %v154
  %v362 = vpop.f32.mrf.mxu0
  %v363 = vadd.f32 %v99, %v362
  %364 = vmatmul.f32.gmra.mxu0 %v157
  %v365 = vpop.f32.mrf.mxu0
  %v366 = vadd.f32 %v99, %v365
  %367 = vmatmul.f32.gmra.mxu0 %v160
  %v368 = vpop.f32.mrf.mxu0
  %v369 = vadd.f32 %v99, %v368
  %370 = vmatmul.f32.gmra.mxu0 %v163
  %v371 = vpop.f32.mrf.mxu0
  %v372 = vadd.f32 %v99, %v371
  %373 = vmatmul.f32.gmra.mxu0 %v166
  %v374 = vpop.f32.mrf.mxu0
  %v375 = vadd.f32 %v99, %v374
  %376 = vmatmul.f32.gmra.mxu0 %v169
  %v377 = vpop.f32.mrf.mxu0
  %v378 = vadd.f32 %v99, %v377
  %379 = vmatmul.f32.gmra.mxu0 %v172
  %v380 = vpop.f32.mrf.mxu0
  %v381 = vadd.f32 %v99, %v380
  %382 = vmatmul.f32.gmra.mxu0 %v175
  %v383 = vpop.f32.mrf.mxu0
  %v384 = vadd.f32 %v99, %v383
  %385 = vmatmul.f32.gmra.mxu0 %v178
  %v386 = vpop.f32.mrf.mxu0
  %v387 = vadd.f32 %v99, %v386
  %388 = vmatmul.f32.gmra.mxu0 %v181
  %v389 = vpop.f32.mrf.mxu0
  %v390 = vadd.f32 %v99, %v389
  %391 = vmatmul.f32.gmra.mxu0 %v184
  %v392 = vpop.f32.mrf.mxu0
  %v393 = vadd.f32 %v99, %v392
  %394 = vmatmul.f32.gmra.mxu0 %v187
  %v395 = vpop.f32.mrf.mxu0
  %v396 = vadd.f32 %v99, %v395
  %397 = vmatmul.f32.gmra.mxu0 %v190
  %v398 = vpop.f32.mrf.mxu0
  %v399 = vadd.f32 %v99, %v398
  %400 = vmatmul.f32.gmra.mxu0 %v193
  %v401 = vpop.f32.mrf.mxu0
  %v402 = vadd.f32 %v99, %v401
  %403 = vmatmul.f32.gmra.mxu0 %v196
  %v404 = vpop.f32.mrf.mxu0
  %v405 = vadd.f32 %v99, %v404
  %406 = vmatmul.f32.gmra.mxu0 %v199
  %v407 = vpop.f32.mrf.mxu0
  %v408 = vadd.f32 %v99, %v407
  %409 = vmatmul.f32.gmra.mxu0 %v202
  %v410 = vpop.f32.mrf.mxu0
  %v411 = vadd.f32 %v99, %v410
  %412 = vmatmul.f32.gmra.mxu0 %v205
  %v413 = vpop.f32.mrf.mxu0
  %v414 = vadd.f32 %v99, %v413
  %415 = vmatmul.f32.gmra.mxu0 %v208
  %v416 = vpop.f32.mrf.mxu0
  %v417 = vadd.f32 %v99, %v416
  %418 = vmatmul.f32.gmra.mxu0 %v211
  %v419 = vpop.f32.mrf.mxu0
  %v420 = vadd.f32 %v99, %v419
  %421 = vmatmul.f32.gmra.mxu0 %v214
  %v422 = vpop.f32.mrf.mxu0
  %v423 = vadd.f32 %v99, %v422
  %424 = vmatmul.f32.gmra.mxu0 %v217
  %v425 = vpop.f32.mrf.mxu0
  %v426 = vadd.f32 %v99, %v425
  %427 = vmatmul.f32.gmra.mxu0 %v220
  %v428 = vpop.f32.mrf.mxu0
  %v429 = vadd.f32 %v99, %v428
  %430 = vmatmul.f32.gmra.mxu0 %v223
  %v431 = vpop.f32.mrf.mxu0
  %v432 = vadd.f32 %v99, %v431
  %433 = vmatmul.f32.gmra.mxu0 %v226
  %v434 = vpop.f32.mrf.mxu0
  %v435 = vadd.f32 %v99, %v434
  %436 = vmatmul.f32.gmra.mxu0 %v229
  %v437 = vpop.f32.mrf.mxu0
  %v438 = vadd.f32 %v99, %v437
  %439 = vmatmul.f32.gmra.mxu0 %v232
  %v440 = vpop.f32.mrf.mxu0
  %v441 = vadd.f32 %v99, %v440
  %442 = vmatmul.f32.gmra.mxu0 %v235
  %v443 = vpop.f32.mrf.mxu0
  %v444 = vadd.f32 %v99, %v443
  %445 = vmatmul.f32.gmra.mxu0 %v238
  %v446 = vpop.f32.mrf.mxu0
  %v447 = vadd.f32 %v99, %v446
  %448 = vmatmul.f32.gmra.mxu0 %v241
  %v449 = vpop.f32.mrf.mxu0
  %v450 = vadd.f32 %v99, %v449
  %451 = vmatmul.f32.gmra.mxu0 %v244
  %v452 = vpop.f32.mrf.mxu0
  %v453 = vadd.f32 %v99, %v452
  %454 = vmatmul.f32.gmra.mxu0 %v247
  %v455 = vpop.f32.mrf.mxu0
  %v456 = vadd.f32 %v99, %v455
  %457 = vmatmul.f32.gmra.mxu0 %v250
  %v458 = vpop.f32.mrf.mxu0
  %v459 = vadd.f32 %v99, %v458
  %460 = vmatmul.f32.gmra.mxu0 %v253
  %v461 = vpop.f32.mrf.mxu0
  %v462 = vadd.f32 %v99, %v461
  %463 = vmatmul.f32.gmra.mxu0 %v256
  %v464 = vpop.f32.mrf.mxu0
  %v465 = vadd.f32 %v99, %v464
  %466 = vmatmul.f32.gmra.mxu0 %v259
  %v467 = vpop.f32.mrf.mxu0
  %v468 = vadd.f32 %v99, %v467
  %469 = vmatmul.f32.gmra.mxu0 %v262
  %v470 = vpop.f32.mrf.mxu0
  %v471 = vadd.f32 %v99, %v470
  %472 = vmatmul.f32.gmra.mxu0 %v265
  %v473 = vpop.f32.mrf.mxu0
  %v474 = vadd.f32 %v99, %v473
  %475 = vmatmul.f32.gmra.mxu0 %v268
  %v476 = vpop.f32.mrf.mxu0
  %v477 = vadd.f32 %v99, %v476
  %478 = vmatmul.f32.gmra.mxu0 %v271
  %v479 = vpop.f32.mrf.mxu0
  %v480 = vadd.f32 %v99, %v479
  %481 = vmatmul.f32.gmra.mxu0 %v274
  %v482 = vpop.f32.mrf.mxu0
  %v483 = vadd.f32 %v99, %v482
  %484 = vmatmul.f32.gmra.mxu0 %v277
  %v485 = vpop.f32.mrf.mxu0
  %v486 = vadd.f32 %v99, %v485
  %487 = vmatmul.f32.gmra.mxu0 %v280
  %v488 = vpop.f32.mrf.mxu0
  %v489 = vadd.f32 %v99, %v488
  %490 = vmatmul.f32.gmra.mxu0 %v283
  %v491 = vpop.f32.mrf.mxu0
  %v492 = vadd.f32 %v99, %v491
  %493 = vmatmul.f32.gmra.mxu0 %v286
  %v494 = vpop.f32.mrf.mxu0
  %v495 = vadd.f32 %v99, %v494
  %496 = vmatmul.f32.gmra.mxu0 %v289
  %v497 = vpop.f32.mrf.mxu0
  %v498 = vadd.f32 %v99, %v497
  %499 = vmatmul.f32.gmra.mxu0 %v292
  %v500 = vpop.f32.mrf.mxu0
  %v501 = vadd.f32 %v99, %v500
  %502 = vdwg.mxu0
  %511 = vrot.lane.b32.xlu0 %v312, 96
  %v512 = vpop.permute.xlu0 %511
  %513 = vrot.lane.b32.xlu0 %v315, 96
  %v514 = vpop.permute.xlu0 %513
  %515 = vrot.lane.b32.xlu0 %v318, 96
  %v516 = vpop.permute.xlu0 %515
  %517 = vrot.lane.b32.xlu0 %v321, 96
  %v518 = vpop.permute.xlu0 %517
  %519 = vrot.lane.b32.xlu0 %v324, 96
  %v520 = vpop.permute.xlu0 %519
  %521 = vrot.lane.b32.xlu0 %v327, 96
  %v522 = vpop.permute.xlu0 %521
  %523 = vrot.lane.b32.xlu0 %v330, 96
  %v524 = vpop.permute.xlu0 %523
  %525 = vrot.lane.b32.xlu0 %v333, 96
  %v526 = vpop.permute.xlu0 %525
  %v527 = vsel %vm101, %v312, 0
  %v529 = vsel %vm101, %v315, 0
  %v531 = vsel %vm101, %v318, 0
  %v533 = vsel %vm101, %v321, 0
  %v535 = vsel %vm101, %v324, 0
  %v537 = vsel %vm101, %v327, 0
  %v539 = vsel %vm101, %v330, 0
  %v541 = vsel %vm101, %v333, 0
  %v543 = vsel %vm101, %v512, 0
  %v545 = vsel %vm101, %v514, 0
  %v547 = vsel %vm101, %v516, 0
  %v549 = vsel %vm101, %v518, 0
  %v551 = vsel %vm101, %v520, 0
  %v553 = vsel %vm101, %v522, 0
  %v555 = vsel %vm101, %v524, 0
  %v557 = vsel %vm101, %v526, 0
  %559 = vmatpush.xpose.msra.mxu0 0.0
  %560 = vmatpush.xpose.msra.mxu0 0.0
  %561 = vmatpush.xpose.msra.mxu0 0.0
  %562 = vmatpush.xpose.msra.mxu0 0.0
  %563 = vmatpush.xpose.msra.mxu0 0.0
  %564 = vmatpush.xpose.msra.mxu0 0.0
  %565 = vmatpush.xpose.msra.mxu0 0.0
  %566 = vmatpush.xpose.msra.mxu0 0.0
  %567 = vmatpush.xpose.msra.mxu0 %v557
  %568 = vmatpush.xpose.msra.mxu0 %v555
  %569 = vmatpush.xpose.msra.mxu0 %v553
  %570 = vmatpush.xpose.msra.mxu0 %v551
  %571 = vmatpush.xpose.msra.mxu0 %v549
  %572 = vmatpush.xpose.msra.mxu0 %v547
  %573 = vmatpush.xpose.msra.mxu0 %v545
  %574 = vmatpush.xpose.msra.mxu0 %v543
  %575 = vmatmul.f32.gmra.mxu0 %v527
  %v576 = vpop.f32.mrf.mxu0
  %v577 = vadd.f32 0.0, %v576
  %578 = vmatmul.f32.gmra.mxu0 %v529
  %v579 = vpop.f32.mrf.mxu0
  %v580 = vadd.f32 0.0, %v579
  %581 = vmatmul.f32.gmra.mxu0 %v531
  %v582 = vpop.f32.mrf.mxu0
  %v583 = vadd.f32 0.0, %v582
  %584 = vmatmul.f32.gmra.mxu0 %v533
  %v585 = vpop.f32.mrf.mxu0
  %v586 = vadd.f32 0.0, %v585
  %587 = vmatmul.f32.gmra.mxu0 %v535
  %v588 = vpop.f32.mrf.mxu0
  %v589 = vadd.f32 0.0, %v588
  %590 = vmatmul.f32.gmra.mxu0 %v537
  %v591 = vpop.f32.mrf.mxu0
  %v592 = vadd.f32 0.0, %v591
  %593 = vmatmul.f32.gmra.mxu0 %v539
  %v594 = vpop.f32.mrf.mxu0
  %v595 = vadd.f32 0.0, %v594
  %596 = vmatmul.f32.gmra.mxu0 %v541
  %v597 = vpop.f32.mrf.mxu0
  %v598 = vadd.f32 0.0, %v597
  %599 = vdwg.mxu0
  %608 = vrot.lane.b32.xlu0 %v336, 96
  %v609 = vpop.permute.xlu0 %608
  %610 = vrot.lane.b32.xlu0 %v339, 96
  %v611 = vpop.permute.xlu0 %610
  %612 = vrot.lane.b32.xlu0 %v342, 96
  %v613 = vpop.permute.xlu0 %612
  %614 = vrot.lane.b32.xlu0 %v345, 96
  %v615 = vpop.permute.xlu0 %614
  %616 = vrot.lane.b32.xlu0 %v348, 96
  %v617 = vpop.permute.xlu0 %616
  %618 = vrot.lane.b32.xlu0 %v351, 96
  %v619 = vpop.permute.xlu0 %618
  %620 = vrot.lane.b32.xlu0 %v354, 96
  %v621 = vpop.permute.xlu0 %620
  %622 = vrot.lane.b32.xlu0 %v357, 96
  %v623 = vpop.permute.xlu0 %622
  %v624 = vsel %vm101, %v336, 0
  %v626 = vsel %vm101, %v339, 0
  %v628 = vsel %vm101, %v342, 0
  %v630 = vsel %vm101, %v345, 0
  %v632 = vsel %vm101, %v348, 0
  %v634 = vsel %vm101, %v351, 0
  %v636 = vsel %vm101, %v354, 0
  %v638 = vsel %vm101, %v357, 0
  %v640 = vsel %vm101, %v609, 0
  %v642 = vsel %vm101, %v611, 0
  %v644 = vsel %vm101, %v613, 0
  %v646 = vsel %vm101, %v615, 0
  %v648 = vsel %vm101, %v617, 0
  %v650 = vsel %vm101, %v619, 0
  %v652 = vsel %vm101, %v621, 0
  %v654 = vsel %vm101, %v623, 0
  %656 = vmatpush.xpose.msra.mxu0 0.0
  %657 = vmatpush.xpose.msra.mxu0 0.0
  %658 = vmatpush.xpose.msra.mxu0 0.0
  %659 = vmatpush.xpose.msra.mxu0 0.0
  %660 = vmatpush.xpose.msra.mxu0 0.0
  %661 = vmatpush.xpose.msra.mxu0 0.0
  %662 = vmatpush.xpose.msra.mxu0 0.0
  %663 = vmatpush.xpose.msra.mxu0 0.0
  %664 = vmatpush.xpose.msra.mxu0 %v654
  %665 = vmatpush.xpose.msra.mxu0 %v652
  %666 = vmatpush.xpose.msra.mxu0 %v650
  %667 = vmatpush.xpose.msra.mxu0 %v648
  %668 = vmatpush.xpose.msra.mxu0 %v646
  %669 = vmatpush.xpose.msra.mxu0 %v644
  %670 = vmatpush.xpose.msra.mxu0 %v642
  %671 = vmatpush.xpose.msra.mxu0 %v640
  %672 = vmatmul.f32.gmra.mxu0 %v624
  %v673 = vpop.f32.mrf.mxu0
  %v674 = vadd.f32 0.0, %v673
  %675 = vmatmul.f32.gmra.mxu0 %v626
  %v676 = vpop.f32.mrf.mxu0
  %v677 = vadd.f32 0.0, %v676
  %678 = vmatmul.f32.gmra.mxu0 %v628
  %v679 = vpop.f32.mrf.mxu0
  %v680 = vadd.f32 0.0, %v679
  %681 = vmatmul.f32.gmra.mxu0 %v630
  %v682 = vpop.f32.mrf.mxu0
  %v683 = vadd.f32 0.0, %v682
  %684 = vmatmul.f32.gmra.mxu0 %v632
  %v685 = vpop.f32.mrf.mxu0
  %v686 = vadd.f32 0.0, %v685
  %687 = vmatmul.f32.gmra.mxu0 %v634
  %v688 = vpop.f32.mrf.mxu0
  %v689 = vadd.f32 0.0, %v688
  %690 = vmatmul.f32.gmra.mxu0 %v636
  %v691 = vpop.f32.mrf.mxu0
  %v692 = vadd.f32 0.0, %v691
  %693 = vmatmul.f32.gmra.mxu0 %v638
  %v694 = vpop.f32.mrf.mxu0
  %v695 = vadd.f32 0.0, %v694
  %696 = vdwg.mxu0
  %705 = vrot.lane.b32.xlu0 %v360, 96
  %v706 = vpop.permute.xlu0 %705
  %707 = vrot.lane.b32.xlu0 %v363, 96
  %v708 = vpop.permute.xlu0 %707
  %709 = vrot.lane.b32.xlu0 %v366, 96
  %v710 = vpop.permute.xlu0 %709
  %711 = vrot.lane.b32.xlu0 %v369, 96
  %v712 = vpop.permute.xlu0 %711
  %713 = vrot.lane.b32.xlu0 %v372, 96
  %v714 = vpop.permute.xlu0 %713
  %715 = vrot.lane.b32.xlu0 %v375, 96
  %v716 = vpop.permute.xlu0 %715
  %717 = vrot.lane.b32.xlu0 %v378, 96
  %v718 = vpop.permute.xlu0 %717
  %719 = vrot.lane.b32.xlu0 %v381, 96
  %v720 = vpop.permute.xlu0 %719
  %v721 = vsel %vm101, %v360, 0
  %v723 = vsel %vm101, %v363, 0
  %v725 = vsel %vm101, %v366, 0
  %v727 = vsel %vm101, %v369, 0
  %v729 = vsel %vm101, %v372, 0
  %v731 = vsel %vm101, %v375, 0
  %v733 = vsel %vm101, %v378, 0
  %v735 = vsel %vm101, %v381, 0
  %v737 = vsel %vm101, %v706, 0
  %v739 = vsel %vm101, %v708, 0
  %v741 = vsel %vm101, %v710, 0
  %v743 = vsel %vm101, %v712, 0
  %v745 = vsel %vm101, %v714, 0
  %v747 = vsel %vm101, %v716, 0
  %v749 = vsel %vm101, %v718, 0
  %v751 = vsel %vm101, %v720, 0
  %753 = vmatpush.xpose.msra.mxu0 0.0
  %754 = vmatpush.xpose.msra.mxu0 0.0
  %755 = vmatpush.xpose.msra.mxu0 0.0
  %756 = vmatpush.xpose.msra.mxu0 0.0
  %757 = vmatpush.xpose.msra.mxu0 0.0
  %758 = vmatpush.xpose.msra.mxu0 0.0
  %759 = vmatpush.xpose.msra.mxu0 0.0
  %760 = vmatpush.xpose.msra.mxu0 0.0
  %761 = vmatpush.xpose.msra.mxu0 %v751
  %762 = vmatpush.xpose.msra.mxu0 %v749
  %763 = vmatpush.xpose.msra.mxu0 %v747
  %764 = vmatpush.xpose.msra.mxu0 %v745
  %765 = vmatpush.xpose.msra.mxu0 %v743
  %766 = vmatpush.xpose.msra.mxu0 %v741
  %767 = vmatpush.xpose.msra.mxu0 %v739
  %768 = vmatpush.xpose.msra.mxu0 %v737
  %769 = vmatmul.f32.gmra.mxu0 %v721
  %v770 = vpop.f32.mrf.mxu0
  %v771 = vadd.f32 0.0, %v770
  %772 = vmatmul.f32.gmra.mxu0 %v723
  %v773 = vpop.f32.mrf.mxu0
  %v774 = vadd.f32 0.0, %v773
  %775 = vmatmul.f32.gmra.mxu0 %v725
  %v776 = vpop.f32.mrf.mxu0
  %v777 = vadd.f32 0.0, %v776
  %778 = vmatmul.f32.gmra.mxu0 %v727
  %v779 = vpop.f32.mrf.mxu0
  %v780 = vadd.f32 0.0, %v779
  %781 = vmatmul.f32.gmra.mxu0 %v729
  %v782 = vpop.f32.mrf.mxu0
  %v783 = vadd.f32 0.0, %v782
  %784 = vmatmul.f32.gmra.mxu0 %v731
  %v785 = vpop.f32.mrf.mxu0
  %v786 = vadd.f32 0.0, %v785
  %787 = vmatmul.f32.gmra.mxu0 %v733
  %v788 = vpop.f32.mrf.mxu0
  %v789 = vadd.f32 0.0, %v788
  %790 = vmatmul.f32.gmra.mxu0 %v735
  %v791 = vpop.f32.mrf.mxu0
  %v792 = vadd.f32 0.0, %v791
  %793 = vdwg.mxu0
  %802 = vrot.lane.b32.xlu0 %v384, 96
  %v803 = vpop.permute.xlu0 %802
  %804 = vrot.lane.b32.xlu0 %v387, 96
  %v805 = vpop.permute.xlu0 %804
  %806 = vrot.lane.b32.xlu0 %v390, 96
  %v807 = vpop.permute.xlu0 %806
  %808 = vrot.lane.b32.xlu0 %v393, 96
  %v809 = vpop.permute.xlu0 %808
  %810 = vrot.lane.b32.xlu0 %v396, 96
  %v811 = vpop.permute.xlu0 %810
  %812 = vrot.lane.b32.xlu0 %v399, 96
  %v813 = vpop.permute.xlu0 %812
  %814 = vrot.lane.b32.xlu0 %v402, 96
  %v815 = vpop.permute.xlu0 %814
  %816 = vrot.lane.b32.xlu0 %v405, 96
  %v817 = vpop.permute.xlu0 %816
  %v818 = vsel %vm101, %v384, 0
  %v820 = vsel %vm101, %v387, 0
  %v822 = vsel %vm101, %v390, 0
  %v824 = vsel %vm101, %v393, 0
  %v826 = vsel %vm101, %v396, 0
  %v828 = vsel %vm101, %v399, 0
  %v830 = vsel %vm101, %v402, 0
  %v832 = vsel %vm101, %v405, 0
  %v834 = vsel %vm101, %v803, 0
  %v836 = vsel %vm101, %v805, 0
  %v838 = vsel %vm101, %v807, 0
  %v840 = vsel %vm101, %v809, 0
  %v842 = vsel %vm101, %v811, 0
  %v844 = vsel %vm101, %v813, 0
  %v846 = vsel %vm101, %v815, 0
  %v848 = vsel %vm101, %v817, 0
  %850 = vmatpush.xpose.msra.mxu0 0.0
  %851 = vmatpush.xpose.msra.mxu0 0.0
  %852 = vmatpush.xpose.msra.mxu0 0.0
  %853 = vmatpush.xpose.msra.mxu0 0.0
  %854 = vmatpush.xpose.msra.mxu0 0.0
  %855 = vmatpush.xpose.msra.mxu0 0.0
  %856 = vmatpush.xpose.msra.mxu0 0.0
  %857 = vmatpush.xpose.msra.mxu0 0.0
  %858 = vmatpush.xpose.msra.mxu0 %v848
  %859 = vmatpush.xpose.msra.mxu0 %v846
  %860 = vmatpush.xpose.msra.mxu0 %v844
  %861 = vmatpush.xpose.msra.mxu0 %v842
  %862 = vmatpush.xpose.msra.mxu0 %v840
  %863 = vmatpush.xpose.msra.mxu0 %v838
  %864 = vmatpush.xpose.msra.mxu0 %v836
  %865 = vmatpush.xpose.msra.mxu0 %v834
  %866 = vmatmul.f32.gmra.mxu0 %v818
  %v867 = vpop.f32.mrf.mxu0
  %v868 = vadd.f32 0.0, %v867
  %869 = vmatmul.f32.gmra.mxu0 %v820
  %v870 = vpop.f32.mrf.mxu0
  %v871 = vadd.f32 0.0, %v870
  %872 = vmatmul.f32.gmra.mxu0 %v822
  %v873 = vpop.f32.mrf.mxu0
  %v874 = vadd.f32 0.0, %v873
  %875 = vmatmul.f32.gmra.mxu0 %v824
  %v876 = vpop.f32.mrf.mxu0
  %v877 = vadd.f32 0.0, %v876
  %878 = vmatmul.f32.gmra.mxu0 %v826
  %v879 = vpop.f32.mrf.mxu0
  %v880 = vadd.f32 0.0, %v879
  %881 = vmatmul.f32.gmra.mxu0 %v828
  %v882 = vpop.f32.mrf.mxu0
  %v883 = vadd.f32 0.0, %v882
  %884 = vmatmul.f32.gmra.mxu0 %v830
  %v885 = vpop.f32.mrf.mxu0
  %v886 = vadd.f32 0.0, %v885
  %887 = vmatmul.f32.gmra.mxu0 %v832
  %v888 = vpop.f32.mrf.mxu0
  %v889 = vadd.f32 0.0, %v888
  %890 = vdwg.mxu0
  %899 = vrot.lane.b32.xlu0 %v408, 96
  %v900 = vpop.permute.xlu0 %899
  %901 = vrot.lane.b32.xlu0 %v411, 96
  %v902 = vpop.permute.xlu0 %901
  %903 = vrot.lane.b32.xlu0 %v414, 96
  %v904 = vpop.permute.xlu0 %903
  %905 = vrot.lane.b32.xlu0 %v417, 96
  %v906 = vpop.permute.xlu0 %905
  %907 = vrot.lane.b32.xlu0 %v420, 96
  %v908 = vpop.permute.xlu0 %907
  %909 = vrot.lane.b32.xlu0 %v423, 96
  %v910 = vpop.permute.xlu0 %909
  %911 = vrot.lane.b32.xlu0 %v426, 96
  %v912 = vpop.permute.xlu0 %911
  %913 = vrot.lane.b32.xlu0 %v429, 96
  %v914 = vpop.permute.xlu0 %913
  %v915 = vsel %vm101, %v408, 0
  %v917 = vsel %vm101, %v411, 0
  %v919 = vsel %vm101, %v414, 0
  %v921 = vsel %vm101, %v417, 0
  %v923 = vsel %vm101, %v420, 0
  %v925 = vsel %vm101, %v423, 0
  %v927 = vsel %vm101, %v426, 0
  %v929 = vsel %vm101, %v429, 0
  %v931 = vsel %vm101, %v900, 0
  %v933 = vsel %vm101, %v902, 0
  %v935 = vsel %vm101, %v904, 0
  %v937 = vsel %vm101, %v906, 0
  %v939 = vsel %vm101, %v908, 0
  %v941 = vsel %vm101, %v910, 0
  %v943 = vsel %vm101, %v912, 0
  %v945 = vsel %vm101, %v914, 0
  %947 = vmatpush.xpose.msra.mxu0 0.0
  %948 = vmatpush.xpose.msra.mxu0 0.0
  %949 = vmatpush.xpose.msra.mxu0 0.0
  %950 = vmatpush.xpose.msra.mxu0 0.0
  %951 = vmatpush.xpose.msra.mxu0 0.0
  %952 = vmatpush.xpose.msra.mxu0 0.0
  %953 = vmatpush.xpose.msra.mxu0 0.0
  %954 = vmatpush.xpose.msra.mxu0 0.0
  %955 = vmatpush.xpose.msra.mxu0 %v945
  %956 = vmatpush.xpose.msra.mxu0 %v943
  %957 = vmatpush.xpose.msra.mxu0 %v941
  %958 = vmatpush.xpose.msra.mxu0 %v939
  %959 = vmatpush.xpose.msra.mxu0 %v937
  %960 = vmatpush.xpose.msra.mxu0 %v935
  %961 = vmatpush.xpose.msra.mxu0 %v933
  %962 = vmatpush.xpose.msra.mxu0 %v931
  %963 = vmatmul.f32.gmra.mxu0 %v915
  %v964 = vpop.f32.mrf.mxu0
  %v965 = vadd.f32 0.0, %v964
  %966 = vmatmul.f32.gmra.mxu0 %v917
  %v967 = vpop.f32.mrf.mxu0
  %v968 = vadd.f32 0.0, %v967
  %969 = vmatmul.f32.gmra.mxu0 %v919
  %v970 = vpop.f32.mrf.mxu0
  %v971 = vadd.f32 0.0, %v970
  %972 = vmatmul.f32.gmra.mxu0 %v921
  %v973 = vpop.f32.mrf.mxu0
  %v974 = vadd.f32 0.0, %v973
  %975 = vmatmul.f32.gmra.mxu0 %v923
  %v976 = vpop.f32.mrf.mxu0
  %v977 = vadd.f32 0.0, %v976
  %978 = vmatmul.f32.gmra.mxu0 %v925
  %v979 = vpop.f32.mrf.mxu0
  %v980 = vadd.f32 0.0, %v979
  %981 = vmatmul.f32.gmra.mxu0 %v927
  %v982 = vpop.f32.mrf.mxu0
  %v983 = vadd.f32 0.0, %v982
  %984 = vmatmul.f32.gmra.mxu0 %v929
  %v985 = vpop.f32.mrf.mxu0
  %v986 = vadd.f32 0.0, %v985
  %987 = vdwg.mxu0
  %996 = vrot.lane.b32.xlu0 %v432, 96
  %v997 = vpop.permute.xlu0 %996
  %998 = vrot.lane.b32.xlu0 %v435, 96
  %v999 = vpop.permute.xlu0 %998
  %1000 = vrot.lane.b32.xlu0 %v438, 96
  %v1001 = vpop.permute.xlu0 %1000
  %1002 = vrot.lane.b32.xlu0 %v441, 96
  %v1003 = vpop.permute.xlu0 %1002
  %1004 = vrot.lane.b32.xlu0 %v444, 96
  %v1005 = vpop.permute.xlu0 %1004
  %1006 = vrot.lane.b32.xlu0 %v447, 96
  %v1007 = vpop.permute.xlu0 %1006
  %1008 = vrot.lane.b32.xlu0 %v450, 96
  %v1009 = vpop.permute.xlu0 %1008
  %1010 = vrot.lane.b32.xlu0 %v453, 96
  %v1011 = vpop.permute.xlu0 %1010
  %v1012 = vsel %vm101, %v432, 0
  %v1014 = vsel %vm101, %v435, 0
  %v1016 = vsel %vm101, %v438, 0
  %v1018 = vsel %vm101, %v441, 0
  %v1020 = vsel %vm101, %v444, 0
  %v1022 = vsel %vm101, %v447, 0
  %v1024 = vsel %vm101, %v450, 0
  %v1026 = vsel %vm101, %v453, 0
  %v1028 = vsel %vm101, %v997, 0
  %v1030 = vsel %vm101, %v999, 0
  %v1032 = vsel %vm101, %v1001, 0
  %v1034 = vsel %vm101, %v1003, 0
  %v1036 = vsel %vm101, %v1005, 0
  %v1038 = vsel %vm101, %v1007, 0
  %v1040 = vsel %vm101, %v1009, 0
  %v1042 = vsel %vm101, %v1011, 0
  %1044 = vmatpush.xpose.msra.mxu0 0.0
  %1045 = vmatpush.xpose.msra.mxu0 0.0
  %1046 = vmatpush.xpose.msra.mxu0 0.0
  %1047 = vmatpush.xpose.msra.mxu0 0.0
  %1048 = vmatpush.xpose.msra.mxu0 0.0
  %1049 = vmatpush.xpose.msra.mxu0 0.0
  %1050 = vmatpush.xpose.msra.mxu0 0.0
  %1051 = vmatpush.xpose.msra.mxu0 0.0
  %1052 = vmatpush.xpose.msra.mxu0 %v1042
  %1053 = vmatpush.xpose.msra.mxu0 %v1040
  %1054 = vmatpush.xpose.msra.mxu0 %v1038
  %1055 = vmatpush.xpose.msra.mxu0 %v1036
  %1056 = vmatpush.xpose.msra.mxu0 %v1034
  %1057 = vmatpush.xpose.msra.mxu0 %v1032
  %1058 = vmatpush.xpose.msra.mxu0 %v1030
  %1059 = vmatpush.xpose.msra.mxu0 %v1028
  %1060 = vmatmul.f32.gmra.mxu0 %v1012
  %v1061 = vpop.f32.mrf.mxu0
  %v1062 = vadd.f32 0.0, %v1061
  %1063 = vmatmul.f32.gmra.mxu0 %v1014
  %v1064 = vpop.f32.mrf.mxu0
  %v1065 = vadd.f32 0.0, %v1064
  %1066 = vmatmul.f32.gmra.mxu0 %v1016
  %v1067 = vpop.f32.mrf.mxu0
  %v1068 = vadd.f32 0.0, %v1067
  %1069 = vmatmul.f32.gmra.mxu0 %v1018
  %v1070 = vpop.f32.mrf.mxu0
  %v1071 = vadd.f32 0.0, %v1070
  %1072 = vmatmul.f32.gmra.mxu0 %v1020
  %v1073 = vpop.f32.mrf.mxu0
  %v1074 = vadd.f32 0.0, %v1073
  %1075 = vmatmul.f32.gmra.mxu0 %v1022
  %v1076 = vpop.f32.mrf.mxu0
  %v1077 = vadd.f32 0.0, %v1076
  %1078 = vmatmul.f32.gmra.mxu0 %v1024
  %v1079 = vpop.f32.mrf.mxu0
  %v1080 = vadd.f32 0.0, %v1079
  %1081 = vmatmul.f32.gmra.mxu0 %v1026
  %v1082 = vpop.f32.mrf.mxu0
  %v1083 = vadd.f32 0.0, %v1082
  %1084 = vdwg.mxu0
  %1093 = vrot.lane.b32.xlu0 %v456, 96
  %v1094 = vpop.permute.xlu0 %1093
  %1095 = vrot.lane.b32.xlu0 %v459, 96
  %v1096 = vpop.permute.xlu0 %1095
  %1097 = vrot.lane.b32.xlu0 %v462, 96
  %v1098 = vpop.permute.xlu0 %1097
  %1099 = vrot.lane.b32.xlu0 %v465, 96
  %v1100 = vpop.permute.xlu0 %1099
  %1101 = vrot.lane.b32.xlu0 %v468, 96
  %v1102 = vpop.permute.xlu0 %1101
  %1103 = vrot.lane.b32.xlu0 %v471, 96
  %v1104 = vpop.permute.xlu0 %1103
  %1105 = vrot.lane.b32.xlu0 %v474, 96
  %v1106 = vpop.permute.xlu0 %1105
  %1107 = vrot.lane.b32.xlu0 %v477, 96
  %v1108 = vpop.permute.xlu0 %1107
  %v1109 = vsel %vm101, %v456, 0
  %v1111 = vsel %vm101, %v459, 0
  %v1113 = vsel %vm101, %v462, 0
  %v1115 = vsel %vm101, %v465, 0
  %v1117 = vsel %vm101, %v468, 0
  %v1119 = vsel %vm101, %v471, 0
  %v1121 = vsel %vm101, %v474, 0
  %v1123 = vsel %vm101, %v477, 0
  %v1125 = vsel %vm101, %v1094, 0
  %v1127 = vsel %vm101, %v1096, 0
  %v1129 = vsel %vm101, %v1098, 0
  %v1131 = vsel %vm101, %v1100, 0
  %v1133 = vsel %vm101, %v1102, 0
  %v1135 = vsel %vm101, %v1104, 0
  %v1137 = vsel %vm101, %v1106, 0
  %v1139 = vsel %vm101, %v1108, 0
  %1141 = vmatpush.xpose.msra.mxu0 0.0
  %1142 = vmatpush.xpose.msra.mxu0 0.0
  %1143 = vmatpush.xpose.msra.mxu0 0.0
  %1144 = vmatpush.xpose.msra.mxu0 0.0
  %1145 = vmatpush.xpose.msra.mxu0 0.0
  %1146 = vmatpush.xpose.msra.mxu0 0.0
  %1147 = vmatpush.xpose.msra.mxu0 0.0
  %1148 = vmatpush.xpose.msra.mxu0 0.0
  %1149 = vmatpush.xpose.msra.mxu0 %v1139
  %1150 = vmatpush.xpose.msra.mxu0 %v1137
  %1151 = vmatpush.xpose.msra.mxu0 %v1135
  %1152 = vmatpush.xpose.msra.mxu0 %v1133
  %1153 = vmatpush.xpose.msra.mxu0 %v1131
  %1154 = vmatpush.xpose.msra.mxu0 %v1129
  %1155 = vmatpush.xpose.msra.mxu0 %v1127
  %1156 = vmatpush.xpose.msra.mxu0 %v1125
  %1157 = vmatmul.f32.gmra.mxu0 %v1109
  %v1158 = vpop.f32.mrf.mxu0
  %v1159 = vadd.f32 0.0, %v1158
  %1160 = vmatmul.f32.gmra.mxu0 %v1111
  %v1161 = vpop.f32.mrf.mxu0
  %v1162 = vadd.f32 0.0, %v1161
  %1163 = vmatmul.f32.gmra.mxu0 %v1113
  %v1164 = vpop.f32.mrf.mxu0
  %v1165 = vadd.f32 0.0, %v1164
  %1166 = vmatmul.f32.gmra.mxu0 %v1115
  %v1167 = vpop.f32.mrf.mxu0
  %v1168 = vadd.f32 0.0, %v1167
  %1169 = vmatmul.f32.gmra.mxu0 %v1117
  %v1170 = vpop.f32.mrf.mxu0
  %v1171 = vadd.f32 0.0, %v1170
  %1172 = vmatmul.f32.gmra.mxu0 %v1119
  %v1173 = vpop.f32.mrf.mxu0
  %v1174 = vadd.f32 0.0, %v1173
  %1175 = vmatmul.f32.gmra.mxu0 %v1121
  %v1176 = vpop.f32.mrf.mxu0
  %v1177 = vadd.f32 0.0, %v1176
  %1178 = vmatmul.f32.gmra.mxu0 %v1123
  %v1179 = vpop.f32.mrf.mxu0
  %v1180 = vadd.f32 0.0, %v1179
  %1181 = vdwg.mxu0
  %1190 = vrot.lane.b32.xlu0 %v480, 96
  %v1191 = vpop.permute.xlu0 %1190
  %1192 = vrot.lane.b32.xlu0 %v483, 96
  %v1193 = vpop.permute.xlu0 %1192
  %1194 = vrot.lane.b32.xlu0 %v486, 96
  %v1195 = vpop.permute.xlu0 %1194
  %1196 = vrot.lane.b32.xlu0 %v489, 96
  %v1197 = vpop.permute.xlu0 %1196
  %1198 = vrot.lane.b32.xlu0 %v492, 96
  %v1199 = vpop.permute.xlu0 %1198
  %1200 = vrot.lane.b32.xlu0 %v495, 96
  %v1201 = vpop.permute.xlu0 %1200
  %1202 = vrot.lane.b32.xlu0 %v498, 96
  %v1203 = vpop.permute.xlu0 %1202
  %1204 = vrot.lane.b32.xlu0 %v501, 96
  %v1205 = vpop.permute.xlu0 %1204
  %v1206 = vsel %vm101, %v480, 0
  %v1208 = vsel %vm101, %v483, 0
  %v1210 = vsel %vm101, %v486, 0
  %v1212 = vsel %vm101, %v489, 0
  %v1214 = vsel %vm101, %v492, 0
  %v1216 = vsel %vm101, %v495, 0
  %v1218 = vsel %vm101, %v498, 0
  %v1220 = vsel %vm101, %v501, 0
  %v1222 = vsel %vm101, %v1191, 0
  %v1224 = vsel %vm101, %v1193, 0
  %v1226 = vsel %vm101, %v1195, 0
  %v1228 = vsel %vm101, %v1197, 0
  %v1230 = vsel %vm101, %v1199, 0
  %v1232 = vsel %vm101, %v1201, 0
  %v1234 = vsel %vm101, %v1203, 0
  %v1236 = vsel %vm101, %v1205, 0
  %1238 = vmatpush.xpose.msra.mxu0 0.0
  %1239 = vmatpush.xpose.msra.mxu0 0.0
  %1240 = vmatpush.xpose.msra.mxu0 0.0
  %1241 = vmatpush.xpose.msra.mxu0 0.0
  %1242 = vmatpush.xpose.msra.mxu0 0.0
  %1243 = vmatpush.xpose.msra.mxu0 0.0
  %1244 = vmatpush.xpose.msra.mxu0 0.0
  %1245 = vmatpush.xpose.msra.mxu0 0.0
  %1246 = vmatpush.xpose.msra.mxu0 %v1236
  %1247 = vmatpush.xpose.msra.mxu0 %v1234
  %1248 = vmatpush.xpose.msra.mxu0 %v1232
  %1249 = vmatpush.xpose.msra.mxu0 %v1230
  %1250 = vmatpush.xpose.msra.mxu0 %v1228
  %1251 = vmatpush.xpose.msra.mxu0 %v1226
  %1252 = vmatpush.xpose.msra.mxu0 %v1224
  %1253 = vmatpush.xpose.msra.mxu0 %v1222
  %1254 = vmatmul.f32.gmra.mxu0 %v1206
  %v1255 = vpop.f32.mrf.mxu0
  %v1256 = vadd.f32 0.0, %v1255
  %1257 = vmatmul.f32.gmra.mxu0 %v1208
  %v1258 = vpop.f32.mrf.mxu0
  %v1259 = vadd.f32 0.0, %v1258
  %1260 = vmatmul.f32.gmra.mxu0 %v1210
  %v1261 = vpop.f32.mrf.mxu0
  %v1262 = vadd.f32 0.0, %v1261
  %1263 = vmatmul.f32.gmra.mxu0 %v1212
  %v1264 = vpop.f32.mrf.mxu0
  %v1265 = vadd.f32 0.0, %v1264
  %1266 = vmatmul.f32.gmra.mxu0 %v1214
  %v1267 = vpop.f32.mrf.mxu0
  %v1268 = vadd.f32 0.0, %v1267
  %1269 = vmatmul.f32.gmra.mxu0 %v1216
  %v1270 = vpop.f32.mrf.mxu0
  %v1271 = vadd.f32 0.0, %v1270
  %1272 = vmatmul.f32.gmra.mxu0 %v1218
  %v1273 = vpop.f32.mrf.mxu0
  %v1274 = vadd.f32 0.0, %v1273
  %1275 = vmatmul.f32.gmra.mxu0 %v1220
  %v1276 = vpop.f32.mrf.mxu0
  %v1277 = vadd.f32 0.0, %v1276
  %1278 = vdwg.mxu0
  %vm1279 = vcmask 523264
  %v1280 = vsel %vm1279, %v577, -inf
  %1281 = vmax.xlane.f32.xlu0 %v1280
  %v1282 = vpop.xlane.xlu0 %1281
  %v1283 = vsel %vm1279, %v580, -inf
  %1284 = vmax.xlane.f32.xlu0 %v1283
  %v1285 = vpop.xlane.xlu0 %1284
  %v1286 = vsel %vm1279, %v583, -inf
  %1287 = vmax.xlane.f32.xlu0 %v1286
  %v1288 = vpop.xlane.xlu0 %1287
  %v1289 = vsel %vm1279, %v586, -inf
  %1290 = vmax.xlane.f32.xlu0 %v1289
  %v1291 = vpop.xlane.xlu0 %1290
  %v1292 = vsel %vm1279, %v589, -inf
  %1293 = vmax.xlane.f32.xlu0 %v1292
  %v1294 = vpop.xlane.xlu0 %1293
  %v1295 = vsel %vm1279, %v592, -inf
  %1296 = vmax.xlane.f32.xlu0 %v1295
  %v1297 = vpop.xlane.xlu0 %1296
  %v1298 = vsel %vm1279, %v595, -inf
  %1299 = vmax.xlane.f32.xlu0 %v1298
  %v1300 = vpop.xlane.xlu0 %1299
  %v1301 = vsel %vm1279, %v598, -inf
  %1302 = vmax.xlane.f32.xlu0 %v1301
  %v1303 = vpop.xlane.xlu0 %1302
  %v1304 = vsel %vm1279, %v674, -inf
  %1305 = vmax.xlane.f32.xlu0 %v1304
  %v1306 = vpop.xlane.xlu0 %1305
  %v1307 = vsel %vm1279, %v677, -inf
  %1308 = vmax.xlane.f32.xlu0 %v1307
  %v1309 = vpop.xlane.xlu0 %1308
  %v1310 = vsel %vm1279, %v680, -inf
  %1311 = vmax.xlane.f32.xlu0 %v1310
  %v1312 = vpop.xlane.xlu0 %1311
  %v1313 = vsel %vm1279, %v683, -inf
  %1314 = vmax.xlane.f32.xlu0 %v1313
  %v1315 = vpop.xlane.xlu0 %1314
  %v1316 = vsel %vm1279, %v686, -inf
  %1317 = vmax.xlane.f32.xlu0 %v1316
  %v1318 = vpop.xlane.xlu0 %1317
  %v1319 = vsel %vm1279, %v689, -inf
  %1320 = vmax.xlane.f32.xlu0 %v1319
  %v1321 = vpop.xlane.xlu0 %1320
  %v1322 = vsel %vm1279, %v692, -inf
  %1323 = vmax.xlane.f32.xlu0 %v1322
  %v1324 = vpop.xlane.xlu0 %1323
  %v1325 = vsel %vm1279, %v695, -inf
  %1326 = vmax.xlane.f32.xlu0 %v1325
  %v1327 = vpop.xlane.xlu0 %1326
  %v1328 = vsel %vm1279, %v771, -inf
  %1329 = vmax.xlane.f32.xlu0 %v1328
  %v1330 = vpop.xlane.xlu0 %1329
  %v1331 = vsel %vm1279, %v774, -inf
  %1332 = vmax.xlane.f32.xlu0 %v1331
  %v1333 = vpop.xlane.xlu0 %1332
  %v1334 = vsel %vm1279, %v777, -inf
  %1335 = vmax.xlane.f32.xlu0 %v1334
  %v1336 = vpop.xlane.xlu0 %1335
  %v1337 = vsel %vm1279, %v780, -inf
  %1338 = vmax.xlane.f32.xlu0 %v1337
  %v1339 = vpop.xlane.xlu0 %1338
  %v1340 = vsel %vm1279, %v783, -inf
  %1341 = vmax.xlane.f32.xlu0 %v1340
  %v1342 = vpop.xlane.xlu0 %1341
  %v1343 = vsel %vm1279, %v786, -inf
  %1344 = vmax.xlane.f32.xlu0 %v1343
  %v1345 = vpop.xlane.xlu0 %1344
  %v1346 = vsel %vm1279, %v789, -inf
  %1347 = vmax.xlane.f32.xlu0 %v1346
  %v1348 = vpop.xlane.xlu0 %1347
  %v1349 = vsel %vm1279, %v792, -inf
  %1350 = vmax.xlane.f32.xlu0 %v1349
  %v1351 = vpop.xlane.xlu0 %1350
  %v1352 = vsel %vm1279, %v868, -inf
  %1353 = vmax.xlane.f32.xlu0 %v1352
  %v1354 = vpop.xlane.xlu0 %1353
  %v1355 = vsel %vm1279, %v871, -inf
  %1356 = vmax.xlane.f32.xlu0 %v1355
  %v1357 = vpop.xlane.xlu0 %1356
  %v1358 = vsel %vm1279, %v874, -inf
  %1359 = vmax.xlane.f32.xlu0 %v1358
  %v1360 = vpop.xlane.xlu0 %1359
  %v1361 = vsel %vm1279, %v877, -inf
  %1362 = vmax.xlane.f32.xlu0 %v1361
  %v1363 = vpop.xlane.xlu0 %1362
  %v1364 = vsel %vm1279, %v880, -inf
  %1365 = vmax.xlane.f32.xlu0 %v1364
  %v1366 = vpop.xlane.xlu0 %1365
  %v1367 = vsel %vm1279, %v883, -inf
  %1368 = vmax.xlane.f32.xlu0 %v1367
  %v1369 = vpop.xlane.xlu0 %1368
  %v1370 = vsel %vm1279, %v886, -inf
  %1371 = vmax.xlane.f32.xlu0 %v1370
  %v1372 = vpop.xlane.xlu0 %1371
  %v1373 = vsel %vm1279, %v889, -inf
  %1374 = vmax.xlane.f32.xlu0 %v1373
  %v1375 = vpop.xlane.xlu0 %1374
  %v1376 = vsel %vm1279, %v965, -inf
  %1377 = vmax.xlane.f32.xlu0 %v1376
  %v1378 = vpop.xlane.xlu0 %1377
  %v1379 = vsel %vm1279, %v968, -inf
  %1380 = vmax.xlane.f32.xlu0 %v1379
  %v1381 = vpop.xlane.xlu0 %1380
  %v1382 = vsel %vm1279, %v971, -inf
  %1383 = vmax.xlane.f32.xlu0 %v1382
  %v1384 = vpop.xlane.xlu0 %1383
  %v1385 = vsel %vm1279, %v974, -inf
  %1386 = vmax.xlane.f32.xlu0 %v1385
  %v1387 = vpop.xlane.xlu0 %1386
  %v1388 = vsel %vm1279, %v977, -inf
  %1389 = vmax.xlane.f32.xlu0 %v1388
  %v1390 = vpop.xlane.xlu0 %1389
  %v1391 = vsel %vm1279, %v980, -inf
  %1392 = vmax.xlane.f32.xlu0 %v1391
  %v1393 = vpop.xlane.xlu0 %1392
  %v1394 = vsel %vm1279, %v983, -inf
  %1395 = vmax.xlane.f32.xlu0 %v1394
  %v1396 = vpop.xlane.xlu0 %1395
  %v1397 = vsel %vm1279, %v986, -inf
  %1398 = vmax.xlane.f32.xlu0 %v1397
  %v1399 = vpop.xlane.xlu0 %1398
  %v1400 = vsel %vm1279, %v1062, -inf
  %1401 = vmax.xlane.f32.xlu0 %v1400
  %v1402 = vpop.xlane.xlu0 %1401
  %v1403 = vsel %vm1279, %v1065, -inf
  %1404 = vmax.xlane.f32.xlu0 %v1403
  %v1405 = vpop.xlane.xlu0 %1404
  %v1406 = vsel %vm1279, %v1068, -inf
  %1407 = vmax.xlane.f32.xlu0 %v1406
  %v1408 = vpop.xlane.xlu0 %1407
  %v1409 = vsel %vm1279, %v1071, -inf
  %1410 = vmax.xlane.f32.xlu0 %v1409
  %v1411 = vpop.xlane.xlu0 %1410
  %v1412 = vsel %vm1279, %v1074, -inf
  %1413 = vmax.xlane.f32.xlu0 %v1412
  %v1414 = vpop.xlane.xlu0 %1413
  %v1415 = vsel %vm1279, %v1077, -inf
  %1416 = vmax.xlane.f32.xlu0 %v1415
  %v1417 = vpop.xlane.xlu0 %1416
  %v1418 = vsel %vm1279, %v1080, -inf
  %1419 = vmax.xlane.f32.xlu0 %v1418
  %v1420 = vpop.xlane.xlu0 %1419
  %v1421 = vsel %vm1279, %v1083, -inf
  %1422 = vmax.xlane.f32.xlu0 %v1421
  %v1423 = vpop.xlane.xlu0 %1422
  %v1424 = vsel %vm1279, %v1159, -inf
  %1425 = vmax.xlane.f32.xlu0 %v1424
  %v1426 = vpop.xlane.xlu0 %1425
  %v1427 = vsel %vm1279, %v1162, -inf
  %1428 = vmax.xlane.f32.xlu0 %v1427
  %v1429 = vpop.xlane.xlu0 %1428
  %v1430 = vsel %vm1279, %v1165, -inf
  %1431 = vmax.xlane.f32.xlu0 %v1430
  %v1432 = vpop.xlane.xlu0 %1431
  %v1433 = vsel %vm1279, %v1168, -inf
  %1434 = vmax.xlane.f32.xlu0 %v1433
  %v1435 = vpop.xlane.xlu0 %1434
  %v1436 = vsel %vm1279, %v1171, -inf
  %1437 = vmax.xlane.f32.xlu0 %v1436
  %v1438 = vpop.xlane.xlu0 %1437
  %v1439 = vsel %vm1279, %v1174, -inf
  %1440 = vmax.xlane.f32.xlu0 %v1439
  %v1441 = vpop.xlane.xlu0 %1440
  %v1442 = vsel %vm1279, %v1177, -inf
  %1443 = vmax.xlane.f32.xlu0 %v1442
  %v1444 = vpop.xlane.xlu0 %1443
  %v1445 = vsel %vm1279, %v1180, -inf
  %1446 = vmax.xlane.f32.xlu0 %v1445
  %v1447 = vpop.xlane.xlu0 %1446
  %v1448 = vsel %vm1279, %v1256, -inf
  %1449 = vmax.xlane.f32.xlu0 %v1448
  %v1450 = vpop.xlane.xlu0 %1449
  %v1451 = vsel %vm1279, %v1259, -inf
  %1452 = vmax.xlane.f32.xlu0 %v1451
  %v1453 = vpop.xlane.xlu0 %1452
  %v1454 = vsel %vm1279, %v1262, -inf
  %1455 = vmax.xlane.f32.xlu0 %v1454
  %v1456 = vpop.xlane.xlu0 %1455
  %v1457 = vsel %vm1279, %v1265, -inf
  %1458 = vmax.xlane.f32.xlu0 %v1457
  %v1459 = vpop.xlane.xlu0 %1458
  %v1460 = vsel %vm1279, %v1268, -inf
  %1461 = vmax.xlane.f32.xlu0 %v1460
  %v1462 = vpop.xlane.xlu0 %1461
  %v1463 = vsel %vm1279, %v1271, -inf
  %1464 = vmax.xlane.f32.xlu0 %v1463
  %v1465 = vpop.xlane.xlu0 %1464
  %v1466 = vsel %vm1279, %v1274, -inf
  %1467 = vmax.xlane.f32.xlu0 %v1466
  %v1468 = vpop.xlane.xlu0 %1467
  %v1469 = vsel %vm1279, %v1277, -inf
  %1470 = vmax.xlane.f32.xlu0 %v1469
  %v1471 = vpop.xlane.xlu0 %1470
  %v1472 = vsub.f32 %v577, %v1282
  %v1473 = vsub.f32 %v580, %v1285
  %v1474 = vsub.f32 %v583, %v1288
  %v1475 = vsub.f32 %v586, %v1291
  %v1476 = vsub.f32 %v589, %v1294
  %v1477 = vsub.f32 %v592, %v1297
  %v1478 = vsub.f32 %v595, %v1300
  %v1479 = vsub.f32 %v598, %v1303
  %v1480 = vsub.f32 %v674, %v1306
  %v1481 = vsub.f32 %v677, %v1309
  %v1482 = vsub.f32 %v680, %v1312
  %v1483 = vsub.f32 %v683, %v1315
  %v1484 = vsub.f32 %v686, %v1318
  %v1485 = vsub.f32 %v689, %v1321
  %v1486 = vsub.f32 %v692, %v1324
  %v1487 = vsub.f32 %v695, %v1327
  %v1488 = vsub.f32 %v771, %v1330
  %v1489 = vsub.f32 %v774, %v1333
  %v1490 = vsub.f32 %v777, %v1336
  %v1491 = vsub.f32 %v780, %v1339
  %v1492 = vsub.f32 %v783, %v1342
  %v1493 = vsub.f32 %v786, %v1345
  %v1494 = vsub.f32 %v789, %v1348
  %v1495 = vsub.f32 %v792, %v1351
  %v1496 = vsub.f32 %v868, %v1354
  %v1497 = vsub.f32 %v871, %v1357
  %v1498 = vsub.f32 %v874, %v1360
  %v1499 = vsub.f32 %v877, %v1363
  %v1500 = vsub.f32 %v880, %v1366
  %v1501 = vsub.f32 %v883, %v1369
  %v1502 = vsub.f32 %v886, %v1372
  %v1503 = vsub.f32 %v889, %v1375
  %v1504 = vsub.f32 %v965, %v1378
  %v1505 = vsub.f32 %v968, %v1381
  %v1506 = vsub.f32 %v971, %v1384
  %v1507 = vsub.f32 %v974, %v1387
  %v1508 = vsub.f32 %v977, %v1390
  %v1509 = vsub.f32 %v980, %v1393
  %v1510 = vsub.f32 %v983, %v1396
  %v1511 = vsub.f32 %v986, %v1399
  %v1512 = vsub.f32 %v1062, %v1402
  %v1513 = vsub.f32 %v1065, %v1405
  %v1514 = vsub.f32 %v1068, %v1408
  %v1515 = vsub.f32 %v1071, %v1411
  %v1516 = vsub.f32 %v1074, %v1414
  %v1517 = vsub.f32 %v1077, %v1417
  %v1518 = vsub.f32 %v1080, %v1420
  %v1519 = vsub.f32 %v1083, %v1423
  %v1520 = vsub.f32 %v1159, %v1426
  %v1521 = vsub.f32 %v1162, %v1429
  %v1522 = vsub.f32 %v1165, %v1432
  %v1523 = vsub.f32 %v1168, %v1435
  %v1524 = vsub.f32 %v1171, %v1438
  %v1525 = vsub.f32 %v1174, %v1441
  %v1526 = vsub.f32 %v1177, %v1444
  %v1527 = vsub.f32 %v1180, %v1447
  %v1528 = vsub.f32 %v1256, %v1450
  %v1529 = vsub.f32 %v1259, %v1453
  %v1530 = vsub.f32 %v1262, %v1456
  %v1531 = vsub.f32 %v1265, %v1459
  %v1532 = vsub.f32 %v1268, %v1462
  %v1533 = vsub.f32 %v1271, %v1465
  %v1534 = vsub.f32 %v1274, %v1468
  %v1535 = vsub.f32 %v1277, %v1471
  %v1536 = vmul.f32 %v1472, 1.442695
  %v1537 = vpow.pop %v1536
  %v1538 = vmul.f32 %v1473, 1.442695
  %v1539 = vpow.pop %v1538
  %v1540 = vmul.f32 %v1474, 1.442695
  %v1541 = vpow.pop %v1540
  %v1542 = vmul.f32 %v1475, 1.442695
  %v1543 = vpow.pop %v1542
  %v1544 = vmul.f32 %v1476, 1.442695
  %v1545 = vpow.pop %v1544
  %v1546 = vmul.f32 %v1477, 1.442695
  %v1547 = vpow.pop %v1546
  %v1548 = vmul.f32 %v1478, 1.442695
  %v1549 = vpow.pop %v1548
  %v1550 = vmul.f32 %v1479, 1.442695
  %v1551 = vpow.pop %v1550
  %v1552 = vmul.f32 %v1480, 1.442695
  %v1553 = vpow.pop %v1552
  %v1554 = vmul.f32 %v1481, 1.442695
  %v1555 = vpow.pop %v1554
  %v1556 = vmul.f32 %v1482, 1.442695
  %v1557 = vpow.pop %v1556
  %v1558 = vmul.f32 %v1483, 1.442695
  %v1559 = vpow.pop %v1558
  %v1560 = vmul.f32 %v1484, 1.442695
  %v1561 = vpow.pop %v1560
  %v1562 = vmul.f32 %v1485, 1.442695
  %v1563 = vpow.pop %v1562
  %v1564 = vmul.f32 %v1486, 1.442695
  %v1565 = vpow.pop %v1564
  %v1566 = vmul.f32 %v1487, 1.442695
  %v1567 = vpow.pop %v1566
  %v1568 = vmul.f32 %v1488, 1.442695
  %v1569 = vpow.pop %v1568
  %v1570 = vmul.f32 %v1489, 1.442695
  %v1571 = vpow.pop %v1570
  %v1572 = vmul.f32 %v1490, 1.442695
  %v1573 = vpow.pop %v1572
  %v1574 = vmul.f32 %v1491, 1.442695
  %v1575 = vpow.pop %v1574
  %v1576 = vmul.f32 %v1492, 1.442695
  %v1577 = vpow.pop %v1576
  %v1578 = vmul.f32 %v1493, 1.442695
  %v1579 = vpow.pop %v1578
  %v1580 = vmul.f32 %v1494, 1.442695
  %v1581 = vpow.pop %v1580
  %v1582 = vmul.f32 %v1495, 1.442695
  %v1583 = vpow.pop %v1582
  %v1584 = vmul.f32 %v1496, 1.442695
  %v1585 = vpow.pop %v1584
  %v1586 = vmul.f32 %v1497, 1.442695
  %v1587 = vpow.pop %v1586
  %v1588 = vmul.f32 %v1498, 1.442695
  %v1589 = vpow.pop %v1588
  %v1590 = vmul.f32 %v1499, 1.442695
  %v1591 = vpow.pop %v1590
  %v1592 = vmul.f32 %v1500, 1.442695
  %v1593 = vpow.pop %v1592
  %v1594 = vmul.f32 %v1501, 1.442695
  %v1595 = vpow.pop %v1594
  %v1596 = vmul.f32 %v1502, 1.442695
  %v1597 = vpow.pop %v1596
  %v1598 = vmul.f32 %v1503, 1.442695
  %v1599 = vpow.pop %v1598
  %v1600 = vmul.f32 %v1504, 1.442695
  %v1601 = vpow.pop %v1600
  %v1602 = vmul.f32 %v1505, 1.442695
  %v1603 = vpow.pop %v1602
  %v1604 = vmul.f32 %v1506, 1.442695
  %v1605 = vpow.pop %v1604
  %v1606 = vmul.f32 %v1507, 1.442695
  %v1607 = vpow.pop %v1606
  %v1608 = vmul.f32 %v1508, 1.442695
  %v1609 = vpow.pop %v1608
  %v1610 = vmul.f32 %v1509, 1.442695
  %v1611 = vpow.pop %v1610
  %v1612 = vmul.f32 %v1510, 1.442695
  %v1613 = vpow.pop %v1612
  %v1614 = vmul.f32 %v1511, 1.442695
  %v1615 = vpow.pop %v1614
  %v1616 = vmul.f32 %v1512, 1.442695
  %v1617 = vpow.pop %v1616
  %v1618 = vmul.f32 %v1513, 1.442695
  %v1619 = vpow.pop %v1618
  %v1620 = vmul.f32 %v1514, 1.442695
  %v1621 = vpow.pop %v1620
  %v1622 = vmul.f32 %v1515, 1.442695
  %v1623 = vpow.pop %v1622
  %v1624 = vmul.f32 %v1516, 1.442695
  %v1625 = vpow.pop %v1624
  %v1626 = vmul.f32 %v1517, 1.442695
  %v1627 = vpow.pop %v1626
  %v1628 = vmul.f32 %v1518, 1.442695
  %v1629 = vpow.pop %v1628
  %v1630 = vmul.f32 %v1519, 1.442695
  %v1631 = vpow.pop %v1630
  %v1632 = vmul.f32 %v1520, 1.442695
  %v1633 = vpow.pop %v1632
  %v1634 = vmul.f32 %v1521, 1.442695
  %v1635 = vpow.pop %v1634
  %v1636 = vmul.f32 %v1522, 1.442695
  %v1637 = vpow.pop %v1636
  %v1638 = vmul.f32 %v1523, 1.442695
  %v1639 = vpow.pop %v1638
  %v1640 = vmul.f32 %v1524, 1.442695
  %v1641 = vpow.pop %v1640
  %v1642 = vmul.f32 %v1525, 1.442695
  %v1643 = vpow.pop %v1642
  %v1644 = vmul.f32 %v1526, 1.442695
  %v1645 = vpow.pop %v1644
  %v1646 = vmul.f32 %v1527, 1.442695
  %v1647 = vpow.pop %v1646
  %v1648 = vmul.f32 %v1528, 1.442695
  %v1649 = vpow.pop %v1648
  %v1650 = vmul.f32 %v1529, 1.442695
  %v1651 = vpow.pop %v1650
  %v1652 = vmul.f32 %v1530, 1.442695
  %v1653 = vpow.pop %v1652
  %v1654 = vmul.f32 %v1531, 1.442695
  %v1655 = vpow.pop %v1654
  %v1656 = vmul.f32 %v1532, 1.442695
  %v1657 = vpow.pop %v1656
  %v1658 = vmul.f32 %v1533, 1.442695
  %v1659 = vpow.pop %v1658
  %v1660 = vmul.f32 %v1534, 1.442695
  %v1661 = vpow.pop %v1660
  %v1662 = vmul.f32 %v1535, 1.442695
  %v1663 = vpow.pop %v1662
  %v1664 = vsel %vm1279, %v1537, 0.0
  %1665 = vadd.xlane.f32.xlu0 %v1664
  %v1666 = vpop.xlane.xlu0 %1665
  %v1667 = vsel %vm1279, %v1539, 0.0
  %1668 = vadd.xlane.f32.xlu0 %v1667
  %v1669 = vpop.xlane.xlu0 %1668
  %v1670 = vsel %vm1279, %v1541, 0.0
  %1671 = vadd.xlane.f32.xlu0 %v1670
  %v1672 = vpop.xlane.xlu0 %1671
  %v1673 = vsel %vm1279, %v1543, 0.0
  %1674 = vadd.xlane.f32.xlu0 %v1673
  %v1675 = vpop.xlane.xlu0 %1674
  %v1676 = vsel %vm1279, %v1545, 0.0
  %1677 = vadd.xlane.f32.xlu0 %v1676
  %v1678 = vpop.xlane.xlu0 %1677
  %v1679 = vsel %vm1279, %v1547, 0.0
  %1680 = vadd.xlane.f32.xlu0 %v1679
  %v1681 = vpop.xlane.xlu0 %1680
  %v1682 = vsel %vm1279, %v1549, 0.0
  %1683 = vadd.xlane.f32.xlu0 %v1682
  %v1684 = vpop.xlane.xlu0 %1683
  %v1685 = vsel %vm1279, %v1551, 0.0
  %1686 = vadd.xlane.f32.xlu0 %v1685
  %v1687 = vpop.xlane.xlu0 %1686
  %v1688 = vsel %vm1279, %v1553, 0.0
  %1689 = vadd.xlane.f32.xlu0 %v1688
  %v1690 = vpop.xlane.xlu0 %1689
  %v1691 = vsel %vm1279, %v1555, 0.0
  %1692 = vadd.xlane.f32.xlu0 %v1691
  %v1693 = vpop.xlane.xlu0 %1692
  %v1694 = vsel %vm1279, %v1557, 0.0
  %1695 = vadd.xlane.f32.xlu0 %v1694
  %v1696 = vpop.xlane.xlu0 %1695
  %v1697 = vsel %vm1279, %v1559, 0.0
  %1698 = vadd.xlane.f32.xlu0 %v1697
  %v1699 = vpop.xlane.xlu0 %1698
  %v1700 = vsel %vm1279, %v1561, 0.0
  %1701 = vadd.xlane.f32.xlu0 %v1700
  %v1702 = vpop.xlane.xlu0 %1701
  %v1703 = vsel %vm1279, %v1563, 0.0
  %1704 = vadd.xlane.f32.xlu0 %v1703
  %v1705 = vpop.xlane.xlu0 %1704
  %v1706 = vsel %vm1279, %v1565, 0.0
  %1707 = vadd.xlane.f32.xlu0 %v1706
  %v1708 = vpop.xlane.xlu0 %1707
  %v1709 = vsel %vm1279, %v1567, 0.0
  %1710 = vadd.xlane.f32.xlu0 %v1709
  %v1711 = vpop.xlane.xlu0 %1710
  %v1712 = vsel %vm1279, %v1569, 0.0
  %1713 = vadd.xlane.f32.xlu0 %v1712
  %v1714 = vpop.xlane.xlu0 %1713
  %v1715 = vsel %vm1279, %v1571, 0.0
  %1716 = vadd.xlane.f32.xlu0 %v1715
  %v1717 = vpop.xlane.xlu0 %1716
  %v1718 = vsel %vm1279, %v1573, 0.0
  %1719 = vadd.xlane.f32.xlu0 %v1718
  %v1720 = vpop.xlane.xlu0 %1719
  %v1721 = vsel %vm1279, %v1575, 0.0
  %1722 = vadd.xlane.f32.xlu0 %v1721
  %v1723 = vpop.xlane.xlu0 %1722
  %v1724 = vsel %vm1279, %v1577, 0.0
  %1725 = vadd.xlane.f32.xlu0 %v1724
  %v1726 = vpop.xlane.xlu0 %1725
  %v1727 = vsel %vm1279, %v1579, 0.0
  %1728 = vadd.xlane.f32.xlu0 %v1727
  %v1729 = vpop.xlane.xlu0 %1728
  %v1730 = vsel %vm1279, %v1581, 0.0
  %1731 = vadd.xlane.f32.xlu0 %v1730
  %v1732 = vpop.xlane.xlu0 %1731
  %v1733 = vsel %vm1279, %v1583, 0.0
  %1734 = vadd.xlane.f32.xlu0 %v1733
  %v1735 = vpop.xlane.xlu0 %1734
  %v1736 = vsel %vm1279, %v1585, 0.0
  %1737 = vadd.xlane.f32.xlu0 %v1736
  %v1738 = vpop.xlane.xlu0 %1737
  %v1739 = vsel %vm1279, %v1587, 0.0
  %1740 = vadd.xlane.f32.xlu0 %v1739
  %v1741 = vpop.xlane.xlu0 %1740
  %v1742 = vsel %vm1279, %v1589, 0.0
  %1743 = vadd.xlane.f32.xlu0 %v1742
  %v1744 = vpop.xlane.xlu0 %1743
  %v1745 = vsel %vm1279, %v1591, 0.0
  %1746 = vadd.xlane.f32.xlu0 %v1745
  %v1747 = vpop.xlane.xlu0 %1746
  %v1748 = vsel %vm1279, %v1593, 0.0
  %1749 = vadd.xlane.f32.xlu0 %v1748
  %v1750 = vpop.xlane.xlu0 %1749
  %v1751 = vsel %vm1279, %v1595, 0.0
  %1752 = vadd.xlane.f32.xlu0 %v1751
  %v1753 = vpop.xlane.xlu0 %1752
  %v1754 = vsel %vm1279, %v1597, 0.0
  %1755 = vadd.xlane.f32.xlu0 %v1754
  %v1756 = vpop.xlane.xlu0 %1755
  %v1757 = vsel %vm1279, %v1599, 0.0
  %1758 = vadd.xlane.f32.xlu0 %v1757
  %v1759 = vpop.xlane.xlu0 %1758
  %v1760 = vsel %vm1279, %v1601, 0.0
  %1761 = vadd.xlane.f32.xlu0 %v1760
  %v1762 = vpop.xlane.xlu0 %1761
  %v1763 = vsel %vm1279, %v1603, 0.0
  %1764 = vadd.xlane.f32.xlu0 %v1763
  %v1765 = vpop.xlane.xlu0 %1764
  %v1766 = vsel %vm1279, %v1605, 0.0
  %1767 = vadd.xlane.f32.xlu0 %v1766
  %v1768 = vpop.xlane.xlu0 %1767
  %v1769 = vsel %vm1279, %v1607, 0.0
  %1770 = vadd.xlane.f32.xlu0 %v1769
  %v1771 = vpop.xlane.xlu0 %1770
  %v1772 = vsel %vm1279, %v1609, 0.0
  %1773 = vadd.xlane.f32.xlu0 %v1772
  %v1774 = vpop.xlane.xlu0 %1773
  %v1775 = vsel %vm1279, %v1611, 0.0
  %1776 = vadd.xlane.f32.xlu0 %v1775
  %v1777 = vpop.xlane.xlu0 %1776
  %v1778 = vsel %vm1279, %v1613, 0.0
  %1779 = vadd.xlane.f32.xlu0 %v1778
  %v1780 = vpop.xlane.xlu0 %1779
  %v1781 = vsel %vm1279, %v1615, 0.0
  %1782 = vadd.xlane.f32.xlu0 %v1781
  %v1783 = vpop.xlane.xlu0 %1782
  %v1784 = vsel %vm1279, %v1617, 0.0
  %1785 = vadd.xlane.f32.xlu0 %v1784
  %v1786 = vpop.xlane.xlu0 %1785
  %v1787 = vsel %vm1279, %v1619, 0.0
  %1788 = vadd.xlane.f32.xlu0 %v1787
  %v1789 = vpop.xlane.xlu0 %1788
  %v1790 = vsel %vm1279, %v1621, 0.0
  %1791 = vadd.xlane.f32.xlu0 %v1790
  %v1792 = vpop.xlane.xlu0 %1791
  %v1793 = vsel %vm1279, %v1623, 0.0
  %1794 = vadd.xlane.f32.xlu0 %v1793
  %v1795 = vpop.xlane.xlu0 %1794
  %v1796 = vsel %vm1279, %v1625, 0.0
  %1797 = vadd.xlane.f32.xlu0 %v1796
  %v1798 = vpop.xlane.xlu0 %1797
  %v1799 = vsel %vm1279, %v1627, 0.0
  %1800 = vadd.xlane.f32.xlu0 %v1799
  %v1801 = vpop.xlane.xlu0 %1800
  %v1802 = vsel %vm1279, %v1629, 0.0
  %1803 = vadd.xlane.f32.xlu0 %v1802
  %v1804 = vpop.xlane.xlu0 %1803
  %v1805 = vsel %vm1279, %v1631, 0.0
  %1806 = vadd.xlane.f32.xlu0 %v1805
  %v1807 = vpop.xlane.xlu0 %1806
  %v1808 = vsel %vm1279, %v1633, 0.0
  %1809 = vadd.xlane.f32.xlu0 %v1808
  %v1810 = vpop.xlane.xlu0 %1809
  %v1811 = vsel %vm1279, %v1635, 0.0
  %1812 = vadd.xlane.f32.xlu0 %v1811
  %v1813 = vpop.xlane.xlu0 %1812
  %v1814 = vsel %vm1279, %v1637, 0.0
  %1815 = vadd.xlane.f32.xlu0 %v1814
  %v1816 = vpop.xlane.xlu0 %1815
  %v1817 = vsel %vm1279, %v1639, 0.0
  %1818 = vadd.xlane.f32.xlu0 %v1817
  %v1819 = vpop.xlane.xlu0 %1818
  %v1820 = vsel %vm1279, %v1641, 0.0
  %1821 = vadd.xlane.f32.xlu0 %v1820
  %v1822 = vpop.xlane.xlu0 %1821
  %v1823 = vsel %vm1279, %v1643, 0.0
  %1824 = vadd.xlane.f32.xlu0 %v1823
  %v1825 = vpop.xlane.xlu0 %1824
  %v1826 = vsel %vm1279, %v1645, 0.0
  %1827 = vadd.xlane.f32.xlu0 %v1826
  %v1828 = vpop.xlane.xlu0 %1827
  %v1829 = vsel %vm1279, %v1647, 0.0
  %1830 = vadd.xlane.f32.xlu0 %v1829
  %v1831 = vpop.xlane.xlu0 %1830
  %v1832 = vsel %vm1279, %v1649, 0.0
  %1833 = vadd.xlane.f32.xlu0 %v1832
  %v1834 = vpop.xlane.xlu0 %1833
  %v1835 = vsel %vm1279, %v1651, 0.0
  %1836 = vadd.xlane.f32.xlu0 %v1835
  %v1837 = vpop.xlane.xlu0 %1836
  %v1838 = vsel %vm1279, %v1653, 0.0
  %1839 = vadd.xlane.f32.xlu0 %v1838
  %v1840 = vpop.xlane.xlu0 %1839
  %v1841 = vsel %vm1279, %v1655, 0.0
  %1842 = vadd.xlane.f32.xlu0 %v1841
  %v1843 = vpop.xlane.xlu0 %1842
  %v1844 = vsel %vm1279, %v1657, 0.0
  %1845 = vadd.xlane.f32.xlu0 %v1844
  %v1846 = vpop.xlane.xlu0 %1845
  %v1847 = vsel %vm1279, %v1659, 0.0
  %1848 = vadd.xlane.f32.xlu0 %v1847
  %v1849 = vpop.xlane.xlu0 %1848
  %v1850 = vsel %vm1279, %v1661, 0.0
  %1851 = vadd.xlane.f32.xlu0 %v1850
  %v1852 = vpop.xlane.xlu0 %1851
  %v1853 = vsel %vm1279, %v1663, 0.0
  %1854 = vadd.xlane.f32.xlu0 %v1853
  %v1855 = vpop.xlane.xlu0 %1854
  %1856 = vrot.lane.b32.xlu0 %v312, 64
  %v1857 = vpop.permute.xlu0 %1856
  %1858 = vrot.lane.b32.xlu0 %v315, 64
  %v1859 = vpop.permute.xlu0 %1858
  %1860 = vrot.lane.b32.xlu0 %v318, 64
  %v1861 = vpop.permute.xlu0 %1860
  %1862 = vrot.lane.b32.xlu0 %v321, 64
  %v1863 = vpop.permute.xlu0 %1862
  %1864 = vrot.lane.b32.xlu0 %v324, 64
  %v1865 = vpop.permute.xlu0 %1864
  %1866 = vrot.lane.b32.xlu0 %v327, 64
  %v1867 = vpop.permute.xlu0 %1866
  %1868 = vrot.lane.b32.xlu0 %v330, 64
  %v1869 = vpop.permute.xlu0 %1868
  %1870 = vrot.lane.b32.xlu0 %v333, 64
  %v1871 = vpop.permute.xlu0 %1870
  %v1881 = vsel %vm1279, %v1537, 0
  %v1884 = vsel %vm1279, %v1539, 0
  %v1887 = vsel %vm1279, %v1541, 0
  %v1890 = vsel %vm1279, %v1543, 0
  %v1893 = vsel %vm1279, %v1545, 0
  %v1896 = vsel %vm1279, %v1547, 0
  %v1899 = vsel %vm1279, %v1549, 0
  %v1902 = vsel %vm1279, %v1551, 0
  %1904 = vmatpush.msra.mxu0 0.0
  %1905 = vmatpush.msra.mxu0 0.0
  %1906 = vmatpush.msra.mxu0 0.0
  %1907 = vmatpush.msra.mxu0 0.0
  %1908 = vmatpush.msra.mxu0 0.0
  %1909 = vmatpush.msra.mxu0 0.0
  %1910 = vmatpush.msra.mxu0 0.0
  %1911 = vmatpush.msra.mxu0 0.0
  %1912 = vmatpush.msra.mxu0 %v1871
  %1913 = vmatpush.msra.mxu0 %v1869
  %1914 = vmatpush.msra.mxu0 %v1867
  %1915 = vmatpush.msra.mxu0 %v1865
  %1916 = vmatpush.msra.mxu0 %v1863
  %1917 = vmatpush.msra.mxu0 %v1861
  %1918 = vmatpush.msra.mxu0 %v1859
  %1919 = vmatpush.msra.mxu0 %v1857
  %1920 = vmatmul.f32.gmra.mxu0 %v1881
  %v1921 = vpop.f32.mrf.mxu0
  %v1922 = vadd.f32 0.0, %v1921
  %1923 = vmatmul.f32.gmra.mxu0 %v1884
  %v1924 = vpop.f32.mrf.mxu0
  %v1925 = vadd.f32 0.0, %v1924
  %1926 = vmatmul.f32.gmra.mxu0 %v1887
  %v1927 = vpop.f32.mrf.mxu0
  %v1928 = vadd.f32 0.0, %v1927
  %1929 = vmatmul.f32.gmra.mxu0 %v1890
  %v1930 = vpop.f32.mrf.mxu0
  %v1931 = vadd.f32 0.0, %v1930
  %1932 = vmatmul.f32.gmra.mxu0 %v1893
  %v1933 = vpop.f32.mrf.mxu0
  %v1934 = vadd.f32 0.0, %v1933
  %1935 = vmatmul.f32.gmra.mxu0 %v1896
  %v1936 = vpop.f32.mrf.mxu0
  %v1937 = vadd.f32 0.0, %v1936
  %1938 = vmatmul.f32.gmra.mxu0 %v1899
  %v1939 = vpop.f32.mrf.mxu0
  %v1940 = vadd.f32 0.0, %v1939
  %1941 = vmatmul.f32.gmra.mxu0 %v1902
  %v1942 = vpop.f32.mrf.mxu0
  %v1943 = vadd.f32 0.0, %v1942
  %1944 = vdwg.mxu0
  %1945 = vrot.lane.b32.xlu0 %v336, 64
  %v1946 = vpop.permute.xlu0 %1945
  %1947 = vrot.lane.b32.xlu0 %v339, 64
  %v1948 = vpop.permute.xlu0 %1947
  %1949 = vrot.lane.b32.xlu0 %v342, 64
  %v1950 = vpop.permute.xlu0 %1949
  %1951 = vrot.lane.b32.xlu0 %v345, 64
  %v1952 = vpop.permute.xlu0 %1951
  %1953 = vrot.lane.b32.xlu0 %v348, 64
  %v1954 = vpop.permute.xlu0 %1953
  %1955 = vrot.lane.b32.xlu0 %v351, 64
  %v1956 = vpop.permute.xlu0 %1955
  %1957 = vrot.lane.b32.xlu0 %v354, 64
  %v1958 = vpop.permute.xlu0 %1957
  %1959 = vrot.lane.b32.xlu0 %v357, 64
  %v1960 = vpop.permute.xlu0 %1959
  %v1970 = vsel %vm1279, %v1553, 0
  %v1973 = vsel %vm1279, %v1555, 0
  %v1976 = vsel %vm1279, %v1557, 0
  %v1979 = vsel %vm1279, %v1559, 0
  %v1982 = vsel %vm1279, %v1561, 0
  %v1985 = vsel %vm1279, %v1563, 0
  %v1988 = vsel %vm1279, %v1565, 0
  %v1991 = vsel %vm1279, %v1567, 0
  %1993 = vmatpush.msra.mxu0 0.0
  %1994 = vmatpush.msra.mxu0 0.0
  %1995 = vmatpush.msra.mxu0 0.0
  %1996 = vmatpush.msra.mxu0 0.0
  %1997 = vmatpush.msra.mxu0 0.0
  %1998 = vmatpush.msra.mxu0 0.0
  %1999 = vmatpush.msra.mxu0 0.0
  %2000 = vmatpush.msra.mxu0 0.0
  %2001 = vmatpush.msra.mxu0 %v1960
  %2002 = vmatpush.msra.mxu0 %v1958
  %2003 = vmatpush.msra.mxu0 %v1956
  %2004 = vmatpush.msra.mxu0 %v1954
  %2005 = vmatpush.msra.mxu0 %v1952
  %2006 = vmatpush.msra.mxu0 %v1950
  %2007 = vmatpush.msra.mxu0 %v1948
  %2008 = vmatpush.msra.mxu0 %v1946
  %2009 = vmatmul.f32.gmra.mxu0 %v1970
  %v2010 = vpop.f32.mrf.mxu0
  %v2011 = vadd.f32 0.0, %v2010
  %2012 = vmatmul.f32.gmra.mxu0 %v1973
  %v2013 = vpop.f32.mrf.mxu0
  %v2014 = vadd.f32 0.0, %v2013
  %2015 = vmatmul.f32.gmra.mxu0 %v1976
  %v2016 = vpop.f32.mrf.mxu0
  %v2017 = vadd.f32 0.0, %v2016
  %2018 = vmatmul.f32.gmra.mxu0 %v1979
  %v2019 = vpop.f32.mrf.mxu0
  %v2020 = vadd.f32 0.0, %v2019
  %2021 = vmatmul.f32.gmra.mxu0 %v1982
  %v2022 = vpop.f32.mrf.mxu0
  %v2023 = vadd.f32 0.0, %v2022
  %2024 = vmatmul.f32.gmra.mxu0 %v1985
  %v2025 = vpop.f32.mrf.mxu0
  %v2026 = vadd.f32 0.0, %v2025
  %2027 = vmatmul.f32.gmra.mxu0 %v1988
  %v2028 = vpop.f32.mrf.mxu0
  %v2029 = vadd.f32 0.0, %v2028
  %2030 = vmatmul.f32.gmra.mxu0 %v1991
  %v2031 = vpop.f32.mrf.mxu0
  %v2032 = vadd.f32 0.0, %v2031
  %2033 = vdwg.mxu0
  %2034 = vrot.lane.b32.xlu0 %v360, 64
  %v2035 = vpop.permute.xlu0 %2034
  %2036 = vrot.lane.b32.xlu0 %v363, 64
  %v2037 = vpop.permute.xlu0 %2036
  %2038 = vrot.lane.b32.xlu0 %v366, 64
  %v2039 = vpop.permute.xlu0 %2038
  %2040 = vrot.lane.b32.xlu0 %v369, 64
  %v2041 = vpop.permute.xlu0 %2040
  %2042 = vrot.lane.b32.xlu0 %v372, 64
  %v2043 = vpop.permute.xlu0 %2042
  %2044 = vrot.lane.b32.xlu0 %v375, 64
  %v2045 = vpop.permute.xlu0 %2044
  %2046 = vrot.lane.b32.xlu0 %v378, 64
  %v2047 = vpop.permute.xlu0 %2046
  %2048 = vrot.lane.b32.xlu0 %v381, 64
  %v2049 = vpop.permute.xlu0 %2048
  %v2059 = vsel %vm1279, %v1569, 0
  %v2062 = vsel %vm1279, %v1571, 0
  %v2065 = vsel %vm1279, %v1573, 0
  %v2068 = vsel %vm1279, %v1575, 0
  %v2071 = vsel %vm1279, %v1577, 0
  %v2074 = vsel %vm1279, %v1579, 0
  %v2077 = vsel %vm1279, %v1581, 0
  %v2080 = vsel %vm1279, %v1583, 0
  %2082 = vmatpush.msra.mxu0 0.0
  %2083 = vmatpush.msra.mxu0 0.0
  %2084 = vmatpush.msra.mxu0 0.0
  %2085 = vmatpush.msra.mxu0 0.0
  %2086 = vmatpush.msra.mxu0 0.0
  %2087 = vmatpush.msra.mxu0 0.0
  %2088 = vmatpush.msra.mxu0 0.0
  %2089 = vmatpush.msra.mxu0 0.0
  %2090 = vmatpush.msra.mxu0 %v2049
  %2091 = vmatpush.msra.mxu0 %v2047
  %2092 = vmatpush.msra.mxu0 %v2045
  %2093 = vmatpush.msra.mxu0 %v2043
  %2094 = vmatpush.msra.mxu0 %v2041
  %2095 = vmatpush.msra.mxu0 %v2039
  %2096 = vmatpush.msra.mxu0 %v2037
  %2097 = vmatpush.msra.mxu0 %v2035
  %2098 = vmatmul.f32.gmra.mxu0 %v2059
  %v2099 = vpop.f32.mrf.mxu0
  %v2100 = vadd.f32 0.0, %v2099
  %2101 = vmatmul.f32.gmra.mxu0 %v2062
  %v2102 = vpop.f32.mrf.mxu0
  %v2103 = vadd.f32 0.0, %v2102
  %2104 = vmatmul.f32.gmra.mxu0 %v2065
  %v2105 = vpop.f32.mrf.mxu0
  %v2106 = vadd.f32 0.0, %v2105
  %2107 = vmatmul.f32.gmra.mxu0 %v2068
  %v2108 = vpop.f32.mrf.mxu0
  %v2109 = vadd.f32 0.0, %v2108
  %2110 = vmatmul.f32.gmra.mxu0 %v2071
  %v2111 = vpop.f32.mrf.mxu0
  %v2112 = vadd.f32 0.0, %v2111
  %2113 = vmatmul.f32.gmra.mxu0 %v2074
  %v2114 = vpop.f32.mrf.mxu0
  %v2115 = vadd.f32 0.0, %v2114
  %2116 = vmatmul.f32.gmra.mxu0 %v2077
  %v2117 = vpop.f32.mrf.mxu0
  %v2118 = vadd.f32 0.0, %v2117
  %2119 = vmatmul.f32.gmra.mxu0 %v2080
  %v2120 = vpop.f32.mrf.mxu0
  %v2121 = vadd.f32 0.0, %v2120
  %2122 = vdwg.mxu0
  %2123 = vrot.lane.b32.xlu0 %v384, 64
  %v2124 = vpop.permute.xlu0 %2123
  %2125 = vrot.lane.b32.xlu0 %v387, 64
  %v2126 = vpop.permute.xlu0 %2125
  %2127 = vrot.lane.b32.xlu0 %v390, 64
  %v2128 = vpop.permute.xlu0 %2127
  %2129 = vrot.lane.b32.xlu0 %v393, 64
  %v2130 = vpop.permute.xlu0 %2129
  %2131 = vrot.lane.b32.xlu0 %v396, 64
  %v2132 = vpop.permute.xlu0 %2131
  %2133 = vrot.lane.b32.xlu0 %v399, 64
  %v2134 = vpop.permute.xlu0 %2133
  %2135 = vrot.lane.b32.xlu0 %v402, 64
  %v2136 = vpop.permute.xlu0 %2135
  %2137 = vrot.lane.b32.xlu0 %v405, 64
  %v2138 = vpop.permute.xlu0 %2137
  %v2148 = vsel %vm1279, %v1585, 0
  %v2151 = vsel %vm1279, %v1587, 0
  %v2154 = vsel %vm1279, %v1589, 0
  %v2157 = vsel %vm1279, %v1591, 0
  %v2160 = vsel %vm1279, %v1593, 0
  %v2163 = vsel %vm1279, %v1595, 0
  %v2166 = vsel %vm1279, %v1597, 0
  %v2169 = vsel %vm1279, %v1599, 0
  %2171 = vmatpush.msra.mxu0 0.0
  %2172 = vmatpush.msra.mxu0 0.0
  %2173 = vmatpush.msra.mxu0 0.0
  %2174 = vmatpush.msra.mxu0 0.0
  %2175 = vmatpush.msra.mxu0 0.0
  %2176 = vmatpush.msra.mxu0 0.0
  %2177 = vmatpush.msra.mxu0 0.0
  %2178 = vmatpush.msra.mxu0 0.0
  %2179 = vmatpush.msra.mxu0 %v2138
  %2180 = vmatpush.msra.mxu0 %v2136
  %2181 = vmatpush.msra.mxu0 %v2134
  %2182 = vmatpush.msra.mxu0 %v2132
  %2183 = vmatpush.msra.mxu0 %v2130
  %2184 = vmatpush.msra.mxu0 %v2128
  %2185 = vmatpush.msra.mxu0 %v2126
  %2186 = vmatpush.msra.mxu0 %v2124
  %2187 = vmatmul.f32.gmra.mxu0 %v2148
  %v2188 = vpop.f32.mrf.mxu0
  %v2189 = vadd.f32 0.0, %v2188
  %2190 = vmatmul.f32.gmra.mxu0 %v2151
  %v2191 = vpop.f32.mrf.mxu0
  %v2192 = vadd.f32 0.0, %v2191
  %2193 = vmatmul.f32.gmra.mxu0 %v2154
  %v2194 = vpop.f32.mrf.mxu0
  %v2195 = vadd.f32 0.0, %v2194
  %2196 = vmatmul.f32.gmra.mxu0 %v2157
  %v2197 = vpop.f32.mrf.mxu0
  %v2198 = vadd.f32 0.0, %v2197
  %2199 = vmatmul.f32.gmra.mxu0 %v2160
  %v2200 = vpop.f32.mrf.mxu0
  %v2201 = vadd.f32 0.0, %v2200
  %2202 = vmatmul.f32.gmra.mxu0 %v2163
  %v2203 = vpop.f32.mrf.mxu0
  %v2204 = vadd.f32 0.0, %v2203
  %2205 = vmatmul.f32.gmra.mxu0 %v2166
  %v2206 = vpop.f32.mrf.mxu0
  %v2207 = vadd.f32 0.0, %v2206
  %2208 = vmatmul.f32.gmra.mxu0 %v2169
  %v2209 = vpop.f32.mrf.mxu0
  %v2210 = vadd.f32 0.0, %v2209
  %2211 = vdwg.mxu0
  %2212 = vrot.lane.b32.xlu0 %v408, 64
  %v2213 = vpop.permute.xlu0 %2212
  %2214 = vrot.lane.b32.xlu0 %v411, 64
  %v2215 = vpop.permute.xlu0 %2214
  %2216 = vrot.lane.b32.xlu0 %v414, 64
  %v2217 = vpop.permute.xlu0 %2216
  %2218 = vrot.lane.b32.xlu0 %v417, 64
  %v2219 = vpop.permute.xlu0 %2218
  %2220 = vrot.lane.b32.xlu0 %v420, 64
  %v2221 = vpop.permute.xlu0 %2220
  %2222 = vrot.lane.b32.xlu0 %v423, 64
  %v2223 = vpop.permute.xlu0 %2222
  %2224 = vrot.lane.b32.xlu0 %v426, 64
  %v2225 = vpop.permute.xlu0 %2224
  %2226 = vrot.lane.b32.xlu0 %v429, 64
  %v2227 = vpop.permute.xlu0 %2226
  %v2237 = vsel %vm1279, %v1601, 0
  %v2240 = vsel %vm1279, %v1603, 0
  %v2243 = vsel %vm1279, %v1605, 0
  %v2246 = vsel %vm1279, %v1607, 0
  %v2249 = vsel %vm1279, %v1609, 0
  %v2252 = vsel %vm1279, %v1611, 0
  %v2255 = vsel %vm1279, %v1613, 0
  %v2258 = vsel %vm1279, %v1615, 0
  %2260 = vmatpush.msra.mxu0 0.0
  %2261 = vmatpush.msra.mxu0 0.0
  %2262 = vmatpush.msra.mxu0 0.0
  %2263 = vmatpush.msra.mxu0 0.0
  %2264 = vmatpush.msra.mxu0 0.0
  %2265 = vmatpush.msra.mxu0 0.0
  %2266 = vmatpush.msra.mxu0 0.0
  %2267 = vmatpush.msra.mxu0 0.0
  %2268 = vmatpush.msra.mxu0 %v2227
  %2269 = vmatpush.msra.mxu0 %v2225
  %2270 = vmatpush.msra.mxu0 %v2223
  %2271 = vmatpush.msra.mxu0 %v2221
  %2272 = vmatpush.msra.mxu0 %v2219
  %2273 = vmatpush.msra.mxu0 %v2217
  %2274 = vmatpush.msra.mxu0 %v2215
  %2275 = vmatpush.msra.mxu0 %v2213
  %2276 = vmatmul.f32.gmra.mxu0 %v2237
  %v2277 = vpop.f32.mrf.mxu0
  %v2278 = vadd.f32 0.0, %v2277
  %2279 = vmatmul.f32.gmra.mxu0 %v2240
  %v2280 = vpop.f32.mrf.mxu0
  %v2281 = vadd.f32 0.0, %v2280
  %2282 = vmatmul.f32.gmra.mxu0 %v2243
  %v2283 = vpop.f32.mrf.mxu0
  %v2284 = vadd.f32 0.0, %v2283
  %2285 = vmatmul.f32.gmra.mxu0 %v2246
  %v2286 = vpop.f32.mrf.mxu0
  %v2287 = vadd.f32 0.0, %v2286
  %2288 = vmatmul.f32.gmra.mxu0 %v2249
  %v2289 = vpop.f32.mrf.mxu0
  %v2290 = vadd.f32 0.0, %v2289
  %2291 = vmatmul.f32.gmra.mxu0 %v2252
  %v2292 = vpop.f32.mrf.mxu0
  %v2293 = vadd.f32 0.0, %v2292
  %2294 = vmatmul.f32.gmra.mxu0 %v2255
  %v2295 = vpop.f32.mrf.mxu0
  %v2296 = vadd.f32 0.0, %v2295
  %2297 = vmatmul.f32.gmra.mxu0 %v2258
  %v2298 = vpop.f32.mrf.mxu0
  %v2299 = vadd.f32 0.0, %v2298
  %2300 = vdwg.mxu0
  %2301 = vrot.lane.b32.xlu0 %v432, 64
  %v2302 = vpop.permute.xlu0 %2301
  %2303 = vrot.lane.b32.xlu0 %v435, 64
  %v2304 = vpop.permute.xlu0 %2303
  %2305 = vrot.lane.b32.xlu0 %v438, 64
  %v2306 = vpop.permute.xlu0 %2305
  %2307 = vrot.lane.b32.xlu0 %v441, 64
  %v2308 = vpop.permute.xlu0 %2307
  %2309 = vrot.lane.b32.xlu0 %v444, 64
  %v2310 = vpop.permute.xlu0 %2309
  %2311 = vrot.lane.b32.xlu0 %v447, 64
  %v2312 = vpop.permute.xlu0 %2311
  %2313 = vrot.lane.b32.xlu0 %v450, 64
  %v2314 = vpop.permute.xlu0 %2313
  %2315 = vrot.lane.b32.xlu0 %v453, 64
  %v2316 = vpop.permute.xlu0 %2315
  %v2326 = vsel %vm1279, %v1617, 0
  %v2329 = vsel %vm1279, %v1619, 0
  %v2332 = vsel %vm1279, %v1621, 0
  %v2335 = vsel %vm1279, %v1623, 0
  %v2338 = vsel %vm1279, %v1625, 0
  %v2341 = vsel %vm1279, %v1627, 0
  %v2344 = vsel %vm1279, %v1629, 0
  %v2347 = vsel %vm1279, %v1631, 0
  %2349 = vmatpush.msra.mxu0 0.0
  %2350 = vmatpush.msra.mxu0 0.0
  %2351 = vmatpush.msra.mxu0 0.0
  %2352 = vmatpush.msra.mxu0 0.0
  %2353 = vmatpush.msra.mxu0 0.0
  %2354 = vmatpush.msra.mxu0 0.0
  %2355 = vmatpush.msra.mxu0 0.0
  %2356 = vmatpush.msra.mxu0 0.0
  %2357 = vmatpush.msra.mxu0 %v2316
  %2358 = vmatpush.msra.mxu0 %v2314
  %2359 = vmatpush.msra.mxu0 %v2312
  %2360 = vmatpush.msra.mxu0 %v2310
  %2361 = vmatpush.msra.mxu0 %v2308
  %2362 = vmatpush.msra.mxu0 %v2306
  %2363 = vmatpush.msra.mxu0 %v2304
  %2364 = vmatpush.msra.mxu0 %v2302
  %2365 = vmatmul.f32.gmra.mxu0 %v2326
  %v2366 = vpop.f32.mrf.mxu0
  %v2367 = vadd.f32 0.0, %v2366
  %2368 = vmatmul.f32.gmra.mxu0 %v2329
  %v2369 = vpop.f32.mrf.mxu0
  %v2370 = vadd.f32 0.0, %v2369
  %2371 = vmatmul.f32.gmra.mxu0 %v2332
  %v2372 = vpop.f32.mrf.mxu0
  %v2373 = vadd.f32 0.0, %v2372
  %2374 = vmatmul.f32.gmra.mxu0 %v2335
  %v2375 = vpop.f32.mrf.mxu0
  %v2376 = vadd.f32 0.0, %v2375
  %2377 = vmatmul.f32.gmra.mxu0 %v2338
  %v2378 = vpop.f32.mrf.mxu0
  %v2379 = vadd.f32 0.0, %v2378
  %2380 = vmatmul.f32.gmra.mxu0 %v2341
  %v2381 = vpop.f32.mrf.mxu0
  %v2382 = vadd.f32 0.0, %v2381
  %2383 = vmatmul.f32.gmra.mxu0 %v2344
  %v2384 = vpop.f32.mrf.mxu0
  %v2385 = vadd.f32 0.0, %v2384
  %2386 = vmatmul.f32.gmra.mxu0 %v2347
  %v2387 = vpop.f32.mrf.mxu0
  %v2388 = vadd.f32 0.0, %v2387
  %2389 = vdwg.mxu0
  %2390 = vrot.lane.b32.xlu0 %v456, 64
  %v2391 = vpop.permute.xlu0 %2390
  %2392 = vrot.lane.b32.xlu0 %v459, 64
  %v2393 = vpop.permute.xlu0 %2392
  %2394 = vrot.lane.b32.xlu0 %v462, 64
  %v2395 = vpop.permute.xlu0 %2394
  %2396 = vrot.lane.b32.xlu0 %v465, 64
  %v2397 = vpop.permute.xlu0 %2396
  %2398 = vrot.lane.b32.xlu0 %v468, 64
  %v2399 = vpop.permute.xlu0 %2398
  %2400 = vrot.lane.b32.xlu0 %v471, 64
  %v2401 = vpop.permute.xlu0 %2400
  %2402 = vrot.lane.b32.xlu0 %v474, 64
  %v2403 = vpop.permute.xlu0 %2402
  %2404 = vrot.lane.b32.xlu0 %v477, 64
  %v2405 = vpop.permute.xlu0 %2404
  %v2415 = vsel %vm1279, %v1633, 0
  %v2418 = vsel %vm1279, %v1635, 0
  %v2421 = vsel %vm1279, %v1637, 0
  %v2424 = vsel %vm1279, %v1639, 0
  %v2427 = vsel %vm1279, %v1641, 0
  %v2430 = vsel %vm1279, %v1643, 0
  %v2433 = vsel %vm1279, %v1645, 0
  %v2436 = vsel %vm1279, %v1647, 0
  %2438 = vmatpush.msra.mxu0 0.0
  %2439 = vmatpush.msra.mxu0 0.0
  %2440 = vmatpush.msra.mxu0 0.0
  %2441 = vmatpush.msra.mxu0 0.0
  %2442 = vmatpush.msra.mxu0 0.0
  %2443 = vmatpush.msra.mxu0 0.0
  %2444 = vmatpush.msra.mxu0 0.0
  %2445 = vmatpush.msra.mxu0 0.0
  %2446 = vmatpush.msra.mxu0 %v2405
  %2447 = vmatpush.msra.mxu0 %v2403
  %2448 = vmatpush.msra.mxu0 %v2401
  %2449 = vmatpush.msra.mxu0 %v2399
  %2450 = vmatpush.msra.mxu0 %v2397
  %2451 = vmatpush.msra.mxu0 %v2395
  %2452 = vmatpush.msra.mxu0 %v2393
  %2453 = vmatpush.msra.mxu0 %v2391
  %2454 = vmatmul.f32.gmra.mxu0 %v2415
  %v2455 = vpop.f32.mrf.mxu0
  %v2456 = vadd.f32 0.0, %v2455
  %2457 = vmatmul.f32.gmra.mxu0 %v2418
  %v2458 = vpop.f32.mrf.mxu0
  %v2459 = vadd.f32 0.0, %v2458
  %2460 = vmatmul.f32.gmra.mxu0 %v2421
  %v2461 = vpop.f32.mrf.mxu0
  %v2462 = vadd.f32 0.0, %v2461
  %2463 = vmatmul.f32.gmra.mxu0 %v2424
  %v2464 = vpop.f32.mrf.mxu0
  %v2465 = vadd.f32 0.0, %v2464
  %2466 = vmatmul.f32.gmra.mxu0 %v2427
  %v2467 = vpop.f32.mrf.mxu0
  %v2468 = vadd.f32 0.0, %v2467
  %2469 = vmatmul.f32.gmra.mxu0 %v2430
  %v2470 = vpop.f32.mrf.mxu0
  %v2471 = vadd.f32 0.0, %v2470
  %2472 = vmatmul.f32.gmra.mxu0 %v2433
  %v2473 = vpop.f32.mrf.mxu0
  %v2474 = vadd.f32 0.0, %v2473
  %2475 = vmatmul.f32.gmra.mxu0 %v2436
  %v2476 = vpop.f32.mrf.mxu0
  %v2477 = vadd.f32 0.0, %v2476
  %2478 = vdwg.mxu0
  %2479 = vrot.lane.b32.xlu0 %v480, 64
  %v2480 = vpop.permute.xlu0 %2479
  %2481 = vrot.lane.b32.xlu0 %v483, 64
  %v2482 = vpop.permute.xlu0 %2481
  %2483 = vrot.lane.b32.xlu0 %v486, 64
  %v2484 = vpop.permute.xlu0 %2483
  %2485 = vrot.lane.b32.xlu0 %v489, 64
  %v2486 = vpop.permute.xlu0 %2485
  %2487 = vrot.lane.b32.xlu0 %v492, 64
  %v2488 = vpop.permute.xlu0 %2487
  %2489 = vrot.lane.b32.xlu0 %v495, 64
  %v2490 = vpop.permute.xlu0 %2489
  %2491 = vrot.lane.b32.xlu0 %v498, 64
  %v2492 = vpop.permute.xlu0 %2491
  %2493 = vrot.lane.b32.xlu0 %v501, 64
  %v2494 = vpop.permute.xlu0 %2493
  %v2504 = vsel %vm1279, %v1649, 0
  %v2507 = vsel %vm1279, %v1651, 0
  %v2510 = vsel %vm1279, %v1653, 0
  %v2513 = vsel %vm1279, %v1655, 0
  %v2516 = vsel %vm1279, %v1657, 0
  %v2519 = vsel %vm1279, %v1659, 0
  %v2522 = vsel %vm1279, %v1661, 0
  %v2525 = vsel %vm1279, %v1663, 0
  %2527 = vmatpush.msra.mxu0 0.0
  %2528 = vmatpush.msra.mxu0 0.0
  %2529 = vmatpush.msra.mxu0 0.0
  %2530 = vmatpush.msra.mxu0 0.0
  %2531 = vmatpush.msra.mxu0 0.0
  %2532 = vmatpush.msra.mxu0 0.0
  %2533 = vmatpush.msra.mxu0 0.0
  %2534 = vmatpush.msra.mxu0 0.0
  %2535 = vmatpush.msra.mxu0 %v2494
  %2536 = vmatpush.msra.mxu0 %v2492
  %2537 = vmatpush.msra.mxu0 %v2490
  %2538 = vmatpush.msra.mxu0 %v2488
  %2539 = vmatpush.msra.mxu0 %v2486
  %2540 = vmatpush.msra.mxu0 %v2484
  %2541 = vmatpush.msra.mxu0 %v2482
  %2542 = vmatpush.msra.mxu0 %v2480
  %2543 = vmatmul.f32.gmra.mxu0 %v2504
  %v2544 = vpop.f32.mrf.mxu0
  %v2545 = vadd.f32 0.0, %v2544
  %2546 = vmatmul.f32.gmra.mxu0 %v2507
  %v2547 = vpop.f32.mrf.mxu0
  %v2548 = vadd.f32 0.0, %v2547
  %2549 = vmatmul.f32.gmra.mxu0 %v2510
  %v2550 = vpop.f32.mrf.mxu0
  %v2551 = vadd.f32 0.0, %v2550
  %2552 = vmatmul.f32.gmra.mxu0 %v2513
  %v2553 = vpop.f32.mrf.mxu0
  %v2554 = vadd.f32 0.0, %v2553
  %2555 = vmatmul.f32.gmra.mxu0 %v2516
  %v2556 = vpop.f32.mrf.mxu0
  %v2557 = vadd.f32 0.0, %v2556
  %2558 = vmatmul.f32.gmra.mxu0 %v2519
  %v2559 = vpop.f32.mrf.mxu0
  %v2560 = vadd.f32 0.0, %v2559
  %2561 = vmatmul.f32.gmra.mxu0 %v2522
  %v2562 = vpop.f32.mrf.mxu0
  %v2563 = vadd.f32 0.0, %v2562
  %2564 = vmatmul.f32.gmra.mxu0 %v2525
  %v2565 = vpop.f32.mrf.mxu0
  %v2566 = vadd.f32 0.0, %v2565
  %2567 = vdwg.mxu0
  %v2568 = vrcp.pop %v1666
  %v2569 = vmul.f32 %v1666, %v2568
  %v2570 = vsub.f32 1.0, %v2569
  %v2571 = vmul.f32 %v2568, %v2570
  %v2572 = vadd.f32 %v2568, %v2571
  %vm2573 = vweird.f32 %v1666
  %vm2574 = vweird.f32 %v2568
  %vm2575 = vmor %vm2573, %vm2574
  %v2576 = vsel %vm2575, %v2568, %v2572
  %v2577 = vand.u32 2147483647, %v1666
  %vm2578 = vcmp.eq.f32.partialorder %v2577, 8.507059e+37
  %v2579 = vand.u32 %v1666, 2147483648
  %v2580 = vor.u32 1.1754944e-38, %v2579
  %v2581 = vsel %vm2578, %v2580, %v2576
  %v2582 = vmul.f32 %v1922, %v2581
  %v2583 = vrcp.pop %v1669
  %v2584 = vmul.f32 %v1669, %v2583
  %v2585 = vsub.f32 1.0, %v2584
  %v2586 = vmul.f32 %v2583, %v2585
  %v2587 = vadd.f32 %v2583, %v2586
  %vm2588 = vweird.f32 %v1669
  %vm2589 = vweird.f32 %v2583
  %vm2590 = vmor %vm2588, %vm2589
  %v2591 = vsel %vm2590, %v2583, %v2587
  %v2592 = vand.u32 2147483647, %v1669
  %vm2593 = vcmp.eq.f32.partialorder %v2592, 8.507059e+37
  %v2594 = vand.u32 %v1669, 2147483648
  %v2595 = vor.u32 1.1754944e-38, %v2594
  %v2596 = vsel %vm2593, %v2595, %v2591
  %v2597 = vmul.f32 %v1925, %v2596
  %v2598 = vrcp.pop %v1672
  %v2599 = vmul.f32 %v1672, %v2598
  %v2600 = vsub.f32 1.0, %v2599
  %v2601 = vmul.f32 %v2598, %v2600
  %v2602 = vadd.f32 %v2598, %v2601
  %vm2603 = vweird.f32 %v1672
  %vm2604 = vweird.f32 %v2598
  %vm2605 = vmor %vm2603, %vm2604
  %v2606 = vsel %vm2605, %v2598, %v2602
  %v2607 = vand.u32 2147483647, %v1672
  %vm2608 = vcmp.eq.f32.partialorder %v2607, 8.507059e+37
  %v2609 = vand.u32 %v1672, 2147483648
  %v2610 = vor.u32 1.1754944e-38, %v2609
  %v2611 = vsel %vm2608, %v2610, %v2606
  %v2612 = vmul.f32 %v1928, %v2611
  %v2613 = vrcp.pop %v1675
  %v2614 = vmul.f32 %v1675, %v2613
  %v2615 = vsub.f32 1.0, %v2614
  %v2616 = vmul.f32 %v2613, %v2615
  %v2617 = vadd.f32 %v2613, %v2616
  %vm2618 = vweird.f32 %v1675
  %vm2619 = vweird.f32 %v2613
  %vm2620 = vmor %vm2618, %vm2619
  %v2621 = vsel %vm2620, %v2613, %v2617
  %v2622 = vand.u32 2147483647, %v1675
  %vm2623 = vcmp.eq.f32.partialorder %v2622, 8.507059e+37
  %v2624 = vand.u32 %v1675, 2147483648
  %v2625 = vor.u32 1.1754944e-38, %v2624
  %v2626 = vsel %vm2623, %v2625, %v2621
  %v2627 = vmul.f32 %v1931, %v2626
  %v2628 = vrcp.pop %v1678
  %v2629 = vmul.f32 %v1678, %v2628
  %v2630 = vsub.f32 1.0, %v2629
  %v2631 = vmul.f32 %v2628, %v2630
  %v2632 = vadd.f32 %v2628, %v2631
  %vm2633 = vweird.f32 %v1678
  %vm2634 = vweird.f32 %v2628
  %vm2635 = vmor %vm2633, %vm2634
  %v2636 = vsel %vm2635, %v2628, %v2632
  %v2637 = vand.u32 2147483647, %v1678
  %vm2638 = vcmp.eq.f32.partialorder %v2637, 8.507059e+37
  %v2639 = vand.u32 %v1678, 2147483648
  %v2640 = vor.u32 1.1754944e-38, %v2639
  %v2641 = vsel %vm2638, %v2640, %v2636
  %v2642 = vmul.f32 %v1934, %v2641
  %v2643 = vrcp.pop %v1681
  %v2644 = vmul.f32 %v1681, %v2643
  %v2645 = vsub.f32 1.0, %v2644
  %v2646 = vmul.f32 %v2643, %v2645
  %v2647 = vadd.f32 %v2643, %v2646
  %vm2648 = vweird.f32 %v1681
  %vm2649 = vweird.f32 %v2643
  %vm2650 = vmor %vm2648, %vm2649
  %v2651 = vsel %vm2650, %v2643, %v2647
  %v2652 = vand.u32 2147483647, %v1681
  %vm2653 = vcmp.eq.f32.partialorder %v2652, 8.507059e+37
  %v2654 = vand.u32 %v1681, 2147483648
  %v2655 = vor.u32 1.1754944e-38, %v2654
  %v2656 = vsel %vm2653, %v2655, %v2651
  %v2657 = vmul.f32 %v1937, %v2656
  %v2658 = vrcp.pop %v1684
  %v2659 = vmul.f32 %v1684, %v2658
  %v2660 = vsub.f32 1.0, %v2659
  %v2661 = vmul.f32 %v2658, %v2660
  %v2662 = vadd.f32 %v2658, %v2661
  %vm2663 = vweird.f32 %v1684
  %vm2664 = vweird.f32 %v2658
  %vm2665 = vmor %vm2663, %vm2664
  %v2666 = vsel %vm2665, %v2658, %v2662
  %v2667 = vand.u32 2147483647, %v1684
  %vm2668 = vcmp.eq.f32.partialorder %v2667, 8.507059e+37
  %v2669 = vand.u32 %v1684, 2147483648
  %v2670 = vor.u32 1.1754944e-38, %v2669
  %v2671 = vsel %vm2668, %v2670, %v2666
  %v2672 = vmul.f32 %v1940, %v2671
  %v2673 = vrcp.pop %v1687
  %v2674 = vmul.f32 %v1687, %v2673
  %v2675 = vsub.f32 1.0, %v2674
  %v2676 = vmul.f32 %v2673, %v2675
  %v2677 = vadd.f32 %v2673, %v2676
  %vm2678 = vweird.f32 %v1687
  %vm2679 = vweird.f32 %v2673
  %vm2680 = vmor %vm2678, %vm2679
  %v2681 = vsel %vm2680, %v2673, %v2677
  %v2682 = vand.u32 2147483647, %v1687
  %vm2683 = vcmp.eq.f32.partialorder %v2682, 8.507059e+37
  %v2684 = vand.u32 %v1687, 2147483648
  %v2685 = vor.u32 1.1754944e-38, %v2684
  %v2686 = vsel %vm2683, %v2685, %v2681
  %v2687 = vmul.f32 %v1943, %v2686
  %v2688 = vrcp.pop %v1690
  %v2689 = vmul.f32 %v1690, %v2688
  %v2690 = vsub.f32 1.0, %v2689
  %v2691 = vmul.f32 %v2688, %v2690
  %v2692 = vadd.f32 %v2688, %v2691
  %vm2693 = vweird.f32 %v1690
  %vm2694 = vweird.f32 %v2688
  %vm2695 = vmor %vm2693, %vm2694
  %v2696 = vsel %vm2695, %v2688, %v2692
  %v2697 = vand.u32 2147483647, %v1690
  %vm2698 = vcmp.eq.f32.partialorder %v2697, 8.507059e+37
  %v2699 = vand.u32 %v1690, 2147483648
  %v2700 = vor.u32 1.1754944e-38, %v2699
  %v2701 = vsel %vm2698, %v2700, %v2696
  %v2702 = vmul.f32 %v2011, %v2701
  %v2703 = vrcp.pop %v1693
  %v2704 = vmul.f32 %v1693, %v2703
  %v2705 = vsub.f32 1.0, %v2704
  %v2706 = vmul.f32 %v2703, %v2705
  %v2707 = vadd.f32 %v2703, %v2706
  %vm2708 = vweird.f32 %v1693
  %vm2709 = vweird.f32 %v2703
  %vm2710 = vmor %vm2708, %vm2709
  %v2711 = vsel %vm2710, %v2703, %v2707
  %v2712 = vand.u32 2147483647, %v1693
  %vm2713 = vcmp.eq.f32.partialorder %v2712, 8.507059e+37
  %v2714 = vand.u32 %v1693, 2147483648
  %v2715 = vor.u32 1.1754944e-38, %v2714
  %v2716 = vsel %vm2713, %v2715, %v2711
  %v2717 = vmul.f32 %v2014, %v2716
  %v2718 = vrcp.pop %v1696
  %v2719 = vmul.f32 %v1696, %v2718
  %v2720 = vsub.f32 1.0, %v2719
  %v2721 = vmul.f32 %v2718, %v2720
  %v2722 = vadd.f32 %v2718, %v2721
  %vm2723 = vweird.f32 %v1696
  %vm2724 = vweird.f32 %v2718
  %vm2725 = vmor %vm2723, %vm2724
  %v2726 = vsel %vm2725, %v2718, %v2722
  %v2727 = vand.u32 2147483647, %v1696
  %vm2728 = vcmp.eq.f32.partialorder %v2727, 8.507059e+37
  %v2729 = vand.u32 %v1696, 2147483648
  %v2730 = vor.u32 1.1754944e-38, %v2729
  %v2731 = vsel %vm2728, %v2730, %v2726
  %v2732 = vmul.f32 %v2017, %v2731
  %v2733 = vrcp.pop %v1699
  %v2734 = vmul.f32 %v1699, %v2733
  %v2735 = vsub.f32 1.0, %v2734
  %v2736 = vmul.f32 %v2733, %v2735
  %v2737 = vadd.f32 %v2733, %v2736
  %vm2738 = vweird.f32 %v1699
  %vm2739 = vweird.f32 %v2733
  %vm2740 = vmor %vm2738, %vm2739
  %v2741 = vsel %vm2740, %v2733, %v2737
  %v2742 = vand.u32 2147483647, %v1699
  %vm2743 = vcmp.eq.f32.partialorder %v2742, 8.507059e+37
  %v2744 = vand.u32 %v1699, 2147483648
  %v2745 = vor.u32 1.1754944e-38, %v2744
  %v2746 = vsel %vm2743, %v2745, %v2741
  %v2747 = vmul.f32 %v2020, %v2746
  %v2748 = vrcp.pop %v1702
  %v2749 = vmul.f32 %v1702, %v2748
  %v2750 = vsub.f32 1.0, %v2749
  %v2751 = vmul.f32 %v2748, %v2750
  %v2752 = vadd.f32 %v2748, %v2751
  %vm2753 = vweird.f32 %v1702
  %vm2754 = vweird.f32 %v2748
  %vm2755 = vmor %vm2753, %vm2754
  %v2756 = vsel %vm2755, %v2748, %v2752
  %v2757 = vand.u32 2147483647, %v1702
  %vm2758 = vcmp.eq.f32.partialorder %v2757, 8.507059e+37
  %v2759 = vand.u32 %v1702, 2147483648
  %v2760 = vor.u32 1.1754944e-38, %v2759
  %v2761 = vsel %vm2758, %v2760, %v2756
  %v2762 = vmul.f32 %v2023, %v2761
  %v2763 = vrcp.pop %v1705
  %v2764 = vmul.f32 %v1705, %v2763
  %v2765 = vsub.f32 1.0, %v2764
  %v2766 = vmul.f32 %v2763, %v2765
  %v2767 = vadd.f32 %v2763, %v2766
  %vm2768 = vweird.f32 %v1705
  %vm2769 = vweird.f32 %v2763
  %vm2770 = vmor %vm2768, %vm2769
  %v2771 = vsel %vm2770, %v2763, %v2767
  %v2772 = vand.u32 2147483647, %v1705
  %vm2773 = vcmp.eq.f32.partialorder %v2772, 8.507059e+37
  %v2774 = vand.u32 %v1705, 2147483648
  %v2775 = vor.u32 1.1754944e-38, %v2774
  %v2776 = vsel %vm2773, %v2775, %v2771
  %v2777 = vmul.f32 %v2026, %v2776
  %v2778 = vrcp.pop %v1708
  %v2779 = vmul.f32 %v1708, %v2778
  %v2780 = vsub.f32 1.0, %v2779
  %v2781 = vmul.f32 %v2778, %v2780
  %v2782 = vadd.f32 %v2778, %v2781
  %vm2783 = vweird.f32 %v1708
  %vm2784 = vweird.f32 %v2778
  %vm2785 = vmor %vm2783, %vm2784
  %v2786 = vsel %vm2785, %v2778, %v2782
  %v2787 = vand.u32 2147483647, %v1708
  %vm2788 = vcmp.eq.f32.partialorder %v2787, 8.507059e+37
  %v2789 = vand.u32 %v1708, 2147483648
  %v2790 = vor.u32 1.1754944e-38, %v2789
  %v2791 = vsel %vm2788, %v2790, %v2786
  %v2792 = vmul.f32 %v2029, %v2791
  %v2793 = vrcp.pop %v1711
  %v2794 = vmul.f32 %v1711, %v2793
  %v2795 = vsub.f32 1.0, %v2794
  %v2796 = vmul.f32 %v2793, %v2795
  %v2797 = vadd.f32 %v2793, %v2796
  %vm2798 = vweird.f32 %v1711
  %vm2799 = vweird.f32 %v2793
  %vm2800 = vmor %vm2798, %vm2799
  %v2801 = vsel %vm2800, %v2793, %v2797
  %v2802 = vand.u32 2147483647, %v1711
  %vm2803 = vcmp.eq.f32.partialorder %v2802, 8.507059e+37
  %v2804 = vand.u32 %v1711, 2147483648
  %v2805 = vor.u32 1.1754944e-38, %v2804
  %v2806 = vsel %vm2803, %v2805, %v2801
  %v2807 = vmul.f32 %v2032, %v2806
  %v2808 = vrcp.pop %v1714
  %v2809 = vmul.f32 %v1714, %v2808
  %v2810 = vsub.f32 1.0, %v2809
  %v2811 = vmul.f32 %v2808, %v2810
  %v2812 = vadd.f32 %v2808, %v2811
  %vm2813 = vweird.f32 %v1714
  %vm2814 = vweird.f32 %v2808
  %vm2815 = vmor %vm2813, %vm2814
  %v2816 = vsel %vm2815, %v2808, %v2812
  %v2817 = vand.u32 2147483647, %v1714
  %vm2818 = vcmp.eq.f32.partialorder %v2817, 8.507059e+37
  %v2819 = vand.u32 %v1714, 2147483648
  %v2820 = vor.u32 1.1754944e-38, %v2819
  %v2821 = vsel %vm2818, %v2820, %v2816
  %v2822 = vmul.f32 %v2100, %v2821
  %v2823 = vrcp.pop %v1717
  %v2824 = vmul.f32 %v1717, %v2823
  %v2825 = vsub.f32 1.0, %v2824
  %v2826 = vmul.f32 %v2823, %v2825
  %v2827 = vadd.f32 %v2823, %v2826
  %vm2828 = vweird.f32 %v1717
  %vm2829 = vweird.f32 %v2823
  %vm2830 = vmor %vm2828, %vm2829
  %v2831 = vsel %vm2830, %v2823, %v2827
  %v2832 = vand.u32 2147483647, %v1717
  %vm2833 = vcmp.eq.f32.partialorder %v2832, 8.507059e+37
  %v2834 = vand.u32 %v1717, 2147483648
  %v2835 = vor.u32 1.1754944e-38, %v2834
  %v2836 = vsel %vm2833, %v2835, %v2831
  %v2837 = vmul.f32 %v2103, %v2836
  %v2838 = vrcp.pop %v1720
  %v2839 = vmul.f32 %v1720, %v2838
  %v2840 = vsub.f32 1.0, %v2839
  %v2841 = vmul.f32 %v2838, %v2840
  %v2842 = vadd.f32 %v2838, %v2841
  %vm2843 = vweird.f32 %v1720
  %vm2844 = vweird.f32 %v2838
  %vm2845 = vmor %vm2843, %vm2844
  %v2846 = vsel %vm2845, %v2838, %v2842
  %v2847 = vand.u32 2147483647, %v1720
  %vm2848 = vcmp.eq.f32.partialorder %v2847, 8.507059e+37
  %v2849 = vand.u32 %v1720, 2147483648
  %v2850 = vor.u32 1.1754944e-38, %v2849
  %v2851 = vsel %vm2848, %v2850, %v2846
  %v2852 = vmul.f32 %v2106, %v2851
  %v2853 = vrcp.pop %v1723
  %v2854 = vmul.f32 %v1723, %v2853
  %v2855 = vsub.f32 1.0, %v2854
  %v2856 = vmul.f32 %v2853, %v2855
  %v2857 = vadd.f32 %v2853, %v2856
  %vm2858 = vweird.f32 %v1723
  %vm2859 = vweird.f32 %v2853
  %vm2860 = vmor %vm2858, %vm2859
  %v2861 = vsel %vm2860, %v2853, %v2857
  %v2862 = vand.u32 2147483647, %v1723
  %vm2863 = vcmp.eq.f32.partialorder %v2862, 8.507059e+37
  %v2864 = vand.u32 %v1723, 2147483648
  %v2865 = vor.u32 1.1754944e-38, %v2864
  %v2866 = vsel %vm2863, %v2865, %v2861
  %v2867 = vmul.f32 %v2109, %v2866
  %v2868 = vrcp.pop %v1726
  %v2869 = vmul.f32 %v1726, %v2868
  %v2870 = vsub.f32 1.0, %v2869
  %v2871 = vmul.f32 %v2868, %v2870
  %v2872 = vadd.f32 %v2868, %v2871
  %vm2873 = vweird.f32 %v1726
  %vm2874 = vweird.f32 %v2868
  %vm2875 = vmor %vm2873, %vm2874
  %v2876 = vsel %vm2875, %v2868, %v2872
  %v2877 = vand.u32 2147483647, %v1726
  %vm2878 = vcmp.eq.f32.partialorder %v2877, 8.507059e+37
  %v2879 = vand.u32 %v1726, 2147483648
  %v2880 = vor.u32 1.1754944e-38, %v2879
  %v2881 = vsel %vm2878, %v2880, %v2876
  %v2882 = vmul.f32 %v2112, %v2881
  %v2883 = vrcp.pop %v1729
  %v2884 = vmul.f32 %v1729, %v2883
  %v2885 = vsub.f32 1.0, %v2884
  %v2886 = vmul.f32 %v2883, %v2885
  %v2887 = vadd.f32 %v2883, %v2886
  %vm2888 = vweird.f32 %v1729
  %vm2889 = vweird.f32 %v2883
  %vm2890 = vmor %vm2888, %vm2889
  %v2891 = vsel %vm2890, %v2883, %v2887
  %v2892 = vand.u32 2147483647, %v1729
  %vm2893 = vcmp.eq.f32.partialorder %v2892, 8.507059e+37
  %v2894 = vand.u32 %v1729, 2147483648
  %v2895 = vor.u32 1.1754944e-38, %v2894
  %v2896 = vsel %vm2893, %v2895, %v2891
  %v2897 = vmul.f32 %v2115, %v2896
  %v2898 = vrcp.pop %v1732
  %v2899 = vmul.f32 %v1732, %v2898
  %v2900 = vsub.f32 1.0, %v2899
  %v2901 = vmul.f32 %v2898, %v2900
  %v2902 = vadd.f32 %v2898, %v2901
  %vm2903 = vweird.f32 %v1732
  %vm2904 = vweird.f32 %v2898
  %vm2905 = vmor %vm2903, %vm2904
  %v2906 = vsel %vm2905, %v2898, %v2902
  %v2907 = vand.u32 2147483647, %v1732
  %vm2908 = vcmp.eq.f32.partialorder %v2907, 8.507059e+37
  %v2909 = vand.u32 %v1732, 2147483648
  %v2910 = vor.u32 1.1754944e-38, %v2909
  %v2911 = vsel %vm2908, %v2910, %v2906
  %v2912 = vmul.f32 %v2118, %v2911
  %v2913 = vrcp.pop %v1735
  %v2914 = vmul.f32 %v1735, %v2913
  %v2915 = vsub.f32 1.0, %v2914
  %v2916 = vmul.f32 %v2913, %v2915
  %v2917 = vadd.f32 %v2913, %v2916
  %vm2918 = vweird.f32 %v1735
  %vm2919 = vweird.f32 %v2913
  %vm2920 = vmor %vm2918, %vm2919
  %v2921 = vsel %vm2920, %v2913, %v2917
  %v2922 = vand.u32 2147483647, %v1735
  %vm2923 = vcmp.eq.f32.partialorder %v2922, 8.507059e+37
  %v2924 = vand.u32 %v1735, 2147483648
  %v2925 = vor.u32 1.1754944e-38, %v2924
  %v2926 = vsel %vm2923, %v2925, %v2921
  %v2927 = vmul.f32 %v2121, %v2926
  %v2928 = vrcp.pop %v1738
  %v2929 = vmul.f32 %v1738, %v2928
  %v2930 = vsub.f32 1.0, %v2929
  %v2931 = vmul.f32 %v2928, %v2930
  %v2932 = vadd.f32 %v2928, %v2931
  %vm2933 = vweird.f32 %v1738
  %vm2934 = vweird.f32 %v2928
  %vm2935 = vmor %vm2933, %vm2934
  %v2936 = vsel %vm2935, %v2928, %v2932
  %v2937 = vand.u32 2147483647, %v1738
  %vm2938 = vcmp.eq.f32.partialorder %v2937, 8.507059e+37
  %v2939 = vand.u32 %v1738, 2147483648
  %v2940 = vor.u32 1.1754944e-38, %v2939
  %v2941 = vsel %vm2938, %v2940, %v2936
  %v2942 = vmul.f32 %v2189, %v2941
  %v2943 = vrcp.pop %v1741
  %v2944 = vmul.f32 %v1741, %v2943
  %v2945 = vsub.f32 1.0, %v2944
  %v2946 = vmul.f32 %v2943, %v2945
  %v2947 = vadd.f32 %v2943, %v2946
  %vm2948 = vweird.f32 %v1741
  %vm2949 = vweird.f32 %v2943
  %vm2950 = vmor %vm2948, %vm2949
  %v2951 = vsel %vm2950, %v2943, %v2947
  %v2952 = vand.u32 2147483647, %v1741
  %vm2953 = vcmp.eq.f32.partialorder %v2952, 8.507059e+37
  %v2954 = vand.u32 %v1741, 2147483648
  %v2955 = vor.u32 1.1754944e-38, %v2954
  %v2956 = vsel %vm2953, %v2955, %v2951
  %v2957 = vmul.f32 %v2192, %v2956
  %v2958 = vrcp.pop %v1744
  %v2959 = vmul.f32 %v1744, %v2958
  %v2960 = vsub.f32 1.0, %v2959
  %v2961 = vmul.f32 %v2958, %v2960
  %v2962 = vadd.f32 %v2958, %v2961
  %vm2963 = vweird.f32 %v1744
  %vm2964 = vweird.f32 %v2958
  %vm2965 = vmor %vm2963, %vm2964
  %v2966 = vsel %vm2965, %v2958, %v2962
  %v2967 = vand.u32 2147483647, %v1744
  %vm2968 = vcmp.eq.f32.partialorder %v2967, 8.507059e+37
  %v2969 = vand.u32 %v1744, 2147483648
  %v2970 = vor.u32 1.1754944e-38, %v2969
  %v2971 = vsel %vm2968, %v2970, %v2966
  %v2972 = vmul.f32 %v2195, %v2971
  %v2973 = vrcp.pop %v1747
  %v2974 = vmul.f32 %v1747, %v2973
  %v2975 = vsub.f32 1.0, %v2974
  %v2976 = vmul.f32 %v2973, %v2975
  %v2977 = vadd.f32 %v2973, %v2976
  %vm2978 = vweird.f32 %v1747
  %vm2979 = vweird.f32 %v2973
  %vm2980 = vmor %vm2978, %vm2979
  %v2981 = vsel %vm2980, %v2973, %v2977
  %v2982 = vand.u32 2147483647, %v1747
  %vm2983 = vcmp.eq.f32.partialorder %v2982, 8.507059e+37
  %v2984 = vand.u32 %v1747, 2147483648
  %v2985 = vor.u32 1.1754944e-38, %v2984
  %v2986 = vsel %vm2983, %v2985, %v2981
  %v2987 = vmul.f32 %v2198, %v2986
  %v2988 = vrcp.pop %v1750
  %v2989 = vmul.f32 %v1750, %v2988
  %v2990 = vsub.f32 1.0, %v2989
  %v2991 = vmul.f32 %v2988, %v2990
  %v2992 = vadd.f32 %v2988, %v2991
  %vm2993 = vweird.f32 %v1750
  %vm2994 = vweird.f32 %v2988
  %vm2995 = vmor %vm2993, %vm2994
  %v2996 = vsel %vm2995, %v2988, %v2992
  %v2997 = vand.u32 2147483647, %v1750
  %vm2998 = vcmp.eq.f32.partialorder %v2997, 8.507059e+37
  %v2999 = vand.u32 %v1750, 2147483648
  %v3000 = vor.u32 1.1754944e-38, %v2999
  %v3001 = vsel %vm2998, %v3000, %v2996
  %v3002 = vmul.f32 %v2201, %v3001
  %v3003 = vrcp.pop %v1753
  %v3004 = vmul.f32 %v1753, %v3003
  %v3005 = vsub.f32 1.0, %v3004
  %v3006 = vmul.f32 %v3003, %v3005
  %v3007 = vadd.f32 %v3003, %v3006
  %vm3008 = vweird.f32 %v1753
  %vm3009 = vweird.f32 %v3003
  %vm3010 = vmor %vm3008, %vm3009
  %v3011 = vsel %vm3010, %v3003, %v3007
  %v3012 = vand.u32 2147483647, %v1753
  %vm3013 = vcmp.eq.f32.partialorder %v3012, 8.507059e+37
  %v3014 = vand.u32 %v1753, 2147483648
  %v3015 = vor.u32 1.1754944e-38, %v3014
  %v3016 = vsel %vm3013, %v3015, %v3011
  %v3017 = vmul.f32 %v2204, %v3016
  %v3018 = vrcp.pop %v1756
  %v3019 = vmul.f32 %v1756, %v3018
  %v3020 = vsub.f32 1.0, %v3019
  %v3021 = vmul.f32 %v3018, %v3020
  %v3022 = vadd.f32 %v3018, %v3021
  %vm3023 = vweird.f32 %v1756
  %vm3024 = vweird.f32 %v3018
  %vm3025 = vmor %vm3023, %vm3024
  %v3026 = vsel %vm3025, %v3018, %v3022
  %v3027 = vand.u32 2147483647, %v1756
  %vm3028 = vcmp.eq.f32.partialorder %v3027, 8.507059e+37
  %v3029 = vand.u32 %v1756, 2147483648
  %v3030 = vor.u32 1.1754944e-38, %v3029
  %v3031 = vsel %vm3028, %v3030, %v3026
  %v3032 = vmul.f32 %v2207, %v3031
  %v3033 = vrcp.pop %v1759
  %v3034 = vmul.f32 %v1759, %v3033
  %v3035 = vsub.f32 1.0, %v3034
  %v3036 = vmul.f32 %v3033, %v3035
  %v3037 = vadd.f32 %v3033, %v3036
  %vm3038 = vweird.f32 %v1759
  %vm3039 = vweird.f32 %v3033
  %vm3040 = vmor %vm3038, %vm3039
  %v3041 = vsel %vm3040, %v3033, %v3037
  %v3042 = vand.u32 2147483647, %v1759
  %vm3043 = vcmp.eq.f32.partialorder %v3042, 8.507059e+37
  %v3044 = vand.u32 %v1759, 2147483648
  %v3045 = vor.u32 1.1754944e-38, %v3044
  %v3046 = vsel %vm3043, %v3045, %v3041
  %v3047 = vmul.f32 %v2210, %v3046
  %v3048 = vrcp.pop %v1762
  %v3049 = vmul.f32 %v1762, %v3048
  %v3050 = vsub.f32 1.0, %v3049
  %v3051 = vmul.f32 %v3048, %v3050
  %v3052 = vadd.f32 %v3048, %v3051
  %vm3053 = vweird.f32 %v1762
  %vm3054 = vweird.f32 %v3048
  %vm3055 = vmor %vm3053, %vm3054
  %v3056 = vsel %vm3055, %v3048, %v3052
  %v3057 = vand.u32 2147483647, %v1762
  %vm3058 = vcmp.eq.f32.partialorder %v3057, 8.507059e+37
  %v3059 = vand.u32 %v1762, 2147483648
  %v3060 = vor.u32 1.1754944e-38, %v3059
  %v3061 = vsel %vm3058, %v3060, %v3056
  %v3062 = vmul.f32 %v2278, %v3061
  %v3063 = vrcp.pop %v1765
  %v3064 = vmul.f32 %v1765, %v3063
  %v3065 = vsub.f32 1.0, %v3064
  %v3066 = vmul.f32 %v3063, %v3065
  %v3067 = vadd.f32 %v3063, %v3066
  %vm3068 = vweird.f32 %v1765
  %vm3069 = vweird.f32 %v3063
  %vm3070 = vmor %vm3068, %vm3069
  %v3071 = vsel %vm3070, %v3063, %v3067
  %v3072 = vand.u32 2147483647, %v1765
  %vm3073 = vcmp.eq.f32.partialorder %v3072, 8.507059e+37
  %v3074 = vand.u32 %v1765, 2147483648
  %v3075 = vor.u32 1.1754944e-38, %v3074
  %v3076 = vsel %vm3073, %v3075, %v3071
  %v3077 = vmul.f32 %v2281, %v3076
  %v3078 = vrcp.pop %v1768
  %v3079 = vmul.f32 %v1768, %v3078
  %v3080 = vsub.f32 1.0, %v3079
  %v3081 = vmul.f32 %v3078, %v3080
  %v3082 = vadd.f32 %v3078, %v3081
  %vm3083 = vweird.f32 %v1768
  %vm3084 = vweird.f32 %v3078
  %vm3085 = vmor %vm3083, %vm3084
  %v3086 = vsel %vm3085, %v3078, %v3082
  %v3087 = vand.u32 2147483647, %v1768
  %vm3088 = vcmp.eq.f32.partialorder %v3087, 8.507059e+37
  %v3089 = vand.u32 %v1768, 2147483648
  %v3090 = vor.u32 1.1754944e-38, %v3089
  %v3091 = vsel %vm3088, %v3090, %v3086
  %v3092 = vmul.f32 %v2284, %v3091
  %v3093 = vrcp.pop %v1771
  %v3094 = vmul.f32 %v1771, %v3093
  %v3095 = vsub.f32 1.0, %v3094
  %v3096 = vmul.f32 %v3093, %v3095
  %v3097 = vadd.f32 %v3093, %v3096
  %vm3098 = vweird.f32 %v1771
  %vm3099 = vweird.f32 %v3093
  %vm3100 = vmor %vm3098, %vm3099
  %v3101 = vsel %vm3100, %v3093, %v3097
  %v3102 = vand.u32 2147483647, %v1771
  %vm3103 = vcmp.eq.f32.partialorder %v3102, 8.507059e+37
  %v3104 = vand.u32 %v1771, 2147483648
  %v3105 = vor.u32 1.1754944e-38, %v3104
  %v3106 = vsel %vm3103, %v3105, %v3101
  %v3107 = vmul.f32 %v2287, %v3106
  %v3108 = vrcp.pop %v1774
  %v3109 = vmul.f32 %v1774, %v3108
  %v3110 = vsub.f32 1.0, %v3109
  %v3111 = vmul.f32 %v3108, %v3110
  %v3112 = vadd.f32 %v3108, %v3111
  %vm3113 = vweird.f32 %v1774
  %vm3114 = vweird.f32 %v3108
  %vm3115 = vmor %vm3113, %vm3114
  %v3116 = vsel %vm3115, %v3108, %v3112
  %v3117 = vand.u32 2147483647, %v1774
  %vm3118 = vcmp.eq.f32.partialorder %v3117, 8.507059e+37
  %v3119 = vand.u32 %v1774, 2147483648
  %v3120 = vor.u32 1.1754944e-38, %v3119
  %v3121 = vsel %vm3118, %v3120, %v3116
  %v3122 = vmul.f32 %v2290, %v3121
  %v3123 = vrcp.pop %v1777
  %v3124 = vmul.f32 %v1777, %v3123
  %v3125 = vsub.f32 1.0, %v3124
  %v3126 = vmul.f32 %v3123, %v3125
  %v3127 = vadd.f32 %v3123, %v3126
  %vm3128 = vweird.f32 %v1777
  %vm3129 = vweird.f32 %v3123
  %vm3130 = vmor %vm3128, %vm3129
  %v3131 = vsel %vm3130, %v3123, %v3127
  %v3132 = vand.u32 2147483647, %v1777
  %vm3133 = vcmp.eq.f32.partialorder %v3132, 8.507059e+37
  %v3134 = vand.u32 %v1777, 2147483648
  %v3135 = vor.u32 1.1754944e-38, %v3134
  %v3136 = vsel %vm3133, %v3135, %v3131
  %v3137 = vmul.f32 %v2293, %v3136
  %v3138 = vrcp.pop %v1780
  %v3139 = vmul.f32 %v1780, %v3138
  %v3140 = vsub.f32 1.0, %v3139
  %v3141 = vmul.f32 %v3138, %v3140
  %v3142 = vadd.f32 %v3138, %v3141
  %vm3143 = vweird.f32 %v1780
  %vm3144 = vweird.f32 %v3138
  %vm3145 = vmor %vm3143, %vm3144
  %v3146 = vsel %vm3145, %v3138, %v3142
  %v3147 = vand.u32 2147483647, %v1780
  %vm3148 = vcmp.eq.f32.partialorder %v3147, 8.507059e+37
  %v3149 = vand.u32 %v1780, 2147483648
  %v3150 = vor.u32 1.1754944e-38, %v3149
  %v3151 = vsel %vm3148, %v3150, %v3146
  %v3152 = vmul.f32 %v2296, %v3151
  %v3153 = vrcp.pop %v1783
  %v3154 = vmul.f32 %v1783, %v3153
  %v3155 = vsub.f32 1.0, %v3154
  %v3156 = vmul.f32 %v3153, %v3155
  %v3157 = vadd.f32 %v3153, %v3156
  %vm3158 = vweird.f32 %v1783
  %vm3159 = vweird.f32 %v3153
  %vm3160 = vmor %vm3158, %vm3159
  %v3161 = vsel %vm3160, %v3153, %v3157
  %v3162 = vand.u32 2147483647, %v1783
  %vm3163 = vcmp.eq.f32.partialorder %v3162, 8.507059e+37
  %v3164 = vand.u32 %v1783, 2147483648
  %v3165 = vor.u32 1.1754944e-38, %v3164
  %v3166 = vsel %vm3163, %v3165, %v3161
  %v3167 = vmul.f32 %v2299, %v3166
  %v3168 = vrcp.pop %v1786
  %v3169 = vmul.f32 %v1786, %v3168
  %v3170 = vsub.f32 1.0, %v3169
  %v3171 = vmul.f32 %v3168, %v3170
  %v3172 = vadd.f32 %v3168, %v3171
  %vm3173 = vweird.f32 %v1786
  %vm3174 = vweird.f32 %v3168
  %vm3175 = vmor %vm3173, %vm3174
  %v3176 = vsel %vm3175, %v3168, %v3172
  %v3177 = vand.u32 2147483647, %v1786
  %vm3178 = vcmp.eq.f32.partialorder %v3177, 8.507059e+37
  %v3179 = vand.u32 %v1786, 2147483648
  %v3180 = vor.u32 1.1754944e-38, %v3179
  %v3181 = vsel %vm3178, %v3180, %v3176
  %v3182 = vmul.f32 %v2367, %v3181
  %v3183 = vrcp.pop %v1789
  %v3184 = vmul.f32 %v1789, %v3183
  %v3185 = vsub.f32 1.0, %v3184
  %v3186 = vmul.f32 %v3183, %v3185
  %v3187 = vadd.f32 %v3183, %v3186
  %vm3188 = vweird.f32 %v1789
  %vm3189 = vweird.f32 %v3183
  %vm3190 = vmor %vm3188, %vm3189
  %v3191 = vsel %vm3190, %v3183, %v3187
  %v3192 = vand.u32 2147483647, %v1789
  %vm3193 = vcmp.eq.f32.partialorder %v3192, 8.507059e+37
  %v3194 = vand.u32 %v1789, 2147483648
  %v3195 = vor.u32 1.1754944e-38, %v3194
  %v3196 = vsel %vm3193, %v3195, %v3191
  %v3197 = vmul.f32 %v2370, %v3196
  %v3198 = vrcp.pop %v1792
  %v3199 = vmul.f32 %v1792, %v3198
  %v3200 = vsub.f32 1.0, %v3199
  %v3201 = vmul.f32 %v3198, %v3200
  %v3202 = vadd.f32 %v3198, %v3201
  %vm3203 = vweird.f32 %v1792
  %vm3204 = vweird.f32 %v3198
  %vm3205 = vmor %vm3203, %vm3204
  %v3206 = vsel %vm3205, %v3198, %v3202
  %v3207 = vand.u32 2147483647, %v1792
  %vm3208 = vcmp.eq.f32.partialorder %v3207, 8.507059e+37
  %v3209 = vand.u32 %v1792, 2147483648
  %v3210 = vor.u32 1.1754944e-38, %v3209
  %v3211 = vsel %vm3208, %v3210, %v3206
  %v3212 = vmul.f32 %v2373, %v3211
  %v3213 = vrcp.pop %v1795
  %v3214 = vmul.f32 %v1795, %v3213
  %v3215 = vsub.f32 1.0, %v3214
  %v3216 = vmul.f32 %v3213, %v3215
  %v3217 = vadd.f32 %v3213, %v3216
  %vm3218 = vweird.f32 %v1795
  %vm3219 = vweird.f32 %v3213
  %vm3220 = vmor %vm3218, %vm3219
  %v3221 = vsel %vm3220, %v3213, %v3217
  %v3222 = vand.u32 2147483647, %v1795
  %vm3223 = vcmp.eq.f32.partialorder %v3222, 8.507059e+37
  %v3224 = vand.u32 %v1795, 2147483648
  %v3225 = vor.u32 1.1754944e-38, %v3224
  %v3226 = vsel %vm3223, %v3225, %v3221
  %v3227 = vmul.f32 %v2376, %v3226
  %v3228 = vrcp.pop %v1798
  %v3229 = vmul.f32 %v1798, %v3228
  %v3230 = vsub.f32 1.0, %v3229
  %v3231 = vmul.f32 %v3228, %v3230
  %v3232 = vadd.f32 %v3228, %v3231
  %vm3233 = vweird.f32 %v1798
  %vm3234 = vweird.f32 %v3228
  %vm3235 = vmor %vm3233, %vm3234
  %v3236 = vsel %vm3235, %v3228, %v3232
  %v3237 = vand.u32 2147483647, %v1798
  %vm3238 = vcmp.eq.f32.partialorder %v3237, 8.507059e+37
  %v3239 = vand.u32 %v1798, 2147483648
  %v3240 = vor.u32 1.1754944e-38, %v3239
  %v3241 = vsel %vm3238, %v3240, %v3236
  %v3242 = vmul.f32 %v2379, %v3241
  %v3243 = vrcp.pop %v1801
  %v3244 = vmul.f32 %v1801, %v3243
  %v3245 = vsub.f32 1.0, %v3244
  %v3246 = vmul.f32 %v3243, %v3245
  %v3247 = vadd.f32 %v3243, %v3246
  %vm3248 = vweird.f32 %v1801
  %vm3249 = vweird.f32 %v3243
  %vm3250 = vmor %vm3248, %vm3249
  %v3251 = vsel %vm3250, %v3243, %v3247
  %v3252 = vand.u32 2147483647, %v1801
  %vm3253 = vcmp.eq.f32.partialorder %v3252, 8.507059e+37
  %v3254 = vand.u32 %v1801, 2147483648
  %v3255 = vor.u32 1.1754944e-38, %v3254
  %v3256 = vsel %vm3253, %v3255, %v3251
  %v3257 = vmul.f32 %v2382, %v3256
  %v3258 = vrcp.pop %v1804
  %v3259 = vmul.f32 %v1804, %v3258
  %v3260 = vsub.f32 1.0, %v3259
  %v3261 = vmul.f32 %v3258, %v3260
  %v3262 = vadd.f32 %v3258, %v3261
  %vm3263 = vweird.f32 %v1804
  %vm3264 = vweird.f32 %v3258
  %vm3265 = vmor %vm3263, %vm3264
  %v3266 = vsel %vm3265, %v3258, %v3262
  %v3267 = vand.u32 2147483647, %v1804
  %vm3268 = vcmp.eq.f32.partialorder %v3267, 8.507059e+37
  %v3269 = vand.u32 %v1804, 2147483648
  %v3270 = vor.u32 1.1754944e-38, %v3269
  %v3271 = vsel %vm3268, %v3270, %v3266
  %v3272 = vmul.f32 %v2385, %v3271
  %v3273 = vrcp.pop %v1807
  %v3274 = vmul.f32 %v1807, %v3273
  %v3275 = vsub.f32 1.0, %v3274
  %v3276 = vmul.f32 %v3273, %v3275
  %v3277 = vadd.f32 %v3273, %v3276
  %vm3278 = vweird.f32 %v1807
  %vm3279 = vweird.f32 %v3273
  %vm3280 = vmor %vm3278, %vm3279
  %v3281 = vsel %vm3280, %v3273, %v3277
  %v3282 = vand.u32 2147483647, %v1807
  %vm3283 = vcmp.eq.f32.partialorder %v3282, 8.507059e+37
  %v3284 = vand.u32 %v1807, 2147483648
  %v3285 = vor.u32 1.1754944e-38, %v3284
  %v3286 = vsel %vm3283, %v3285, %v3281
  %v3287 = vmul.f32 %v2388, %v3286
  %v3288 = vrcp.pop %v1810
  %v3289 = vmul.f32 %v1810, %v3288
  %v3290 = vsub.f32 1.0, %v3289
  %v3291 = vmul.f32 %v3288, %v3290
  %v3292 = vadd.f32 %v3288, %v3291
  %vm3293 = vweird.f32 %v1810
  %vm3294 = vweird.f32 %v3288
  %vm3295 = vmor %vm3293, %vm3294
  %v3296 = vsel %vm3295, %v3288, %v3292
  %v3297 = vand.u32 2147483647, %v1810
  %vm3298 = vcmp.eq.f32.partialorder %v3297, 8.507059e+37
  %v3299 = vand.u32 %v1810, 2147483648
  %v3300 = vor.u32 1.1754944e-38, %v3299
  %v3301 = vsel %vm3298, %v3300, %v3296
  %v3302 = vmul.f32 %v2456, %v3301
  %v3303 = vrcp.pop %v1813
  %v3304 = vmul.f32 %v1813, %v3303
  %v3305 = vsub.f32 1.0, %v3304
  %v3306 = vmul.f32 %v3303, %v3305
  %v3307 = vadd.f32 %v3303, %v3306
  %vm3308 = vweird.f32 %v1813
  %vm3309 = vweird.f32 %v3303
  %vm3310 = vmor %vm3308, %vm3309
  %v3311 = vsel %vm3310, %v3303, %v3307
  %v3312 = vand.u32 2147483647, %v1813
  %vm3313 = vcmp.eq.f32.partialorder %v3312, 8.507059e+37
  %v3314 = vand.u32 %v1813, 2147483648
  %v3315 = vor.u32 1.1754944e-38, %v3314
  %v3316 = vsel %vm3313, %v3315, %v3311
  %v3317 = vmul.f32 %v2459, %v3316
  %v3318 = vrcp.pop %v1816
  %v3319 = vmul.f32 %v1816, %v3318
  %v3320 = vsub.f32 1.0, %v3319
  %v3321 = vmul.f32 %v3318, %v3320
  %v3322 = vadd.f32 %v3318, %v3321
  %vm3323 = vweird.f32 %v1816
  %vm3324 = vweird.f32 %v3318
  %vm3325 = vmor %vm3323, %vm3324
  %v3326 = vsel %vm3325, %v3318, %v3322
  %v3327 = vand.u32 2147483647, %v1816
  %vm3328 = vcmp.eq.f32.partialorder %v3327, 8.507059e+37
  %v3329 = vand.u32 %v1816, 2147483648
  %v3330 = vor.u32 1.1754944e-38, %v3329
  %v3331 = vsel %vm3328, %v3330, %v3326
  %v3332 = vmul.f32 %v2462, %v3331
  %v3333 = vrcp.pop %v1819
  %v3334 = vmul.f32 %v1819, %v3333
  %v3335 = vsub.f32 1.0, %v3334
  %v3336 = vmul.f32 %v3333, %v3335
  %v3337 = vadd.f32 %v3333, %v3336
  %vm3338 = vweird.f32 %v1819
  %vm3339 = vweird.f32 %v3333
  %vm3340 = vmor %vm3338, %vm3339
  %v3341 = vsel %vm3340, %v3333, %v3337
  %v3342 = vand.u32 2147483647, %v1819
  %vm3343 = vcmp.eq.f32.partialorder %v3342, 8.507059e+37
  %v3344 = vand.u32 %v1819, 2147483648
  %v3345 = vor.u32 1.1754944e-38, %v3344
  %v3346 = vsel %vm3343, %v3345, %v3341
  %v3347 = vmul.f32 %v2465, %v3346
  %v3348 = vrcp.pop %v1822
  %v3349 = vmul.f32 %v1822, %v3348
  %v3350 = vsub.f32 1.0, %v3349
  %v3351 = vmul.f32 %v3348, %v3350
  %v3352 = vadd.f32 %v3348, %v3351
  %vm3353 = vweird.f32 %v1822
  %vm3354 = vweird.f32 %v3348
  %vm3355 = vmor %vm3353, %vm3354
  %v3356 = vsel %vm3355, %v3348, %v3352
  %v3357 = vand.u32 2147483647, %v1822
  %vm3358 = vcmp.eq.f32.partialorder %v3357, 8.507059e+37
  %v3359 = vand.u32 %v1822, 2147483648
  %v3360 = vor.u32 1.1754944e-38, %v3359
  %v3361 = vsel %vm3358, %v3360, %v3356
  %v3362 = vmul.f32 %v2468, %v3361
  %v3363 = vrcp.pop %v1825
  %v3364 = vmul.f32 %v1825, %v3363
  %v3365 = vsub.f32 1.0, %v3364
  %v3366 = vmul.f32 %v3363, %v3365
  %v3367 = vadd.f32 %v3363, %v3366
  %vm3368 = vweird.f32 %v1825
  %vm3369 = vweird.f32 %v3363
  %vm3370 = vmor %vm3368, %vm3369
  %v3371 = vsel %vm3370, %v3363, %v3367
  %v3372 = vand.u32 2147483647, %v1825
  %vm3373 = vcmp.eq.f32.partialorder %v3372, 8.507059e+37
  %v3374 = vand.u32 %v1825, 2147483648
  %v3375 = vor.u32 1.1754944e-38, %v3374
  %v3376 = vsel %vm3373, %v3375, %v3371
  %v3377 = vmul.f32 %v2471, %v3376
  %v3378 = vrcp.pop %v1828
  %v3379 = vmul.f32 %v1828, %v3378
  %v3380 = vsub.f32 1.0, %v3379
  %v3381 = vmul.f32 %v3378, %v3380
  %v3382 = vadd.f32 %v3378, %v3381
  %vm3383 = vweird.f32 %v1828
  %vm3384 = vweird.f32 %v3378
  %vm3385 = vmor %vm3383, %vm3384
  %v3386 = vsel %vm3385, %v3378, %v3382
  %v3387 = vand.u32 2147483647, %v1828
  %vm3388 = vcmp.eq.f32.partialorder %v3387, 8.507059e+37
  %v3389 = vand.u32 %v1828, 2147483648
  %v3390 = vor.u32 1.1754944e-38, %v3389
  %v3391 = vsel %vm3388, %v3390, %v3386
  %v3392 = vmul.f32 %v2474, %v3391
  %v3393 = vrcp.pop %v1831
  %v3394 = vmul.f32 %v1831, %v3393
  %v3395 = vsub.f32 1.0, %v3394
  %v3396 = vmul.f32 %v3393, %v3395
  %v3397 = vadd.f32 %v3393, %v3396
  %vm3398 = vweird.f32 %v1831
  %vm3399 = vweird.f32 %v3393
  %vm3400 = vmor %vm3398, %vm3399
  %v3401 = vsel %vm3400, %v3393, %v3397
  %v3402 = vand.u32 2147483647, %v1831
  %vm3403 = vcmp.eq.f32.partialorder %v3402, 8.507059e+37
  %v3404 = vand.u32 %v1831, 2147483648
  %v3405 = vor.u32 1.1754944e-38, %v3404
  %v3406 = vsel %vm3403, %v3405, %v3401
  %v3407 = vmul.f32 %v2477, %v3406
  %v3408 = vrcp.pop %v1834
  %v3409 = vmul.f32 %v1834, %v3408
  %v3410 = vsub.f32 1.0, %v3409
  %v3411 = vmul.f32 %v3408, %v3410
  %v3412 = vadd.f32 %v3408, %v3411
  %vm3413 = vweird.f32 %v1834
  %vm3414 = vweird.f32 %v3408
  %vm3415 = vmor %vm3413, %vm3414
  %v3416 = vsel %vm3415, %v3408, %v3412
  %v3417 = vand.u32 2147483647, %v1834
  %vm3418 = vcmp.eq.f32.partialorder %v3417, 8.507059e+37
  %v3419 = vand.u32 %v1834, 2147483648
  %v3420 = vor.u32 1.1754944e-38, %v3419
  %v3421 = vsel %vm3418, %v3420, %v3416
  %v3422 = vmul.f32 %v2545, %v3421
  %v3423 = vrcp.pop %v1837
  %v3424 = vmul.f32 %v1837, %v3423
  %v3425 = vsub.f32 1.0, %v3424
  %v3426 = vmul.f32 %v3423, %v3425
  %v3427 = vadd.f32 %v3423, %v3426
  %vm3428 = vweird.f32 %v1837
  %vm3429 = vweird.f32 %v3423
  %vm3430 = vmor %vm3428, %vm3429
  %v3431 = vsel %vm3430, %v3423, %v3427
  %v3432 = vand.u32 2147483647, %v1837
  %vm3433 = vcmp.eq.f32.partialorder %v3432, 8.507059e+37
  %v3434 = vand.u32 %v1837, 2147483648
  %v3435 = vor.u32 1.1754944e-38, %v3434
  %v3436 = vsel %vm3433, %v3435, %v3431
  %v3437 = vmul.f32 %v2548, %v3436
  %v3438 = vrcp.pop %v1840
  %v3439 = vmul.f32 %v1840, %v3438
  %v3440 = vsub.f32 1.0, %v3439
  %v3441 = vmul.f32 %v3438, %v3440
  %v3442 = vadd.f32 %v3438, %v3441
  %vm3443 = vweird.f32 %v1840
  %vm3444 = vweird.f32 %v3438
  %vm3445 = vmor %vm3443, %vm3444
  %v3446 = vsel %vm3445, %v3438, %v3442
  %v3447 = vand.u32 2147483647, %v1840
  %vm3448 = vcmp.eq.f32.partialorder %v3447, 8.507059e+37
  %v3449 = vand.u32 %v1840, 2147483648
  %v3450 = vor.u32 1.1754944e-38, %v3449
  %v3451 = vsel %vm3448, %v3450, %v3446
  %v3452 = vmul.f32 %v2551, %v3451
  %v3453 = vrcp.pop %v1843
  %v3454 = vmul.f32 %v1843, %v3453
  %v3455 = vsub.f32 1.0, %v3454
  %v3456 = vmul.f32 %v3453, %v3455
  %v3457 = vadd.f32 %v3453, %v3456
  %vm3458 = vweird.f32 %v1843
  %vm3459 = vweird.f32 %v3453
  %vm3460 = vmor %vm3458, %vm3459
  %v3461 = vsel %vm3460, %v3453, %v3457
  %v3462 = vand.u32 2147483647, %v1843
  %vm3463 = vcmp.eq.f32.partialorder %v3462, 8.507059e+37
  %v3464 = vand.u32 %v1843, 2147483648
  %v3465 = vor.u32 1.1754944e-38, %v3464
  %v3466 = vsel %vm3463, %v3465, %v3461
  %v3467 = vmul.f32 %v2554, %v3466
  %v3468 = vrcp.pop %v1846
  %v3469 = vmul.f32 %v1846, %v3468
  %v3470 = vsub.f32 1.0, %v3469
  %v3471 = vmul.f32 %v3468, %v3470
  %v3472 = vadd.f32 %v3468, %v3471
  %vm3473 = vweird.f32 %v1846
  %vm3474 = vweird.f32 %v3468
  %vm3475 = vmor %vm3473, %vm3474
  %v3476 = vsel %vm3475, %v3468, %v3472
  %v3477 = vand.u32 2147483647, %v1846
  %vm3478 = vcmp.eq.f32.partialorder %v3477, 8.507059e+37
  %v3479 = vand.u32 %v1846, 2147483648
  %v3480 = vor.u32 1.1754944e-38, %v3479
  %v3481 = vsel %vm3478, %v3480, %v3476
  %v3482 = vmul.f32 %v2557, %v3481
  %v3483 = vrcp.pop %v1849
  %v3484 = vmul.f32 %v1849, %v3483
  %v3485 = vsub.f32 1.0, %v3484
  %v3486 = vmul.f32 %v3483, %v3485
  %v3487 = vadd.f32 %v3483, %v3486
  %vm3488 = vweird.f32 %v1849
  %vm3489 = vweird.f32 %v3483
  %vm3490 = vmor %vm3488, %vm3489
  %v3491 = vsel %vm3490, %v3483, %v3487
  %v3492 = vand.u32 2147483647, %v1849
  %vm3493 = vcmp.eq.f32.partialorder %v3492, 8.507059e+37
  %v3494 = vand.u32 %v1849, 2147483648
  %v3495 = vor.u32 1.1754944e-38, %v3494
  %v3496 = vsel %vm3493, %v3495, %v3491
  %v3497 = vmul.f32 %v2560, %v3496
  %v3498 = vrcp.pop %v1852
  %v3499 = vmul.f32 %v1852, %v3498
  %v3500 = vsub.f32 1.0, %v3499
  %v3501 = vmul.f32 %v3498, %v3500
  %v3502 = vadd.f32 %v3498, %v3501
  %vm3503 = vweird.f32 %v1852
  %vm3504 = vweird.f32 %v3498
  %vm3505 = vmor %vm3503, %vm3504
  %v3506 = vsel %vm3505, %v3498, %v3502
  %v3507 = vand.u32 2147483647, %v1852
  %vm3508 = vcmp.eq.f32.partialorder %v3507, 8.507059e+37
  %v3509 = vand.u32 %v1852, 2147483648
  %v3510 = vor.u32 1.1754944e-38, %v3509
  %v3511 = vsel %vm3508, %v3510, %v3506
  %v3512 = vmul.f32 %v2563, %v3511
  %v3513 = vrcp.pop %v1855
  %v3514 = vmul.f32 %v1855, %v3513
  %v3515 = vsub.f32 1.0, %v3514
  %v3516 = vmul.f32 %v3513, %v3515
  %v3517 = vadd.f32 %v3513, %v3516
  %vm3518 = vweird.f32 %v1855
  %vm3519 = vweird.f32 %v3513
  %vm3520 = vmor %vm3518, %vm3519
  %v3521 = vsel %vm3520, %v3513, %v3517
  %v3522 = vand.u32 2147483647, %v1855
  %vm3523 = vcmp.eq.f32.partialorder %v3522, 8.507059e+37
  %v3524 = vand.u32 %v1855, 2147483648
  %v3525 = vor.u32 1.1754944e-38, %v3524
  %v3526 = vsel %vm3523, %v3525, %v3521
  %v3527 = vmul.f32 %v2566, %v3526
  %v3528 = vld [vmem:[%s3] sm:$0xff]
  %v3529 = vld [vmem:[%s3 + $0x8] sm:$0xff]
  %v3530 = vld [vmem:[%s3 + $0x10] sm:$0xff]
  %v3531 = vld [vmem:[%s3 + $0x18] sm:$0xff]
  %v3532 = vld [vmem:[%s3 + $0x20] sm:$0xff]
  %v3533 = vld [vmem:[%s3 + $0x28] sm:$0xff]
  %v3534 = vld [vmem:[%s3 + $0x30] sm:$0xff]
  %v3535 = vld [vmem:[%s3 + $0x38] sm:$0xff]
  %v3536 = vld [vmem:[%s3 + $0x40] sm:$0xff]
  %v3537 = vld [vmem:[%s3 + $0x48] sm:$0xff]
  %v3538 = vld [vmem:[%s3 + $0x50] sm:$0xff]
  %v3539 = vld [vmem:[%s3 + $0x58] sm:$0xff]
  %v3540 = vld [vmem:[%s3 + $0x60] sm:$0xff]
  %v3541 = vld [vmem:[%s3 + $0x68] sm:$0xff]
  %v3542 = vld [vmem:[%s3 + $0x70] sm:$0xff]
  %v3543 = vld [vmem:[%s3 + $0x78] sm:$0xff]
  %v3544 = vld [vmem:[%s3 + $0x80] sm:$0xff]
  %v3545 = vld [vmem:[%s3 + $0x88] sm:$0xff]
  %v3546 = vld [vmem:[%s3 + $0x90] sm:$0xff]
  %v3547 = vld [vmem:[%s3 + $0x98] sm:$0xff]
  %v3548 = vld [vmem:[%s3 + $0xa0] sm:$0xff]
  %v3549 = vld [vmem:[%s3 + $0xa8] sm:$0xff]
  %v3550 = vld [vmem:[%s3 + $0xb0] sm:$0xff]
  %v3551 = vld [vmem:[%s3 + $0xb8] sm:$0xff]
  %v3552 = vld [vmem:[%s3 + $0xc0] sm:$0xff]
  %v3553 = vld [vmem:[%s3 + $0xc8] sm:$0xff]
  %v3554 = vld [vmem:[%s3 + $0xd0] sm:$0xff]
  %v3555 = vld [vmem:[%s3 + $0xd8] sm:$0xff]
  %v3556 = vld [vmem:[%s3 + $0xe0] sm:$0xff]
  %v3557 = vld [vmem:[%s3 + $0xe8] sm:$0xff]
  %v3558 = vld [vmem:[%s3 + $0xf0] sm:$0xff]
  %v3559 = vld [vmem:[%s3 + $0xf8] sm:$0xff]
  %v3560 = vld [vmem:[%s3 + $0x100] sm:$0xff]
  %v3561 = vld [vmem:[%s3 + $0x108] sm:$0xff]
  %v3562 = vld [vmem:[%s3 + $0x110] sm:$0xff]
  %v3563 = vld [vmem:[%s3 + $0x118] sm:$0xff]
  %v3564 = vld [vmem:[%s3 + $0x120] sm:$0xff]
  %v3565 = vld [vmem:[%s3 + $0x128] sm:$0xff]
  %v3566 = vld [vmem:[%s3 + $0x130] sm:$0xff]
  %v3567 = vld [vmem:[%s3 + $0x138] sm:$0xff]
  %v3568 = vld [vmem:[%s3 + $0x140] sm:$0xff]
  %v3569 = vld [vmem:[%s3 + $0x148] sm:$0xff]
  %v3570 = vld [vmem:[%s3 + $0x150] sm:$0xff]
  %v3571 = vld [vmem:[%s3 + $0x158] sm:$0xff]
  %v3572 = vld [vmem:[%s3 + $0x160] sm:$0xff]
  %v3573 = vld [vmem:[%s3 + $0x168] sm:$0xff]
  %v3574 = vld [vmem:[%s3 + $0x170] sm:$0xff]
  %v3575 = vld [vmem:[%s3 + $0x178] sm:$0xff]
  %v3576 = vld [vmem:[%s3 + $0x180] sm:$0xff]
  %v3577 = vld [vmem:[%s3 + $0x188] sm:$0xff]
  %v3578 = vld [vmem:[%s3 + $0x190] sm:$0xff]
  %v3579 = vld [vmem:[%s3 + $0x198] sm:$0xff]
  %v3580 = vld [vmem:[%s3 + $0x1a0] sm:$0xff]
  %v3581 = vld [vmem:[%s3 + $0x1a8] sm:$0xff]
  %v3582 = vld [vmem:[%s3 + $0x1b0] sm:$0xff]
  %v3583 = vld [vmem:[%s3 + $0x1b8] sm:$0xff]
  %v3584 = vld [vmem:[%s3 + $0x1c0] sm:$0xff]
  %v3585 = vld [vmem:[%s3 + $0x1c8] sm:$0xff]
  %v3586 = vld [vmem:[%s3 + $0x1d0] sm:$0xff]
  %v3587 = vld [vmem:[%s3 + $0x1d8] sm:$0xff]
  %v3588 = vld [vmem:[%s3 + $0x1e0] sm:$0xff]
  %v3589 = vld [vmem:[%s3 + $0x1e8] sm:$0xff]
  %v3590 = vld [vmem:[%s3 + $0x1f0] sm:$0xff]
  %v3591 = vld [vmem:[%s3 + $0x1f8] sm:$0xff]
  %v3592 = vld [vmem:[%s3 + $0x200] sm:$0xff]
  %v3593 = vld [vmem:[%s3 + $0x208] sm:$0xff]
  %v3594 = vld [vmem:[%s3 + $0x210] sm:$0xff]
  %v3595 = vld [vmem:[%s3 + $0x218] sm:$0xff]
  %v3596 = vld [vmem:[%s3 + $0x220] sm:$0xff]
  %v3597 = vld [vmem:[%s3 + $0x228] sm:$0xff]
  %v3598 = vld [vmem:[%s3 + $0x230] sm:$0xff]
  %v3599 = vld [vmem:[%s3 + $0x238] sm:$0xff]
  %v3600 = vld [vmem:[%s4] sm:$0xff]
  %v3601 = vld [vmem:[%s4 + $0x8] sm:$0xff]
  %v3602 = vld [vmem:[%s4 + $0x10] sm:$0xff]
  %v3603 = vld [vmem:[%s4 + $0x18] sm:$0xff]
  %v3604 = vld [vmem:[%s4 + $0x20] sm:$0xff]
  %v3605 = vld [vmem:[%s4 + $0x28] sm:$0xff]
  %v3606 = vld [vmem:[%s4 + $0x30] sm:$0xff]
  %v3607 = vld [vmem:[%s4 + $0x38] sm:$0xff]
  %v3608 = vld [vmem:[%s4 + $0x40] sm:$0xff]
  %v3609 = vld [vmem:[%s4 + $0x48] sm:$0xff]
  %v3610 = vld [vmem:[%s4 + $0x50] sm:$0xff]
  %v3611 = vld [vmem:[%s4 + $0x58] sm:$0xff]
  %v3612 = vld [vmem:[%s4 + $0x60] sm:$0xff]
  %v3613 = vld [vmem:[%s4 + $0x68] sm:$0xff]
  %v3614 = vld [vmem:[%s4 + $0x70] sm:$0xff]
  %v3615 = vld [vmem:[%s4 + $0x78] sm:$0xff]
  %v3616 = vld [vmem:[%s4 + $0x80] sm:$0xff]
  %v3617 = vld [vmem:[%s4 + $0x88] sm:$0xff]
  %v3618 = vld [vmem:[%s4 + $0x90] sm:$0xff]
  %v3619 = vld [vmem:[%s4 + $0x98] sm:$0xff]
  %v3620 = vld [vmem:[%s4 + $0xa0] sm:$0xff]
  %v3621 = vld [vmem:[%s4 + $0xa8] sm:$0xff]
  %v3622 = vld [vmem:[%s4 + $0xb0] sm:$0xff]
  %v3623 = vld [vmem:[%s4 + $0xb8] sm:$0xff]
  %v3624 = vld [vmem:[%s4 + $0xc0] sm:$0xff]
  %v3625 = vld [vmem:[%s4 + $0xc8] sm:$0xff]
  %v3626 = vld [vmem:[%s4 + $0xd0] sm:$0xff]
  %v3627 = vld [vmem:[%s4 + $0xd8] sm:$0xff]
  %v3628 = vld [vmem:[%s4 + $0xe0] sm:$0xff]
  %v3629 = vld [vmem:[%s4 + $0xe8] sm:$0xff]
  %v3630 = vld [vmem:[%s4 + $0xf0] sm:$0xff]
  %v3631 = vld [vmem:[%s4 + $0xf8] sm:$0xff]
  %v3632 = vld [vmem:[%s4 + $0x140] sm:$0xff]
  %v3633 = vld [vmem:[%s4 + $0x148] sm:$0xff]
  %v3634 = vld [vmem:[%s4 + $0x150] sm:$0xff]
  %v3635 = vld [vmem:[%s4 + $0x158] sm:$0xff]
  %v3636 = vld [vmem:[%s4 + $0x160] sm:$0xff]
  %v3637 = vld [vmem:[%s4 + $0x168] sm:$0xff]
  %v3638 = vld [vmem:[%s4 + $0x170] sm:$0xff]
  %v3639 = vld [vmem:[%s4 + $0x178] sm:$0xff]
  %v3640 = vld [vmem:[%s4 + $0x180] sm:$0xff]
  %v3641 = vld [vmem:[%s4 + $0x188] sm:$0xff]
  %v3642 = vld [vmem:[%s4 + $0x190] sm:$0xff]
  %v3643 = vld [vmem:[%s4 + $0x198] sm:$0xff]
  %v3644 = vld [vmem:[%s4 + $0x1a0] sm:$0xff]
  %v3645 = vld [vmem:[%s4 + $0x1a8] sm:$0xff]
  %v3646 = vld [vmem:[%s4 + $0x1b0] sm:$0xff]
  %v3647 = vld [vmem:[%s4 + $0x1b8] sm:$0xff]
  %v3648 = vld [vmem:[%s4 + $0x1c0] sm:$0xff]
  %v3649 = vld [vmem:[%s4 + $0x1c8] sm:$0xff]
  %v3650 = vld [vmem:[%s4 + $0x1d0] sm:$0xff]
  %v3651 = vld [vmem:[%s4 + $0x1d8] sm:$0xff]
  %v3652 = vld [vmem:[%s4 + $0x1e0] sm:$0xff]
  %v3653 = vld [vmem:[%s4 + $0x1e8] sm:$0xff]
  %v3654 = vld [vmem:[%s4 + $0x1f0] sm:$0xff]
  %v3655 = vld [vmem:[%s4 + $0x1f8] sm:$0xff]
  %v3656 = vld [vmem:[%s4 + $0x200] sm:$0xff]
  %v3657 = vld [vmem:[%s4 + $0x208] sm:$0xff]
  %v3658 = vld [vmem:[%s4 + $0x210] sm:$0xff]
  %v3659 = vld [vmem:[%s4 + $0x218] sm:$0xff]
  %v3660 = vld [vmem:[%s4 + $0x220] sm:$0xff]
  %v3661 = vld [vmem:[%s4 + $0x228] sm:$0xff]
  %v3662 = vld [vmem:[%s4 + $0x230] sm:$0xff]
  %v3663 = vld [vmem:[%s4 + $0x238] sm:$0xff]
  %3672 = vrot.lane.b32.xlu0 %v3560, 64
  %v3673 = vpop.permute.xlu0 %3672
  %3674 = vrot.lane.b32.xlu0 %v3561, 64
  %v3675 = vpop.permute.xlu0 %3674
  %3676 = vrot.lane.b32.xlu0 %v3562, 64
  %v3677 = vpop.permute.xlu0 %3676
  %3678 = vrot.lane.b32.xlu0 %v3563, 64
  %v3679 = vpop.permute.xlu0 %3678
  %3680 = vrot.lane.b32.xlu0 %v3564, 64
  %v3681 = vpop.permute.xlu0 %3680
  %3682 = vrot.lane.b32.xlu0 %v3565, 64
  %v3683 = vpop.permute.xlu0 %3682
  %3684 = vrot.lane.b32.xlu0 %v3566, 64
  %v3685 = vpop.permute.xlu0 %3684
  %3686 = vrot.lane.b32.xlu0 %v3567, 64
  %v3687 = vpop.permute.xlu0 %3686
  %v3696 = vmul.f32 %v312, %v3673
  %v3697 = vmul.f32 %v315, %v3675
  %v3698 = vmul.f32 %v318, %v3677
  %v3699 = vmul.f32 %v321, %v3679
  %v3700 = vmul.f32 %v324, %v3681
  %v3701 = vmul.f32 %v327, %v3683
  %v3702 = vmul.f32 %v330, %v3685
  %v3703 = vmul.f32 %v333, %v3687
  %v3704 = vmul.f32 %v336, %v3673
  %v3705 = vmul.f32 %v339, %v3675
  %v3706 = vmul.f32 %v342, %v3677
  %v3707 = vmul.f32 %v345, %v3679
  %v3708 = vmul.f32 %v348, %v3681
  %v3709 = vmul.f32 %v351, %v3683
  %v3710 = vmul.f32 %v354, %v3685
  %v3711 = vmul.f32 %v357, %v3687
  %v3712 = vmul.f32 %v360, %v3673
  %v3713 = vmul.f32 %v363, %v3675
  %v3714 = vmul.f32 %v366, %v3677
  %v3715 = vmul.f32 %v369, %v3679
  %v3716 = vmul.f32 %v372, %v3681
  %v3717 = vmul.f32 %v375, %v3683
  %v3718 = vmul.f32 %v378, %v3685
  %v3719 = vmul.f32 %v381, %v3687
  %v3720 = vmul.f32 %v384, %v3673
  %v3721 = vmul.f32 %v387, %v3675
  %v3722 = vmul.f32 %v390, %v3677
  %v3723 = vmul.f32 %v393, %v3679
  %v3724 = vmul.f32 %v396, %v3681
  %v3725 = vmul.f32 %v399, %v3683
  %v3726 = vmul.f32 %v402, %v3685
  %v3727 = vmul.f32 %v405, %v3687
  %v3728 = vmul.f32 %v408, %v3673
  %v3729 = vmul.f32 %v411, %v3675
  %v3730 = vmul.f32 %v414, %v3677
  %v3731 = vmul.f32 %v417, %v3679
  %v3732 = vmul.f32 %v420, %v3681
  %v3733 = vmul.f32 %v423, %v3683
  %v3734 = vmul.f32 %v426, %v3685
  %v3735 = vmul.f32 %v429, %v3687
  %v3736 = vmul.f32 %v432, %v3673
  %v3737 = vmul.f32 %v435, %v3675
  %v3738 = vmul.f32 %v438, %v3677
  %v3739 = vmul.f32 %v441, %v3679
  %v3740 = vmul.f32 %v444, %v3681
  %v3741 = vmul.f32 %v447, %v3683
  %v3742 = vmul.f32 %v450, %v3685
  %v3743 = vmul.f32 %v453, %v3687
  %v3744 = vmul.f32 %v456, %v3673
  %v3745 = vmul.f32 %v459, %v3675
  %v3746 = vmul.f32 %v462, %v3677
  %v3747 = vmul.f32 %v465, %v3679
  %v3748 = vmul.f32 %v468, %v3681
  %v3749 = vmul.f32 %v471, %v3683
  %v3750 = vmul.f32 %v474, %v3685
  %v3751 = vmul.f32 %v477, %v3687
  %v3752 = vmul.f32 %v480, %v3673
  %v3753 = vmul.f32 %v483, %v3675
  %v3754 = vmul.f32 %v486, %v3677
  %v3755 = vmul.f32 %v489, %v3679
  %v3756 = vmul.f32 %v492, %v3681
  %v3757 = vmul.f32 %v495, %v3683
  %v3758 = vmul.f32 %v498, %v3685
  %v3759 = vmul.f32 %v501, %v3687
  %3760 = vrot.lane.b32.xlu0 %v312, 41
  %v3761 = vpop.permute.xlu0 %3760
  %3762 = vrot.lane.b32.xlu0 %v315, 41
  %v3763 = vpop.permute.xlu0 %3762
  %3764 = vrot.lane.b32.xlu0 %v318, 41
  %v3765 = vpop.permute.xlu0 %3764
  %3766 = vrot.lane.b32.xlu0 %v321, 41
  %v3767 = vpop.permute.xlu0 %3766
  %3768 = vrot.lane.b32.xlu0 %v324, 41
  %v3769 = vpop.permute.xlu0 %3768
  %3770 = vrot.lane.b32.xlu0 %v327, 41
  %v3771 = vpop.permute.xlu0 %3770
  %3772 = vrot.lane.b32.xlu0 %v330, 41
  %v3773 = vpop.permute.xlu0 %3772
  %3774 = vrot.lane.b32.xlu0 %v333, 41
  %v3775 = vpop.permute.xlu0 %3774
  %3776 = vrot.lane.b32.xlu0 %v336, 41
  %v3777 = vpop.permute.xlu0 %3776
  %3778 = vrot.lane.b32.xlu0 %v339, 41
  %v3779 = vpop.permute.xlu0 %3778
  %3780 = vrot.lane.b32.xlu0 %v342, 41
  %v3781 = vpop.permute.xlu0 %3780
  %3782 = vrot.lane.b32.xlu0 %v345, 41
  %v3783 = vpop.permute.xlu0 %3782
  %3784 = vrot.lane.b32.xlu0 %v348, 41
  %v3785 = vpop.permute.xlu0 %3784
  %3786 = vrot.lane.b32.xlu0 %v351, 41
  %v3787 = vpop.permute.xlu0 %3786
  %3788 = vrot.lane.b32.xlu0 %v354, 41
  %v3789 = vpop.permute.xlu0 %3788
  %3790 = vrot.lane.b32.xlu0 %v357, 41
  %v3791 = vpop.permute.xlu0 %3790
  %3792 = vrot.lane.b32.xlu0 %v360, 41
  %v3793 = vpop.permute.xlu0 %3792
  %3794 = vrot.lane.b32.xlu0 %v363, 41
  %v3795 = vpop.permute.xlu0 %3794
  %3796 = vrot.lane.b32.xlu0 %v366, 41
  %v3797 = vpop.permute.xlu0 %3796
  %3798 = vrot.lane.b32.xlu0 %v369, 41
  %v3799 = vpop.permute.xlu0 %3798
  %3800 = vrot.lane.b32.xlu0 %v372, 41
  %v3801 = vpop.permute.xlu0 %3800
  %3802 = vrot.lane.b32.xlu0 %v375, 41
  %v3803 = vpop.permute.xlu0 %3802
  %3804 = vrot.lane.b32.xlu0 %v378, 41
  %v3805 = vpop.permute.xlu0 %3804
  %3806 = vrot.lane.b32.xlu0 %v381, 41
  %v3807 = vpop.permute.xlu0 %3806
  %3808 = vrot.lane.b32.xlu0 %v384, 41
  %v3809 = vpop.permute.xlu0 %3808
  %3810 = vrot.lane.b32.xlu0 %v387, 41
  %v3811 = vpop.permute.xlu0 %3810
  %3812 = vrot.lane.b32.xlu0 %v390, 41
  %v3813 = vpop.permute.xlu0 %3812
  %3814 = vrot.lane.b32.xlu0 %v393, 41
  %v3815 = vpop.permute.xlu0 %3814
  %3816 = vrot.lane.b32.xlu0 %v396, 41
  %v3817 = vpop.permute.xlu0 %3816
  %3818 = vrot.lane.b32.xlu0 %v399, 41
  %v3819 = vpop.permute.xlu0 %3818
  %3820 = vrot.lane.b32.xlu0 %v402, 41
  %v3821 = vpop.permute.xlu0 %3820
  %3822 = vrot.lane.b32.xlu0 %v405, 41
  %v3823 = vpop.permute.xlu0 %3822
  %3824 = vrot.lane.b32.xlu0 %v408, 41
  %v3825 = vpop.permute.xlu0 %3824
  %3826 = vrot.lane.b32.xlu0 %v411, 41
  %v3827 = vpop.permute.xlu0 %3826
  %3828 = vrot.lane.b32.xlu0 %v414, 41
  %v3829 = vpop.permute.xlu0 %3828
  %3830 = vrot.lane.b32.xlu0 %v417, 41
  %v3831 = vpop.permute.xlu0 %3830
  %3832 = vrot.lane.b32.xlu0 %v420, 41
  %v3833 = vpop.permute.xlu0 %3832
  %3834 = vrot.lane.b32.xlu0 %v423, 41
  %v3835 = vpop.permute.xlu0 %3834
  %3836 = vrot.lane.b32.xlu0 %v426, 41
  %v3837 = vpop.permute.xlu0 %3836
  %3838 = vrot.lane.b32.xlu0 %v429, 41
  %v3839 = vpop.permute.xlu0 %3838
  %3840 = vrot.lane.b32.xlu0 %v432, 41
  %v3841 = vpop.permute.xlu0 %3840
  %3842 = vrot.lane.b32.xlu0 %v435, 41
  %v3843 = vpop.permute.xlu0 %3842
  %3844 = vrot.lane.b32.xlu0 %v438, 41
  %v3845 = vpop.permute.xlu0 %3844
  %3846 = vrot.lane.b32.xlu0 %v441, 41
  %v3847 = vpop.permute.xlu0 %3846
  %3848 = vrot.lane.b32.xlu0 %v444, 41
  %v3849 = vpop.permute.xlu0 %3848
  %3850 = vrot.lane.b32.xlu0 %v447, 41
  %v3851 = vpop.permute.xlu0 %3850
  %3852 = vrot.lane.b32.xlu0 %v450, 41
  %v3853 = vpop.permute.xlu0 %3852
  %3854 = vrot.lane.b32.xlu0 %v453, 41
  %v3855 = vpop.permute.xlu0 %3854
  %3856 = vrot.lane.b32.xlu0 %v456, 41
  %v3857 = vpop.permute.xlu0 %3856
  %3858 = vrot.lane.b32.xlu0 %v459, 41
  %v3859 = vpop.permute.xlu0 %3858
  %3860 = vrot.lane.b32.xlu0 %v462, 41
  %v3861 = vpop.permute.xlu0 %3860
  %3862 = vrot.lane.b32.xlu0 %v465, 41
  %v3863 = vpop.permute.xlu0 %3862
  %3864 = vrot.lane.b32.xlu0 %v468, 41
  %v3865 = vpop.permute.xlu0 %3864
  %3866 = vrot.lane.b32.xlu0 %v471, 41
  %v3867 = vpop.permute.xlu0 %3866
  %3868 = vrot.lane.b32.xlu0 %v474, 41
  %v3869 = vpop.permute.xlu0 %3868
  %3870 = vrot.lane.b32.xlu0 %v477, 41
  %v3871 = vpop.permute.xlu0 %3870
  %3872 = vrot.lane.b32.xlu0 %v480, 41
  %v3873 = vpop.permute.xlu0 %3872
  %3874 = vrot.lane.b32.xlu0 %v483, 41
  %v3875 = vpop.permute.xlu0 %3874
  %3876 = vrot.lane.b32.xlu0 %v486, 41
  %v3877 = vpop.permute.xlu0 %3876
  %3878 = vrot.lane.b32.xlu0 %v489, 41
  %v3879 = vpop.permute.xlu0 %3878
  %3880 = vrot.lane.b32.xlu0 %v492, 41
  %v3881 = vpop.permute.xlu0 %3880
  %3882 = vrot.lane.b32.xlu0 %v495, 41
  %v3883 = vpop.permute.xlu0 %3882
  %3884 = vrot.lane.b32.xlu0 %v498, 41
  %v3885 = vpop.permute.xlu0 %3884
  %3886 = vrot.lane.b32.xlu0 %v501, 41
  %v3887 = vpop.permute.xlu0 %3886
  %3952 = vrot.lane.b32.xlu0 %v312, 73
  %v3953 = vpop.permute.xlu0 %3952
  %3954 = vrot.lane.b32.xlu0 %v315, 73
  %v3955 = vpop.permute.xlu0 %3954
  %3956 = vrot.lane.b32.xlu0 %v318, 73
  %v3957 = vpop.permute.xlu0 %3956
  %3958 = vrot.lane.b32.xlu0 %v321, 73
  %v3959 = vpop.permute.xlu0 %3958
  %3960 = vrot.lane.b32.xlu0 %v324, 73
  %v3961 = vpop.permute.xlu0 %3960
  %3962 = vrot.lane.b32.xlu0 %v327, 73
  %v3963 = vpop.permute.xlu0 %3962
  %3964 = vrot.lane.b32.xlu0 %v330, 73
  %v3965 = vpop.permute.xlu0 %3964
  %3966 = vrot.lane.b32.xlu0 %v333, 73
  %v3967 = vpop.permute.xlu0 %3966
  %3968 = vrot.lane.b32.xlu0 %v336, 73
  %v3969 = vpop.permute.xlu0 %3968
  %3970 = vrot.lane.b32.xlu0 %v339, 73
  %v3971 = vpop.permute.xlu0 %3970
  %3972 = vrot.lane.b32.xlu0 %v342, 73
  %v3973 = vpop.permute.xlu0 %3972
  %3974 = vrot.lane.b32.xlu0 %v345, 73
  %v3975 = vpop.permute.xlu0 %3974
  %3976 = vrot.lane.b32.xlu0 %v348, 73
  %v3977 = vpop.permute.xlu0 %3976
  %3978 = vrot.lane.b32.xlu0 %v351, 73
  %v3979 = vpop.permute.xlu0 %3978
  %3980 = vrot.lane.b32.xlu0 %v354, 73
  %v3981 = vpop.permute.xlu0 %3980
  %3982 = vrot.lane.b32.xlu0 %v357, 73
  %v3983 = vpop.permute.xlu0 %3982
  %3984 = vrot.lane.b32.xlu0 %v360, 73
  %v3985 = vpop.permute.xlu0 %3984
  %3986 = vrot.lane.b32.xlu0 %v363, 73
  %v3987 = vpop.permute.xlu0 %3986
  %3988 = vrot.lane.b32.xlu0 %v366, 73
  %v3989 = vpop.permute.xlu0 %3988
  %3990 = vrot.lane.b32.xlu0 %v369, 73
  %v3991 = vpop.permute.xlu0 %3990
  %3992 = vrot.lane.b32.xlu0 %v372, 73
  %v3993 = vpop.permute.xlu0 %3992
  %3994 = vrot.lane.b32.xlu0 %v375, 73
  %v3995 = vpop.permute.xlu0 %3994
  %3996 = vrot.lane.b32.xlu0 %v378, 73
  %v3997 = vpop.permute.xlu0 %3996
  %3998 = vrot.lane.b32.xlu0 %v381, 73
  %v3999 = vpop.permute.xlu0 %3998
  %4000 = vrot.lane.b32.xlu0 %v384, 73
  %v4001 = vpop.permute.xlu0 %4000
  %4002 = vrot.lane.b32.xlu0 %v387, 73
  %v4003 = vpop.permute.xlu0 %4002
  %4004 = vrot.lane.b32.xlu0 %v390, 73
  %v4005 = vpop.permute.xlu0 %4004
  %4006 = vrot.lane.b32.xlu0 %v393, 73
  %v4007 = vpop.permute.xlu0 %4006
  %4008 = vrot.lane.b32.xlu0 %v396, 73
  %v4009 = vpop.permute.xlu0 %4008
  %4010 = vrot.lane.b32.xlu0 %v399, 73
  %v4011 = vpop.permute.xlu0 %4010
  %4012 = vrot.lane.b32.xlu0 %v402, 73
  %v4013 = vpop.permute.xlu0 %4012
  %4014 = vrot.lane.b32.xlu0 %v405, 73
  %v4015 = vpop.permute.xlu0 %4014
  %4016 = vrot.lane.b32.xlu0 %v408, 73
  %v4017 = vpop.permute.xlu0 %4016
  %4018 = vrot.lane.b32.xlu0 %v411, 73
  %v4019 = vpop.permute.xlu0 %4018
  %4020 = vrot.lane.b32.xlu0 %v414, 73
  %v4021 = vpop.permute.xlu0 %4020
  %4022 = vrot.lane.b32.xlu0 %v417, 73
  %v4023 = vpop.permute.xlu0 %4022
  %4024 = vrot.lane.b32.xlu0 %v420, 73
  %v4025 = vpop.permute.xlu0 %4024
  %4026 = vrot.lane.b32.xlu0 %v423, 73
  %v4027 = vpop.permute.xlu0 %4026
  %4028 = vrot.lane.b32.xlu0 %v426, 73
  %v4029 = vpop.permute.xlu0 %4028
  %4030 = vrot.lane.b32.xlu0 %v429, 73
  %v4031 = vpop.permute.xlu0 %4030
  %4032 = vrot.lane.b32.xlu0 %v432, 73
  %v4033 = vpop.permute.xlu0 %4032
  %4034 = vrot.lane.b32.xlu0 %v435, 73
  %v4035 = vpop.permute.xlu0 %4034
  %4036 = vrot.lane.b32.xlu0 %v438, 73
  %v4037 = vpop.permute.xlu0 %4036
  %4038 = vrot.lane.b32.xlu0 %v441, 73
  %v4039 = vpop.permute.xlu0 %4038
  %4040 = vrot.lane.b32.xlu0 %v444, 73
  %v4041 = vpop.permute.xlu0 %4040
  %4042 = vrot.lane.b32.xlu0 %v447, 73
  %v4043 = vpop.permute.xlu0 %4042
  %4044 = vrot.lane.b32.xlu0 %v450, 73
  %v4045 = vpop.permute.xlu0 %4044
  %4046 = vrot.lane.b32.xlu0 %v453, 73
  %v4047 = vpop.permute.xlu0 %4046
  %4048 = vrot.lane.b32.xlu0 %v456, 73
  %v4049 = vpop.permute.xlu0 %4048
  %4050 = vrot.lane.b32.xlu0 %v459, 73
  %v4051 = vpop.permute.xlu0 %4050
  %4052 = vrot.lane.b32.xlu0 %v462, 73
  %v4053 = vpop.permute.xlu0 %4052
  %4054 = vrot.lane.b32.xlu0 %v465, 73
  %v4055 = vpop.permute.xlu0 %4054
  %4056 = vrot.lane.b32.xlu0 %v468, 73
  %v4057 = vpop.permute.xlu0 %4056
  %4058 = vrot.lane.b32.xlu0 %v471, 73
  %v4059 = vpop.permute.xlu0 %4058
  %4060 = vrot.lane.b32.xlu0 %v474, 73
  %v4061 = vpop.permute.xlu0 %4060
  %4062 = vrot.lane.b32.xlu0 %v477, 73
  %v4063 = vpop.permute.xlu0 %4062
  %4064 = vrot.lane.b32.xlu0 %v480, 73
  %v4065 = vpop.permute.xlu0 %4064
  %4066 = vrot.lane.b32.xlu0 %v483, 73
  %v4067 = vpop.permute.xlu0 %4066
  %4068 = vrot.lane.b32.xlu0 %v486, 73
  %v4069 = vpop.permute.xlu0 %4068
  %4070 = vrot.lane.b32.xlu0 %v489, 73
  %v4071 = vpop.permute.xlu0 %4070
  %4072 = vrot.lane.b32.xlu0 %v492, 73
  %v4073 = vpop.permute.xlu0 %4072
  %4074 = vrot.lane.b32.xlu0 %v495, 73
  %v4075 = vpop.permute.xlu0 %4074
  %4076 = vrot.lane.b32.xlu0 %v498, 73
  %v4077 = vpop.permute.xlu0 %4076
  %4078 = vrot.lane.b32.xlu0 %v501, 73
  %v4079 = vpop.permute.xlu0 %4078
  %vm4144 = vcmask 72704
  %v4145 = vsel %vm4144, %v3761, %v3953
  %v4146 = vsel %vm4144, %v3763, %v3955
  %v4147 = vsel %vm4144, %v3765, %v3957
  %v4148 = vsel %vm4144, %v3767, %v3959
  %v4149 = vsel %vm4144, %v3769, %v3961
  %v4150 = vsel %vm4144, %v3771, %v3963
  %v4151 = vsel %vm4144, %v3773, %v3965
  %v4152 = vsel %vm4144, %v3775, %v3967
  %v4153 = vsel %vm4144, %v3777, %v3969
  %v4154 = vsel %vm4144, %v3779, %v3971
  %v4155 = vsel %vm4144, %v3781, %v3973
  %v4156 = vsel %vm4144, %v3783, %v3975
  %v4157 = vsel %vm4144, %v3785, %v3977
  %v4158 = vsel %vm4144, %v3787, %v3979
  %v4159 = vsel %vm4144, %v3789, %v3981
  %v4160 = vsel %vm4144, %v3791, %v3983
  %v4161 = vsel %vm4144, %v3793, %v3985
  %v4162 = vsel %vm4144, %v3795, %v3987
  %v4163 = vsel %vm4144, %v3797, %v3989
  %v4164 = vsel %vm4144, %v3799, %v3991
  %v4165 = vsel %vm4144, %v3801, %v3993
  %v4166 = vsel %vm4144, %v3803, %v3995
  %v4167 = vsel %vm4144, %v3805, %v3997
  %v4168 = vsel %vm4144, %v3807, %v3999
  %v4169 = vsel %vm4144, %v3809, %v4001
  %v4170 = vsel %vm4144, %v3811, %v4003
  %v4171 = vsel %vm4144, %v3813, %v4005
  %v4172 = vsel %vm4144, %v3815, %v4007
  %v4173 = vsel %vm4144, %v3817, %v4009
  %v4174 = vsel %vm4144, %v3819, %v4011
  %v4175 = vsel %vm4144, %v3821, %v4013
  %v4176 = vsel %vm4144, %v3823, %v4015
  %v4177 = vsel %vm4144, %v3825, %v4017
  %v4178 = vsel %vm4144, %v3827, %v4019
  %v4179 = vsel %vm4144, %v3829, %v4021
  %v4180 = vsel %vm4144, %v3831, %v4023
  %v4181 = vsel %vm4144, %v3833, %v4025
  %v4182 = vsel %vm4144, %v3835, %v4027
  %v4183 = vsel %vm4144, %v3837, %v4029
  %v4184 = vsel %vm4144, %v3839, %v4031
  %v4185 = vsel %vm4144, %v3841, %v4033
  %v4186 = vsel %vm4144, %v3843, %v4035
  %v4187 = vsel %vm4144, %v3845, %v4037
  %v4188 = vsel %vm4144, %v3847, %v4039
  %v4189 = vsel %vm4144, %v3849, %v4041
  %v4190 = vsel %vm4144, %v3851, %v4043
  %v4191 = vsel %vm4144, %v3853, %v4045
  %v4192 = vsel %vm4144, %v3855, %v4047
  %v4193 = vsel %vm4144, %v3857, %v4049
  %v4194 = vsel %vm4144, %v3859, %v4051
  %v4195 = vsel %vm4144, %v3861, %v4053
  %v4196 = vsel %vm4144, %v3863, %v4055
  %v4197 = vsel %vm4144, %v3865, %v4057
  %v4198 = vsel %vm4144, %v3867, %v4059
  %v4199 = vsel %vm4144, %v3869, %v4061
  %v4200 = vsel %vm4144, %v3871, %v4063
  %v4201 = vsel %vm4144, %v3873, %v4065
  %v4202 = vsel %vm4144, %v3875, %v4067
  %v4203 = vsel %vm4144, %v3877, %v4069
  %v4204 = vsel %vm4144, %v3879, %v4071
  %v4205 = vsel %vm4144, %v3881, %v4073
  %v4206 = vsel %vm4144, %v3883, %v4075
  %v4207 = vsel %vm4144, %v3885, %v4077
  %v4208 = vsel %vm4144, %v3887, %v4079
  %v4209 = vmul.f32 %v4145, %v3528
  %v4210 = vmul.f32 %v4146, %v3529
  %v4211 = vmul.f32 %v4147, %v3530
  %v4212 = vmul.f32 %v4148, %v3531
  %v4213 = vmul.f32 %v4149, %v3532
  %v4214 = vmul.f32 %v4150, %v3533
  %v4215 = vmul.f32 %v4151, %v3534
  %v4216 = vmul.f32 %v4152, %v3535
  %v4217 = vmul.f32 %v4153, %v3528
  %v4218 = vmul.f32 %v4154, %v3529
  %v4219 = vmul.f32 %v4155, %v3530
  %v4220 = vmul.f32 %v4156, %v3531
  %v4221 = vmul.f32 %v4157, %v3532
  %v4222 = vmul.f32 %v4158, %v3533
  %v4223 = vmul.f32 %v4159, %v3534
  %v4224 = vmul.f32 %v4160, %v3535
  %v4225 = vmul.f32 %v4161, %v3528
  %v4226 = vmul.f32 %v4162, %v3529
  %v4227 = vmul.f32 %v4163, %v3530
  %v4228 = vmul.f32 %v4164, %v3531
  %v4229 = vmul.f32 %v4165, %v3532
  %v4230 = vmul.f32 %v4166, %v3533
  %v4231 = vmul.f32 %v4167, %v3534
  %v4232 = vmul.f32 %v4168, %v3535
  %v4233 = vmul.f32 %v4169, %v3528
  %v4234 = vmul.f32 %v4170, %v3529
  %v4235 = vmul.f32 %v4171, %v3530
  %v4236 = vmul.f32 %v4172, %v3531
  %v4237 = vmul.f32 %v4173, %v3532
  %v4238 = vmul.f32 %v4174, %v3533
  %v4239 = vmul.f32 %v4175, %v3534
  %v4240 = vmul.f32 %v4176, %v3535
  %v4241 = vmul.f32 %v4177, %v3528
  %v4242 = vmul.f32 %v4178, %v3529
  %v4243 = vmul.f32 %v4179, %v3530
  %v4244 = vmul.f32 %v4180, %v3531
  %v4245 = vmul.f32 %v4181, %v3532
  %v4246 = vmul.f32 %v4182, %v3533
  %v4247 = vmul.f32 %v4183, %v3534
  %v4248 = vmul.f32 %v4184, %v3535
  %v4249 = vmul.f32 %v4185, %v3528
  %v4250 = vmul.f32 %v4186, %v3529
  %v4251 = vmul.f32 %v4187, %v3530
  %v4252 = vmul.f32 %v4188, %v3531
  %v4253 = vmul.f32 %v4189, %v3532
  %v4254 = vmul.f32 %v4190, %v3533
  %v4255 = vmul.f32 %v4191, %v3534
  %v4256 = vmul.f32 %v4192, %v3535
  %v4257 = vmul.f32 %v4193, %v3528
  %v4258 = vmul.f32 %v4194, %v3529
  %v4259 = vmul.f32 %v4195, %v3530
  %v4260 = vmul.f32 %v4196, %v3531
  %v4261 = vmul.f32 %v4197, %v3532
  %v4262 = vmul.f32 %v4198, %v3533
  %v4263 = vmul.f32 %v4199, %v3534
  %v4264 = vmul.f32 %v4200, %v3535
  %v4265 = vmul.f32 %v4201, %v3528
  %v4266 = vmul.f32 %v4202, %v3529
  %v4267 = vmul.f32 %v4203, %v3530
  %v4268 = vmul.f32 %v4204, %v3531
  %v4269 = vmul.f32 %v4205, %v3532
  %v4270 = vmul.f32 %v4206, %v3533
  %v4271 = vmul.f32 %v4207, %v3534
  %v4272 = vmul.f32 %v4208, %v3535
  %4337 = vrot.lane.b32.xlu0 %v4209, 64
  %v4338 = vpop.permute.xlu0 %4337
  %4339 = vrot.lane.b32.xlu0 %v4210, 64
  %v4340 = vpop.permute.xlu0 %4339
  %4341 = vrot.lane.b32.xlu0 %v4211, 64
  %v4342 = vpop.permute.xlu0 %4341
  %4343 = vrot.lane.b32.xlu0 %v4212, 64
  %v4344 = vpop.permute.xlu0 %4343
  %4345 = vrot.lane.b32.xlu0 %v4213, 64
  %v4346 = vpop.permute.xlu0 %4345
  %4347 = vrot.lane.b32.xlu0 %v4214, 64
  %v4348 = vpop.permute.xlu0 %4347
  %4349 = vrot.lane.b32.xlu0 %v4215, 64
  %v4350 = vpop.permute.xlu0 %4349
  %4351 = vrot.lane.b32.xlu0 %v4216, 64
  %v4352 = vpop.permute.xlu0 %4351
  %4353 = vrot.lane.b32.xlu0 %v4217, 64
  %v4354 = vpop.permute.xlu0 %4353
  %4355 = vrot.lane.b32.xlu0 %v4218, 64
  %v4356 = vpop.permute.xlu0 %4355
  %4357 = vrot.lane.b32.xlu0 %v4219, 64
  %v4358 = vpop.permute.xlu0 %4357
  %4359 = vrot.lane.b32.xlu0 %v4220, 64
  %v4360 = vpop.permute.xlu0 %4359
  %4361 = vrot.lane.b32.xlu0 %v4221, 64
  %v4362 = vpop.permute.xlu0 %4361
  %4363 = vrot.lane.b32.xlu0 %v4222, 64
  %v4364 = vpop.permute.xlu0 %4363
  %4365 = vrot.lane.b32.xlu0 %v4223, 64
  %v4366 = vpop.permute.xlu0 %4365
  %4367 = vrot.lane.b32.xlu0 %v4224, 64
  %v4368 = vpop.permute.xlu0 %4367
  %4369 = vrot.lane.b32.xlu0 %v4225, 64
  %v4370 = vpop.permute.xlu0 %4369
  %4371 = vrot.lane.b32.xlu0 %v4226, 64
  %v4372 = vpop.permute.xlu0 %4371
  %4373 = vrot.lane.b32.xlu0 %v4227, 64
  %v4374 = vpop.permute.xlu0 %4373
  %4375 = vrot.lane.b32.xlu0 %v4228, 64
  %v4376 = vpop.permute.xlu0 %4375
  %4377 = vrot.lane.b32.xlu0 %v4229, 64
  %v4378 = vpop.permute.xlu0 %4377
  %4379 = vrot.lane.b32.xlu0 %v4230, 64
  %v4380 = vpop.permute.xlu0 %4379
  %4381 = vrot.lane.b32.xlu0 %v4231, 64
  %v4382 = vpop.permute.xlu0 %4381
  %4383 = vrot.lane.b32.xlu0 %v4232, 64
  %v4384 = vpop.permute.xlu0 %4383
  %4385 = vrot.lane.b32.xlu0 %v4233, 64
  %v4386 = vpop.permute.xlu0 %4385
  %4387 = vrot.lane.b32.xlu0 %v4234, 64
  %v4388 = vpop.permute.xlu0 %4387
  %4389 = vrot.lane.b32.xlu0 %v4235, 64
  %v4390 = vpop.permute.xlu0 %4389
  %4391 = vrot.lane.b32.xlu0 %v4236, 64
  %v4392 = vpop.permute.xlu0 %4391
  %4393 = vrot.lane.b32.xlu0 %v4237, 64
  %v4394 = vpop.permute.xlu0 %4393
  %4395 = vrot.lane.b32.xlu0 %v4238, 64
  %v4396 = vpop.permute.xlu0 %4395
  %4397 = vrot.lane.b32.xlu0 %v4239, 64
  %v4398 = vpop.permute.xlu0 %4397
  %4399 = vrot.lane.b32.xlu0 %v4240, 64
  %v4400 = vpop.permute.xlu0 %4399
  %4401 = vrot.lane.b32.xlu0 %v4241, 64
  %v4402 = vpop.permute.xlu0 %4401
  %4403 = vrot.lane.b32.xlu0 %v4242, 64
  %v4404 = vpop.permute.xlu0 %4403
  %4405 = vrot.lane.b32.xlu0 %v4243, 64
  %v4406 = vpop.permute.xlu0 %4405
  %4407 = vrot.lane.b32.xlu0 %v4244, 64
  %v4408 = vpop.permute.xlu0 %4407
  %4409 = vrot.lane.b32.xlu0 %v4245, 64
  %v4410 = vpop.permute.xlu0 %4409
  %4411 = vrot.lane.b32.xlu0 %v4246, 64
  %v4412 = vpop.permute.xlu0 %4411
  %4413 = vrot.lane.b32.xlu0 %v4247, 64
  %v4414 = vpop.permute.xlu0 %4413
  %4415 = vrot.lane.b32.xlu0 %v4248, 64
  %v4416 = vpop.permute.xlu0 %4415
  %4417 = vrot.lane.b32.xlu0 %v4249, 64
  %v4418 = vpop.permute.xlu0 %4417
  %4419 = vrot.lane.b32.xlu0 %v4250, 64
  %v4420 = vpop.permute.xlu0 %4419
  %4421 = vrot.lane.b32.xlu0 %v4251, 64
  %v4422 = vpop.permute.xlu0 %4421
  %4423 = vrot.lane.b32.xlu0 %v4252, 64
  %v4424 = vpop.permute.xlu0 %4423
  %4425 = vrot.lane.b32.xlu0 %v4253, 64
  %v4426 = vpop.permute.xlu0 %4425
  %4427 = vrot.lane.b32.xlu0 %v4254, 64
  %v4428 = vpop.permute.xlu0 %4427
  %4429 = vrot.lane.b32.xlu0 %v4255, 64
  %v4430 = vpop.permute.xlu0 %4429
  %4431 = vrot.lane.b32.xlu0 %v4256, 64
  %v4432 = vpop.permute.xlu0 %4431
  %4433 = vrot.lane.b32.xlu0 %v4257, 64
  %v4434 = vpop.permute.xlu0 %4433
  %4435 = vrot.lane.b32.xlu0 %v4258, 64
  %v4436 = vpop.permute.xlu0 %4435
  %4437 = vrot.lane.b32.xlu0 %v4259, 64
  %v4438 = vpop.permute.xlu0 %4437
  %4439 = vrot.lane.b32.xlu0 %v4260, 64
  %v4440 = vpop.permute.xlu0 %4439
  %4441 = vrot.lane.b32.xlu0 %v4261, 64
  %v4442 = vpop.permute.xlu0 %4441
  %4443 = vrot.lane.b32.xlu0 %v4262, 64
  %v4444 = vpop.permute.xlu0 %4443
  %4445 = vrot.lane.b32.xlu0 %v4263, 64
  %v4446 = vpop.permute.xlu0 %4445
  %4447 = vrot.lane.b32.xlu0 %v4264, 64
  %v4448 = vpop.permute.xlu0 %4447
  %4449 = vrot.lane.b32.xlu0 %v4265, 64
  %v4450 = vpop.permute.xlu0 %4449
  %4451 = vrot.lane.b32.xlu0 %v4266, 64
  %v4452 = vpop.permute.xlu0 %4451
  %4453 = vrot.lane.b32.xlu0 %v4267, 64
  %v4454 = vpop.permute.xlu0 %4453
  %4455 = vrot.lane.b32.xlu0 %v4268, 64
  %v4456 = vpop.permute.xlu0 %4455
  %4457 = vrot.lane.b32.xlu0 %v4269, 64
  %v4458 = vpop.permute.xlu0 %4457
  %4459 = vrot.lane.b32.xlu0 %v4270, 64
  %v4460 = vpop.permute.xlu0 %4459
  %4461 = vrot.lane.b32.xlu0 %v4271, 64
  %v4462 = vpop.permute.xlu0 %4461
  %4463 = vrot.lane.b32.xlu0 %v4272, 64
  %v4464 = vpop.permute.xlu0 %4463
  %v4529 = vadd.f32 %v3696, %v4338
  %v4530 = vadd.f32 %v3697, %v4340
  %v4531 = vadd.f32 %v3698, %v4342
  %v4532 = vadd.f32 %v3699, %v4344
  %v4533 = vadd.f32 %v3700, %v4346
  %v4534 = vadd.f32 %v3701, %v4348
  %v4535 = vadd.f32 %v3702, %v4350
  %v4536 = vadd.f32 %v3703, %v4352
  %v4537 = vadd.f32 %v3704, %v4354
  %v4538 = vadd.f32 %v3705, %v4356
  %v4539 = vadd.f32 %v3706, %v4358
  %v4540 = vadd.f32 %v3707, %v4360
  %v4541 = vadd.f32 %v3708, %v4362
  %v4542 = vadd.f32 %v3709, %v4364
  %v4543 = vadd.f32 %v3710, %v4366
  %v4544 = vadd.f32 %v3711, %v4368
  %v4545 = vadd.f32 %v3712, %v4370
  %v4546 = vadd.f32 %v3713, %v4372
  %v4547 = vadd.f32 %v3714, %v4374
  %v4548 = vadd.f32 %v3715, %v4376
  %v4549 = vadd.f32 %v3716, %v4378
  %v4550 = vadd.f32 %v3717, %v4380
  %v4551 = vadd.f32 %v3718, %v4382
  %v4552 = vadd.f32 %v3719, %v4384
  %v4553 = vadd.f32 %v3720, %v4386
  %v4554 = vadd.f32 %v3721, %v4388
  %v4555 = vadd.f32 %v3722, %v4390
  %v4556 = vadd.f32 %v3723, %v4392
  %v4557 = vadd.f32 %v3724, %v4394
  %v4558 = vadd.f32 %v3725, %v4396
  %v4559 = vadd.f32 %v3726, %v4398
  %v4560 = vadd.f32 %v3727, %v4400
  %v4561 = vadd.f32 %v3728, %v4402
  %v4562 = vadd.f32 %v3729, %v4404
  %v4563 = vadd.f32 %v3730, %v4406
  %v4564 = vadd.f32 %v3731, %v4408
  %v4565 = vadd.f32 %v3732, %v4410
  %v4566 = vadd.f32 %v3733, %v4412
  %v4567 = vadd.f32 %v3734, %v4414
  %v4568 = vadd.f32 %v3735, %v4416
  %v4569 = vadd.f32 %v3736, %v4418
  %v4570 = vadd.f32 %v3737, %v4420
  %v4571 = vadd.f32 %v3738, %v4422
  %v4572 = vadd.f32 %v3739, %v4424
  %v4573 = vadd.f32 %v3740, %v4426
  %v4574 = vadd.f32 %v3741, %v4428
  %v4575 = vadd.f32 %v3742, %v4430
  %v4576 = vadd.f32 %v3743, %v4432
  %v4577 = vadd.f32 %v3744, %v4434
  %v4578 = vadd.f32 %v3745, %v4436
  %v4579 = vadd.f32 %v3746, %v4438
  %v4580 = vadd.f32 %v3747, %v4440
  %v4581 = vadd.f32 %v3748, %v4442
  %v4582 = vadd.f32 %v3749, %v4444
  %v4583 = vadd.f32 %v3750, %v4446
  %v4584 = vadd.f32 %v3751, %v4448
  %v4585 = vadd.f32 %v3752, %v4450
  %v4586 = vadd.f32 %v3753, %v4452
  %v4587 = vadd.f32 %v3754, %v4454
  %v4588 = vadd.f32 %v3755, %v4456
  %v4589 = vadd.f32 %v3756, %v4458
  %v4590 = vadd.f32 %v3757, %v4460
  %v4591 = vadd.f32 %v3758, %v4462
  %v4592 = vadd.f32 %v3759, %v4464
  %v4593 = vmul.f32 %v4145, %v3600
  %v4594 = vmul.f32 %v4146, %v3601
  %v4595 = vmul.f32 %v4147, %v3602
  %v4596 = vmul.f32 %v4148, %v3603
  %v4597 = vmul.f32 %v4149, %v3604
  %v4598 = vmul.f32 %v4150, %v3605
  %v4599 = vmul.f32 %v4151, %v3606
  %v4600 = vmul.f32 %v4152, %v3607
  %v4601 = vmul.f32 %v4153, %v3600
  %v4602 = vmul.f32 %v4154, %v3601
  %v4603 = vmul.f32 %v4155, %v3602
  %v4604 = vmul.f32 %v4156, %v3603
  %v4605 = vmul.f32 %v4157, %v3604
  %v4606 = vmul.f32 %v4158, %v3605
  %v4607 = vmul.f32 %v4159, %v3606
  %v4608 = vmul.f32 %v4160, %v3607
  %v4609 = vmul.f32 %v4161, %v3600
  %v4610 = vmul.f32 %v4162, %v3601
  %v4611 = vmul.f32 %v4163, %v3602
  %v4612 = vmul.f32 %v4164, %v3603
  %v4613 = vmul.f32 %v4165, %v3604
  %v4614 = vmul.f32 %v4166, %v3605
  %v4615 = vmul.f32 %v4167, %v3606
  %v4616 = vmul.f32 %v4168, %v3607
  %v4617 = vmul.f32 %v4169, %v3600
  %v4618 = vmul.f32 %v4170, %v3601
  %v4619 = vmul.f32 %v4171, %v3602
  %v4620 = vmul.f32 %v4172, %v3603
  %v4621 = vmul.f32 %v4173, %v3604
  %v4622 = vmul.f32 %v4174, %v3605
  %v4623 = vmul.f32 %v4175, %v3606
  %v4624 = vmul.f32 %v4176, %v3607
  %v4625 = vmul.f32 %v4177, %v3600
  %v4626 = vmul.f32 %v4178, %v3601
  %v4627 = vmul.f32 %v4179, %v3602
  %v4628 = vmul.f32 %v4180, %v3603
  %v4629 = vmul.f32 %v4181, %v3604
  %v4630 = vmul.f32 %v4182, %v3605
  %v4631 = vmul.f32 %v4183, %v3606
  %v4632 = vmul.f32 %v4184, %v3607
  %v4633 = vmul.f32 %v4185, %v3600
  %v4634 = vmul.f32 %v4186, %v3601
  %v4635 = vmul.f32 %v4187, %v3602
  %v4636 = vmul.f32 %v4188, %v3603
  %v4637 = vmul.f32 %v4189, %v3604
  %v4638 = vmul.f32 %v4190, %v3605
  %v4639 = vmul.f32 %v4191, %v3606
  %v4640 = vmul.f32 %v4192, %v3607
  %v4641 = vmul.f32 %v4193, %v3600
  %v4642 = vmul.f32 %v4194, %v3601
  %v4643 = vmul.f32 %v4195, %v3602
  %v4644 = vmul.f32 %v4196, %v3603
  %v4645 = vmul.f32 %v4197, %v3604
  %v4646 = vmul.f32 %v4198, %v3605
  %v4647 = vmul.f32 %v4199, %v3606
  %v4648 = vmul.f32 %v4200, %v3607
  %v4649 = vmul.f32 %v4201, %v3600
  %v4650 = vmul.f32 %v4202, %v3601
  %v4651 = vmul.f32 %v4203, %v3602
  %v4652 = vmul.f32 %v4204, %v3603
  %v4653 = vmul.f32 %v4205, %v3604
  %v4654 = vmul.f32 %v4206, %v3605
  %v4655 = vmul.f32 %v4207, %v3606
  %v4656 = vmul.f32 %v4208, %v3607
  %v4657 = vadd.f32 %v4593, 0.0
  %v4658 = vadd.f32 %v4594, 0.0
  %v4659 = vadd.f32 %v4595, 0.0
  %v4660 = vadd.f32 %v4596, 0.0
  %v4661 = vadd.f32 %v4597, 0.0
  %v4662 = vadd.f32 %v4598, 0.0
  %v4663 = vadd.f32 %v4599, 0.0
  %v4664 = vadd.f32 %v4600, 0.0
  %v4665 = vadd.f32 %v4601, 0.0
  %v4666 = vadd.f32 %v4602, 0.0
  %v4667 = vadd.f32 %v4603, 0.0
  %v4668 = vadd.f32 %v4604, 0.0
  %v4669 = vadd.f32 %v4605, 0.0
  %v4670 = vadd.f32 %v4606, 0.0
  %v4671 = vadd.f32 %v4607, 0.0
  %v4672 = vadd.f32 %v4608, 0.0
  %v4673 = vadd.f32 %v4609, 0.0
  %v4674 = vadd.f32 %v4610, 0.0
  %v4675 = vadd.f32 %v4611, 0.0
  %v4676 = vadd.f32 %v4612, 0.0
  %v4677 = vadd.f32 %v4613, 0.0
  %v4678 = vadd.f32 %v4614, 0.0
  %v4679 = vadd.f32 %v4615, 0.0
  %v4680 = vadd.f32 %v4616, 0.0
  %v4681 = vadd.f32 %v4617, 0.0
  %v4682 = vadd.f32 %v4618, 0.0
  %v4683 = vadd.f32 %v4619, 0.0
  %v4684 = vadd.f32 %v4620, 0.0
  %v4685 = vadd.f32 %v4621, 0.0
  %v4686 = vadd.f32 %v4622, 0.0
  %v4687 = vadd.f32 %v4623, 0.0
  %v4688 = vadd.f32 %v4624, 0.0
  %v4689 = vadd.f32 %v4625, 0.0
  %v4690 = vadd.f32 %v4626, 0.0
  %v4691 = vadd.f32 %v4627, 0.0
  %v4692 = vadd.f32 %v4628, 0.0
  %v4693 = vadd.f32 %v4629, 0.0
  %v4694 = vadd.f32 %v4630, 0.0
  %v4695 = vadd.f32 %v4631, 0.0
  %v4696 = vadd.f32 %v4632, 0.0
  %v4697 = vadd.f32 %v4633, 0.0
  %v4698 = vadd.f32 %v4634, 0.0
  %v4699 = vadd.f32 %v4635, 0.0
  %v4700 = vadd.f32 %v4636, 0.0
  %v4701 = vadd.f32 %v4637, 0.0
  %v4702 = vadd.f32 %v4638, 0.0
  %v4703 = vadd.f32 %v4639, 0.0
  %v4704 = vadd.f32 %v4640, 0.0
  %v4705 = vadd.f32 %v4641, 0.0
  %v4706 = vadd.f32 %v4642, 0.0
  %v4707 = vadd.f32 %v4643, 0.0
  %v4708 = vadd.f32 %v4644, 0.0
  %v4709 = vadd.f32 %v4645, 0.0
  %v4710 = vadd.f32 %v4646, 0.0
  %v4711 = vadd.f32 %v4647, 0.0
  %v4712 = vadd.f32 %v4648, 0.0
  %v4713 = vadd.f32 %v4649, 0.0
  %v4714 = vadd.f32 %v4650, 0.0
  %v4715 = vadd.f32 %v4651, 0.0
  %v4716 = vadd.f32 %v4652, 0.0
  %v4717 = vadd.f32 %v4653, 0.0
  %v4718 = vadd.f32 %v4654, 0.0
  %v4719 = vadd.f32 %v4655, 0.0
  %v4720 = vadd.f32 %v4656, 0.0
  %4721 = vrot.lane.b32.xlu0 %v312, 40
  %v4722 = vpop.permute.xlu0 %4721
  %4723 = vrot.lane.b32.xlu0 %v315, 40
  %v4724 = vpop.permute.xlu0 %4723
  %4725 = vrot.lane.b32.xlu0 %v318, 40
  %v4726 = vpop.permute.xlu0 %4725
  %4727 = vrot.lane.b32.xlu0 %v321, 40
  %v4728 = vpop.permute.xlu0 %4727
  %4729 = vrot.lane.b32.xlu0 %v324, 40
  %v4730 = vpop.permute.xlu0 %4729
  %4731 = vrot.lane.b32.xlu0 %v327, 40
  %v4732 = vpop.permute.xlu0 %4731
  %4733 = vrot.lane.b32.xlu0 %v330, 40
  %v4734 = vpop.permute.xlu0 %4733
  %4735 = vrot.lane.b32.xlu0 %v333, 40
  %v4736 = vpop.permute.xlu0 %4735
  %4737 = vrot.lane.b32.xlu0 %v336, 40
  %v4738 = vpop.permute.xlu0 %4737
  %4739 = vrot.lane.b32.xlu0 %v339, 40
  %v4740 = vpop.permute.xlu0 %4739
  %4741 = vrot.lane.b32.xlu0 %v342, 40
  %v4742 = vpop.permute.xlu0 %4741
  %4743 = vrot.lane.b32.xlu0 %v345, 40
  %v4744 = vpop.permute.xlu0 %4743
  %4745 = vrot.lane.b32.xlu0 %v348, 40
  %v4746 = vpop.permute.xlu0 %4745
  %4747 = vrot.lane.b32.xlu0 %v351, 40
  %v4748 = vpop.permute.xlu0 %4747
  %4749 = vrot.lane.b32.xlu0 %v354, 40
  %v4750 = vpop.permute.xlu0 %4749
  %4751 = vrot.lane.b32.xlu0 %v357, 40
  %v4752 = vpop.permute.xlu0 %4751
  %4753 = vrot.lane.b32.xlu0 %v360, 40
  %v4754 = vpop.permute.xlu0 %4753
  %4755 = vrot.lane.b32.xlu0 %v363, 40
  %v4756 = vpop.permute.xlu0 %4755
  %4757 = vrot.lane.b32.xlu0 %v366, 40
  %v4758 = vpop.permute.xlu0 %4757
  %4759 = vrot.lane.b32.xlu0 %v369, 40
  %v4760 = vpop.permute.xlu0 %4759
  %4761 = vrot.lane.b32.xlu0 %v372, 40
  %v4762 = vpop.permute.xlu0 %4761
  %4763 = vrot.lane.b32.xlu0 %v375, 40
  %v4764 = vpop.permute.xlu0 %4763
  %4765 = vrot.lane.b32.xlu0 %v378, 40
  %v4766 = vpop.permute.xlu0 %4765
  %4767 = vrot.lane.b32.xlu0 %v381, 40
  %v4768 = vpop.permute.xlu0 %4767
  %4769 = vrot.lane.b32.xlu0 %v384, 40
  %v4770 = vpop.permute.xlu0 %4769
  %4771 = vrot.lane.b32.xlu0 %v387, 40
  %v4772 = vpop.permute.xlu0 %4771
  %4773 = vrot.lane.b32.xlu0 %v390, 40
  %v4774 = vpop.permute.xlu0 %4773
  %4775 = vrot.lane.b32.xlu0 %v393, 40
  %v4776 = vpop.permute.xlu0 %4775
  %4777 = vrot.lane.b32.xlu0 %v396, 40
  %v4778 = vpop.permute.xlu0 %4777
  %4779 = vrot.lane.b32.xlu0 %v399, 40
  %v4780 = vpop.permute.xlu0 %4779
  %4781 = vrot.lane.b32.xlu0 %v402, 40
  %v4782 = vpop.permute.xlu0 %4781
  %4783 = vrot.lane.b32.xlu0 %v405, 40
  %v4784 = vpop.permute.xlu0 %4783
  %4785 = vrot.lane.b32.xlu0 %v408, 40
  %v4786 = vpop.permute.xlu0 %4785
  %4787 = vrot.lane.b32.xlu0 %v411, 40
  %v4788 = vpop.permute.xlu0 %4787
  %4789 = vrot.lane.b32.xlu0 %v414, 40
  %v4790 = vpop.permute.xlu0 %4789
  %4791 = vrot.lane.b32.xlu0 %v417, 40
  %v4792 = vpop.permute.xlu0 %4791
  %4793 = vrot.lane.b32.xlu0 %v420, 40
  %v4794 = vpop.permute.xlu0 %4793
  %4795 = vrot.lane.b32.xlu0 %v423, 40
  %v4796 = vpop.permute.xlu0 %4795
  %4797 = vrot.lane.b32.xlu0 %v426, 40
  %v4798 = vpop.permute.xlu0 %4797
  %4799 = vrot.lane.b32.xlu0 %v429, 40
  %v4800 = vpop.permute.xlu0 %4799
  %4801 = vrot.lane.b32.xlu0 %v432, 40
  %v4802 = vpop.permute.xlu0 %4801
  %4803 = vrot.lane.b32.xlu0 %v435, 40
  %v4804 = vpop.permute.xlu0 %4803
  %4805 = vrot.lane.b32.xlu0 %v438, 40
  %v4806 = vpop.permute.xlu0 %4805
  %4807 = vrot.lane.b32.xlu0 %v441, 40
  %v4808 = vpop.permute.xlu0 %4807
  %4809 = vrot.lane.b32.xlu0 %v444, 40
  %v4810 = vpop.permute.xlu0 %4809
  %4811 = vrot.lane.b32.xlu0 %v447, 40
  %v4812 = vpop.permute.xlu0 %4811
  %4813 = vrot.lane.b32.xlu0 %v450, 40
  %v4814 = vpop.permute.xlu0 %4813
  %4815 = vrot.lane.b32.xlu0 %v453, 40
  %v4816 = vpop.permute.xlu0 %4815
  %4817 = vrot.lane.b32.xlu0 %v456, 40
  %v4818 = vpop.permute.xlu0 %4817
  %4819 = vrot.lane.b32.xlu0 %v459, 40
  %v4820 = vpop.permute.xlu0 %4819
  %4821 = vrot.lane.b32.xlu0 %v462, 40
  %v4822 = vpop.permute.xlu0 %4821
  %4823 = vrot.lane.b32.xlu0 %v465, 40
  %v4824 = vpop.permute.xlu0 %4823
  %4825 = vrot.lane.b32.xlu0 %v468, 40
  %v4826 = vpop.permute.xlu0 %4825
  %4827 = vrot.lane.b32.xlu0 %v471, 40
  %v4828 = vpop.permute.xlu0 %4827
  %4829 = vrot.lane.b32.xlu0 %v474, 40
  %v4830 = vpop.permute.xlu0 %4829
  %4831 = vrot.lane.b32.xlu0 %v477, 40
  %v4832 = vpop.permute.xlu0 %4831
  %4833 = vrot.lane.b32.xlu0 %v480, 40
  %v4834 = vpop.permute.xlu0 %4833
  %4835 = vrot.lane.b32.xlu0 %v483, 40
  %v4836 = vpop.permute.xlu0 %4835
  %4837 = vrot.lane.b32.xlu0 %v486, 40
  %v4838 = vpop.permute.xlu0 %4837
  %4839 = vrot.lane.b32.xlu0 %v489, 40
  %v4840 = vpop.permute.xlu0 %4839
  %4841 = vrot.lane.b32.xlu0 %v492, 40
  %v4842 = vpop.permute.xlu0 %4841
  %4843 = vrot.lane.b32.xlu0 %v495, 40
  %v4844 = vpop.permute.xlu0 %4843
  %4845 = vrot.lane.b32.xlu0 %v498, 40
  %v4846 = vpop.permute.xlu0 %4845
  %4847 = vrot.lane.b32.xlu0 %v501, 40
  %v4848 = vpop.permute.xlu0 %4847
  %4913 = vrot.lane.b32.xlu0 %v312, 72
  %v4914 = vpop.permute.xlu0 %4913
  %4915 = vrot.lane.b32.xlu0 %v315, 72
  %v4916 = vpop.permute.xlu0 %4915
  %4917 = vrot.lane.b32.xlu0 %v318, 72
  %v4918 = vpop.permute.xlu0 %4917
  %4919 = vrot.lane.b32.xlu0 %v321, 72
  %v4920 = vpop.permute.xlu0 %4919
  %4921 = vrot.lane.b32.xlu0 %v324, 72
  %v4922 = vpop.permute.xlu0 %4921
  %4923 = vrot.lane.b32.xlu0 %v327, 72
  %v4924 = vpop.permute.xlu0 %4923
  %4925 = vrot.lane.b32.xlu0 %v330, 72
  %v4926 = vpop.permute.xlu0 %4925
  %4927 = vrot.lane.b32.xlu0 %v333, 72
  %v4928 = vpop.permute.xlu0 %4927
  %4929 = vrot.lane.b32.xlu0 %v336, 72
  %v4930 = vpop.permute.xlu0 %4929
  %4931 = vrot.lane.b32.xlu0 %v339, 72
  %v4932 = vpop.permute.xlu0 %4931
  %4933 = vrot.lane.b32.xlu0 %v342, 72
  %v4934 = vpop.permute.xlu0 %4933
  %4935 = vrot.lane.b32.xlu0 %v345, 72
  %v4936 = vpop.permute.xlu0 %4935
  %4937 = vrot.lane.b32.xlu0 %v348, 72
  %v4938 = vpop.permute.xlu0 %4937
  %4939 = vrot.lane.b32.xlu0 %v351, 72
  %v4940 = vpop.permute.xlu0 %4939
  %4941 = vrot.lane.b32.xlu0 %v354, 72
  %v4942 = vpop.permute.xlu0 %4941
  %4943 = vrot.lane.b32.xlu0 %v357, 72
  %v4944 = vpop.permute.xlu0 %4943
  %4945 = vrot.lane.b32.xlu0 %v360, 72
  %v4946 = vpop.permute.xlu0 %4945
  %4947 = vrot.lane.b32.xlu0 %v363, 72
  %v4948 = vpop.permute.xlu0 %4947
  %4949 = vrot.lane.b32.xlu0 %v366, 72
  %v4950 = vpop.permute.xlu0 %4949
  %4951 = vrot.lane.b32.xlu0 %v369, 72
  %v4952 = vpop.permute.xlu0 %4951
  %4953 = vrot.lane.b32.xlu0 %v372, 72
  %v4954 = vpop.permute.xlu0 %4953
  %4955 = vrot.lane.b32.xlu0 %v375, 72
  %v4956 = vpop.permute.xlu0 %4955
  %4957 = vrot.lane.b32.xlu0 %v378, 72
  %v4958 = vpop.permute.xlu0 %4957
  %4959 = vrot.lane.b32.xlu0 %v381, 72
  %v4960 = vpop.permute.xlu0 %4959
  %4961 = vrot.lane.b32.xlu0 %v384, 72
  %v4962 = vpop.permute.xlu0 %4961
  %4963 = vrot.lane.b32.xlu0 %v387, 72
  %v4964 = vpop.permute.xlu0 %4963
  %4965 = vrot.lane.b32.xlu0 %v390, 72
  %v4966 = vpop.permute.xlu0 %4965
  %4967 = vrot.lane.b32.xlu0 %v393, 72
  %v4968 = vpop.permute.xlu0 %4967
  %4969 = vrot.lane.b32.xlu0 %v396, 72
  %v4970 = vpop.permute.xlu0 %4969
  %4971 = vrot.lane.b32.xlu0 %v399, 72
  %v4972 = vpop.permute.xlu0 %4971
  %4973 = vrot.lane.b32.xlu0 %v402, 72
  %v4974 = vpop.permute.xlu0 %4973
  %4975 = vrot.lane.b32.xlu0 %v405, 72
  %v4976 = vpop.permute.xlu0 %4975
  %4977 = vrot.lane.b32.xlu0 %v408, 72
  %v4978 = vpop.permute.xlu0 %4977
  %4979 = vrot.lane.b32.xlu0 %v411, 72
  %v4980 = vpop.permute.xlu0 %4979
  %4981 = vrot.lane.b32.xlu0 %v414, 72
  %v4982 = vpop.permute.xlu0 %4981
  %4983 = vrot.lane.b32.xlu0 %v417, 72
  %v4984 = vpop.permute.xlu0 %4983
  %4985 = vrot.lane.b32.xlu0 %v420, 72
  %v4986 = vpop.permute.xlu0 %4985
  %4987 = vrot.lane.b32.xlu0 %v423, 72
  %v4988 = vpop.permute.xlu0 %4987
  %4989 = vrot.lane.b32.xlu0 %v426, 72
  %v4990 = vpop.permute.xlu0 %4989
  %4991 = vrot.lane.b32.xlu0 %v429, 72
  %v4992 = vpop.permute.xlu0 %4991
  %4993 = vrot.lane.b32.xlu0 %v432, 72
  %v4994 = vpop.permute.xlu0 %4993
  %4995 = vrot.lane.b32.xlu0 %v435, 72
  %v4996 = vpop.permute.xlu0 %4995
  %4997 = vrot.lane.b32.xlu0 %v438, 72
  %v4998 = vpop.permute.xlu0 %4997
  %4999 = vrot.lane.b32.xlu0 %v441, 72
  %v5000 = vpop.permute.xlu0 %4999
  %5001 = vrot.lane.b32.xlu0 %v444, 72
  %v5002 = vpop.permute.xlu0 %5001
  %5003 = vrot.lane.b32.xlu0 %v447, 72
  %v5004 = vpop.permute.xlu0 %5003
  %5005 = vrot.lane.b32.xlu0 %v450, 72
  %v5006 = vpop.permute.xlu0 %5005
  %5007 = vrot.lane.b32.xlu0 %v453, 72
  %v5008 = vpop.permute.xlu0 %5007
  %5009 = vrot.lane.b32.xlu0 %v456, 72
  %v5010 = vpop.permute.xlu0 %5009
  %5011 = vrot.lane.b32.xlu0 %v459, 72
  %v5012 = vpop.permute.xlu0 %5011
  %5013 = vrot.lane.b32.xlu0 %v462, 72
  %v5014 = vpop.permute.xlu0 %5013
  %5015 = vrot.lane.b32.xlu0 %v465, 72
  %v5016 = vpop.permute.xlu0 %5015
  %5017 = vrot.lane.b32.xlu0 %v468, 72
  %v5018 = vpop.permute.xlu0 %5017
  %5019 = vrot.lane.b32.xlu0 %v471, 72
  %v5020 = vpop.permute.xlu0 %5019
  %5021 = vrot.lane.b32.xlu0 %v474, 72
  %v5022 = vpop.permute.xlu0 %5021
  %5023 = vrot.lane.b32.xlu0 %v477, 72
  %v5024 = vpop.permute.xlu0 %5023
  %5025 = vrot.lane.b32.xlu0 %v480, 72
  %v5026 = vpop.permute.xlu0 %5025
  %5027 = vrot.lane.b32.xlu0 %v483, 72
  %v5028 = vpop.permute.xlu0 %5027
  %5029 = vrot.lane.b32.xlu0 %v486, 72
  %v5030 = vpop.permute.xlu0 %5029
  %5031 = vrot.lane.b32.xlu0 %v489, 72
  %v5032 = vpop.permute.xlu0 %5031
  %5033 = vrot.lane.b32.xlu0 %v492, 72
  %v5034 = vpop.permute.xlu0 %5033
  %5035 = vrot.lane.b32.xlu0 %v495, 72
  %v5036 = vpop.permute.xlu0 %5035
  %5037 = vrot.lane.b32.xlu0 %v498, 72
  %v5038 = vpop.permute.xlu0 %5037
  %5039 = vrot.lane.b32.xlu0 %v501, 72
  %v5040 = vpop.permute.xlu0 %5039
  %vm5105 = vcmask 64512
  %v5106 = vsel %vm5105, %v4722, %v4914
  %v5107 = vsel %vm5105, %v4724, %v4916
  %v5108 = vsel %vm5105, %v4726, %v4918
  %v5109 = vsel %vm5105, %v4728, %v4920
  %v5110 = vsel %vm5105, %v4730, %v4922
  %v5111 = vsel %vm5105, %v4732, %v4924
  %v5112 = vsel %vm5105, %v4734, %v4926
  %v5113 = vsel %vm5105, %v4736, %v4928
  %v5114 = vsel %vm5105, %v4738, %v4930
  %v5115 = vsel %vm5105, %v4740, %v4932
  %v5116 = vsel %vm5105, %v4742, %v4934
  %v5117 = vsel %vm5105, %v4744, %v4936
  %v5118 = vsel %vm5105, %v4746, %v4938
  %v5119 = vsel %vm5105, %v4748, %v4940
  %v5120 = vsel %vm5105, %v4750, %v4942
  %v5121 = vsel %vm5105, %v4752, %v4944
  %v5122 = vsel %vm5105, %v4754, %v4946
  %v5123 = vsel %vm5105, %v4756, %v4948
  %v5124 = vsel %vm5105, %v4758, %v4950
  %v5125 = vsel %vm5105, %v4760, %v4952
  %v5126 = vsel %vm5105, %v4762, %v4954
  %v5127 = vsel %vm5105, %v4764, %v4956
  %v5128 = vsel %vm5105, %v4766, %v4958
  %v5129 = vsel %vm5105, %v4768, %v4960
  %v5130 = vsel %vm5105, %v4770, %v4962
  %v5131 = vsel %vm5105, %v4772, %v4964
  %v5132 = vsel %vm5105, %v4774, %v4966
  %v5133 = vsel %vm5105, %v4776, %v4968
  %v5134 = vsel %vm5105, %v4778, %v4970
  %v5135 = vsel %vm5105, %v4780, %v4972
  %v5136 = vsel %vm5105, %v4782, %v4974
  %v5137 = vsel %vm5105, %v4784, %v4976
  %v5138 = vsel %vm5105, %v4786, %v4978
  %v5139 = vsel %vm5105, %v4788, %v4980
  %v5140 = vsel %vm5105, %v4790, %v4982
  %v5141 = vsel %vm5105, %v4792, %v4984
  %v5142 = vsel %vm5105, %v4794, %v4986
  %v5143 = vsel %vm5105, %v4796, %v4988
  %v5144 = vsel %vm5105, %v4798, %v4990
  %v5145 = vsel %vm5105, %v4800, %v4992
  %v5146 = vsel %vm5105, %v4802, %v4994
  %v5147 = vsel %vm5105, %v4804, %v4996
  %v5148 = vsel %vm5105, %v4806, %v4998
  %v5149 = vsel %vm5105, %v4808, %v5000
  %v5150 = vsel %vm5105, %v4810, %v5002
  %v5151 = vsel %vm5105, %v4812, %v5004
  %v5152 = vsel %vm5105, %v4814, %v5006
  %v5153 = vsel %vm5105, %v4816, %v5008
  %v5154 = vsel %vm5105, %v4818, %v5010
  %v5155 = vsel %vm5105, %v4820, %v5012
  %v5156 = vsel %vm5105, %v4822, %v5014
  %v5157 = vsel %vm5105, %v4824, %v5016
  %v5158 = vsel %vm5105, %v4826, %v5018
  %v5159 = vsel %vm5105, %v4828, %v5020
  %v5160 = vsel %vm5105, %v4830, %v5022
  %v5161 = vsel %vm5105, %v4832, %v5024
  %v5162 = vsel %vm5105, %v4834, %v5026
  %v5163 = vsel %vm5105, %v4836, %v5028
  %v5164 = vsel %vm5105, %v4838, %v5030
  %v5165 = vsel %vm5105, %v4840, %v5032
  %v5166 = vsel %vm5105, %v4842, %v5034
  %v5167 = vsel %vm5105, %v4844, %v5036
  %v5168 = vsel %vm5105, %v4846, %v5038
  %v5169 = vsel %vm5105, %v4848, %v5040
  %v5170 = vmul.f32 %v5106, %v3536
  %v5171 = vmul.f32 %v5107, %v3537
  %v5172 = vmul.f32 %v5108, %v3538
  %v5173 = vmul.f32 %v5109, %v3539
  %v5174 = vmul.f32 %v5110, %v3540
  %v5175 = vmul.f32 %v5111, %v3541
  %v5176 = vmul.f32 %v5112, %v3542
  %v5177 = vmul.f32 %v5113, %v3543
  %v5178 = vmul.f32 %v5114, %v3536
  %v5179 = vmul.f32 %v5115, %v3537
  %v5180 = vmul.f32 %v5116, %v3538
  %v5181 = vmul.f32 %v5117, %v3539
  %v5182 = vmul.f32 %v5118, %v3540
  %v5183 = vmul.f32 %v5119, %v3541
  %v5184 = vmul.f32 %v5120, %v3542
  %v5185 = vmul.f32 %v5121, %v3543
  %v5186 = vmul.f32 %v5122, %v3536
  %v5187 = vmul.f32 %v5123, %v3537
  %v5188 = vmul.f32 %v5124, %v3538
  %v5189 = vmul.f32 %v5125, %v3539
  %v5190 = vmul.f32 %v5126, %v3540
  %v5191 = vmul.f32 %v5127, %v3541
  %v5192 = vmul.f32 %v5128, %v3542
  %v5193 = vmul.f32 %v5129, %v3543
  %v5194 = vmul.f32 %v5130, %v3536
  %v5195 = vmul.f32 %v5131, %v3537
  %v5196 = vmul.f32 %v5132, %v3538
  %v5197 = vmul.f32 %v5133, %v3539
  %v5198 = vmul.f32 %v5134, %v3540
  %v5199 = vmul.f32 %v5135, %v3541
  %v5200 = vmul.f32 %v5136, %v3542
  %v5201 = vmul.f32 %v5137, %v3543
  %v5202 = vmul.f32 %v5138, %v3536
  %v5203 = vmul.f32 %v5139, %v3537
  %v5204 = vmul.f32 %v5140, %v3538
  %v5205 = vmul.f32 %v5141, %v3539
  %v5206 = vmul.f32 %v5142, %v3540
  %v5207 = vmul.f32 %v5143, %v3541
  %v5208 = vmul.f32 %v5144, %v3542
  %v5209 = vmul.f32 %v5145, %v3543
  %v5210 = vmul.f32 %v5146, %v3536
  %v5211 = vmul.f32 %v5147, %v3537
  %v5212 = vmul.f32 %v5148, %v3538
  %v5213 = vmul.f32 %v5149, %v3539
  %v5214 = vmul.f32 %v5150, %v3540
  %v5215 = vmul.f32 %v5151, %v3541
  %v5216 = vmul.f32 %v5152, %v3542
  %v5217 = vmul.f32 %v5153, %v3543
  %v5218 = vmul.f32 %v5154, %v3536
  %v5219 = vmul.f32 %v5155, %v3537
  %v5220 = vmul.f32 %v5156, %v3538
  %v5221 = vmul.f32 %v5157, %v3539
  %v5222 = vmul.f32 %v5158, %v3540
  %v5223 = vmul.f32 %v5159, %v3541
  %v5224 = vmul.f32 %v5160, %v3542
  %v5225 = vmul.f32 %v5161, %v3543
  %v5226 = vmul.f32 %v5162, %v3536
  %v5227 = vmul.f32 %v5163, %v3537
  %v5228 = vmul.f32 %v5164, %v3538
  %v5229 = vmul.f32 %v5165, %v3539
  %v5230 = vmul.f32 %v5166, %v3540
  %v5231 = vmul.f32 %v5167, %v3541
  %v5232 = vmul.f32 %v5168, %v3542
  %v5233 = vmul.f32 %v5169, %v3543
  %5298 = vrot.lane.b32.xlu0 %v5170, 64
  %v5299 = vpop.permute.xlu0 %5298
  %5300 = vrot.lane.b32.xlu0 %v5171, 64
  %v5301 = vpop.permute.xlu0 %5300
  %5302 = vrot.lane.b32.xlu0 %v5172, 64
  %v5303 = vpop.permute.xlu0 %5302
  %5304 = vrot.lane.b32.xlu0 %v5173, 64
  %v5305 = vpop.permute.xlu0 %5304
  %5306 = vrot.lane.b32.xlu0 %v5174, 64
  %v5307 = vpop.permute.xlu0 %5306
  %5308 = vrot.lane.b32.xlu0 %v5175, 64
  %v5309 = vpop.permute.xlu0 %5308
  %5310 = vrot.lane.b32.xlu0 %v5176, 64
  %v5311 = vpop.permute.xlu0 %5310
  %5312 = vrot.lane.b32.xlu0 %v5177, 64
  %v5313 = vpop.permute.xlu0 %5312
  %5314 = vrot.lane.b32.xlu0 %v5178, 64
  %v5315 = vpop.permute.xlu0 %5314
  %5316 = vrot.lane.b32.xlu0 %v5179, 64
  %v5317 = vpop.permute.xlu0 %5316
  %5318 = vrot.lane.b32.xlu0 %v5180, 64
  %v5319 = vpop.permute.xlu0 %5318
  %5320 = vrot.lane.b32.xlu0 %v5181, 64
  %v5321 = vpop.permute.xlu0 %5320
  %5322 = vrot.lane.b32.xlu0 %v5182, 64
  %v5323 = vpop.permute.xlu0 %5322
  %5324 = vrot.lane.b32.xlu0 %v5183, 64
  %v5325 = vpop.permute.xlu0 %5324
  %5326 = vrot.lane.b32.xlu0 %v5184, 64
  %v5327 = vpop.permute.xlu0 %5326
  %5328 = vrot.lane.b32.xlu0 %v5185, 64
  %v5329 = vpop.permute.xlu0 %5328
  %5330 = vrot.lane.b32.xlu0 %v5186, 64
  %v5331 = vpop.permute.xlu0 %5330
  %5332 = vrot.lane.b32.xlu0 %v5187, 64
  %v5333 = vpop.permute.xlu0 %5332
  %5334 = vrot.lane.b32.xlu0 %v5188, 64
  %v5335 = vpop.permute.xlu0 %5334
  %5336 = vrot.lane.b32.xlu0 %v5189, 64
  %v5337 = vpop.permute.xlu0 %5336
  %5338 = vrot.lane.b32.xlu0 %v5190, 64
  %v5339 = vpop.permute.xlu0 %5338
  %5340 = vrot.lane.b32.xlu0 %v5191, 64
  %v5341 = vpop.permute.xlu0 %5340
  %5342 = vrot.lane.b32.xlu0 %v5192, 64
  %v5343 = vpop.permute.xlu0 %5342
  %5344 = vrot.lane.b32.xlu0 %v5193, 64
  %v5345 = vpop.permute.xlu0 %5344
  %5346 = vrot.lane.b32.xlu0 %v5194, 64
  %v5347 = vpop.permute.xlu0 %5346
  %5348 = vrot.lane.b32.xlu0 %v5195, 64
  %v5349 = vpop.permute.xlu0 %5348
  %5350 = vrot.lane.b32.xlu0 %v5196, 64
  %v5351 = vpop.permute.xlu0 %5350
  %5352 = vrot.lane.b32.xlu0 %v5197, 64
  %v5353 = vpop.permute.xlu0 %5352
  %5354 = vrot.lane.b32.xlu0 %v5198, 64
  %v5355 = vpop.permute.xlu0 %5354
  %5356 = vrot.lane.b32.xlu0 %v5199, 64
  %v5357 = vpop.permute.xlu0 %5356
  %5358 = vrot.lane.b32.xlu0 %v5200, 64
  %v5359 = vpop.permute.xlu0 %5358
  %5360 = vrot.lane.b32.xlu0 %v5201, 64
  %v5361 = vpop.permute.xlu0 %5360
  %5362 = vrot.lane.b32.xlu0 %v5202, 64
  %v5363 = vpop.permute.xlu0 %5362
  %5364 = vrot.lane.b32.xlu0 %v5203, 64
  %v5365 = vpop.permute.xlu0 %5364
  %5366 = vrot.lane.b32.xlu0 %v5204, 64
  %v5367 = vpop.permute.xlu0 %5366
  %5368 = vrot.lane.b32.xlu0 %v5205, 64
  %v5369 = vpop.permute.xlu0 %5368
  %5370 = vrot.lane.b32.xlu0 %v5206, 64
  %v5371 = vpop.permute.xlu0 %5370
  %5372 = vrot.lane.b32.xlu0 %v5207, 64
  %v5373 = vpop.permute.xlu0 %5372
  %5374 = vrot.lane.b32.xlu0 %v5208, 64
  %v5375 = vpop.permute.xlu0 %5374
  %5376 = vrot.lane.b32.xlu0 %v5209, 64
  %v5377 = vpop.permute.xlu0 %5376
  %5378 = vrot.lane.b32.xlu0 %v5210, 64
  %v5379 = vpop.permute.xlu0 %5378
  %5380 = vrot.lane.b32.xlu0 %v5211, 64
  %v5381 = vpop.permute.xlu0 %5380
  %5382 = vrot.lane.b32.xlu0 %v5212, 64
  %v5383 = vpop.permute.xlu0 %5382
  %5384 = vrot.lane.b32.xlu0 %v5213, 64
  %v5385 = vpop.permute.xlu0 %5384
  %5386 = vrot.lane.b32.xlu0 %v5214, 64
  %v5387 = vpop.permute.xlu0 %5386
  %5388 = vrot.lane.b32.xlu0 %v5215, 64
  %v5389 = vpop.permute.xlu0 %5388
  %5390 = vrot.lane.b32.xlu0 %v5216, 64
  %v5391 = vpop.permute.xlu0 %5390
  %5392 = vrot.lane.b32.xlu0 %v5217, 64
  %v5393 = vpop.permute.xlu0 %5392
  %5394 = vrot.lane.b32.xlu0 %v5218, 64
  %v5395 = vpop.permute.xlu0 %5394
  %5396 = vrot.lane.b32.xlu0 %v5219, 64
  %v5397 = vpop.permute.xlu0 %5396
  %5398 = vrot.lane.b32.xlu0 %v5220, 64
  %v5399 = vpop.permute.xlu0 %5398
  %5400 = vrot.lane.b32.xlu0 %v5221, 64
  %v5401 = vpop.permute.xlu0 %5400
  %5402 = vrot.lane.b32.xlu0 %v5222, 64
  %v5403 = vpop.permute.xlu0 %5402
  %5404 = vrot.lane.b32.xlu0 %v5223, 64
  %v5405 = vpop.permute.xlu0 %5404
  %5406 = vrot.lane.b32.xlu0 %v5224, 64
  %v5407 = vpop.permute.xlu0 %5406
  %5408 = vrot.lane.b32.xlu0 %v5225, 64
  %v5409 = vpop.permute.xlu0 %5408
  %5410 = vrot.lane.b32.xlu0 %v5226, 64
  %v5411 = vpop.permute.xlu0 %5410
  %5412 = vrot.lane.b32.xlu0 %v5227, 64
  %v5413 = vpop.permute.xlu0 %5412
  %5414 = vrot.lane.b32.xlu0 %v5228, 64
  %v5415 = vpop.permute.xlu0 %5414
  %5416 = vrot.lane.b32.xlu0 %v5229, 64
  %v5417 = vpop.permute.xlu0 %5416
  %5418 = vrot.lane.b32.xlu0 %v5230, 64
  %v5419 = vpop.permute.xlu0 %5418
  %5420 = vrot.lane.b32.xlu0 %v5231, 64
  %v5421 = vpop.permute.xlu0 %5420
  %5422 = vrot.lane.b32.xlu0 %v5232, 64
  %v5423 = vpop.permute.xlu0 %5422
  %5424 = vrot.lane.b32.xlu0 %v5233, 64
  %v5425 = vpop.permute.xlu0 %5424
  %v5490 = vadd.f32 %v4529, %v5299
  %v5491 = vadd.f32 %v4530, %v5301
  %v5492 = vadd.f32 %v4531, %v5303
  %v5493 = vadd.f32 %v4532, %v5305
  %v5494 = vadd.f32 %v4533, %v5307
  %v5495 = vadd.f32 %v4534, %v5309
  %v5496 = vadd.f32 %v4535, %v5311
  %v5497 = vadd.f32 %v4536, %v5313
  %v5498 = vadd.f32 %v4537, %v5315
  %v5499 = vadd.f32 %v4538, %v5317
  %v5500 = vadd.f32 %v4539, %v5319
  %v5501 = vadd.f32 %v4540, %v5321
  %v5502 = vadd.f32 %v4541, %v5323
  %v5503 = vadd.f32 %v4542, %v5325
  %v5504 = vadd.f32 %v4543, %v5327
  %v5505 = vadd.f32 %v4544, %v5329
  %v5506 = vadd.f32 %v4545, %v5331
  %v5507 = vadd.f32 %v4546, %v5333
  %v5508 = vadd.f32 %v4547, %v5335
  %v5509 = vadd.f32 %v4548, %v5337
  %v5510 = vadd.f32 %v4549, %v5339
  %v5511 = vadd.f32 %v4550, %v5341
  %v5512 = vadd.f32 %v4551, %v5343
  %v5513 = vadd.f32 %v4552, %v5345
  %v5514 = vadd.f32 %v4553, %v5347
  %v5515 = vadd.f32 %v4554, %v5349
  %v5516 = vadd.f32 %v4555, %v5351
  %v5517 = vadd.f32 %v4556, %v5353
  %v5518 = vadd.f32 %v4557, %v5355
  %v5519 = vadd.f32 %v4558, %v5357
  %v5520 = vadd.f32 %v4559, %v5359
  %v5521 = vadd.f32 %v4560, %v5361
  %v5522 = vadd.f32 %v4561, %v5363
  %v5523 = vadd.f32 %v4562, %v5365
  %v5524 = vadd.f32 %v4563, %v5367
  %v5525 = vadd.f32 %v4564, %v5369
  %v5526 = vadd.f32 %v4565, %v5371
  %v5527 = vadd.f32 %v4566, %v5373
  %v5528 = vadd.f32 %v4567, %v5375
  %v5529 = vadd.f32 %v4568, %v5377
  %v5530 = vadd.f32 %v4569, %v5379
  %v5531 = vadd.f32 %v4570, %v5381
  %v5532 = vadd.f32 %v4571, %v5383
  %v5533 = vadd.f32 %v4572, %v5385
  %v5534 = vadd.f32 %v4573, %v5387
  %v5535 = vadd.f32 %v4574, %v5389
  %v5536 = vadd.f32 %v4575, %v5391
  %v5537 = vadd.f32 %v4576, %v5393
  %v5538 = vadd.f32 %v4577, %v5395
  %v5539 = vadd.f32 %v4578, %v5397
  %v5540 = vadd.f32 %v4579, %v5399
  %v5541 = vadd.f32 %v4580, %v5401
  %v5542 = vadd.f32 %v4581, %v5403
  %v5543 = vadd.f32 %v4582, %v5405
  %v5544 = vadd.f32 %v4583, %v5407
  %v5545 = vadd.f32 %v4584, %v5409
  %v5546 = vadd.f32 %v4585, %v5411
  %v5547 = vadd.f32 %v4586, %v5413
  %v5548 = vadd.f32 %v4587, %v5415
  %v5549 = vadd.f32 %v4588, %v5417
  %v5550 = vadd.f32 %v4589, %v5419
  %v5551 = vadd.f32 %v4590, %v5421
  %v5552 = vadd.f32 %v4591, %v5423
  %v5553 = vadd.f32 %v4592, %v5425
  %v5554 = vmul.f32 %v5106, %v3608
  %v5555 = vmul.f32 %v5107, %v3609
  %v5556 = vmul.f32 %v5108, %v3610
  %v5557 = vmul.f32 %v5109, %v3611
  %v5558 = vmul.f32 %v5110, %v3612
  %v5559 = vmul.f32 %v5111, %v3613
  %v5560 = vmul.f32 %v5112, %v3614
  %v5561 = vmul.f32 %v5113, %v3615
  %v5562 = vmul.f32 %v5114, %v3608
  %v5563 = vmul.f32 %v5115, %v3609
  %v5564 = vmul.f32 %v5116, %v3610
  %v5565 = vmul.f32 %v5117, %v3611
  %v5566 = vmul.f32 %v5118, %v3612
  %v5567 = vmul.f32 %v5119, %v3613
  %v5568 = vmul.f32 %v5120, %v3614
  %v5569 = vmul.f32 %v5121, %v3615
  %v5570 = vmul.f32 %v5122, %v3608
  %v5571 = vmul.f32 %v5123, %v3609
  %v5572 = vmul.f32 %v5124, %v3610
  %v5573 = vmul.f32 %v5125, %v3611
  %v5574 = vmul.f32 %v5126, %v3612
  %v5575 = vmul.f32 %v5127, %v3613
  %v5576 = vmul.f32 %v5128, %v3614
  %v5577 = vmul.f32 %v5129, %v3615
  %v5578 = vmul.f32 %v5130, %v3608
  %v5579 = vmul.f32 %v5131, %v3609
  %v5580 = vmul.f32 %v5132, %v3610
  %v5581 = vmul.f32 %v5133, %v3611
  %v5582 = vmul.f32 %v5134, %v3612
  %v5583 = vmul.f32 %v5135, %v3613
  %v5584 = vmul.f32 %v5136, %v3614
  %v5585 = vmul.f32 %v5137, %v3615
  %v5586 = vmul.f32 %v5138, %v3608
  %v5587 = vmul.f32 %v5139, %v3609
  %v5588 = vmul.f32 %v5140, %v3610
  %v5589 = vmul.f32 %v5141, %v3611
  %v5590 = vmul.f32 %v5142, %v3612
  %v5591 = vmul.f32 %v5143, %v3613
  %v5592 = vmul.f32 %v5144, %v3614
  %v5593 = vmul.f32 %v5145, %v3615
  %v5594 = vmul.f32 %v5146, %v3608
  %v5595 = vmul.f32 %v5147, %v3609
  %v5596 = vmul.f32 %v5148, %v3610
  %v5597 = vmul.f32 %v5149, %v3611
  %v5598 = vmul.f32 %v5150, %v3612
  %v5599 = vmul.f32 %v5151, %v3613
  %v5600 = vmul.f32 %v5152, %v3614
  %v5601 = vmul.f32 %v5153, %v3615
  %v5602 = vmul.f32 %v5154, %v3608
  %v5603 = vmul.f32 %v5155, %v3609
  %v5604 = vmul.f32 %v5156, %v3610
  %v5605 = vmul.f32 %v5157, %v3611
  %v5606 = vmul.f32 %v5158, %v3612
  %v5607 = vmul.f32 %v5159, %v3613
  %v5608 = vmul.f32 %v5160, %v3614
  %v5609 = vmul.f32 %v5161, %v3615
  %v5610 = vmul.f32 %v5162, %v3608
  %v5611 = vmul.f32 %v5163, %v3609
  %v5612 = vmul.f32 %v5164, %v3610
  %v5613 = vmul.f32 %v5165, %v3611
  %v5614 = vmul.f32 %v5166, %v3612
  %v5615 = vmul.f32 %v5167, %v3613
  %v5616 = vmul.f32 %v5168, %v3614
  %v5617 = vmul.f32 %v5169, %v3615
  %v5618 = vadd.f32 %v4657, %v5554
  %v5619 = vadd.f32 %v4658, %v5555
  %v5620 = vadd.f32 %v4659, %v5556
  %v5621 = vadd.f32 %v4660, %v5557
  %v5622 = vadd.f32 %v4661, %v5558
  %v5623 = vadd.f32 %v4662, %v5559
  %v5624 = vadd.f32 %v4663, %v5560
  %v5625 = vadd.f32 %v4664, %v5561
  %v5626 = vadd.f32 %v4665, %v5562
  %v5627 = vadd.f32 %v4666, %v5563
  %v5628 = vadd.f32 %v4667, %v5564
  %v5629 = vadd.f32 %v4668, %v5565
  %v5630 = vadd.f32 %v4669, %v5566
  %v5631 = vadd.f32 %v4670, %v5567
  %v5632 = vadd.f32 %v4671, %v5568
  %v5633 = vadd.f32 %v4672, %v5569
  %v5634 = vadd.f32 %v4673, %v5570
  %v5635 = vadd.f32 %v4674, %v5571
  %v5636 = vadd.f32 %v4675, %v5572
  %v5637 = vadd.f32 %v4676, %v5573
  %v5638 = vadd.f32 %v4677, %v5574
  %v5639 = vadd.f32 %v4678, %v5575
  %v5640 = vadd.f32 %v4679, %v5576
  %v5641 = vadd.f32 %v4680, %v5577
  %v5642 = vadd.f32 %v4681, %v5578
  %v5643 = vadd.f32 %v4682, %v5579
  %v5644 = vadd.f32 %v4683, %v5580
  %v5645 = vadd.f32 %v4684, %v5581
  %v5646 = vadd.f32 %v4685, %v5582
  %v5647 = vadd.f32 %v4686, %v5583
  %v5648 = vadd.f32 %v4687, %v5584
  %v5649 = vadd.f32 %v4688, %v5585
  %v5650 = vadd.f32 %v4689, %v5586
  %v5651 = vadd.f32 %v4690, %v5587
  %v5652 = vadd.f32 %v4691, %v5588
  %v5653 = vadd.f32 %v4692, %v5589
  %v5654 = vadd.f32 %v4693, %v5590
  %v5655 = vadd.f32 %v4694, %v5591
  %v5656 = vadd.f32 %v4695, %v5592
  %v5657 = vadd.f32 %v4696, %v5593
  %v5658 = vadd.f32 %v4697, %v5594
  %v5659 = vadd.f32 %v4698, %v5595
  %v5660 = vadd.f32 %v4699, %v5596
  %v5661 = vadd.f32 %v4700, %v5597
  %v5662 = vadd.f32 %v4701, %v5598
  %v5663 = vadd.f32 %v4702, %v5599
  %v5664 = vadd.f32 %v4703, %v5600
  %v5665 = vadd.f32 %v4704, %v5601
  %v5666 = vadd.f32 %v4705, %v5602
  %v5667 = vadd.f32 %v4706, %v5603
  %v5668 = vadd.f32 %v4707, %v5604
  %v5669 = vadd.f32 %v4708, %v5605
  %v5670 = vadd.f32 %v4709, %v5606
  %v5671 = vadd.f32 %v4710, %v5607
  %v5672 = vadd.f32 %v4711, %v5608
  %v5673 = vadd.f32 %v4712, %v5609
  %v5674 = vadd.f32 %v4713, %v5610
  %v5675 = vadd.f32 %v4714, %v5611
  %v5676 = vadd.f32 %v4715, %v5612
  %v5677 = vadd.f32 %v4716, %v5613
  %v5678 = vadd.f32 %v4717, %v5614
  %v5679 = vadd.f32 %v4718, %v5615
  %v5680 = vadd.f32 %v4719, %v5616
  %v5681 = vadd.f32 %v4720, %v5617
  %5682 = vrot.lane.b32.xlu0 %v312, 39
  %v5683 = vpop.permute.xlu0 %5682
  %5684 = vrot.lane.b32.xlu0 %v315, 39
  %v5685 = vpop.permute.xlu0 %5684
  %5686 = vrot.lane.b32.xlu0 %v318, 39
  %v5687 = vpop.permute.xlu0 %5686
  %5688 = vrot.lane.b32.xlu0 %v321, 39
  %v5689 = vpop.permute.xlu0 %5688
  %5690 = vrot.lane.b32.xlu0 %v324, 39
  %v5691 = vpop.permute.xlu0 %5690
  %5692 = vrot.lane.b32.xlu0 %v327, 39
  %v5693 = vpop.permute.xlu0 %5692
  %5694 = vrot.lane.b32.xlu0 %v330, 39
  %v5695 = vpop.permute.xlu0 %5694
  %5696 = vrot.lane.b32.xlu0 %v333, 39
  %v5697 = vpop.permute.xlu0 %5696
  %5698 = vrot.lane.b32.xlu0 %v336, 39
  %v5699 = vpop.permute.xlu0 %5698
  %5700 = vrot.lane.b32.xlu0 %v339, 39
  %v5701 = vpop.permute.xlu0 %5700
  %5702 = vrot.lane.b32.xlu0 %v342, 39
  %v5703 = vpop.permute.xlu0 %5702
  %5704 = vrot.lane.b32.xlu0 %v345, 39
  %v5705 = vpop.permute.xlu0 %5704
  %5706 = vrot.lane.b32.xlu0 %v348, 39
  %v5707 = vpop.permute.xlu0 %5706
  %5708 = vrot.lane.b32.xlu0 %v351, 39
  %v5709 = vpop.permute.xlu0 %5708
  %5710 = vrot.lane.b32.xlu0 %v354, 39
  %v5711 = vpop.permute.xlu0 %5710
  %5712 = vrot.lane.b32.xlu0 %v357, 39
  %v5713 = vpop.permute.xlu0 %5712
  %5714 = vrot.lane.b32.xlu0 %v360, 39
  %v5715 = vpop.permute.xlu0 %5714
  %5716 = vrot.lane.b32.xlu0 %v363, 39
  %v5717 = vpop.permute.xlu0 %5716
  %5718 = vrot.lane.b32.xlu0 %v366, 39
  %v5719 = vpop.permute.xlu0 %5718
  %5720 = vrot.lane.b32.xlu0 %v369, 39
  %v5721 = vpop.permute.xlu0 %5720
  %5722 = vrot.lane.b32.xlu0 %v372, 39
  %v5723 = vpop.permute.xlu0 %5722
  %5724 = vrot.lane.b32.xlu0 %v375, 39
  %v5725 = vpop.permute.xlu0 %5724
  %5726 = vrot.lane.b32.xlu0 %v378, 39
  %v5727 = vpop.permute.xlu0 %5726
  %5728 = vrot.lane.b32.xlu0 %v381, 39
  %v5729 = vpop.permute.xlu0 %5728
  %5730 = vrot.lane.b32.xlu0 %v384, 39
  %v5731 = vpop.permute.xlu0 %5730
  %5732 = vrot.lane.b32.xlu0 %v387, 39
  %v5733 = vpop.permute.xlu0 %5732
  %5734 = vrot.lane.b32.xlu0 %v390, 39
  %v5735 = vpop.permute.xlu0 %5734
  %5736 = vrot.lane.b32.xlu0 %v393, 39
  %v5737 = vpop.permute.xlu0 %5736
  %5738 = vrot.lane.b32.xlu0 %v396, 39
  %v5739 = vpop.permute.xlu0 %5738
  %5740 = vrot.lane.b32.xlu0 %v399, 39
  %v5741 = vpop.permute.xlu0 %5740
  %5742 = vrot.lane.b32.xlu0 %v402, 39
  %v5743 = vpop.permute.xlu0 %5742
  %5744 = vrot.lane.b32.xlu0 %v405, 39
  %v5745 = vpop.permute.xlu0 %5744
  %5746 = vrot.lane.b32.xlu0 %v408, 39
  %v5747 = vpop.permute.xlu0 %5746
  %5748 = vrot.lane.b32.xlu0 %v411, 39
  %v5749 = vpop.permute.xlu0 %5748
  %5750 = vrot.lane.b32.xlu0 %v414, 39
  %v5751 = vpop.permute.xlu0 %5750
  %5752 = vrot.lane.b32.xlu0 %v417, 39
  %v5753 = vpop.permute.xlu0 %5752
  %5754 = vrot.lane.b32.xlu0 %v420, 39
  %v5755 = vpop.permute.xlu0 %5754
  %5756 = vrot.lane.b32.xlu0 %v423, 39
  %v5757 = vpop.permute.xlu0 %5756
  %5758 = vrot.lane.b32.xlu0 %v426, 39
  %v5759 = vpop.permute.xlu0 %5758
  %5760 = vrot.lane.b32.xlu0 %v429, 39
  %v5761 = vpop.permute.xlu0 %5760
  %5762 = vrot.lane.b32.xlu0 %v432, 39
  %v5763 = vpop.permute.xlu0 %5762
  %5764 = vrot.lane.b32.xlu0 %v435, 39
  %v5765 = vpop.permute.xlu0 %5764
  %5766 = vrot.lane.b32.xlu0 %v438, 39
  %v5767 = vpop.permute.xlu0 %5766
  %5768 = vrot.lane.b32.xlu0 %v441, 39
  %v5769 = vpop.permute.xlu0 %5768
  %5770 = vrot.lane.b32.xlu0 %v444, 39
  %v5771 = vpop.permute.xlu0 %5770
  %5772 = vrot.lane.b32.xlu0 %v447, 39
  %v5773 = vpop.permute.xlu0 %5772
  %5774 = vrot.lane.b32.xlu0 %v450, 39
  %v5775 = vpop.permute.xlu0 %5774
  %5776 = vrot.lane.b32.xlu0 %v453, 39
  %v5777 = vpop.permute.xlu0 %5776
  %5778 = vrot.lane.b32.xlu0 %v456, 39
  %v5779 = vpop.permute.xlu0 %5778
  %5780 = vrot.lane.b32.xlu0 %v459, 39
  %v5781 = vpop.permute.xlu0 %5780
  %5782 = vrot.lane.b32.xlu0 %v462, 39
  %v5783 = vpop.permute.xlu0 %5782
  %5784 = vrot.lane.b32.xlu0 %v465, 39
  %v5785 = vpop.permute.xlu0 %5784
  %5786 = vrot.lane.b32.xlu0 %v468, 39
  %v5787 = vpop.permute.xlu0 %5786
  %5788 = vrot.lane.b32.xlu0 %v471, 39
  %v5789 = vpop.permute.xlu0 %5788
  %5790 = vrot.lane.b32.xlu0 %v474, 39
  %v5791 = vpop.permute.xlu0 %5790
  %5792 = vrot.lane.b32.xlu0 %v477, 39
  %v5793 = vpop.permute.xlu0 %5792
  %5794 = vrot.lane.b32.xlu0 %v480, 39
  %v5795 = vpop.permute.xlu0 %5794
  %5796 = vrot.lane.b32.xlu0 %v483, 39
  %v5797 = vpop.permute.xlu0 %5796
  %5798 = vrot.lane.b32.xlu0 %v486, 39
  %v5799 = vpop.permute.xlu0 %5798
  %5800 = vrot.lane.b32.xlu0 %v489, 39
  %v5801 = vpop.permute.xlu0 %5800
  %5802 = vrot.lane.b32.xlu0 %v492, 39
  %v5803 = vpop.permute.xlu0 %5802
  %5804 = vrot.lane.b32.xlu0 %v495, 39
  %v5805 = vpop.permute.xlu0 %5804
  %5806 = vrot.lane.b32.xlu0 %v498, 39
  %v5807 = vpop.permute.xlu0 %5806
  %5808 = vrot.lane.b32.xlu0 %v501, 39
  %v5809 = vpop.permute.xlu0 %5808
  %5874 = vrot.lane.b32.xlu0 %v312, 71
  %v5875 = vpop.permute.xlu0 %5874
  %5876 = vrot.lane.b32.xlu0 %v315, 71
  %v5877 = vpop.permute.xlu0 %5876
  %5878 = vrot.lane.b32.xlu0 %v318, 71
  %v5879 = vpop.permute.xlu0 %5878
  %5880 = vrot.lane.b32.xlu0 %v321, 71
  %v5881 = vpop.permute.xlu0 %5880
  %5882 = vrot.lane.b32.xlu0 %v324, 71
  %v5883 = vpop.permute.xlu0 %5882
  %5884 = vrot.lane.b32.xlu0 %v327, 71
  %v5885 = vpop.permute.xlu0 %5884
  %5886 = vrot.lane.b32.xlu0 %v330, 71
  %v5887 = vpop.permute.xlu0 %5886
  %5888 = vrot.lane.b32.xlu0 %v333, 71
  %v5889 = vpop.permute.xlu0 %5888
  %5890 = vrot.lane.b32.xlu0 %v336, 71
  %v5891 = vpop.permute.xlu0 %5890
  %5892 = vrot.lane.b32.xlu0 %v339, 71
  %v5893 = vpop.permute.xlu0 %5892
  %5894 = vrot.lane.b32.xlu0 %v342, 71
  %v5895 = vpop.permute.xlu0 %5894
  %5896 = vrot.lane.b32.xlu0 %v345, 71
  %v5897 = vpop.permute.xlu0 %5896
  %5898 = vrot.lane.b32.xlu0 %v348, 71
  %v5899 = vpop.permute.xlu0 %5898
  %5900 = vrot.lane.b32.xlu0 %v351, 71
  %v5901 = vpop.permute.xlu0 %5900
  %5902 = vrot.lane.b32.xlu0 %v354, 71
  %v5903 = vpop.permute.xlu0 %5902
  %5904 = vrot.lane.b32.xlu0 %v357, 71
  %v5905 = vpop.permute.xlu0 %5904
  %5906 = vrot.lane.b32.xlu0 %v360, 71
  %v5907 = vpop.permute.xlu0 %5906
  %5908 = vrot.lane.b32.xlu0 %v363, 71
  %v5909 = vpop.permute.xlu0 %5908
  %5910 = vrot.lane.b32.xlu0 %v366, 71
  %v5911 = vpop.permute.xlu0 %5910
  %5912 = vrot.lane.b32.xlu0 %v369, 71
  %v5913 = vpop.permute.xlu0 %5912
  %5914 = vrot.lane.b32.xlu0 %v372, 71
  %v5915 = vpop.permute.xlu0 %5914
  %5916 = vrot.lane.b32.xlu0 %v375, 71
  %v5917 = vpop.permute.xlu0 %5916
  %5918 = vrot.lane.b32.xlu0 %v378, 71
  %v5919 = vpop.permute.xlu0 %5918
  %5920 = vrot.lane.b32.xlu0 %v381, 71
  %v5921 = vpop.permute.xlu0 %5920
  %5922 = vrot.lane.b32.xlu0 %v384, 71
  %v5923 = vpop.permute.xlu0 %5922
  %5924 = vrot.lane.b32.xlu0 %v387, 71
  %v5925 = vpop.permute.xlu0 %5924
  %5926 = vrot.lane.b32.xlu0 %v390, 71
  %v5927 = vpop.permute.xlu0 %5926
  %5928 = vrot.lane.b32.xlu0 %v393, 71
  %v5929 = vpop.permute.xlu0 %5928
  %5930 = vrot.lane.b32.xlu0 %v396, 71
  %v5931 = vpop.permute.xlu0 %5930
  %5932 = vrot.lane.b32.xlu0 %v399, 71
  %v5933 = vpop.permute.xlu0 %5932
  %5934 = vrot.lane.b32.xlu0 %v402, 71
  %v5935 = vpop.permute.xlu0 %5934
  %5936 = vrot.lane.b32.xlu0 %v405, 71
  %v5937 = vpop.permute.xlu0 %5936
  %5938 = vrot.lane.b32.xlu0 %v408, 71
  %v5939 = vpop.permute.xlu0 %5938
  %5940 = vrot.lane.b32.xlu0 %v411, 71
  %v5941 = vpop.permute.xlu0 %5940
  %5942 = vrot.lane.b32.xlu0 %v414, 71
  %v5943 = vpop.permute.xlu0 %5942
  %5944 = vrot.lane.b32.xlu0 %v417, 71
  %v5945 = vpop.permute.xlu0 %5944
  %5946 = vrot.lane.b32.xlu0 %v420, 71
  %v5947 = vpop.permute.xlu0 %5946
  %5948 = vrot.lane.b32.xlu0 %v423, 71
  %v5949 = vpop.permute.xlu0 %5948
  %5950 = vrot.lane.b32.xlu0 %v426, 71
  %v5951 = vpop.permute.xlu0 %5950
  %5952 = vrot.lane.b32.xlu0 %v429, 71
  %v5953 = vpop.permute.xlu0 %5952
  %5954 = vrot.lane.b32.xlu0 %v432, 71
  %v5955 = vpop.permute.xlu0 %5954
  %5956 = vrot.lane.b32.xlu0 %v435, 71
  %v5957 = vpop.permute.xlu0 %5956
  %5958 = vrot.lane.b32.xlu0 %v438, 71
  %v5959 = vpop.permute.xlu0 %5958
  %5960 = vrot.lane.b32.xlu0 %v441, 71
  %v5961 = vpop.permute.xlu0 %5960
  %5962 = vrot.lane.b32.xlu0 %v444, 71
  %v5963 = vpop.permute.xlu0 %5962
  %5964 = vrot.lane.b32.xlu0 %v447, 71
  %v5965 = vpop.permute.xlu0 %5964
  %5966 = vrot.lane.b32.xlu0 %v450, 71
  %v5967 = vpop.permute.xlu0 %5966
  %5968 = vrot.lane.b32.xlu0 %v453, 71
  %v5969 = vpop.permute.xlu0 %5968
  %5970 = vrot.lane.b32.xlu0 %v456, 71
  %v5971 = vpop.permute.xlu0 %5970
  %5972 = vrot.lane.b32.xlu0 %v459, 71
  %v5973 = vpop.permute.xlu0 %5972
  %5974 = vrot.lane.b32.xlu0 %v462, 71
  %v5975 = vpop.permute.xlu0 %5974
  %5976 = vrot.lane.b32.xlu0 %v465, 71
  %v5977 = vpop.permute.xlu0 %5976
  %5978 = vrot.lane.b32.xlu0 %v468, 71
  %v5979 = vpop.permute.xlu0 %5978
  %5980 = vrot.lane.b32.xlu0 %v471, 71
  %v5981 = vpop.permute.xlu0 %5980
  %5982 = vrot.lane.b32.xlu0 %v474, 71
  %v5983 = vpop.permute.xlu0 %5982
  %5984 = vrot.lane.b32.xlu0 %v477, 71
  %v5985 = vpop.permute.xlu0 %5984
  %5986 = vrot.lane.b32.xlu0 %v480, 71
  %v5987 = vpop.permute.xlu0 %5986
  %5988 = vrot.lane.b32.xlu0 %v483, 71
  %v5989 = vpop.permute.xlu0 %5988
  %5990 = vrot.lane.b32.xlu0 %v486, 71
  %v5991 = vpop.permute.xlu0 %5990
  %5992 = vrot.lane.b32.xlu0 %v489, 71
  %v5993 = vpop.permute.xlu0 %5992
  %5994 = vrot.lane.b32.xlu0 %v492, 71
  %v5995 = vpop.permute.xlu0 %5994
  %5996 = vrot.lane.b32.xlu0 %v495, 71
  %v5997 = vpop.permute.xlu0 %5996
  %5998 = vrot.lane.b32.xlu0 %v498, 71
  %v5999 = vpop.permute.xlu0 %5998
  %6000 = vrot.lane.b32.xlu0 %v501, 71
  %v6001 = vpop.permute.xlu0 %6000
  %vm6066 = vcmask 56320
  %v6067 = vsel %vm6066, %v5683, %v5875
  %v6068 = vsel %vm6066, %v5685, %v5877
  %v6069 = vsel %vm6066, %v5687, %v5879
  %v6070 = vsel %vm6066, %v5689, %v5881
  %v6071 = vsel %vm6066, %v5691, %v5883
  %v6072 = vsel %vm6066, %v5693, %v5885
  %v6073 = vsel %vm6066, %v5695, %v5887
  %v6074 = vsel %vm6066, %v5697, %v5889
  %v6075 = vsel %vm6066, %v5699, %v5891
  %v6076 = vsel %vm6066, %v5701, %v5893
  %v6077 = vsel %vm6066, %v5703, %v5895
  %v6078 = vsel %vm6066, %v5705, %v5897
  %v6079 = vsel %vm6066, %v5707, %v5899
  %v6080 = vsel %vm6066, %v5709, %v5901
  %v6081 = vsel %vm6066, %v5711, %v5903
  %v6082 = vsel %vm6066, %v5713, %v5905
  %v6083 = vsel %vm6066, %v5715, %v5907
  %v6084 = vsel %vm6066, %v5717, %v5909
  %v6085 = vsel %vm6066, %v5719, %v5911
  %v6086 = vsel %vm6066, %v5721, %v5913
  %v6087 = vsel %vm6066, %v5723, %v5915
  %v6088 = vsel %vm6066, %v5725, %v5917
  %v6089 = vsel %vm6066, %v5727, %v5919
  %v6090 = vsel %vm6066, %v5729, %v5921
  %v6091 = vsel %vm6066, %v5731, %v5923
  %v6092 = vsel %vm6066, %v5733, %v5925
  %v6093 = vsel %vm6066, %v5735, %v5927
  %v6094 = vsel %vm6066, %v5737, %v5929
  %v6095 = vsel %vm6066, %v5739, %v5931
  %v6096 = vsel %vm6066, %v5741, %v5933
  %v6097 = vsel %vm6066, %v5743, %v5935
  %v6098 = vsel %vm6066, %v5745, %v5937
  %v6099 = vsel %vm6066, %v5747, %v5939
  %v6100 = vsel %vm6066, %v5749, %v5941
  %v6101 = vsel %vm6066, %v5751, %v5943
  %v6102 = vsel %vm6066, %v5753, %v5945
  %v6103 = vsel %vm6066, %v5755, %v5947
  %v6104 = vsel %vm6066, %v5757, %v5949
  %v6105 = vsel %vm6066, %v5759, %v5951
  %v6106 = vsel %vm6066, %v5761, %v5953
  %v6107 = vsel %vm6066, %v5763, %v5955
  %v6108 = vsel %vm6066, %v5765, %v5957
  %v6109 = vsel %vm6066, %v5767, %v5959
  %v6110 = vsel %vm6066, %v5769, %v5961
  %v6111 = vsel %vm6066, %v5771, %v5963
  %v6112 = vsel %vm6066, %v5773, %v5965
  %v6113 = vsel %vm6066, %v5775, %v5967
  %v6114 = vsel %vm6066, %v5777, %v5969
  %v6115 = vsel %vm6066, %v5779, %v5971
  %v6116 = vsel %vm6066, %v5781, %v5973
  %v6117 = vsel %vm6066, %v5783, %v5975
  %v6118 = vsel %vm6066, %v5785, %v5977
  %v6119 = vsel %vm6066, %v5787, %v5979
  %v6120 = vsel %vm6066, %v5789, %v5981
  %v6121 = vsel %vm6066, %v5791, %v5983
  %v6122 = vsel %vm6066, %v5793, %v5985
  %v6123 = vsel %vm6066, %v5795, %v5987
  %v6124 = vsel %vm6066, %v5797, %v5989
  %v6125 = vsel %vm6066, %v5799, %v5991
  %v6126 = vsel %vm6066, %v5801, %v5993
  %v6127 = vsel %vm6066, %v5803, %v5995
  %v6128 = vsel %vm6066, %v5805, %v5997
  %v6129 = vsel %vm6066, %v5807, %v5999
  %v6130 = vsel %vm6066, %v5809, %v6001
  %v6131 = vmul.f32 %v6067, %v3544
  %v6132 = vmul.f32 %v6068, %v3545
  %v6133 = vmul.f32 %v6069, %v3546
  %v6134 = vmul.f32 %v6070, %v3547
  %v6135 = vmul.f32 %v6071, %v3548
  %v6136 = vmul.f32 %v6072, %v3549
  %v6137 = vmul.f32 %v6073, %v3550
  %v6138 = vmul.f32 %v6074, %v3551
  %v6139 = vmul.f32 %v6075, %v3544
  %v6140 = vmul.f32 %v6076, %v3545
  %v6141 = vmul.f32 %v6077, %v3546
  %v6142 = vmul.f32 %v6078, %v3547
  %v6143 = vmul.f32 %v6079, %v3548
  %v6144 = vmul.f32 %v6080, %v3549
  %v6145 = vmul.f32 %v6081, %v3550
  %v6146 = vmul.f32 %v6082, %v3551
  %v6147 = vmul.f32 %v6083, %v3544
  %v6148 = vmul.f32 %v6084, %v3545
  %v6149 = vmul.f32 %v6085, %v3546
  %v6150 = vmul.f32 %v6086, %v3547
  %v6151 = vmul.f32 %v6087, %v3548
  %v6152 = vmul.f32 %v6088, %v3549
  %v6153 = vmul.f32 %v6089, %v3550
  %v6154 = vmul.f32 %v6090, %v3551
  %v6155 = vmul.f32 %v6091, %v3544
  %v6156 = vmul.f32 %v6092, %v3545
  %v6157 = vmul.f32 %v6093, %v3546
  %v6158 = vmul.f32 %v6094, %v3547
  %v6159 = vmul.f32 %v6095, %v3548
  %v6160 = vmul.f32 %v6096, %v3549
  %v6161 = vmul.f32 %v6097, %v3550
  %v6162 = vmul.f32 %v6098, %v3551
  %v6163 = vmul.f32 %v6099, %v3544
  %v6164 = vmul.f32 %v6100, %v3545
  %v6165 = vmul.f32 %v6101, %v3546
  %v6166 = vmul.f32 %v6102, %v3547
  %v6167 = vmul.f32 %v6103, %v3548
  %v6168 = vmul.f32 %v6104, %v3549
  %v6169 = vmul.f32 %v6105, %v3550
  %v6170 = vmul.f32 %v6106, %v3551
  %v6171 = vmul.f32 %v6107, %v3544
  %v6172 = vmul.f32 %v6108, %v3545
  %v6173 = vmul.f32 %v6109, %v3546
  %v6174 = vmul.f32 %v6110, %v3547
  %v6175 = vmul.f32 %v6111, %v3548
  %v6176 = vmul.f32 %v6112, %v3549
  %v6177 = vmul.f32 %v6113, %v3550
  %v6178 = vmul.f32 %v6114, %v3551
  %v6179 = vmul.f32 %v6115, %v3544
  %v6180 = vmul.f32 %v6116, %v3545
  %v6181 = vmul.f32 %v6117, %v3546
  %v6182 = vmul.f32 %v6118, %v3547
  %v6183 = vmul.f32 %v6119, %v3548
  %v6184 = vmul.f32 %v6120, %v3549
  %v6185 = vmul.f32 %v6121, %v3550
  %v6186 = vmul.f32 %v6122, %v3551
  %v6187 = vmul.f32 %v6123, %v3544
  %v6188 = vmul.f32 %v6124, %v3545
  %v6189 = vmul.f32 %v6125, %v3546
  %v6190 = vmul.f32 %v6126, %v3547
  %v6191 = vmul.f32 %v6127, %v3548
  %v6192 = vmul.f32 %v6128, %v3549
  %v6193 = vmul.f32 %v6129, %v3550
  %v6194 = vmul.f32 %v6130, %v3551
  %6259 = vrot.lane.b32.xlu0 %v6131, 64
  %v6260 = vpop.permute.xlu0 %6259
  %6261 = vrot.lane.b32.xlu0 %v6132, 64
  %v6262 = vpop.permute.xlu0 %6261
  %6263 = vrot.lane.b32.xlu0 %v6133, 64
  %v6264 = vpop.permute.xlu0 %6263
  %6265 = vrot.lane.b32.xlu0 %v6134, 64
  %v6266 = vpop.permute.xlu0 %6265
  %6267 = vrot.lane.b32.xlu0 %v6135, 64
  %v6268 = vpop.permute.xlu0 %6267
  %6269 = vrot.lane.b32.xlu0 %v6136, 64
  %v6270 = vpop.permute.xlu0 %6269
  %6271 = vrot.lane.b32.xlu0 %v6137, 64
  %v6272 = vpop.permute.xlu0 %6271
  %6273 = vrot.lane.b32.xlu0 %v6138, 64
  %v6274 = vpop.permute.xlu0 %6273
  %6275 = vrot.lane.b32.xlu0 %v6139, 64
  %v6276 = vpop.permute.xlu0 %6275
  %6277 = vrot.lane.b32.xlu0 %v6140, 64
  %v6278 = vpop.permute.xlu0 %6277
  %6279 = vrot.lane.b32.xlu0 %v6141, 64
  %v6280 = vpop.permute.xlu0 %6279
  %6281 = vrot.lane.b32.xlu0 %v6142, 64
  %v6282 = vpop.permute.xlu0 %6281
  %6283 = vrot.lane.b32.xlu0 %v6143, 64
  %v6284 = vpop.permute.xlu0 %6283
  %6285 = vrot.lane.b32.xlu0 %v6144, 64
  %v6286 = vpop.permute.xlu0 %6285
  %6287 = vrot.lane.b32.xlu0 %v6145, 64
  %v6288 = vpop.permute.xlu0 %6287
  %6289 = vrot.lane.b32.xlu0 %v6146, 64
  %v6290 = vpop.permute.xlu0 %6289
  %6291 = vrot.lane.b32.xlu0 %v6147, 64
  %v6292 = vpop.permute.xlu0 %6291
  %6293 = vrot.lane.b32.xlu0 %v6148, 64
  %v6294 = vpop.permute.xlu0 %6293
  %6295 = vrot.lane.b32.xlu0 %v6149, 64
  %v6296 = vpop.permute.xlu0 %6295
  %6297 = vrot.lane.b32.xlu0 %v6150, 64
  %v6298 = vpop.permute.xlu0 %6297
  %6299 = vrot.lane.b32.xlu0 %v6151, 64
  %v6300 = vpop.permute.xlu0 %6299
  %6301 = vrot.lane.b32.xlu0 %v6152, 64
  %v6302 = vpop.permute.xlu0 %6301
  %6303 = vrot.lane.b32.xlu0 %v6153, 64
  %v6304 = vpop.permute.xlu0 %6303
  %6305 = vrot.lane.b32.xlu0 %v6154, 64
  %v6306 = vpop.permute.xlu0 %6305
  %6307 = vrot.lane.b32.xlu0 %v6155, 64
  %v6308 = vpop.permute.xlu0 %6307
  %6309 = vrot.lane.b32.xlu0 %v6156, 64
  %v6310 = vpop.permute.xlu0 %6309
  %6311 = vrot.lane.b32.xlu0 %v6157, 64
  %v6312 = vpop.permute.xlu0 %6311
  %6313 = vrot.lane.b32.xlu0 %v6158, 64
  %v6314 = vpop.permute.xlu0 %6313
  %6315 = vrot.lane.b32.xlu0 %v6159, 64
  %v6316 = vpop.permute.xlu0 %6315
  %6317 = vrot.lane.b32.xlu0 %v6160, 64
  %v6318 = vpop.permute.xlu0 %6317
  %6319 = vrot.lane.b32.xlu0 %v6161, 64
  %v6320 = vpop.permute.xlu0 %6319
  %6321 = vrot.lane.b32.xlu0 %v6162, 64
  %v6322 = vpop.permute.xlu0 %6321
  %6323 = vrot.lane.b32.xlu0 %v6163, 64
  %v6324 = vpop.permute.xlu0 %6323
  %6325 = vrot.lane.b32.xlu0 %v6164, 64
  %v6326 = vpop.permute.xlu0 %6325
  %6327 = vrot.lane.b32.xlu0 %v6165, 64
  %v6328 = vpop.permute.xlu0 %6327
  %6329 = vrot.lane.b32.xlu0 %v6166, 64
  %v6330 = vpop.permute.xlu0 %6329
  %6331 = vrot.lane.b32.xlu0 %v6167, 64
  %v6332 = vpop.permute.xlu0 %6331
  %6333 = vrot.lane.b32.xlu0 %v6168, 64
  %v6334 = vpop.permute.xlu0 %6333
  %6335 = vrot.lane.b32.xlu0 %v6169, 64
  %v6336 = vpop.permute.xlu0 %6335
  %6337 = vrot.lane.b32.xlu0 %v6170, 64
  %v6338 = vpop.permute.xlu0 %6337
  %6339 = vrot.lane.b32.xlu0 %v6171, 64
  %v6340 = vpop.permute.xlu0 %6339
  %6341 = vrot.lane.b32.xlu0 %v6172, 64
  %v6342 = vpop.permute.xlu0 %6341
  %6343 = vrot.lane.b32.xlu0 %v6173, 64
  %v6344 = vpop.permute.xlu0 %6343
  %6345 = vrot.lane.b32.xlu0 %v6174, 64
  %v6346 = vpop.permute.xlu0 %6345
  %6347 = vrot.lane.b32.xlu0 %v6175, 64
  %v6348 = vpop.permute.xlu0 %6347
  %6349 = vrot.lane.b32.xlu0 %v6176, 64
  %v6350 = vpop.permute.xlu0 %6349
  %6351 = vrot.lane.b32.xlu0 %v6177, 64
  %v6352 = vpop.permute.xlu0 %6351
  %6353 = vrot.lane.b32.xlu0 %v6178, 64
  %v6354 = vpop.permute.xlu0 %6353
  %6355 = vrot.lane.b32.xlu0 %v6179, 64
  %v6356 = vpop.permute.xlu0 %6355
  %6357 = vrot.lane.b32.xlu0 %v6180, 64
  %v6358 = vpop.permute.xlu0 %6357
  %6359 = vrot.lane.b32.xlu0 %v6181, 64
  %v6360 = vpop.permute.xlu0 %6359
  %6361 = vrot.lane.b32.xlu0 %v6182, 64
  %v6362 = vpop.permute.xlu0 %6361
  %6363 = vrot.lane.b32.xlu0 %v6183, 64
  %v6364 = vpop.permute.xlu0 %6363
  %6365 = vrot.lane.b32.xlu0 %v6184, 64
  %v6366 = vpop.permute.xlu0 %6365
  %6367 = vrot.lane.b32.xlu0 %v6185, 64
  %v6368 = vpop.permute.xlu0 %6367
  %6369 = vrot.lane.b32.xlu0 %v6186, 64
  %v6370 = vpop.permute.xlu0 %6369
  %6371 = vrot.lane.b32.xlu0 %v6187, 64
  %v6372 = vpop.permute.xlu0 %6371
  %6373 = vrot.lane.b32.xlu0 %v6188, 64
  %v6374 = vpop.permute.xlu0 %6373
  %6375 = vrot.lane.b32.xlu0 %v6189, 64
  %v6376 = vpop.permute.xlu0 %6375
  %6377 = vrot.lane.b32.xlu0 %v6190, 64
  %v6378 = vpop.permute.xlu0 %6377
  %6379 = vrot.lane.b32.xlu0 %v6191, 64
  %v6380 = vpop.permute.xlu0 %6379
  %6381 = vrot.lane.b32.xlu0 %v6192, 64
  %v6382 = vpop.permute.xlu0 %6381
  %6383 = vrot.lane.b32.xlu0 %v6193, 64
  %v6384 = vpop.permute.xlu0 %6383
  %6385 = vrot.lane.b32.xlu0 %v6194, 64
  %v6386 = vpop.permute.xlu0 %6385
  %v6451 = vadd.f32 %v5490, %v6260
  %v6452 = vadd.f32 %v5491, %v6262
  %v6453 = vadd.f32 %v5492, %v6264
  %v6454 = vadd.f32 %v5493, %v6266
  %v6455 = vadd.f32 %v5494, %v6268
  %v6456 = vadd.f32 %v5495, %v6270
  %v6457 = vadd.f32 %v5496, %v6272
  %v6458 = vadd.f32 %v5497, %v6274
  %v6459 = vadd.f32 %v5498, %v6276
  %v6460 = vadd.f32 %v5499, %v6278
  %v6461 = vadd.f32 %v5500, %v6280
  %v6462 = vadd.f32 %v5501, %v6282
  %v6463 = vadd.f32 %v5502, %v6284
  %v6464 = vadd.f32 %v5503, %v6286
  %v6465 = vadd.f32 %v5504, %v6288
  %v6466 = vadd.f32 %v5505, %v6290
  %v6467 = vadd.f32 %v5506, %v6292
  %v6468 = vadd.f32 %v5507, %v6294
  %v6469 = vadd.f32 %v5508, %v6296
  %v6470 = vadd.f32 %v5509, %v6298
  %v6471 = vadd.f32 %v5510, %v6300
  %v6472 = vadd.f32 %v5511, %v6302
  %v6473 = vadd.f32 %v5512, %v6304
  %v6474 = vadd.f32 %v5513, %v6306
  %v6475 = vadd.f32 %v5514, %v6308
  %v6476 = vadd.f32 %v5515, %v6310
  %v6477 = vadd.f32 %v5516, %v6312
  %v6478 = vadd.f32 %v5517, %v6314
  %v6479 = vadd.f32 %v5518, %v6316
  %v6480 = vadd.f32 %v5519, %v6318
  %v6481 = vadd.f32 %v5520, %v6320
  %v6482 = vadd.f32 %v5521, %v6322
  %v6483 = vadd.f32 %v5522, %v6324
  %v6484 = vadd.f32 %v5523, %v6326
  %v6485 = vadd.f32 %v5524, %v6328
  %v6486 = vadd.f32 %v5525, %v6330
  %v6487 = vadd.f32 %v5526, %v6332
  %v6488 = vadd.f32 %v5527, %v6334
  %v6489 = vadd.f32 %v5528, %v6336
  %v6490 = vadd.f32 %v5529, %v6338
  %v6491 = vadd.f32 %v5530, %v6340
  %v6492 = vadd.f32 %v5531, %v6342
  %v6493 = vadd.f32 %v5532, %v6344
  %v6494 = vadd.f32 %v5533, %v6346
  %v6495 = vadd.f32 %v5534, %v6348
  %v6496 = vadd.f32 %v5535, %v6350
  %v6497 = vadd.f32 %v5536, %v6352
  %v6498 = vadd.f32 %v5537, %v6354
  %v6499 = vadd.f32 %v5538, %v6356
  %v6500 = vadd.f32 %v5539, %v6358
  %v6501 = vadd.f32 %v5540, %v6360
  %v6502 = vadd.f32 %v5541, %v6362
  %v6503 = vadd.f32 %v5542, %v6364
  %v6504 = vadd.f32 %v5543, %v6366
  %v6505 = vadd.f32 %v5544, %v6368
  %v6506 = vadd.f32 %v5545, %v6370
  %v6507 = vadd.f32 %v5546, %v6372
  %v6508 = vadd.f32 %v5547, %v6374
  %v6509 = vadd.f32 %v5548, %v6376
  %v6510 = vadd.f32 %v5549, %v6378
  %v6511 = vadd.f32 %v5550, %v6380
  %v6512 = vadd.f32 %v5551, %v6382
  %v6513 = vadd.f32 %v5552, %v6384
  %v6514 = vadd.f32 %v5553, %v6386
  %v6515 = vmul.f32 %v6067, %v3616
  %v6516 = vmul.f32 %v6068, %v3617
  %v6517 = vmul.f32 %v6069, %v3618
  %v6518 = vmul.f32 %v6070, %v3619
  %v6519 = vmul.f32 %v6071, %v3620
  %v6520 = vmul.f32 %v6072, %v3621
  %v6521 = vmul.f32 %v6073, %v3622
  %v6522 = vmul.f32 %v6074, %v3623
  %v6523 = vmul.f32 %v6075, %v3616
  %v6524 = vmul.f32 %v6076, %v3617
  %v6525 = vmul.f32 %v6077, %v3618
  %v6526 = vmul.f32 %v6078, %v3619
  %v6527 = vmul.f32 %v6079, %v3620
  %v6528 = vmul.f32 %v6080, %v3621
  %v6529 = vmul.f32 %v6081, %v3622
  %v6530 = vmul.f32 %v6082, %v3623
  %v6531 = vmul.f32 %v6083, %v3616
  %v6532 = vmul.f32 %v6084, %v3617
  %v6533 = vmul.f32 %v6085, %v3618
  %v6534 = vmul.f32 %v6086, %v3619
  %v6535 = vmul.f32 %v6087, %v3620
  %v6536 = vmul.f32 %v6088, %v3621
  %v6537 = vmul.f32 %v6089, %v3622
  %v6538 = vmul.f32 %v6090, %v3623
  %v6539 = vmul.f32 %v6091, %v3616
  %v6540 = vmul.f32 %v6092, %v3617
  %v6541 = vmul.f32 %v6093, %v3618
  %v6542 = vmul.f32 %v6094, %v3619
  %v6543 = vmul.f32 %v6095, %v3620
  %v6544 = vmul.f32 %v6096, %v3621
  %v6545 = vmul.f32 %v6097, %v3622
  %v6546 = vmul.f32 %v6098, %v3623
  %v6547 = vmul.f32 %v6099, %v3616
  %v6548 = vmul.f32 %v6100, %v3617
  %v6549 = vmul.f32 %v6101, %v3618
  %v6550 = vmul.f32 %v6102, %v3619
  %v6551 = vmul.f32 %v6103, %v3620
  %v6552 = vmul.f32 %v6104, %v3621
  %v6553 = vmul.f32 %v6105, %v3622
  %v6554 = vmul.f32 %v6106, %v3623
  %v6555 = vmul.f32 %v6107, %v3616
  %v6556 = vmul.f32 %v6108, %v3617
  %v6557 = vmul.f32 %v6109, %v3618
  %v6558 = vmul.f32 %v6110, %v3619
  %v6559 = vmul.f32 %v6111, %v3620
  %v6560 = vmul.f32 %v6112, %v3621
  %v6561 = vmul.f32 %v6113, %v3622
  %v6562 = vmul.f32 %v6114, %v3623
  %v6563 = vmul.f32 %v6115, %v3616
  %v6564 = vmul.f32 %v6116, %v3617
  %v6565 = vmul.f32 %v6117, %v3618
  %v6566 = vmul.f32 %v6118, %v3619
  %v6567 = vmul.f32 %v6119, %v3620
  %v6568 = vmul.f32 %v6120, %v3621
  %v6569 = vmul.f32 %v6121, %v3622
  %v6570 = vmul.f32 %v6122, %v3623
  %v6571 = vmul.f32 %v6123, %v3616
  %v6572 = vmul.f32 %v6124, %v3617
  %v6573 = vmul.f32 %v6125, %v3618
  %v6574 = vmul.f32 %v6126, %v3619
  %v6575 = vmul.f32 %v6127, %v3620
  %v6576 = vmul.f32 %v6128, %v3621
  %v6577 = vmul.f32 %v6129, %v3622
  %v6578 = vmul.f32 %v6130, %v3623
  %v6579 = vadd.f32 %v5618, %v6515
  %v6580 = vadd.f32 %v5619, %v6516
  %v6581 = vadd.f32 %v5620, %v6517
  %v6582 = vadd.f32 %v5621, %v6518
  %v6583 = vadd.f32 %v5622, %v6519
  %v6584 = vadd.f32 %v5623, %v6520
  %v6585 = vadd.f32 %v5624, %v6521
  %v6586 = vadd.f32 %v5625, %v6522
  %v6587 = vadd.f32 %v5626, %v6523
  %v6588 = vadd.f32 %v5627, %v6524
  %v6589 = vadd.f32 %v5628, %v6525
  %v6590 = vadd.f32 %v5629, %v6526
  %v6591 = vadd.f32 %v5630, %v6527
  %v6592 = vadd.f32 %v5631, %v6528
  %v6593 = vadd.f32 %v5632, %v6529
  %v6594 = vadd.f32 %v5633, %v6530
  %v6595 = vadd.f32 %v5634, %v6531
  %v6596 = vadd.f32 %v5635, %v6532
  %v6597 = vadd.f32 %v5636, %v6533
  %v6598 = vadd.f32 %v5637, %v6534
  %v6599 = vadd.f32 %v5638, %v6535
  %v6600 = vadd.f32 %v5639, %v6536
  %v6601 = vadd.f32 %v5640, %v6537
  %v6602 = vadd.f32 %v5641, %v6538
  %v6603 = vadd.f32 %v5642, %v6539
  %v6604 = vadd.f32 %v5643, %v6540
  %v6605 = vadd.f32 %v5644, %v6541
  %v6606 = vadd.f32 %v5645, %v6542
  %v6607 = vadd.f32 %v5646, %v6543
  %v6608 = vadd.f32 %v5647, %v6544
  %v6609 = vadd.f32 %v5648, %v6545
  %v6610 = vadd.f32 %v5649, %v6546
  %v6611 = vadd.f32 %v5650, %v6547
  %v6612 = vadd.f32 %v5651, %v6548
  %v6613 = vadd.f32 %v5652, %v6549
  %v6614 = vadd.f32 %v5653, %v6550
  %v6615 = vadd.f32 %v5654, %v6551
  %v6616 = vadd.f32 %v5655, %v6552
  %v6617 = vadd.f32 %v5656, %v6553
  %v6618 = vadd.f32 %v5657, %v6554
  %v6619 = vadd.f32 %v5658, %v6555
  %v6620 = vadd.f32 %v5659, %v6556
  %v6621 = vadd.f32 %v5660, %v6557
  %v6622 = vadd.f32 %v5661, %v6558
  %v6623 = vadd.f32 %v5662, %v6559
  %v6624 = vadd.f32 %v5663, %v6560
  %v6625 = vadd.f32 %v5664, %v6561
  %v6626 = vadd.f32 %v5665, %v6562
  %v6627 = vadd.f32 %v5666, %v6563
  %v6628 = vadd.f32 %v5667, %v6564
  %v6629 = vadd.f32 %v5668, %v6565
  %v6630 = vadd.f32 %v5669, %v6566
  %v6631 = vadd.f32 %v5670, %v6567
  %v6632 = vadd.f32 %v5671, %v6568
  %v6633 = vadd.f32 %v5672, %v6569
  %v6634 = vadd.f32 %v5673, %v6570
  %v6635 = vadd.f32 %v5674, %v6571
  %v6636 = vadd.f32 %v5675, %v6572
  %v6637 = vadd.f32 %v5676, %v6573
  %v6638 = vadd.f32 %v5677, %v6574
  %v6639 = vadd.f32 %v5678, %v6575
  %v6640 = vadd.f32 %v5679, %v6576
  %v6641 = vadd.f32 %v5680, %v6577
  %v6642 = vadd.f32 %v5681, %v6578
  %6643 = vrot.lane.b32.xlu0 %v312, 33
  %v6644 = vpop.permute.xlu0 %6643
  %6645 = vrot.lane.b32.xlu0 %v315, 33
  %v6646 = vpop.permute.xlu0 %6645
  %6647 = vrot.lane.b32.xlu0 %v318, 33
  %v6648 = vpop.permute.xlu0 %6647
  %6649 = vrot.lane.b32.xlu0 %v321, 33
  %v6650 = vpop.permute.xlu0 %6649
  %6651 = vrot.lane.b32.xlu0 %v324, 33
  %v6652 = vpop.permute.xlu0 %6651
  %6653 = vrot.lane.b32.xlu0 %v327, 33
  %v6654 = vpop.permute.xlu0 %6653
  %6655 = vrot.lane.b32.xlu0 %v330, 33
  %v6656 = vpop.permute.xlu0 %6655
  %6657 = vrot.lane.b32.xlu0 %v333, 33
  %v6658 = vpop.permute.xlu0 %6657
  %6659 = vrot.lane.b32.xlu0 %v336, 33
  %v6660 = vpop.permute.xlu0 %6659
  %6661 = vrot.lane.b32.xlu0 %v339, 33
  %v6662 = vpop.permute.xlu0 %6661
  %6663 = vrot.lane.b32.xlu0 %v342, 33
  %v6664 = vpop.permute.xlu0 %6663
  %6665 = vrot.lane.b32.xlu0 %v345, 33
  %v6666 = vpop.permute.xlu0 %6665
  %6667 = vrot.lane.b32.xlu0 %v348, 33
  %v6668 = vpop.permute.xlu0 %6667
  %6669 = vrot.lane.b32.xlu0 %v351, 33
  %v6670 = vpop.permute.xlu0 %6669
  %6671 = vrot.lane.b32.xlu0 %v354, 33
  %v6672 = vpop.permute.xlu0 %6671
  %6673 = vrot.lane.b32.xlu0 %v357, 33
  %v6674 = vpop.permute.xlu0 %6673
  %6675 = vrot.lane.b32.xlu0 %v360, 33
  %v6676 = vpop.permute.xlu0 %6675
  %6677 = vrot.lane.b32.xlu0 %v363, 33
  %v6678 = vpop.permute.xlu0 %6677
  %6679 = vrot.lane.b32.xlu0 %v366, 33
  %v6680 = vpop.permute.xlu0 %6679
  %6681 = vrot.lane.b32.xlu0 %v369, 33
  %v6682 = vpop.permute.xlu0 %6681
  %6683 = vrot.lane.b32.xlu0 %v372, 33
  %v6684 = vpop.permute.xlu0 %6683
  %6685 = vrot.lane.b32.xlu0 %v375, 33
  %v6686 = vpop.permute.xlu0 %6685
  %6687 = vrot.lane.b32.xlu0 %v378, 33
  %v6688 = vpop.permute.xlu0 %6687
  %6689 = vrot.lane.b32.xlu0 %v381, 33
  %v6690 = vpop.permute.xlu0 %6689
  %6691 = vrot.lane.b32.xlu0 %v384, 33
  %v6692 = vpop.permute.xlu0 %6691
  %6693 = vrot.lane.b32.xlu0 %v387, 33
  %v6694 = vpop.permute.xlu0 %6693
  %6695 = vrot.lane.b32.xlu0 %v390, 33
  %v6696 = vpop.permute.xlu0 %6695
  %6697 = vrot.lane.b32.xlu0 %v393, 33
  %v6698 = vpop.permute.xlu0 %6697
  %6699 = vrot.lane.b32.xlu0 %v396, 33
  %v6700 = vpop.permute.xlu0 %6699
  %6701 = vrot.lane.b32.xlu0 %v399, 33
  %v6702 = vpop.permute.xlu0 %6701
  %6703 = vrot.lane.b32.xlu0 %v402, 33
  %v6704 = vpop.permute.xlu0 %6703
  %6705 = vrot.lane.b32.xlu0 %v405, 33
  %v6706 = vpop.permute.xlu0 %6705
  %6707 = vrot.lane.b32.xlu0 %v408, 33
  %v6708 = vpop.permute.xlu0 %6707
  %6709 = vrot.lane.b32.xlu0 %v411, 33
  %v6710 = vpop.permute.xlu0 %6709
  %6711 = vrot.lane.b32.xlu0 %v414, 33
  %v6712 = vpop.permute.xlu0 %6711
  %6713 = vrot.lane.b32.xlu0 %v417, 33
  %v6714 = vpop.permute.xlu0 %6713
  %6715 = vrot.lane.b32.xlu0 %v420, 33
  %v6716 = vpop.permute.xlu0 %6715
  %6717 = vrot.lane.b32.xlu0 %v423, 33
  %v6718 = vpop.permute.xlu0 %6717
  %6719 = vrot.lane.b32.xlu0 %v426, 33
  %v6720 = vpop.permute.xlu0 %6719
  %6721 = vrot.lane.b32.xlu0 %v429, 33
  %v6722 = vpop.permute.xlu0 %6721
  %6723 = vrot.lane.b32.xlu0 %v432, 33
  %v6724 = vpop.permute.xlu0 %6723
  %6725 = vrot.lane.b32.xlu0 %v435, 33
  %v6726 = vpop.permute.xlu0 %6725
  %6727 = vrot.lane.b32.xlu0 %v438, 33
  %v6728 = vpop.permute.xlu0 %6727
  %6729 = vrot.lane.b32.xlu0 %v441, 33
  %v6730 = vpop.permute.xlu0 %6729
  %6731 = vrot.lane.b32.xlu0 %v444, 33
  %v6732 = vpop.permute.xlu0 %6731
  %6733 = vrot.lane.b32.xlu0 %v447, 33
  %v6734 = vpop.permute.xlu0 %6733
  %6735 = vrot.lane.b32.xlu0 %v450, 33
  %v6736 = vpop.permute.xlu0 %6735
  %6737 = vrot.lane.b32.xlu0 %v453, 33
  %v6738 = vpop.permute.xlu0 %6737
  %6739 = vrot.lane.b32.xlu0 %v456, 33
  %v6740 = vpop.permute.xlu0 %6739
  %6741 = vrot.lane.b32.xlu0 %v459, 33
  %v6742 = vpop.permute.xlu0 %6741
  %6743 = vrot.lane.b32.xlu0 %v462, 33
  %v6744 = vpop.permute.xlu0 %6743
  %6745 = vrot.lane.b32.xlu0 %v465, 33
  %v6746 = vpop.permute.xlu0 %6745
  %6747 = vrot.lane.b32.xlu0 %v468, 33
  %v6748 = vpop.permute.xlu0 %6747
  %6749 = vrot.lane.b32.xlu0 %v471, 33
  %v6750 = vpop.permute.xlu0 %6749
  %6751 = vrot.lane.b32.xlu0 %v474, 33
  %v6752 = vpop.permute.xlu0 %6751
  %6753 = vrot.lane.b32.xlu0 %v477, 33
  %v6754 = vpop.permute.xlu0 %6753
  %6755 = vrot.lane.b32.xlu0 %v480, 33
  %v6756 = vpop.permute.xlu0 %6755
  %6757 = vrot.lane.b32.xlu0 %v483, 33
  %v6758 = vpop.permute.xlu0 %6757
  %6759 = vrot.lane.b32.xlu0 %v486, 33
  %v6760 = vpop.permute.xlu0 %6759
  %6761 = vrot.lane.b32.xlu0 %v489, 33
  %v6762 = vpop.permute.xlu0 %6761
  %6763 = vrot.lane.b32.xlu0 %v492, 33
  %v6764 = vpop.permute.xlu0 %6763
  %6765 = vrot.lane.b32.xlu0 %v495, 33
  %v6766 = vpop.permute.xlu0 %6765
  %6767 = vrot.lane.b32.xlu0 %v498, 33
  %v6768 = vpop.permute.xlu0 %6767
  %6769 = vrot.lane.b32.xlu0 %v501, 33
  %v6770 = vpop.permute.xlu0 %6769
  %6835 = vrot.lane.b32.xlu0 %v312, 65
  %v6836 = vpop.permute.xlu0 %6835
  %6837 = vrot.lane.b32.xlu0 %v315, 65
  %v6838 = vpop.permute.xlu0 %6837
  %6839 = vrot.lane.b32.xlu0 %v318, 65
  %v6840 = vpop.permute.xlu0 %6839
  %6841 = vrot.lane.b32.xlu0 %v321, 65
  %v6842 = vpop.permute.xlu0 %6841
  %6843 = vrot.lane.b32.xlu0 %v324, 65
  %v6844 = vpop.permute.xlu0 %6843
  %6845 = vrot.lane.b32.xlu0 %v327, 65
  %v6846 = vpop.permute.xlu0 %6845
  %6847 = vrot.lane.b32.xlu0 %v330, 65
  %v6848 = vpop.permute.xlu0 %6847
  %6849 = vrot.lane.b32.xlu0 %v333, 65
  %v6850 = vpop.permute.xlu0 %6849
  %6851 = vrot.lane.b32.xlu0 %v336, 65
  %v6852 = vpop.permute.xlu0 %6851
  %6853 = vrot.lane.b32.xlu0 %v339, 65
  %v6854 = vpop.permute.xlu0 %6853
  %6855 = vrot.lane.b32.xlu0 %v342, 65
  %v6856 = vpop.permute.xlu0 %6855
  %6857 = vrot.lane.b32.xlu0 %v345, 65
  %v6858 = vpop.permute.xlu0 %6857
  %6859 = vrot.lane.b32.xlu0 %v348, 65
  %v6860 = vpop.permute.xlu0 %6859
  %6861 = vrot.lane.b32.xlu0 %v351, 65
  %v6862 = vpop.permute.xlu0 %6861
  %6863 = vrot.lane.b32.xlu0 %v354, 65
  %v6864 = vpop.permute.xlu0 %6863
  %6865 = vrot.lane.b32.xlu0 %v357, 65
  %v6866 = vpop.permute.xlu0 %6865
  %6867 = vrot.lane.b32.xlu0 %v360, 65
  %v6868 = vpop.permute.xlu0 %6867
  %6869 = vrot.lane.b32.xlu0 %v363, 65
  %v6870 = vpop.permute.xlu0 %6869
  %6871 = vrot.lane.b32.xlu0 %v366, 65
  %v6872 = vpop.permute.xlu0 %6871
  %6873 = vrot.lane.b32.xlu0 %v369, 65
  %v6874 = vpop.permute.xlu0 %6873
  %6875 = vrot.lane.b32.xlu0 %v372, 65
  %v6876 = vpop.permute.xlu0 %6875
  %6877 = vrot.lane.b32.xlu0 %v375, 65
  %v6878 = vpop.permute.xlu0 %6877
  %6879 = vrot.lane.b32.xlu0 %v378, 65
  %v6880 = vpop.permute.xlu0 %6879
  %6881 = vrot.lane.b32.xlu0 %v381, 65
  %v6882 = vpop.permute.xlu0 %6881
  %6883 = vrot.lane.b32.xlu0 %v384, 65
  %v6884 = vpop.permute.xlu0 %6883
  %6885 = vrot.lane.b32.xlu0 %v387, 65
  %v6886 = vpop.permute.xlu0 %6885
  %6887 = vrot.lane.b32.xlu0 %v390, 65
  %v6888 = vpop.permute.xlu0 %6887
  %6889 = vrot.lane.b32.xlu0 %v393, 65
  %v6890 = vpop.permute.xlu0 %6889
  %6891 = vrot.lane.b32.xlu0 %v396, 65
  %v6892 = vpop.permute.xlu0 %6891
  %6893 = vrot.lane.b32.xlu0 %v399, 65
  %v6894 = vpop.permute.xlu0 %6893
  %6895 = vrot.lane.b32.xlu0 %v402, 65
  %v6896 = vpop.permute.xlu0 %6895
  %6897 = vrot.lane.b32.xlu0 %v405, 65
  %v6898 = vpop.permute.xlu0 %6897
  %6899 = vrot.lane.b32.xlu0 %v408, 65
  %v6900 = vpop.permute.xlu0 %6899
  %6901 = vrot.lane.b32.xlu0 %v411, 65
  %v6902 = vpop.permute.xlu0 %6901
  %6903 = vrot.lane.b32.xlu0 %v414, 65
  %v6904 = vpop.permute.xlu0 %6903
  %6905 = vrot.lane.b32.xlu0 %v417, 65
  %v6906 = vpop.permute.xlu0 %6905
  %6907 = vrot.lane.b32.xlu0 %v420, 65
  %v6908 = vpop.permute.xlu0 %6907
  %6909 = vrot.lane.b32.xlu0 %v423, 65
  %v6910 = vpop.permute.xlu0 %6909
  %6911 = vrot.lane.b32.xlu0 %v426, 65
  %v6912 = vpop.permute.xlu0 %6911
  %6913 = vrot.lane.b32.xlu0 %v429, 65
  %v6914 = vpop.permute.xlu0 %6913
  %6915 = vrot.lane.b32.xlu0 %v432, 65
  %v6916 = vpop.permute.xlu0 %6915
  %6917 = vrot.lane.b32.xlu0 %v435, 65
  %v6918 = vpop.permute.xlu0 %6917
  %6919 = vrot.lane.b32.xlu0 %v438, 65
  %v6920 = vpop.permute.xlu0 %6919
  %6921 = vrot.lane.b32.xlu0 %v441, 65
  %v6922 = vpop.permute.xlu0 %6921
  %6923 = vrot.lane.b32.xlu0 %v444, 65
  %v6924 = vpop.permute.xlu0 %6923
  %6925 = vrot.lane.b32.xlu0 %v447, 65
  %v6926 = vpop.permute.xlu0 %6925
  %6927 = vrot.lane.b32.xlu0 %v450, 65
  %v6928 = vpop.permute.xlu0 %6927
  %6929 = vrot.lane.b32.xlu0 %v453, 65
  %v6930 = vpop.permute.xlu0 %6929
  %6931 = vrot.lane.b32.xlu0 %v456, 65
  %v6932 = vpop.permute.xlu0 %6931
  %6933 = vrot.lane.b32.xlu0 %v459, 65
  %v6934 = vpop.permute.xlu0 %6933
  %6935 = vrot.lane.b32.xlu0 %v462, 65
  %v6936 = vpop.permute.xlu0 %6935
  %6937 = vrot.lane.b32.xlu0 %v465, 65
  %v6938 = vpop.permute.xlu0 %6937
  %6939 = vrot.lane.b32.xlu0 %v468, 65
  %v6940 = vpop.permute.xlu0 %6939
  %6941 = vrot.lane.b32.xlu0 %v471, 65
  %v6942 = vpop.permute.xlu0 %6941
  %6943 = vrot.lane.b32.xlu0 %v474, 65
  %v6944 = vpop.permute.xlu0 %6943
  %6945 = vrot.lane.b32.xlu0 %v477, 65
  %v6946 = vpop.permute.xlu0 %6945
  %6947 = vrot.lane.b32.xlu0 %v480, 65
  %v6948 = vpop.permute.xlu0 %6947
  %6949 = vrot.lane.b32.xlu0 %v483, 65
  %v6950 = vpop.permute.xlu0 %6949
  %6951 = vrot.lane.b32.xlu0 %v486, 65
  %v6952 = vpop.permute.xlu0 %6951
  %6953 = vrot.lane.b32.xlu0 %v489, 65
  %v6954 = vpop.permute.xlu0 %6953
  %6955 = vrot.lane.b32.xlu0 %v492, 65
  %v6956 = vpop.permute.xlu0 %6955
  %6957 = vrot.lane.b32.xlu0 %v495, 65
  %v6958 = vpop.permute.xlu0 %6957
  %6959 = vrot.lane.b32.xlu0 %v498, 65
  %v6960 = vpop.permute.xlu0 %6959
  %6961 = vrot.lane.b32.xlu0 %v501, 65
  %v6962 = vpop.permute.xlu0 %6961
  %vm7027 = vcmask 7168
  %v7028 = vsel %vm7027, %v6644, %v6836
  %v7029 = vsel %vm7027, %v6646, %v6838
  %v7030 = vsel %vm7027, %v6648, %v6840
  %v7031 = vsel %vm7027, %v6650, %v6842
  %v7032 = vsel %vm7027, %v6652, %v6844
  %v7033 = vsel %vm7027, %v6654, %v6846
  %v7034 = vsel %vm7027, %v6656, %v6848
  %v7035 = vsel %vm7027, %v6658, %v6850
  %v7036 = vsel %vm7027, %v6660, %v6852
  %v7037 = vsel %vm7027, %v6662, %v6854
  %v7038 = vsel %vm7027, %v6664, %v6856
  %v7039 = vsel %vm7027, %v6666, %v6858
  %v7040 = vsel %vm7027, %v6668, %v6860
  %v7041 = vsel %vm7027, %v6670, %v6862
  %v7042 = vsel %vm7027, %v6672, %v6864
  %v7043 = vsel %vm7027, %v6674, %v6866
  %v7044 = vsel %vm7027, %v6676, %v6868
  %v7045 = vsel %vm7027, %v6678, %v6870
  %v7046 = vsel %vm7027, %v6680, %v6872
  %v7047 = vsel %vm7027, %v6682, %v6874
  %v7048 = vsel %vm7027, %v6684, %v6876
  %v7049 = vsel %vm7027, %v6686, %v6878
  %v7050 = vsel %vm7027, %v6688, %v6880
  %v7051 = vsel %vm7027, %v6690, %v6882
  %v7052 = vsel %vm7027, %v6692, %v6884
  %v7053 = vsel %vm7027, %v6694, %v6886
  %v7054 = vsel %vm7027, %v6696, %v6888
  %v7055 = vsel %vm7027, %v6698, %v6890
  %v7056 = vsel %vm7027, %v6700, %v6892
  %v7057 = vsel %vm7027, %v6702, %v6894
  %v7058 = vsel %vm7027, %v6704, %v6896
  %v7059 = vsel %vm7027, %v6706, %v6898
  %v7060 = vsel %vm7027, %v6708, %v6900
  %v7061 = vsel %vm7027, %v6710, %v6902
  %v7062 = vsel %vm7027, %v6712, %v6904
  %v7063 = vsel %vm7027, %v6714, %v6906
  %v7064 = vsel %vm7027, %v6716, %v6908
  %v7065 = vsel %vm7027, %v6718, %v6910
  %v7066 = vsel %vm7027, %v6720, %v6912
  %v7067 = vsel %vm7027, %v6722, %v6914
  %v7068 = vsel %vm7027, %v6724, %v6916
  %v7069 = vsel %vm7027, %v6726, %v6918
  %v7070 = vsel %vm7027, %v6728, %v6920
  %v7071 = vsel %vm7027, %v6730, %v6922
  %v7072 = vsel %vm7027, %v6732, %v6924
  %v7073 = vsel %vm7027, %v6734, %v6926
  %v7074 = vsel %vm7027, %v6736, %v6928
  %v7075 = vsel %vm7027, %v6738, %v6930
  %v7076 = vsel %vm7027, %v6740, %v6932
  %v7077 = vsel %vm7027, %v6742, %v6934
  %v7078 = vsel %vm7027, %v6744, %v6936
  %v7079 = vsel %vm7027, %v6746, %v6938
  %v7080 = vsel %vm7027, %v6748, %v6940
  %v7081 = vsel %vm7027, %v6750, %v6942
  %v7082 = vsel %vm7027, %v6752, %v6944
  %v7083 = vsel %vm7027, %v6754, %v6946
  %v7084 = vsel %vm7027, %v6756, %v6948
  %v7085 = vsel %vm7027, %v6758, %v6950
  %v7086 = vsel %vm7027, %v6760, %v6952
  %v7087 = vsel %vm7027, %v6762, %v6954
  %v7088 = vsel %vm7027, %v6764, %v6956
  %v7089 = vsel %vm7027, %v6766, %v6958
  %v7090 = vsel %vm7027, %v6768, %v6960
  %v7091 = vsel %vm7027, %v6770, %v6962
  %v7092 = vmul.f32 %v7028, %v3552
  %v7093 = vmul.f32 %v7029, %v3553
  %v7094 = vmul.f32 %v7030, %v3554
  %v7095 = vmul.f32 %v7031, %v3555
  %v7096 = vmul.f32 %v7032, %v3556
  %v7097 = vmul.f32 %v7033, %v3557
  %v7098 = vmul.f32 %v7034, %v3558
  %v7099 = vmul.f32 %v7035, %v3559
  %v7100 = vmul.f32 %v7036, %v3552
  %v7101 = vmul.f32 %v7037, %v3553
  %v7102 = vmul.f32 %v7038, %v3554
  %v7103 = vmul.f32 %v7039, %v3555
  %v7104 = vmul.f32 %v7040, %v3556
  %v7105 = vmul.f32 %v7041, %v3557
  %v7106 = vmul.f32 %v7042, %v3558
  %v7107 = vmul.f32 %v7043, %v3559
  %v7108 = vmul.f32 %v7044, %v3552
  %v7109 = vmul.f32 %v7045, %v3553
  %v7110 = vmul.f32 %v7046, %v3554
  %v7111 = vmul.f32 %v7047, %v3555
  %v7112 = vmul.f32 %v7048, %v3556
  %v7113 = vmul.f32 %v7049, %v3557
  %v7114 = vmul.f32 %v7050, %v3558
  %v7115 = vmul.f32 %v7051, %v3559
  %v7116 = vmul.f32 %v7052, %v3552
  %v7117 = vmul.f32 %v7053, %v3553
  %v7118 = vmul.f32 %v7054, %v3554
  %v7119 = vmul.f32 %v7055, %v3555
  %v7120 = vmul.f32 %v7056, %v3556
  %v7121 = vmul.f32 %v7057, %v3557
  %v7122 = vmul.f32 %v7058, %v3558
  %v7123 = vmul.f32 %v7059, %v3559
  %v7124 = vmul.f32 %v7060, %v3552
  %v7125 = vmul.f32 %v7061, %v3553
  %v7126 = vmul.f32 %v7062, %v3554
  %v7127 = vmul.f32 %v7063, %v3555
  %v7128 = vmul.f32 %v7064, %v3556
  %v7129 = vmul.f32 %v7065, %v3557
  %v7130 = vmul.f32 %v7066, %v3558
  %v7131 = vmul.f32 %v7067, %v3559
  %v7132 = vmul.f32 %v7068, %v3552
  %v7133 = vmul.f32 %v7069, %v3553
  %v7134 = vmul.f32 %v7070, %v3554
  %v7135 = vmul.f32 %v7071, %v3555
  %v7136 = vmul.f32 %v7072, %v3556
  %v7137 = vmul.f32 %v7073, %v3557
  %v7138 = vmul.f32 %v7074, %v3558
  %v7139 = vmul.f32 %v7075, %v3559
  %v7140 = vmul.f32 %v7076, %v3552
  %v7141 = vmul.f32 %v7077, %v3553
  %v7142 = vmul.f32 %v7078, %v3554
  %v7143 = vmul.f32 %v7079, %v3555
  %v7144 = vmul.f32 %v7080, %v3556
  %v7145 = vmul.f32 %v7081, %v3557
  %v7146 = vmul.f32 %v7082, %v3558
  %v7147 = vmul.f32 %v7083, %v3559
  %v7148 = vmul.f32 %v7084, %v3552
  %v7149 = vmul.f32 %v7085, %v3553
  %v7150 = vmul.f32 %v7086, %v3554
  %v7151 = vmul.f32 %v7087, %v3555
  %v7152 = vmul.f32 %v7088, %v3556
  %v7153 = vmul.f32 %v7089, %v3557
  %v7154 = vmul.f32 %v7090, %v3558
  %v7155 = vmul.f32 %v7091, %v3559
  %7220 = vrot.lane.b32.xlu0 %v7092, 64
  %v7221 = vpop.permute.xlu0 %7220
  %7222 = vrot.lane.b32.xlu0 %v7093, 64
  %v7223 = vpop.permute.xlu0 %7222
  %7224 = vrot.lane.b32.xlu0 %v7094, 64
  %v7225 = vpop.permute.xlu0 %7224
  %7226 = vrot.lane.b32.xlu0 %v7095, 64
  %v7227 = vpop.permute.xlu0 %7226
  %7228 = vrot.lane.b32.xlu0 %v7096, 64
  %v7229 = vpop.permute.xlu0 %7228
  %7230 = vrot.lane.b32.xlu0 %v7097, 64
  %v7231 = vpop.permute.xlu0 %7230
  %7232 = vrot.lane.b32.xlu0 %v7098, 64
  %v7233 = vpop.permute.xlu0 %7232
  %7234 = vrot.lane.b32.xlu0 %v7099, 64
  %v7235 = vpop.permute.xlu0 %7234
  %7236 = vrot.lane.b32.xlu0 %v7100, 64
  %v7237 = vpop.permute.xlu0 %7236
  %7238 = vrot.lane.b32.xlu0 %v7101, 64
  %v7239 = vpop.permute.xlu0 %7238
  %7240 = vrot.lane.b32.xlu0 %v7102, 64
  %v7241 = vpop.permute.xlu0 %7240
  %7242 = vrot.lane.b32.xlu0 %v7103, 64
  %v7243 = vpop.permute.xlu0 %7242
  %7244 = vrot.lane.b32.xlu0 %v7104, 64
  %v7245 = vpop.permute.xlu0 %7244
  %7246 = vrot.lane.b32.xlu0 %v7105, 64
  %v7247 = vpop.permute.xlu0 %7246
  %7248 = vrot.lane.b32.xlu0 %v7106, 64
  %v7249 = vpop.permute.xlu0 %7248
  %7250 = vrot.lane.b32.xlu0 %v7107, 64
  %v7251 = vpop.permute.xlu0 %7250
  %7252 = vrot.lane.b32.xlu0 %v7108, 64
  %v7253 = vpop.permute.xlu0 %7252
  %7254 = vrot.lane.b32.xlu0 %v7109, 64
  %v7255 = vpop.permute.xlu0 %7254
  %7256 = vrot.lane.b32.xlu0 %v7110, 64
  %v7257 = vpop.permute.xlu0 %7256
  %7258 = vrot.lane.b32.xlu0 %v7111, 64
  %v7259 = vpop.permute.xlu0 %7258
  %7260 = vrot.lane.b32.xlu0 %v7112, 64
  %v7261 = vpop.permute.xlu0 %7260
  %7262 = vrot.lane.b32.xlu0 %v7113, 64
  %v7263 = vpop.permute.xlu0 %7262
  %7264 = vrot.lane.b32.xlu0 %v7114, 64
  %v7265 = vpop.permute.xlu0 %7264
  %7266 = vrot.lane.b32.xlu0 %v7115, 64
  %v7267 = vpop.permute.xlu0 %7266
  %7268 = vrot.lane.b32.xlu0 %v7116, 64
  %v7269 = vpop.permute.xlu0 %7268
  %7270 = vrot.lane.b32.xlu0 %v7117, 64
  %v7271 = vpop.permute.xlu0 %7270
  %7272 = vrot.lane.b32.xlu0 %v7118, 64
  %v7273 = vpop.permute.xlu0 %7272
  %7274 = vrot.lane.b32.xlu0 %v7119, 64
  %v7275 = vpop.permute.xlu0 %7274
  %7276 = vrot.lane.b32.xlu0 %v7120, 64
  %v7277 = vpop.permute.xlu0 %7276
  %7278 = vrot.lane.b32.xlu0 %v7121, 64
  %v7279 = vpop.permute.xlu0 %7278
  %7280 = vrot.lane.b32.xlu0 %v7122, 64
  %v7281 = vpop.permute.xlu0 %7280
  %7282 = vrot.lane.b32.xlu0 %v7123, 64
  %v7283 = vpop.permute.xlu0 %7282
  %7284 = vrot.lane.b32.xlu0 %v7124, 64
  %v7285 = vpop.permute.xlu0 %7284
  %7286 = vrot.lane.b32.xlu0 %v7125, 64
  %v7287 = vpop.permute.xlu0 %7286
  %7288 = vrot.lane.b32.xlu0 %v7126, 64
  %v7289 = vpop.permute.xlu0 %7288
  %7290 = vrot.lane.b32.xlu0 %v7127, 64
  %v7291 = vpop.permute.xlu0 %7290
  %7292 = vrot.lane.b32.xlu0 %v7128, 64
  %v7293 = vpop.permute.xlu0 %7292
  %7294 = vrot.lane.b32.xlu0 %v7129, 64
  %v7295 = vpop.permute.xlu0 %7294
  %7296 = vrot.lane.b32.xlu0 %v7130, 64
  %v7297 = vpop.permute.xlu0 %7296
  %7298 = vrot.lane.b32.xlu0 %v7131, 64
  %v7299 = vpop.permute.xlu0 %7298
  %7300 = vrot.lane.b32.xlu0 %v7132, 64
  %v7301 = vpop.permute.xlu0 %7300
  %7302 = vrot.lane.b32.xlu0 %v7133, 64
  %v7303 = vpop.permute.xlu0 %7302
  %7304 = vrot.lane.b32.xlu0 %v7134, 64
  %v7305 = vpop.permute.xlu0 %7304
  %7306 = vrot.lane.b32.xlu0 %v7135, 64
  %v7307 = vpop.permute.xlu0 %7306
  %7308 = vrot.lane.b32.xlu0 %v7136, 64
  %v7309 = vpop.permute.xlu0 %7308
  %7310 = vrot.lane.b32.xlu0 %v7137, 64
  %v7311 = vpop.permute.xlu0 %7310
  %7312 = vrot.lane.b32.xlu0 %v7138, 64
  %v7313 = vpop.permute.xlu0 %7312
  %7314 = vrot.lane.b32.xlu0 %v7139, 64
  %v7315 = vpop.permute.xlu0 %7314
  %7316 = vrot.lane.b32.xlu0 %v7140, 64
  %v7317 = vpop.permute.xlu0 %7316
  %7318 = vrot.lane.b32.xlu0 %v7141, 64
  %v7319 = vpop.permute.xlu0 %7318
  %7320 = vrot.lane.b32.xlu0 %v7142, 64
  %v7321 = vpop.permute.xlu0 %7320
  %7322 = vrot.lane.b32.xlu0 %v7143, 64
  %v7323 = vpop.permute.xlu0 %7322
  %7324 = vrot.lane.b32.xlu0 %v7144, 64
  %v7325 = vpop.permute.xlu0 %7324
  %7326 = vrot.lane.b32.xlu0 %v7145, 64
  %v7327 = vpop.permute.xlu0 %7326
  %7328 = vrot.lane.b32.xlu0 %v7146, 64
  %v7329 = vpop.permute.xlu0 %7328
  %7330 = vrot.lane.b32.xlu0 %v7147, 64
  %v7331 = vpop.permute.xlu0 %7330
  %7332 = vrot.lane.b32.xlu0 %v7148, 64
  %v7333 = vpop.permute.xlu0 %7332
  %7334 = vrot.lane.b32.xlu0 %v7149, 64
  %v7335 = vpop.permute.xlu0 %7334
  %7336 = vrot.lane.b32.xlu0 %v7150, 64
  %v7337 = vpop.permute.xlu0 %7336
  %7338 = vrot.lane.b32.xlu0 %v7151, 64
  %v7339 = vpop.permute.xlu0 %7338
  %7340 = vrot.lane.b32.xlu0 %v7152, 64
  %v7341 = vpop.permute.xlu0 %7340
  %7342 = vrot.lane.b32.xlu0 %v7153, 64
  %v7343 = vpop.permute.xlu0 %7342
  %7344 = vrot.lane.b32.xlu0 %v7154, 64
  %v7345 = vpop.permute.xlu0 %7344
  %7346 = vrot.lane.b32.xlu0 %v7155, 64
  %v7347 = vpop.permute.xlu0 %7346
  %v7412 = vadd.f32 %v6451, %v7221
  %v7413 = vadd.f32 %v6452, %v7223
  %v7414 = vadd.f32 %v6453, %v7225
  %v7415 = vadd.f32 %v6454, %v7227
  %v7416 = vadd.f32 %v6455, %v7229
  %v7417 = vadd.f32 %v6456, %v7231
  %v7418 = vadd.f32 %v6457, %v7233
  %v7419 = vadd.f32 %v6458, %v7235
  %v7420 = vadd.f32 %v6459, %v7237
  %v7421 = vadd.f32 %v6460, %v7239
  %v7422 = vadd.f32 %v6461, %v7241
  %v7423 = vadd.f32 %v6462, %v7243
  %v7424 = vadd.f32 %v6463, %v7245
  %v7425 = vadd.f32 %v6464, %v7247
  %v7426 = vadd.f32 %v6465, %v7249
  %v7427 = vadd.f32 %v6466, %v7251
  %v7428 = vadd.f32 %v6467, %v7253
  %v7429 = vadd.f32 %v6468, %v7255
  %v7430 = vadd.f32 %v6469, %v7257
  %v7431 = vadd.f32 %v6470, %v7259
  %v7432 = vadd.f32 %v6471, %v7261
  %v7433 = vadd.f32 %v6472, %v7263
  %v7434 = vadd.f32 %v6473, %v7265
  %v7435 = vadd.f32 %v6474, %v7267
  %v7436 = vadd.f32 %v6475, %v7269
  %v7437 = vadd.f32 %v6476, %v7271
  %v7438 = vadd.f32 %v6477, %v7273
  %v7439 = vadd.f32 %v6478, %v7275
  %v7440 = vadd.f32 %v6479, %v7277
  %v7441 = vadd.f32 %v6480, %v7279
  %v7442 = vadd.f32 %v6481, %v7281
  %v7443 = vadd.f32 %v6482, %v7283
  %v7444 = vadd.f32 %v6483, %v7285
  %v7445 = vadd.f32 %v6484, %v7287
  %v7446 = vadd.f32 %v6485, %v7289
  %v7447 = vadd.f32 %v6486, %v7291
  %v7448 = vadd.f32 %v6487, %v7293
  %v7449 = vadd.f32 %v6488, %v7295
  %v7450 = vadd.f32 %v6489, %v7297
  %v7451 = vadd.f32 %v6490, %v7299
  %v7452 = vadd.f32 %v6491, %v7301
  %v7453 = vadd.f32 %v6492, %v7303
  %v7454 = vadd.f32 %v6493, %v7305
  %v7455 = vadd.f32 %v6494, %v7307
  %v7456 = vadd.f32 %v6495, %v7309
  %v7457 = vadd.f32 %v6496, %v7311
  %v7458 = vadd.f32 %v6497, %v7313
  %v7459 = vadd.f32 %v6498, %v7315
  %v7460 = vadd.f32 %v6499, %v7317
  %v7461 = vadd.f32 %v6500, %v7319
  %v7462 = vadd.f32 %v6501, %v7321
  %v7463 = vadd.f32 %v6502, %v7323
  %v7464 = vadd.f32 %v6503, %v7325
  %v7465 = vadd.f32 %v6504, %v7327
  %v7466 = vadd.f32 %v6505, %v7329
  %v7467 = vadd.f32 %v6506, %v7331
  %v7468 = vadd.f32 %v6507, %v7333
  %v7469 = vadd.f32 %v6508, %v7335
  %v7470 = vadd.f32 %v6509, %v7337
  %v7471 = vadd.f32 %v6510, %v7339
  %v7472 = vadd.f32 %v6511, %v7341
  %v7473 = vadd.f32 %v6512, %v7343
  %v7474 = vadd.f32 %v6513, %v7345
  %v7475 = vadd.f32 %v6514, %v7347
  %v7476 = vmul.f32 %v7028, %v3624
  %v7477 = vmul.f32 %v7029, %v3625
  %v7478 = vmul.f32 %v7030, %v3626
  %v7479 = vmul.f32 %v7031, %v3627
  %v7480 = vmul.f32 %v7032, %v3628
  %v7481 = vmul.f32 %v7033, %v3629
  %v7482 = vmul.f32 %v7034, %v3630
  %v7483 = vmul.f32 %v7035, %v3631
  %v7484 = vmul.f32 %v7036, %v3624
  %v7485 = vmul.f32 %v7037, %v3625
  %v7486 = vmul.f32 %v7038, %v3626
  %v7487 = vmul.f32 %v7039, %v3627
  %v7488 = vmul.f32 %v7040, %v3628
  %v7489 = vmul.f32 %v7041, %v3629
  %v7490 = vmul.f32 %v7042, %v3630
  %v7491 = vmul.f32 %v7043, %v3631
  %v7492 = vmul.f32 %v7044, %v3624
  %v7493 = vmul.f32 %v7045, %v3625
  %v7494 = vmul.f32 %v7046, %v3626
  %v7495 = vmul.f32 %v7047, %v3627
  %v7496 = vmul.f32 %v7048, %v3628
  %v7497 = vmul.f32 %v7049, %v3629
  %v7498 = vmul.f32 %v7050, %v3630
  %v7499 = vmul.f32 %v7051, %v3631
  %v7500 = vmul.f32 %v7052, %v3624
  %v7501 = vmul.f32 %v7053, %v3625
  %v7502 = vmul.f32 %v7054, %v3626
  %v7503 = vmul.f32 %v7055, %v3627
  %v7504 = vmul.f32 %v7056, %v3628
  %v7505 = vmul.f32 %v7057, %v3629
  %v7506 = vmul.f32 %v7058, %v3630
  %v7507 = vmul.f32 %v7059, %v3631
  %v7508 = vmul.f32 %v7060, %v3624
  %v7509 = vmul.f32 %v7061, %v3625
  %v7510 = vmul.f32 %v7062, %v3626
  %v7511 = vmul.f32 %v7063, %v3627
  %v7512 = vmul.f32 %v7064, %v3628
  %v7513 = vmul.f32 %v7065, %v3629
  %v7514 = vmul.f32 %v7066, %v3630
  %v7515 = vmul.f32 %v7067, %v3631
  %v7516 = vmul.f32 %v7068, %v3624
  %v7517 = vmul.f32 %v7069, %v3625
  %v7518 = vmul.f32 %v7070, %v3626
  %v7519 = vmul.f32 %v7071, %v3627
  %v7520 = vmul.f32 %v7072, %v3628
  %v7521 = vmul.f32 %v7073, %v3629
  %v7522 = vmul.f32 %v7074, %v3630
  %v7523 = vmul.f32 %v7075, %v3631
  %v7524 = vmul.f32 %v7076, %v3624
  %v7525 = vmul.f32 %v7077, %v3625
  %v7526 = vmul.f32 %v7078, %v3626
  %v7527 = vmul.f32 %v7079, %v3627
  %v7528 = vmul.f32 %v7080, %v3628
  %v7529 = vmul.f32 %v7081, %v3629
  %v7530 = vmul.f32 %v7082, %v3630
  %v7531 = vmul.f32 %v7083, %v3631
  %v7532 = vmul.f32 %v7084, %v3624
  %v7533 = vmul.f32 %v7085, %v3625
  %v7534 = vmul.f32 %v7086, %v3626
  %v7535 = vmul.f32 %v7087, %v3627
  %v7536 = vmul.f32 %v7088, %v3628
  %v7537 = vmul.f32 %v7089, %v3629
  %v7538 = vmul.f32 %v7090, %v3630
  %v7539 = vmul.f32 %v7091, %v3631
  %v7540 = vadd.f32 %v6579, %v7476
  %v7541 = vadd.f32 %v6580, %v7477
  %v7542 = vadd.f32 %v6581, %v7478
  %v7543 = vadd.f32 %v6582, %v7479
  %v7544 = vadd.f32 %v6583, %v7480
  %v7545 = vadd.f32 %v6584, %v7481
  %v7546 = vadd.f32 %v6585, %v7482
  %v7547 = vadd.f32 %v6586, %v7483
  %v7548 = vadd.f32 %v6587, %v7484
  %v7549 = vadd.f32 %v6588, %v7485
  %v7550 = vadd.f32 %v6589, %v7486
  %v7551 = vadd.f32 %v6590, %v7487
  %v7552 = vadd.f32 %v6591, %v7488
  %v7553 = vadd.f32 %v6592, %v7489
  %v7554 = vadd.f32 %v6593, %v7490
  %v7555 = vadd.f32 %v6594, %v7491
  %v7556 = vadd.f32 %v6595, %v7492
  %v7557 = vadd.f32 %v6596, %v7493
  %v7558 = vadd.f32 %v6597, %v7494
  %v7559 = vadd.f32 %v6598, %v7495
  %v7560 = vadd.f32 %v6599, %v7496
  %v7561 = vadd.f32 %v6600, %v7497
  %v7562 = vadd.f32 %v6601, %v7498
  %v7563 = vadd.f32 %v6602, %v7499
  %v7564 = vadd.f32 %v6603, %v7500
  %v7565 = vadd.f32 %v6604, %v7501
  %v7566 = vadd.f32 %v6605, %v7502
  %v7567 = vadd.f32 %v6606, %v7503
  %v7568 = vadd.f32 %v6607, %v7504
  %v7569 = vadd.f32 %v6608, %v7505
  %v7570 = vadd.f32 %v6609, %v7506
  %v7571 = vadd.f32 %v6610, %v7507
  %v7572 = vadd.f32 %v6611, %v7508
  %v7573 = vadd.f32 %v6612, %v7509
  %v7574 = vadd.f32 %v6613, %v7510
  %v7575 = vadd.f32 %v6614, %v7511
  %v7576 = vadd.f32 %v6615, %v7512
  %v7577 = vadd.f32 %v6616, %v7513
  %v7578 = vadd.f32 %v6617, %v7514
  %v7579 = vadd.f32 %v6618, %v7515
  %v7580 = vadd.f32 %v6619, %v7516
  %v7581 = vadd.f32 %v6620, %v7517
  %v7582 = vadd.f32 %v6621, %v7518
  %v7583 = vadd.f32 %v6622, %v7519
  %v7584 = vadd.f32 %v6623, %v7520
  %v7585 = vadd.f32 %v6624, %v7521
  %v7586 = vadd.f32 %v6625, %v7522
  %v7587 = vadd.f32 %v6626, %v7523
  %v7588 = vadd.f32 %v6627, %v7524
  %v7589 = vadd.f32 %v6628, %v7525
  %v7590 = vadd.f32 %v6629, %v7526
  %v7591 = vadd.f32 %v6630, %v7527
  %v7592 = vadd.f32 %v6631, %v7528
  %v7593 = vadd.f32 %v6632, %v7529
  %v7594 = vadd.f32 %v6633, %v7530
  %v7595 = vadd.f32 %v6634, %v7531
  %v7596 = vadd.f32 %v6635, %v7532
  %v7597 = vadd.f32 %v6636, %v7533
  %v7598 = vadd.f32 %v6637, %v7534
  %v7599 = vadd.f32 %v6638, %v7535
  %v7600 = vadd.f32 %v6639, %v7536
  %v7601 = vadd.f32 %v6640, %v7537
  %v7602 = vadd.f32 %v6641, %v7538
  %v7603 = vadd.f32 %v6642, %v7539
  %7604 = vrot.lane.b32.xlu0 %v312, 63
  %v7605 = vpop.permute.xlu0 %7604
  %7606 = vrot.lane.b32.xlu0 %v315, 63
  %v7607 = vpop.permute.xlu0 %7606
  %7608 = vrot.lane.b32.xlu0 %v318, 63
  %v7609 = vpop.permute.xlu0 %7608
  %7610 = vrot.lane.b32.xlu0 %v321, 63
  %v7611 = vpop.permute.xlu0 %7610
  %7612 = vrot.lane.b32.xlu0 %v324, 63
  %v7613 = vpop.permute.xlu0 %7612
  %7614 = vrot.lane.b32.xlu0 %v327, 63
  %v7615 = vpop.permute.xlu0 %7614
  %7616 = vrot.lane.b32.xlu0 %v330, 63
  %v7617 = vpop.permute.xlu0 %7616
  %7618 = vrot.lane.b32.xlu0 %v333, 63
  %v7619 = vpop.permute.xlu0 %7618
  %7620 = vrot.lane.b32.xlu0 %v336, 63
  %v7621 = vpop.permute.xlu0 %7620
  %7622 = vrot.lane.b32.xlu0 %v339, 63
  %v7623 = vpop.permute.xlu0 %7622
  %7624 = vrot.lane.b32.xlu0 %v342, 63
  %v7625 = vpop.permute.xlu0 %7624
  %7626 = vrot.lane.b32.xlu0 %v345, 63
  %v7627 = vpop.permute.xlu0 %7626
  %7628 = vrot.lane.b32.xlu0 %v348, 63
  %v7629 = vpop.permute.xlu0 %7628
  %7630 = vrot.lane.b32.xlu0 %v351, 63
  %v7631 = vpop.permute.xlu0 %7630
  %7632 = vrot.lane.b32.xlu0 %v354, 63
  %v7633 = vpop.permute.xlu0 %7632
  %7634 = vrot.lane.b32.xlu0 %v357, 63
  %v7635 = vpop.permute.xlu0 %7634
  %7636 = vrot.lane.b32.xlu0 %v360, 63
  %v7637 = vpop.permute.xlu0 %7636
  %7638 = vrot.lane.b32.xlu0 %v363, 63
  %v7639 = vpop.permute.xlu0 %7638
  %7640 = vrot.lane.b32.xlu0 %v366, 63
  %v7641 = vpop.permute.xlu0 %7640
  %7642 = vrot.lane.b32.xlu0 %v369, 63
  %v7643 = vpop.permute.xlu0 %7642
  %7644 = vrot.lane.b32.xlu0 %v372, 63
  %v7645 = vpop.permute.xlu0 %7644
  %7646 = vrot.lane.b32.xlu0 %v375, 63
  %v7647 = vpop.permute.xlu0 %7646
  %7648 = vrot.lane.b32.xlu0 %v378, 63
  %v7649 = vpop.permute.xlu0 %7648
  %7650 = vrot.lane.b32.xlu0 %v381, 63
  %v7651 = vpop.permute.xlu0 %7650
  %7652 = vrot.lane.b32.xlu0 %v384, 63
  %v7653 = vpop.permute.xlu0 %7652
  %7654 = vrot.lane.b32.xlu0 %v387, 63
  %v7655 = vpop.permute.xlu0 %7654
  %7656 = vrot.lane.b32.xlu0 %v390, 63
  %v7657 = vpop.permute.xlu0 %7656
  %7658 = vrot.lane.b32.xlu0 %v393, 63
  %v7659 = vpop.permute.xlu0 %7658
  %7660 = vrot.lane.b32.xlu0 %v396, 63
  %v7661 = vpop.permute.xlu0 %7660
  %7662 = vrot.lane.b32.xlu0 %v399, 63
  %v7663 = vpop.permute.xlu0 %7662
  %7664 = vrot.lane.b32.xlu0 %v402, 63
  %v7665 = vpop.permute.xlu0 %7664
  %7666 = vrot.lane.b32.xlu0 %v405, 63
  %v7667 = vpop.permute.xlu0 %7666
  %7668 = vrot.lane.b32.xlu0 %v408, 63
  %v7669 = vpop.permute.xlu0 %7668
  %7670 = vrot.lane.b32.xlu0 %v411, 63
  %v7671 = vpop.permute.xlu0 %7670
  %7672 = vrot.lane.b32.xlu0 %v414, 63
  %v7673 = vpop.permute.xlu0 %7672
  %7674 = vrot.lane.b32.xlu0 %v417, 63
  %v7675 = vpop.permute.xlu0 %7674
  %7676 = vrot.lane.b32.xlu0 %v420, 63
  %v7677 = vpop.permute.xlu0 %7676
  %7678 = vrot.lane.b32.xlu0 %v423, 63
  %v7679 = vpop.permute.xlu0 %7678
  %7680 = vrot.lane.b32.xlu0 %v426, 63
  %v7681 = vpop.permute.xlu0 %7680
  %7682 = vrot.lane.b32.xlu0 %v429, 63
  %v7683 = vpop.permute.xlu0 %7682
  %7684 = vrot.lane.b32.xlu0 %v432, 63
  %v7685 = vpop.permute.xlu0 %7684
  %7686 = vrot.lane.b32.xlu0 %v435, 63
  %v7687 = vpop.permute.xlu0 %7686
  %7688 = vrot.lane.b32.xlu0 %v438, 63
  %v7689 = vpop.permute.xlu0 %7688
  %7690 = vrot.lane.b32.xlu0 %v441, 63
  %v7691 = vpop.permute.xlu0 %7690
  %7692 = vrot.lane.b32.xlu0 %v444, 63
  %v7693 = vpop.permute.xlu0 %7692
  %7694 = vrot.lane.b32.xlu0 %v447, 63
  %v7695 = vpop.permute.xlu0 %7694
  %7696 = vrot.lane.b32.xlu0 %v450, 63
  %v7697 = vpop.permute.xlu0 %7696
  %7698 = vrot.lane.b32.xlu0 %v453, 63
  %v7699 = vpop.permute.xlu0 %7698
  %7700 = vrot.lane.b32.xlu0 %v456, 63
  %v7701 = vpop.permute.xlu0 %7700
  %7702 = vrot.lane.b32.xlu0 %v459, 63
  %v7703 = vpop.permute.xlu0 %7702
  %7704 = vrot.lane.b32.xlu0 %v462, 63
  %v7705 = vpop.permute.xlu0 %7704
  %7706 = vrot.lane.b32.xlu0 %v465, 63
  %v7707 = vpop.permute.xlu0 %7706
  %7708 = vrot.lane.b32.xlu0 %v468, 63
  %v7709 = vpop.permute.xlu0 %7708
  %7710 = vrot.lane.b32.xlu0 %v471, 63
  %v7711 = vpop.permute.xlu0 %7710
  %7712 = vrot.lane.b32.xlu0 %v474, 63
  %v7713 = vpop.permute.xlu0 %7712
  %7714 = vrot.lane.b32.xlu0 %v477, 63
  %v7715 = vpop.permute.xlu0 %7714
  %7716 = vrot.lane.b32.xlu0 %v480, 63
  %v7717 = vpop.permute.xlu0 %7716
  %7718 = vrot.lane.b32.xlu0 %v483, 63
  %v7719 = vpop.permute.xlu0 %7718
  %7720 = vrot.lane.b32.xlu0 %v486, 63
  %v7721 = vpop.permute.xlu0 %7720
  %7722 = vrot.lane.b32.xlu0 %v489, 63
  %v7723 = vpop.permute.xlu0 %7722
  %7724 = vrot.lane.b32.xlu0 %v492, 63
  %v7725 = vpop.permute.xlu0 %7724
  %7726 = vrot.lane.b32.xlu0 %v495, 63
  %v7727 = vpop.permute.xlu0 %7726
  %7728 = vrot.lane.b32.xlu0 %v498, 63
  %v7729 = vpop.permute.xlu0 %7728
  %7730 = vrot.lane.b32.xlu0 %v501, 63
  %v7731 = vpop.permute.xlu0 %7730
  %7796 = vrot.lane.b32.xlu0 %v312, 95
  %v7797 = vpop.permute.xlu0 %7796
  %7798 = vrot.lane.b32.xlu0 %v315, 95
  %v7799 = vpop.permute.xlu0 %7798
  %7800 = vrot.lane.b32.xlu0 %v318, 95
  %v7801 = vpop.permute.xlu0 %7800
  %7802 = vrot.lane.b32.xlu0 %v321, 95
  %v7803 = vpop.permute.xlu0 %7802
  %7804 = vrot.lane.b32.xlu0 %v324, 95
  %v7805 = vpop.permute.xlu0 %7804
  %7806 = vrot.lane.b32.xlu0 %v327, 95
  %v7807 = vpop.permute.xlu0 %7806
  %7808 = vrot.lane.b32.xlu0 %v330, 95
  %v7809 = vpop.permute.xlu0 %7808
  %7810 = vrot.lane.b32.xlu0 %v333, 95
  %v7811 = vpop.permute.xlu0 %7810
  %7812 = vrot.lane.b32.xlu0 %v336, 95
  %v7813 = vpop.permute.xlu0 %7812
  %7814 = vrot.lane.b32.xlu0 %v339, 95
  %v7815 = vpop.permute.xlu0 %7814
  %7816 = vrot.lane.b32.xlu0 %v342, 95
  %v7817 = vpop.permute.xlu0 %7816
  %7818 = vrot.lane.b32.xlu0 %v345, 95
  %v7819 = vpop.permute.xlu0 %7818
  %7820 = vrot.lane.b32.xlu0 %v348, 95
  %v7821 = vpop.permute.xlu0 %7820
  %7822 = vrot.lane.b32.xlu0 %v351, 95
  %v7823 = vpop.permute.xlu0 %7822
  %7824 = vrot.lane.b32.xlu0 %v354, 95
  %v7825 = vpop.permute.xlu0 %7824
  %7826 = vrot.lane.b32.xlu0 %v357, 95
  %v7827 = vpop.permute.xlu0 %7826
  %7828 = vrot.lane.b32.xlu0 %v360, 95
  %v7829 = vpop.permute.xlu0 %7828
  %7830 = vrot.lane.b32.xlu0 %v363, 95
  %v7831 = vpop.permute.xlu0 %7830
  %7832 = vrot.lane.b32.xlu0 %v366, 95
  %v7833 = vpop.permute.xlu0 %7832
  %7834 = vrot.lane.b32.xlu0 %v369, 95
  %v7835 = vpop.permute.xlu0 %7834
  %7836 = vrot.lane.b32.xlu0 %v372, 95
  %v7837 = vpop.permute.xlu0 %7836
  %7838 = vrot.lane.b32.xlu0 %v375, 95
  %v7839 = vpop.permute.xlu0 %7838
  %7840 = vrot.lane.b32.xlu0 %v378, 95
  %v7841 = vpop.permute.xlu0 %7840
  %7842 = vrot.lane.b32.xlu0 %v381, 95
  %v7843 = vpop.permute.xlu0 %7842
  %7844 = vrot.lane.b32.xlu0 %v384, 95
  %v7845 = vpop.permute.xlu0 %7844
  %7846 = vrot.lane.b32.xlu0 %v387, 95
  %v7847 = vpop.permute.xlu0 %7846
  %7848 = vrot.lane.b32.xlu0 %v390, 95
  %v7849 = vpop.permute.xlu0 %7848
  %7850 = vrot.lane.b32.xlu0 %v393, 95
  %v7851 = vpop.permute.xlu0 %7850
  %7852 = vrot.lane.b32.xlu0 %v396, 95
  %v7853 = vpop.permute.xlu0 %7852
  %7854 = vrot.lane.b32.xlu0 %v399, 95
  %v7855 = vpop.permute.xlu0 %7854
  %7856 = vrot.lane.b32.xlu0 %v402, 95
  %v7857 = vpop.permute.xlu0 %7856
  %7858 = vrot.lane.b32.xlu0 %v405, 95
  %v7859 = vpop.permute.xlu0 %7858
  %7860 = vrot.lane.b32.xlu0 %v408, 95
  %v7861 = vpop.permute.xlu0 %7860
  %7862 = vrot.lane.b32.xlu0 %v411, 95
  %v7863 = vpop.permute.xlu0 %7862
  %7864 = vrot.lane.b32.xlu0 %v414, 95
  %v7865 = vpop.permute.xlu0 %7864
  %7866 = vrot.lane.b32.xlu0 %v417, 95
  %v7867 = vpop.permute.xlu0 %7866
  %7868 = vrot.lane.b32.xlu0 %v420, 95
  %v7869 = vpop.permute.xlu0 %7868
  %7870 = vrot.lane.b32.xlu0 %v423, 95
  %v7871 = vpop.permute.xlu0 %7870
  %7872 = vrot.lane.b32.xlu0 %v426, 95
  %v7873 = vpop.permute.xlu0 %7872
  %7874 = vrot.lane.b32.xlu0 %v429, 95
  %v7875 = vpop.permute.xlu0 %7874
  %7876 = vrot.lane.b32.xlu0 %v432, 95
  %v7877 = vpop.permute.xlu0 %7876
  %7878 = vrot.lane.b32.xlu0 %v435, 95
  %v7879 = vpop.permute.xlu0 %7878
  %7880 = vrot.lane.b32.xlu0 %v438, 95
  %v7881 = vpop.permute.xlu0 %7880
  %7882 = vrot.lane.b32.xlu0 %v441, 95
  %v7883 = vpop.permute.xlu0 %7882
  %7884 = vrot.lane.b32.xlu0 %v444, 95
  %v7885 = vpop.permute.xlu0 %7884
  %7886 = vrot.lane.b32.xlu0 %v447, 95
  %v7887 = vpop.permute.xlu0 %7886
  %7888 = vrot.lane.b32.xlu0 %v450, 95
  %v7889 = vpop.permute.xlu0 %7888
  %7890 = vrot.lane.b32.xlu0 %v453, 95
  %v7891 = vpop.permute.xlu0 %7890
  %7892 = vrot.lane.b32.xlu0 %v456, 95
  %v7893 = vpop.permute.xlu0 %7892
  %7894 = vrot.lane.b32.xlu0 %v459, 95
  %v7895 = vpop.permute.xlu0 %7894
  %7896 = vrot.lane.b32.xlu0 %v462, 95
  %v7897 = vpop.permute.xlu0 %7896
  %7898 = vrot.lane.b32.xlu0 %v465, 95
  %v7899 = vpop.permute.xlu0 %7898
  %7900 = vrot.lane.b32.xlu0 %v468, 95
  %v7901 = vpop.permute.xlu0 %7900
  %7902 = vrot.lane.b32.xlu0 %v471, 95
  %v7903 = vpop.permute.xlu0 %7902
  %7904 = vrot.lane.b32.xlu0 %v474, 95
  %v7905 = vpop.permute.xlu0 %7904
  %7906 = vrot.lane.b32.xlu0 %v477, 95
  %v7907 = vpop.permute.xlu0 %7906
  %7908 = vrot.lane.b32.xlu0 %v480, 95
  %v7909 = vpop.permute.xlu0 %7908
  %7910 = vrot.lane.b32.xlu0 %v483, 95
  %v7911 = vpop.permute.xlu0 %7910
  %7912 = vrot.lane.b32.xlu0 %v486, 95
  %v7913 = vpop.permute.xlu0 %7912
  %7914 = vrot.lane.b32.xlu0 %v489, 95
  %v7915 = vpop.permute.xlu0 %7914
  %7916 = vrot.lane.b32.xlu0 %v492, 95
  %v7917 = vpop.permute.xlu0 %7916
  %7918 = vrot.lane.b32.xlu0 %v495, 95
  %v7919 = vpop.permute.xlu0 %7918
  %7920 = vrot.lane.b32.xlu0 %v498, 95
  %v7921 = vpop.permute.xlu0 %7920
  %7922 = vrot.lane.b32.xlu0 %v501, 95
  %v7923 = vpop.permute.xlu0 %7922
  %vm7988 = vcmask 252928
  %v7989 = vsel %vm7988, %v7605, %v7797
  %v7990 = vsel %vm7988, %v7607, %v7799
  %v7991 = vsel %vm7988, %v7609, %v7801
  %v7992 = vsel %vm7988, %v7611, %v7803
  %v7993 = vsel %vm7988, %v7613, %v7805
  %v7994 = vsel %vm7988, %v7615, %v7807
  %v7995 = vsel %vm7988, %v7617, %v7809
  %v7996 = vsel %vm7988, %v7619, %v7811
  %v7997 = vsel %vm7988, %v7621, %v7813
  %v7998 = vsel %vm7988, %v7623, %v7815
  %v7999 = vsel %vm7988, %v7625, %v7817
  %v8000 = vsel %vm7988, %v7627, %v7819
  %v8001 = vsel %vm7988, %v7629, %v7821
  %v8002 = vsel %vm7988, %v7631, %v7823
  %v8003 = vsel %vm7988, %v7633, %v7825
  %v8004 = vsel %vm7988, %v7635, %v7827
  %v8005 = vsel %vm7988, %v7637, %v7829
  %v8006 = vsel %vm7988, %v7639, %v7831
  %v8007 = vsel %vm7988, %v7641, %v7833
  %v8008 = vsel %vm7988, %v7643, %v7835
  %v8009 = vsel %vm7988, %v7645, %v7837
  %v8010 = vsel %vm7988, %v7647, %v7839
  %v8011 = vsel %vm7988, %v7649, %v7841
  %v8012 = vsel %vm7988, %v7651, %v7843
  %v8013 = vsel %vm7988, %v7653, %v7845
  %v8014 = vsel %vm7988, %v7655, %v7847
  %v8015 = vsel %vm7988, %v7657, %v7849
  %v8016 = vsel %vm7988, %v7659, %v7851
  %v8017 = vsel %vm7988, %v7661, %v7853
  %v8018 = vsel %vm7988, %v7663, %v7855
  %v8019 = vsel %vm7988, %v7665, %v7857
  %v8020 = vsel %vm7988, %v7667, %v7859
  %v8021 = vsel %vm7988, %v7669, %v7861
  %v8022 = vsel %vm7988, %v7671, %v7863
  %v8023 = vsel %vm7988, %v7673, %v7865
  %v8024 = vsel %vm7988, %v7675, %v7867
  %v8025 = vsel %vm7988, %v7677, %v7869
  %v8026 = vsel %vm7988, %v7679, %v7871
  %v8027 = vsel %vm7988, %v7681, %v7873
  %v8028 = vsel %vm7988, %v7683, %v7875
  %v8029 = vsel %vm7988, %v7685, %v7877
  %v8030 = vsel %vm7988, %v7687, %v7879
  %v8031 = vsel %vm7988, %v7689, %v7881
  %v8032 = vsel %vm7988, %v7691, %v7883
  %v8033 = vsel %vm7988, %v7693, %v7885
  %v8034 = vsel %vm7988, %v7695, %v7887
  %v8035 = vsel %vm7988, %v7697, %v7889
  %v8036 = vsel %vm7988, %v7699, %v7891
  %v8037 = vsel %vm7988, %v7701, %v7893
  %v8038 = vsel %vm7988, %v7703, %v7895
  %v8039 = vsel %vm7988, %v7705, %v7897
  %v8040 = vsel %vm7988, %v7707, %v7899
  %v8041 = vsel %vm7988, %v7709, %v7901
  %v8042 = vsel %vm7988, %v7711, %v7903
  %v8043 = vsel %vm7988, %v7713, %v7905
  %v8044 = vsel %vm7988, %v7715, %v7907
  %v8045 = vsel %vm7988, %v7717, %v7909
  %v8046 = vsel %vm7988, %v7719, %v7911
  %v8047 = vsel %vm7988, %v7721, %v7913
  %v8048 = vsel %vm7988, %v7723, %v7915
  %v8049 = vsel %vm7988, %v7725, %v7917
  %v8050 = vsel %vm7988, %v7727, %v7919
  %v8051 = vsel %vm7988, %v7729, %v7921
  %v8052 = vsel %vm7988, %v7731, %v7923
  %v8053 = vmul.f32 %v7989, %v3568
  %v8054 = vmul.f32 %v7990, %v3569
  %v8055 = vmul.f32 %v7991, %v3570
  %v8056 = vmul.f32 %v7992, %v3571
  %v8057 = vmul.f32 %v7993, %v3572
  %v8058 = vmul.f32 %v7994, %v3573
  %v8059 = vmul.f32 %v7995, %v3574
  %v8060 = vmul.f32 %v7996, %v3575
  %v8061 = vmul.f32 %v7997, %v3568
  %v8062 = vmul.f32 %v7998, %v3569
  %v8063 = vmul.f32 %v7999, %v3570
  %v8064 = vmul.f32 %v8000, %v3571
  %v8065 = vmul.f32 %v8001, %v3572
  %v8066 = vmul.f32 %v8002, %v3573
  %v8067 = vmul.f32 %v8003, %v3574
  %v8068 = vmul.f32 %v8004, %v3575
  %v8069 = vmul.f32 %v8005, %v3568
  %v8070 = vmul.f32 %v8006, %v3569
  %v8071 = vmul.f32 %v8007, %v3570
  %v8072 = vmul.f32 %v8008, %v3571
  %v8073 = vmul.f32 %v8009, %v3572
  %v8074 = vmul.f32 %v8010, %v3573
  %v8075 = vmul.f32 %v8011, %v3574
  %v8076 = vmul.f32 %v8012, %v3575
  %v8077 = vmul.f32 %v8013, %v3568
  %v8078 = vmul.f32 %v8014, %v3569
  %v8079 = vmul.f32 %v8015, %v3570
  %v8080 = vmul.f32 %v8016, %v3571
  %v8081 = vmul.f32 %v8017, %v3572
  %v8082 = vmul.f32 %v8018, %v3573
  %v8083 = vmul.f32 %v8019, %v3574
  %v8084 = vmul.f32 %v8020, %v3575
  %v8085 = vmul.f32 %v8021, %v3568
  %v8086 = vmul.f32 %v8022, %v3569
  %v8087 = vmul.f32 %v8023, %v3570
  %v8088 = vmul.f32 %v8024, %v3571
  %v8089 = vmul.f32 %v8025, %v3572
  %v8090 = vmul.f32 %v8026, %v3573
  %v8091 = vmul.f32 %v8027, %v3574
  %v8092 = vmul.f32 %v8028, %v3575
  %v8093 = vmul.f32 %v8029, %v3568
  %v8094 = vmul.f32 %v8030, %v3569
  %v8095 = vmul.f32 %v8031, %v3570
  %v8096 = vmul.f32 %v8032, %v3571
  %v8097 = vmul.f32 %v8033, %v3572
  %v8098 = vmul.f32 %v8034, %v3573
  %v8099 = vmul.f32 %v8035, %v3574
  %v8100 = vmul.f32 %v8036, %v3575
  %v8101 = vmul.f32 %v8037, %v3568
  %v8102 = vmul.f32 %v8038, %v3569
  %v8103 = vmul.f32 %v8039, %v3570
  %v8104 = vmul.f32 %v8040, %v3571
  %v8105 = vmul.f32 %v8041, %v3572
  %v8106 = vmul.f32 %v8042, %v3573
  %v8107 = vmul.f32 %v8043, %v3574
  %v8108 = vmul.f32 %v8044, %v3575
  %v8109 = vmul.f32 %v8045, %v3568
  %v8110 = vmul.f32 %v8046, %v3569
  %v8111 = vmul.f32 %v8047, %v3570
  %v8112 = vmul.f32 %v8048, %v3571
  %v8113 = vmul.f32 %v8049, %v3572
  %v8114 = vmul.f32 %v8050, %v3573
  %v8115 = vmul.f32 %v8051, %v3574
  %v8116 = vmul.f32 %v8052, %v3575
  %8181 = vrot.lane.b32.xlu0 %v8053, 64
  %v8182 = vpop.permute.xlu0 %8181
  %8183 = vrot.lane.b32.xlu0 %v8054, 64
  %v8184 = vpop.permute.xlu0 %8183
  %8185 = vrot.lane.b32.xlu0 %v8055, 64
  %v8186 = vpop.permute.xlu0 %8185
  %8187 = vrot.lane.b32.xlu0 %v8056, 64
  %v8188 = vpop.permute.xlu0 %8187
  %8189 = vrot.lane.b32.xlu0 %v8057, 64
  %v8190 = vpop.permute.xlu0 %8189
  %8191 = vrot.lane.b32.xlu0 %v8058, 64
  %v8192 = vpop.permute.xlu0 %8191
  %8193 = vrot.lane.b32.xlu0 %v8059, 64
  %v8194 = vpop.permute.xlu0 %8193
  %8195 = vrot.lane.b32.xlu0 %v8060, 64
  %v8196 = vpop.permute.xlu0 %8195
  %8197 = vrot.lane.b32.xlu0 %v8061, 64
  %v8198 = vpop.permute.xlu0 %8197
  %8199 = vrot.lane.b32.xlu0 %v8062, 64
  %v8200 = vpop.permute.xlu0 %8199
  %8201 = vrot.lane.b32.xlu0 %v8063, 64
  %v8202 = vpop.permute.xlu0 %8201
  %8203 = vrot.lane.b32.xlu0 %v8064, 64
  %v8204 = vpop.permute.xlu0 %8203
  %8205 = vrot.lane.b32.xlu0 %v8065, 64
  %v8206 = vpop.permute.xlu0 %8205
  %8207 = vrot.lane.b32.xlu0 %v8066, 64
  %v8208 = vpop.permute.xlu0 %8207
  %8209 = vrot.lane.b32.xlu0 %v8067, 64
  %v8210 = vpop.permute.xlu0 %8209
  %8211 = vrot.lane.b32.xlu0 %v8068, 64
  %v8212 = vpop.permute.xlu0 %8211
  %8213 = vrot.lane.b32.xlu0 %v8069, 64
  %v8214 = vpop.permute.xlu0 %8213
  %8215 = vrot.lane.b32.xlu0 %v8070, 64
  %v8216 = vpop.permute.xlu0 %8215
  %8217 = vrot.lane.b32.xlu0 %v8071, 64
  %v8218 = vpop.permute.xlu0 %8217
  %8219 = vrot.lane.b32.xlu0 %v8072, 64
  %v8220 = vpop.permute.xlu0 %8219
  %8221 = vrot.lane.b32.xlu0 %v8073, 64
  %v8222 = vpop.permute.xlu0 %8221
  %8223 = vrot.lane.b32.xlu0 %v8074, 64
  %v8224 = vpop.permute.xlu0 %8223
  %8225 = vrot.lane.b32.xlu0 %v8075, 64
  %v8226 = vpop.permute.xlu0 %8225
  %8227 = vrot.lane.b32.xlu0 %v8076, 64
  %v8228 = vpop.permute.xlu0 %8227
  %8229 = vrot.lane.b32.xlu0 %v8077, 64
  %v8230 = vpop.permute.xlu0 %8229
  %8231 = vrot.lane.b32.xlu0 %v8078, 64
  %v8232 = vpop.permute.xlu0 %8231
  %8233 = vrot.lane.b32.xlu0 %v8079, 64
  %v8234 = vpop.permute.xlu0 %8233
  %8235 = vrot.lane.b32.xlu0 %v8080, 64
  %v8236 = vpop.permute.xlu0 %8235
  %8237 = vrot.lane.b32.xlu0 %v8081, 64
  %v8238 = vpop.permute.xlu0 %8237
  %8239 = vrot.lane.b32.xlu0 %v8082, 64
  %v8240 = vpop.permute.xlu0 %8239
  %8241 = vrot.lane.b32.xlu0 %v8083, 64
  %v8242 = vpop.permute.xlu0 %8241
  %8243 = vrot.lane.b32.xlu0 %v8084, 64
  %v8244 = vpop.permute.xlu0 %8243
  %8245 = vrot.lane.b32.xlu0 %v8085, 64
  %v8246 = vpop.permute.xlu0 %8245
  %8247 = vrot.lane.b32.xlu0 %v8086, 64
  %v8248 = vpop.permute.xlu0 %8247
  %8249 = vrot.lane.b32.xlu0 %v8087, 64
  %v8250 = vpop.permute.xlu0 %8249
  %8251 = vrot.lane.b32.xlu0 %v8088, 64
  %v8252 = vpop.permute.xlu0 %8251
  %8253 = vrot.lane.b32.xlu0 %v8089, 64
  %v8254 = vpop.permute.xlu0 %8253
  %8255 = vrot.lane.b32.xlu0 %v8090, 64
  %v8256 = vpop.permute.xlu0 %8255
  %8257 = vrot.lane.b32.xlu0 %v8091, 64
  %v8258 = vpop.permute.xlu0 %8257
  %8259 = vrot.lane.b32.xlu0 %v8092, 64
  %v8260 = vpop.permute.xlu0 %8259
  %8261 = vrot.lane.b32.xlu0 %v8093, 64
  %v8262 = vpop.permute.xlu0 %8261
  %8263 = vrot.lane.b32.xlu0 %v8094, 64
  %v8264 = vpop.permute.xlu0 %8263
  %8265 = vrot.lane.b32.xlu0 %v8095, 64
  %v8266 = vpop.permute.xlu0 %8265
  %8267 = vrot.lane.b32.xlu0 %v8096, 64
  %v8268 = vpop.permute.xlu0 %8267
  %8269 = vrot.lane.b32.xlu0 %v8097, 64
  %v8270 = vpop.permute.xlu0 %8269
  %8271 = vrot.lane.b32.xlu0 %v8098, 64
  %v8272 = vpop.permute.xlu0 %8271
  %8273 = vrot.lane.b32.xlu0 %v8099, 64
  %v8274 = vpop.permute.xlu0 %8273
  %8275 = vrot.lane.b32.xlu0 %v8100, 64
  %v8276 = vpop.permute.xlu0 %8275
  %8277 = vrot.lane.b32.xlu0 %v8101, 64
  %v8278 = vpop.permute.xlu0 %8277
  %8279 = vrot.lane.b32.xlu0 %v8102, 64
  %v8280 = vpop.permute.xlu0 %8279
  %8281 = vrot.lane.b32.xlu0 %v8103, 64
  %v8282 = vpop.permute.xlu0 %8281
  %8283 = vrot.lane.b32.xlu0 %v8104, 64
  %v8284 = vpop.permute.xlu0 %8283
  %8285 = vrot.lane.b32.xlu0 %v8105, 64
  %v8286 = vpop.permute.xlu0 %8285
  %8287 = vrot.lane.b32.xlu0 %v8106, 64
  %v8288 = vpop.permute.xlu0 %8287
  %8289 = vrot.lane.b32.xlu0 %v8107, 64
  %v8290 = vpop.permute.xlu0 %8289
  %8291 = vrot.lane.b32.xlu0 %v8108, 64
  %v8292 = vpop.permute.xlu0 %8291
  %8293 = vrot.lane.b32.xlu0 %v8109, 64
  %v8294 = vpop.permute.xlu0 %8293
  %8295 = vrot.lane.b32.xlu0 %v8110, 64
  %v8296 = vpop.permute.xlu0 %8295
  %8297 = vrot.lane.b32.xlu0 %v8111, 64
  %v8298 = vpop.permute.xlu0 %8297
  %8299 = vrot.lane.b32.xlu0 %v8112, 64
  %v8300 = vpop.permute.xlu0 %8299
  %8301 = vrot.lane.b32.xlu0 %v8113, 64
  %v8302 = vpop.permute.xlu0 %8301
  %8303 = vrot.lane.b32.xlu0 %v8114, 64
  %v8304 = vpop.permute.xlu0 %8303
  %8305 = vrot.lane.b32.xlu0 %v8115, 64
  %v8306 = vpop.permute.xlu0 %8305
  %8307 = vrot.lane.b32.xlu0 %v8116, 64
  %v8308 = vpop.permute.xlu0 %8307
  %v8373 = vadd.f32 %v7412, %v8182
  %v8374 = vadd.f32 %v7413, %v8184
  %v8375 = vadd.f32 %v7414, %v8186
  %v8376 = vadd.f32 %v7415, %v8188
  %v8377 = vadd.f32 %v7416, %v8190
  %v8378 = vadd.f32 %v7417, %v8192
  %v8379 = vadd.f32 %v7418, %v8194
  %v8380 = vadd.f32 %v7419, %v8196
  %v8381 = vadd.f32 %v7420, %v8198
  %v8382 = vadd.f32 %v7421, %v8200
  %v8383 = vadd.f32 %v7422, %v8202
  %v8384 = vadd.f32 %v7423, %v8204
  %v8385 = vadd.f32 %v7424, %v8206
  %v8386 = vadd.f32 %v7425, %v8208
  %v8387 = vadd.f32 %v7426, %v8210
  %v8388 = vadd.f32 %v7427, %v8212
  %v8389 = vadd.f32 %v7428, %v8214
  %v8390 = vadd.f32 %v7429, %v8216
  %v8391 = vadd.f32 %v7430, %v8218
  %v8392 = vadd.f32 %v7431, %v8220
  %v8393 = vadd.f32 %v7432, %v8222
  %v8394 = vadd.f32 %v7433, %v8224
  %v8395 = vadd.f32 %v7434, %v8226
  %v8396 = vadd.f32 %v7435, %v8228
  %v8397 = vadd.f32 %v7436, %v8230
  %v8398 = vadd.f32 %v7437, %v8232
  %v8399 = vadd.f32 %v7438, %v8234
  %v8400 = vadd.f32 %v7439, %v8236
  %v8401 = vadd.f32 %v7440, %v8238
  %v8402 = vadd.f32 %v7441, %v8240
  %v8403 = vadd.f32 %v7442, %v8242
  %v8404 = vadd.f32 %v7443, %v8244
  %v8405 = vadd.f32 %v7444, %v8246
  %v8406 = vadd.f32 %v7445, %v8248
  %v8407 = vadd.f32 %v7446, %v8250
  %v8408 = vadd.f32 %v7447, %v8252
  %v8409 = vadd.f32 %v7448, %v8254
  %v8410 = vadd.f32 %v7449, %v8256
  %v8411 = vadd.f32 %v7450, %v8258
  %v8412 = vadd.f32 %v7451, %v8260
  %v8413 = vadd.f32 %v7452, %v8262
  %v8414 = vadd.f32 %v7453, %v8264
  %v8415 = vadd.f32 %v7454, %v8266
  %v8416 = vadd.f32 %v7455, %v8268
  %v8417 = vadd.f32 %v7456, %v8270
  %v8418 = vadd.f32 %v7457, %v8272
  %v8419 = vadd.f32 %v7458, %v8274
  %v8420 = vadd.f32 %v7459, %v8276
  %v8421 = vadd.f32 %v7460, %v8278
  %v8422 = vadd.f32 %v7461, %v8280
  %v8423 = vadd.f32 %v7462, %v8282
  %v8424 = vadd.f32 %v7463, %v8284
  %v8425 = vadd.f32 %v7464, %v8286
  %v8426 = vadd.f32 %v7465, %v8288
  %v8427 = vadd.f32 %v7466, %v8290
  %v8428 = vadd.f32 %v7467, %v8292
  %v8429 = vadd.f32 %v7468, %v8294
  %v8430 = vadd.f32 %v7469, %v8296
  %v8431 = vadd.f32 %v7470, %v8298
  %v8432 = vadd.f32 %v7471, %v8300
  %v8433 = vadd.f32 %v7472, %v8302
  %v8434 = vadd.f32 %v7473, %v8304
  %v8435 = vadd.f32 %v7474, %v8306
  %v8436 = vadd.f32 %v7475, %v8308
  %v8437 = vmul.f32 %v7989, %v3632
  %v8438 = vmul.f32 %v7990, %v3633
  %v8439 = vmul.f32 %v7991, %v3634
  %v8440 = vmul.f32 %v7992, %v3635
  %v8441 = vmul.f32 %v7993, %v3636
  %v8442 = vmul.f32 %v7994, %v3637
  %v8443 = vmul.f32 %v7995, %v3638
  %v8444 = vmul.f32 %v7996, %v3639
  %v8445 = vmul.f32 %v7997, %v3632
  %v8446 = vmul.f32 %v7998, %v3633
  %v8447 = vmul.f32 %v7999, %v3634
  %v8448 = vmul.f32 %v8000, %v3635
  %v8449 = vmul.f32 %v8001, %v3636
  %v8450 = vmul.f32 %v8002, %v3637
  %v8451 = vmul.f32 %v8003, %v3638
  %v8452 = vmul.f32 %v8004, %v3639
  %v8453 = vmul.f32 %v8005, %v3632
  %v8454 = vmul.f32 %v8006, %v3633
  %v8455 = vmul.f32 %v8007, %v3634
  %v8456 = vmul.f32 %v8008, %v3635
  %v8457 = vmul.f32 %v8009, %v3636
  %v8458 = vmul.f32 %v8010, %v3637
  %v8459 = vmul.f32 %v8011, %v3638
  %v8460 = vmul.f32 %v8012, %v3639
  %v8461 = vmul.f32 %v8013, %v3632
  %v8462 = vmul.f32 %v8014, %v3633
  %v8463 = vmul.f32 %v8015, %v3634
  %v8464 = vmul.f32 %v8016, %v3635
  %v8465 = vmul.f32 %v8017, %v3636
  %v8466 = vmul.f32 %v8018, %v3637
  %v8467 = vmul.f32 %v8019, %v3638
  %v8468 = vmul.f32 %v8020, %v3639
  %v8469 = vmul.f32 %v8021, %v3632
  %v8470 = vmul.f32 %v8022, %v3633
  %v8471 = vmul.f32 %v8023, %v3634
  %v8472 = vmul.f32 %v8024, %v3635
  %v8473 = vmul.f32 %v8025, %v3636
  %v8474 = vmul.f32 %v8026, %v3637
  %v8475 = vmul.f32 %v8027, %v3638
  %v8476 = vmul.f32 %v8028, %v3639
  %v8477 = vmul.f32 %v8029, %v3632
  %v8478 = vmul.f32 %v8030, %v3633
  %v8479 = vmul.f32 %v8031, %v3634
  %v8480 = vmul.f32 %v8032, %v3635
  %v8481 = vmul.f32 %v8033, %v3636
  %v8482 = vmul.f32 %v8034, %v3637
  %v8483 = vmul.f32 %v8035, %v3638
  %v8484 = vmul.f32 %v8036, %v3639
  %v8485 = vmul.f32 %v8037, %v3632
  %v8486 = vmul.f32 %v8038, %v3633
  %v8487 = vmul.f32 %v8039, %v3634
  %v8488 = vmul.f32 %v8040, %v3635
  %v8489 = vmul.f32 %v8041, %v3636
  %v8490 = vmul.f32 %v8042, %v3637
  %v8491 = vmul.f32 %v8043, %v3638
  %v8492 = vmul.f32 %v8044, %v3639
  %v8493 = vmul.f32 %v8045, %v3632
  %v8494 = vmul.f32 %v8046, %v3633
  %v8495 = vmul.f32 %v8047, %v3634
  %v8496 = vmul.f32 %v8048, %v3635
  %v8497 = vmul.f32 %v8049, %v3636
  %v8498 = vmul.f32 %v8050, %v3637
  %v8499 = vmul.f32 %v8051, %v3638
  %v8500 = vmul.f32 %v8052, %v3639
  %v8501 = vadd.f32 %v8437, 0.0
  %v8502 = vadd.f32 %v8438, 0.0
  %v8503 = vadd.f32 %v8439, 0.0
  %v8504 = vadd.f32 %v8440, 0.0
  %v8505 = vadd.f32 %v8441, 0.0
  %v8506 = vadd.f32 %v8442, 0.0
  %v8507 = vadd.f32 %v8443, 0.0
  %v8508 = vadd.f32 %v8444, 0.0
  %v8509 = vadd.f32 %v8445, 0.0
  %v8510 = vadd.f32 %v8446, 0.0
  %v8511 = vadd.f32 %v8447, 0.0
  %v8512 = vadd.f32 %v8448, 0.0
  %v8513 = vadd.f32 %v8449, 0.0
  %v8514 = vadd.f32 %v8450, 0.0
  %v8515 = vadd.f32 %v8451, 0.0
  %v8516 = vadd.f32 %v8452, 0.0
  %v8517 = vadd.f32 %v8453, 0.0
  %v8518 = vadd.f32 %v8454, 0.0
  %v8519 = vadd.f32 %v8455, 0.0
  %v8520 = vadd.f32 %v8456, 0.0
  %v8521 = vadd.f32 %v8457, 0.0
  %v8522 = vadd.f32 %v8458, 0.0
  %v8523 = vadd.f32 %v8459, 0.0
  %v8524 = vadd.f32 %v8460, 0.0
  %v8525 = vadd.f32 %v8461, 0.0
  %v8526 = vadd.f32 %v8462, 0.0
  %v8527 = vadd.f32 %v8463, 0.0
  %v8528 = vadd.f32 %v8464, 0.0
  %v8529 = vadd.f32 %v8465, 0.0
  %v8530 = vadd.f32 %v8466, 0.0
  %v8531 = vadd.f32 %v8467, 0.0
  %v8532 = vadd.f32 %v8468, 0.0
  %v8533 = vadd.f32 %v8469, 0.0
  %v8534 = vadd.f32 %v8470, 0.0
  %v8535 = vadd.f32 %v8471, 0.0
  %v8536 = vadd.f32 %v8472, 0.0
  %v8537 = vadd.f32 %v8473, 0.0
  %v8538 = vadd.f32 %v8474, 0.0
  %v8539 = vadd.f32 %v8475, 0.0
  %v8540 = vadd.f32 %v8476, 0.0
  %v8541 = vadd.f32 %v8477, 0.0
  %v8542 = vadd.f32 %v8478, 0.0
  %v8543 = vadd.f32 %v8479, 0.0
  %v8544 = vadd.f32 %v8480, 0.0
  %v8545 = vadd.f32 %v8481, 0.0
  %v8546 = vadd.f32 %v8482, 0.0
  %v8547 = vadd.f32 %v8483, 0.0
  %v8548 = vadd.f32 %v8484, 0.0
  %v8549 = vadd.f32 %v8485, 0.0
  %v8550 = vadd.f32 %v8486, 0.0
  %v8551 = vadd.f32 %v8487, 0.0
  %v8552 = vadd.f32 %v8488, 0.0
  %v8553 = vadd.f32 %v8489, 0.0
  %v8554 = vadd.f32 %v8490, 0.0
  %v8555 = vadd.f32 %v8491, 0.0
  %v8556 = vadd.f32 %v8492, 0.0
  %v8557 = vadd.f32 %v8493, 0.0
  %v8558 = vadd.f32 %v8494, 0.0
  %v8559 = vadd.f32 %v8495, 0.0
  %v8560 = vadd.f32 %v8496, 0.0
  %v8561 = vadd.f32 %v8497, 0.0
  %v8562 = vadd.f32 %v8498, 0.0
  %v8563 = vadd.f32 %v8499, 0.0
  %v8564 = vadd.f32 %v8500, 0.0
  %8565 = vrot.lane.b32.xlu0 %v312, 57
  %v8566 = vpop.permute.xlu0 %8565
  %8567 = vrot.lane.b32.xlu0 %v315, 57
  %v8568 = vpop.permute.xlu0 %8567
  %8569 = vrot.lane.b32.xlu0 %v318, 57
  %v8570 = vpop.permute.xlu0 %8569
  %8571 = vrot.lane.b32.xlu0 %v321, 57
  %v8572 = vpop.permute.xlu0 %8571
  %8573 = vrot.lane.b32.xlu0 %v324, 57
  %v8574 = vpop.permute.xlu0 %8573
  %8575 = vrot.lane.b32.xlu0 %v327, 57
  %v8576 = vpop.permute.xlu0 %8575
  %8577 = vrot.lane.b32.xlu0 %v330, 57
  %v8578 = vpop.permute.xlu0 %8577
  %8579 = vrot.lane.b32.xlu0 %v333, 57
  %v8580 = vpop.permute.xlu0 %8579
  %8581 = vrot.lane.b32.xlu0 %v336, 57
  %v8582 = vpop.permute.xlu0 %8581
  %8583 = vrot.lane.b32.xlu0 %v339, 57
  %v8584 = vpop.permute.xlu0 %8583
  %8585 = vrot.lane.b32.xlu0 %v342, 57
  %v8586 = vpop.permute.xlu0 %8585
  %8587 = vrot.lane.b32.xlu0 %v345, 57
  %v8588 = vpop.permute.xlu0 %8587
  %8589 = vrot.lane.b32.xlu0 %v348, 57
  %v8590 = vpop.permute.xlu0 %8589
  %8591 = vrot.lane.b32.xlu0 %v351, 57
  %v8592 = vpop.permute.xlu0 %8591
  %8593 = vrot.lane.b32.xlu0 %v354, 57
  %v8594 = vpop.permute.xlu0 %8593
  %8595 = vrot.lane.b32.xlu0 %v357, 57
  %v8596 = vpop.permute.xlu0 %8595
  %8597 = vrot.lane.b32.xlu0 %v360, 57
  %v8598 = vpop.permute.xlu0 %8597
  %8599 = vrot.lane.b32.xlu0 %v363, 57
  %v8600 = vpop.permute.xlu0 %8599
  %8601 = vrot.lane.b32.xlu0 %v366, 57
  %v8602 = vpop.permute.xlu0 %8601
  %8603 = vrot.lane.b32.xlu0 %v369, 57
  %v8604 = vpop.permute.xlu0 %8603
  %8605 = vrot.lane.b32.xlu0 %v372, 57
  %v8606 = vpop.permute.xlu0 %8605
  %8607 = vrot.lane.b32.xlu0 %v375, 57
  %v8608 = vpop.permute.xlu0 %8607
  %8609 = vrot.lane.b32.xlu0 %v378, 57
  %v8610 = vpop.permute.xlu0 %8609
  %8611 = vrot.lane.b32.xlu0 %v381, 57
  %v8612 = vpop.permute.xlu0 %8611
  %8613 = vrot.lane.b32.xlu0 %v384, 57
  %v8614 = vpop.permute.xlu0 %8613
  %8615 = vrot.lane.b32.xlu0 %v387, 57
  %v8616 = vpop.permute.xlu0 %8615
  %8617 = vrot.lane.b32.xlu0 %v390, 57
  %v8618 = vpop.permute.xlu0 %8617
  %8619 = vrot.lane.b32.xlu0 %v393, 57
  %v8620 = vpop.permute.xlu0 %8619
  %8621 = vrot.lane.b32.xlu0 %v396, 57
  %v8622 = vpop.permute.xlu0 %8621
  %8623 = vrot.lane.b32.xlu0 %v399, 57
  %v8624 = vpop.permute.xlu0 %8623
  %8625 = vrot.lane.b32.xlu0 %v402, 57
  %v8626 = vpop.permute.xlu0 %8625
  %8627 = vrot.lane.b32.xlu0 %v405, 57
  %v8628 = vpop.permute.xlu0 %8627
  %8629 = vrot.lane.b32.xlu0 %v408, 57
  %v8630 = vpop.permute.xlu0 %8629
  %8631 = vrot.lane.b32.xlu0 %v411, 57
  %v8632 = vpop.permute.xlu0 %8631
  %8633 = vrot.lane.b32.xlu0 %v414, 57
  %v8634 = vpop.permute.xlu0 %8633
  %8635 = vrot.lane.b32.xlu0 %v417, 57
  %v8636 = vpop.permute.xlu0 %8635
  %8637 = vrot.lane.b32.xlu0 %v420, 57
  %v8638 = vpop.permute.xlu0 %8637
  %8639 = vrot.lane.b32.xlu0 %v423, 57
  %v8640 = vpop.permute.xlu0 %8639
  %8641 = vrot.lane.b32.xlu0 %v426, 57
  %v8642 = vpop.permute.xlu0 %8641
  %8643 = vrot.lane.b32.xlu0 %v429, 57
  %v8644 = vpop.permute.xlu0 %8643
  %8645 = vrot.lane.b32.xlu0 %v432, 57
  %v8646 = vpop.permute.xlu0 %8645
  %8647 = vrot.lane.b32.xlu0 %v435, 57
  %v8648 = vpop.permute.xlu0 %8647
  %8649 = vrot.lane.b32.xlu0 %v438, 57
  %v8650 = vpop.permute.xlu0 %8649
  %8651 = vrot.lane.b32.xlu0 %v441, 57
  %v8652 = vpop.permute.xlu0 %8651
  %8653 = vrot.lane.b32.xlu0 %v444, 57
  %v8654 = vpop.permute.xlu0 %8653
  %8655 = vrot.lane.b32.xlu0 %v447, 57
  %v8656 = vpop.permute.xlu0 %8655
  %8657 = vrot.lane.b32.xlu0 %v450, 57
  %v8658 = vpop.permute.xlu0 %8657
  %8659 = vrot.lane.b32.xlu0 %v453, 57
  %v8660 = vpop.permute.xlu0 %8659
  %8661 = vrot.lane.b32.xlu0 %v456, 57
  %v8662 = vpop.permute.xlu0 %8661
  %8663 = vrot.lane.b32.xlu0 %v459, 57
  %v8664 = vpop.permute.xlu0 %8663
  %8665 = vrot.lane.b32.xlu0 %v462, 57
  %v8666 = vpop.permute.xlu0 %8665
  %8667 = vrot.lane.b32.xlu0 %v465, 57
  %v8668 = vpop.permute.xlu0 %8667
  %8669 = vrot.lane.b32.xlu0 %v468, 57
  %v8670 = vpop.permute.xlu0 %8669
  %8671 = vrot.lane.b32.xlu0 %v471, 57
  %v8672 = vpop.permute.xlu0 %8671
  %8673 = vrot.lane.b32.xlu0 %v474, 57
  %v8674 = vpop.permute.xlu0 %8673
  %8675 = vrot.lane.b32.xlu0 %v477, 57
  %v8676 = vpop.permute.xlu0 %8675
  %8677 = vrot.lane.b32.xlu0 %v480, 57
  %v8678 = vpop.permute.xlu0 %8677
  %8679 = vrot.lane.b32.xlu0 %v483, 57
  %v8680 = vpop.permute.xlu0 %8679
  %8681 = vrot.lane.b32.xlu0 %v486, 57
  %v8682 = vpop.permute.xlu0 %8681
  %8683 = vrot.lane.b32.xlu0 %v489, 57
  %v8684 = vpop.permute.xlu0 %8683
  %8685 = vrot.lane.b32.xlu0 %v492, 57
  %v8686 = vpop.permute.xlu0 %8685
  %8687 = vrot.lane.b32.xlu0 %v495, 57
  %v8688 = vpop.permute.xlu0 %8687
  %8689 = vrot.lane.b32.xlu0 %v498, 57
  %v8690 = vpop.permute.xlu0 %8689
  %8691 = vrot.lane.b32.xlu0 %v501, 57
  %v8692 = vpop.permute.xlu0 %8691
  %8757 = vrot.lane.b32.xlu0 %v312, 89
  %v8758 = vpop.permute.xlu0 %8757
  %8759 = vrot.lane.b32.xlu0 %v315, 89
  %v8760 = vpop.permute.xlu0 %8759
  %8761 = vrot.lane.b32.xlu0 %v318, 89
  %v8762 = vpop.permute.xlu0 %8761
  %8763 = vrot.lane.b32.xlu0 %v321, 89
  %v8764 = vpop.permute.xlu0 %8763
  %8765 = vrot.lane.b32.xlu0 %v324, 89
  %v8766 = vpop.permute.xlu0 %8765
  %8767 = vrot.lane.b32.xlu0 %v327, 89
  %v8768 = vpop.permute.xlu0 %8767
  %8769 = vrot.lane.b32.xlu0 %v330, 89
  %v8770 = vpop.permute.xlu0 %8769
  %8771 = vrot.lane.b32.xlu0 %v333, 89
  %v8772 = vpop.permute.xlu0 %8771
  %8773 = vrot.lane.b32.xlu0 %v336, 89
  %v8774 = vpop.permute.xlu0 %8773
  %8775 = vrot.lane.b32.xlu0 %v339, 89
  %v8776 = vpop.permute.xlu0 %8775
  %8777 = vrot.lane.b32.xlu0 %v342, 89
  %v8778 = vpop.permute.xlu0 %8777
  %8779 = vrot.lane.b32.xlu0 %v345, 89
  %v8780 = vpop.permute.xlu0 %8779
  %8781 = vrot.lane.b32.xlu0 %v348, 89
  %v8782 = vpop.permute.xlu0 %8781
  %8783 = vrot.lane.b32.xlu0 %v351, 89
  %v8784 = vpop.permute.xlu0 %8783
  %8785 = vrot.lane.b32.xlu0 %v354, 89
  %v8786 = vpop.permute.xlu0 %8785
  %8787 = vrot.lane.b32.xlu0 %v357, 89
  %v8788 = vpop.permute.xlu0 %8787
  %8789 = vrot.lane.b32.xlu0 %v360, 89
  %v8790 = vpop.permute.xlu0 %8789
  %8791 = vrot.lane.b32.xlu0 %v363, 89
  %v8792 = vpop.permute.xlu0 %8791
  %8793 = vrot.lane.b32.xlu0 %v366, 89
  %v8794 = vpop.permute.xlu0 %8793
  %8795 = vrot.lane.b32.xlu0 %v369, 89
  %v8796 = vpop.permute.xlu0 %8795
  %8797 = vrot.lane.b32.xlu0 %v372, 89
  %v8798 = vpop.permute.xlu0 %8797
  %8799 = vrot.lane.b32.xlu0 %v375, 89
  %v8800 = vpop.permute.xlu0 %8799
  %8801 = vrot.lane.b32.xlu0 %v378, 89
  %v8802 = vpop.permute.xlu0 %8801
  %8803 = vrot.lane.b32.xlu0 %v381, 89
  %v8804 = vpop.permute.xlu0 %8803
  %8805 = vrot.lane.b32.xlu0 %v384, 89
  %v8806 = vpop.permute.xlu0 %8805
  %8807 = vrot.lane.b32.xlu0 %v387, 89
  %v8808 = vpop.permute.xlu0 %8807
  %8809 = vrot.lane.b32.xlu0 %v390, 89
  %v8810 = vpop.permute.xlu0 %8809
  %8811 = vrot.lane.b32.xlu0 %v393, 89
  %v8812 = vpop.permute.xlu0 %8811
  %8813 = vrot.lane.b32.xlu0 %v396, 89
  %v8814 = vpop.permute.xlu0 %8813
  %8815 = vrot.lane.b32.xlu0 %v399, 89
  %v8816 = vpop.permute.xlu0 %8815
  %8817 = vrot.lane.b32.xlu0 %v402, 89
  %v8818 = vpop.permute.xlu0 %8817
  %8819 = vrot.lane.b32.xlu0 %v405, 89
  %v8820 = vpop.permute.xlu0 %8819
  %8821 = vrot.lane.b32.xlu0 %v408, 89
  %v8822 = vpop.permute.xlu0 %8821
  %8823 = vrot.lane.b32.xlu0 %v411, 89
  %v8824 = vpop.permute.xlu0 %8823
  %8825 = vrot.lane.b32.xlu0 %v414, 89
  %v8826 = vpop.permute.xlu0 %8825
  %8827 = vrot.lane.b32.xlu0 %v417, 89
  %v8828 = vpop.permute.xlu0 %8827
  %8829 = vrot.lane.b32.xlu0 %v420, 89
  %v8830 = vpop.permute.xlu0 %8829
  %8831 = vrot.lane.b32.xlu0 %v423, 89
  %v8832 = vpop.permute.xlu0 %8831
  %8833 = vrot.lane.b32.xlu0 %v426, 89
  %v8834 = vpop.permute.xlu0 %8833
  %8835 = vrot.lane.b32.xlu0 %v429, 89
  %v8836 = vpop.permute.xlu0 %8835
  %8837 = vrot.lane.b32.xlu0 %v432, 89
  %v8838 = vpop.permute.xlu0 %8837
  %8839 = vrot.lane.b32.xlu0 %v435, 89
  %v8840 = vpop.permute.xlu0 %8839
  %8841 = vrot.lane.b32.xlu0 %v438, 89
  %v8842 = vpop.permute.xlu0 %8841
  %8843 = vrot.lane.b32.xlu0 %v441, 89
  %v8844 = vpop.permute.xlu0 %8843
  %8845 = vrot.lane.b32.xlu0 %v444, 89
  %v8846 = vpop.permute.xlu0 %8845
  %8847 = vrot.lane.b32.xlu0 %v447, 89
  %v8848 = vpop.permute.xlu0 %8847
  %8849 = vrot.lane.b32.xlu0 %v450, 89
  %v8850 = vpop.permute.xlu0 %8849
  %8851 = vrot.lane.b32.xlu0 %v453, 89
  %v8852 = vpop.permute.xlu0 %8851
  %8853 = vrot.lane.b32.xlu0 %v456, 89
  %v8854 = vpop.permute.xlu0 %8853
  %8855 = vrot.lane.b32.xlu0 %v459, 89
  %v8856 = vpop.permute.xlu0 %8855
  %8857 = vrot.lane.b32.xlu0 %v462, 89
  %v8858 = vpop.permute.xlu0 %8857
  %8859 = vrot.lane.b32.xlu0 %v465, 89
  %v8860 = vpop.permute.xlu0 %8859
  %8861 = vrot.lane.b32.xlu0 %v468, 89
  %v8862 = vpop.permute.xlu0 %8861
  %8863 = vrot.lane.b32.xlu0 %v471, 89
  %v8864 = vpop.permute.xlu0 %8863
  %8865 = vrot.lane.b32.xlu0 %v474, 89
  %v8866 = vpop.permute.xlu0 %8865
  %8867 = vrot.lane.b32.xlu0 %v477, 89
  %v8868 = vpop.permute.xlu0 %8867
  %8869 = vrot.lane.b32.xlu0 %v480, 89
  %v8870 = vpop.permute.xlu0 %8869
  %8871 = vrot.lane.b32.xlu0 %v483, 89
  %v8872 = vpop.permute.xlu0 %8871
  %8873 = vrot.lane.b32.xlu0 %v486, 89
  %v8874 = vpop.permute.xlu0 %8873
  %8875 = vrot.lane.b32.xlu0 %v489, 89
  %v8876 = vpop.permute.xlu0 %8875
  %8877 = vrot.lane.b32.xlu0 %v492, 89
  %v8878 = vpop.permute.xlu0 %8877
  %8879 = vrot.lane.b32.xlu0 %v495, 89
  %v8880 = vpop.permute.xlu0 %8879
  %8881 = vrot.lane.b32.xlu0 %v498, 89
  %v8882 = vpop.permute.xlu0 %8881
  %8883 = vrot.lane.b32.xlu0 %v501, 89
  %v8884 = vpop.permute.xlu0 %8883
  %vm8949 = vcmask 203776
  %v8950 = vsel %vm8949, %v8566, %v8758
  %v8951 = vsel %vm8949, %v8568, %v8760
  %v8952 = vsel %vm8949, %v8570, %v8762
  %v8953 = vsel %vm8949, %v8572, %v8764
  %v8954 = vsel %vm8949, %v8574, %v8766
  %v8955 = vsel %vm8949, %v8576, %v8768
  %v8956 = vsel %vm8949, %v8578, %v8770
  %v8957 = vsel %vm8949, %v8580, %v8772
  %v8958 = vsel %vm8949, %v8582, %v8774
  %v8959 = vsel %vm8949, %v8584, %v8776
  %v8960 = vsel %vm8949, %v8586, %v8778
  %v8961 = vsel %vm8949, %v8588, %v8780
  %v8962 = vsel %vm8949, %v8590, %v8782
  %v8963 = vsel %vm8949, %v8592, %v8784
  %v8964 = vsel %vm8949, %v8594, %v8786
  %v8965 = vsel %vm8949, %v8596, %v8788
  %v8966 = vsel %vm8949, %v8598, %v8790
  %v8967 = vsel %vm8949, %v8600, %v8792
  %v8968 = vsel %vm8949, %v8602, %v8794
  %v8969 = vsel %vm8949, %v8604, %v8796
  %v8970 = vsel %vm8949, %v8606, %v8798
  %v8971 = vsel %vm8949, %v8608, %v8800
  %v8972 = vsel %vm8949, %v8610, %v8802
  %v8973 = vsel %vm8949, %v8612, %v8804
  %v8974 = vsel %vm8949, %v8614, %v8806
  %v8975 = vsel %vm8949, %v8616, %v8808
  %v8976 = vsel %vm8949, %v8618, %v8810
  %v8977 = vsel %vm8949, %v8620, %v8812
  %v8978 = vsel %vm8949, %v8622, %v8814
  %v8979 = vsel %vm8949, %v8624, %v8816
  %v8980 = vsel %vm8949, %v8626, %v8818
  %v8981 = vsel %vm8949, %v8628, %v8820
  %v8982 = vsel %vm8949, %v8630, %v8822
  %v8983 = vsel %vm8949, %v8632, %v8824
  %v8984 = vsel %vm8949, %v8634, %v8826
  %v8985 = vsel %vm8949, %v8636, %v8828
  %v8986 = vsel %vm8949, %v8638, %v8830
  %v8987 = vsel %vm8949, %v8640, %v8832
  %v8988 = vsel %vm8949, %v8642, %v8834
  %v8989 = vsel %vm8949, %v8644, %v8836
  %v8990 = vsel %vm8949, %v8646, %v8838
  %v8991 = vsel %vm8949, %v8648, %v8840
  %v8992 = vsel %vm8949, %v8650, %v8842
  %v8993 = vsel %vm8949, %v8652, %v8844
  %v8994 = vsel %vm8949, %v8654, %v8846
  %v8995 = vsel %vm8949, %v8656, %v8848
  %v8996 = vsel %vm8949, %v8658, %v8850
  %v8997 = vsel %vm8949, %v8660, %v8852
  %v8998 = vsel %vm8949, %v8662, %v8854
  %v8999 = vsel %vm8949, %v8664, %v8856
  %v9000 = vsel %vm8949, %v8666, %v8858
  %v9001 = vsel %vm8949, %v8668, %v8860
  %v9002 = vsel %vm8949, %v8670, %v8862
  %v9003 = vsel %vm8949, %v8672, %v8864
  %v9004 = vsel %vm8949, %v8674, %v8866
  %v9005 = vsel %vm8949, %v8676, %v8868
  %v9006 = vsel %vm8949, %v8678, %v8870
  %v9007 = vsel %vm8949, %v8680, %v8872
  %v9008 = vsel %vm8949, %v8682, %v8874
  %v9009 = vsel %vm8949, %v8684, %v8876
  %v9010 = vsel %vm8949, %v8686, %v8878
  %v9011 = vsel %vm8949, %v8688, %v8880
  %v9012 = vsel %vm8949, %v8690, %v8882
  %v9013 = vsel %vm8949, %v8692, %v8884
  %v9014 = vmul.f32 %v8950, %v3576
  %v9015 = vmul.f32 %v8951, %v3577
  %v9016 = vmul.f32 %v8952, %v3578
  %v9017 = vmul.f32 %v8953, %v3579
  %v9018 = vmul.f32 %v8954, %v3580
  %v9019 = vmul.f32 %v8955, %v3581
  %v9020 = vmul.f32 %v8956, %v3582
  %v9021 = vmul.f32 %v8957, %v3583
  %v9022 = vmul.f32 %v8958, %v3576
  %v9023 = vmul.f32 %v8959, %v3577
  %v9024 = vmul.f32 %v8960, %v3578
  %v9025 = vmul.f32 %v8961, %v3579
  %v9026 = vmul.f32 %v8962, %v3580
  %v9027 = vmul.f32 %v8963, %v3581
  %v9028 = vmul.f32 %v8964, %v3582
  %v9029 = vmul.f32 %v8965, %v3583
  %v9030 = vmul.f32 %v8966, %v3576
  %v9031 = vmul.f32 %v8967, %v3577
  %v9032 = vmul.f32 %v8968, %v3578
  %v9033 = vmul.f32 %v8969, %v3579
  %v9034 = vmul.f32 %v8970, %v3580
  %v9035 = vmul.f32 %v8971, %v3581
  %v9036 = vmul.f32 %v8972, %v3582
  %v9037 = vmul.f32 %v8973, %v3583
  %v9038 = vmul.f32 %v8974, %v3576
  %v9039 = vmul.f32 %v8975, %v3577
  %v9040 = vmul.f32 %v8976, %v3578
  %v9041 = vmul.f32 %v8977, %v3579
  %v9042 = vmul.f32 %v8978, %v3580
  %v9043 = vmul.f32 %v8979, %v3581
  %v9044 = vmul.f32 %v8980, %v3582
  %v9045 = vmul.f32 %v8981, %v3583
  %v9046 = vmul.f32 %v8982, %v3576
  %v9047 = vmul.f32 %v8983, %v3577
  %v9048 = vmul.f32 %v8984, %v3578
  %v9049 = vmul.f32 %v8985, %v3579
  %v9050 = vmul.f32 %v8986, %v3580
  %v9051 = vmul.f32 %v8987, %v3581
  %v9052 = vmul.f32 %v8988, %v3582
  %v9053 = vmul.f32 %v8989, %v3583
  %v9054 = vmul.f32 %v8990, %v3576
  %v9055 = vmul.f32 %v8991, %v3577
  %v9056 = vmul.f32 %v8992, %v3578
  %v9057 = vmul.f32 %v8993, %v3579
  %v9058 = vmul.f32 %v8994, %v3580
  %v9059 = vmul.f32 %v8995, %v3581
  %v9060 = vmul.f32 %v8996, %v3582
  %v9061 = vmul.f32 %v8997, %v3583
  %v9062 = vmul.f32 %v8998, %v3576
  %v9063 = vmul.f32 %v8999, %v3577
  %v9064 = vmul.f32 %v9000, %v3578
  %v9065 = vmul.f32 %v9001, %v3579
  %v9066 = vmul.f32 %v9002, %v3580
  %v9067 = vmul.f32 %v9003, %v3581
  %v9068 = vmul.f32 %v9004, %v3582
  %v9069 = vmul.f32 %v9005, %v3583
  %v9070 = vmul.f32 %v9006, %v3576
  %v9071 = vmul.f32 %v9007, %v3577
  %v9072 = vmul.f32 %v9008, %v3578
  %v9073 = vmul.f32 %v9009, %v3579
  %v9074 = vmul.f32 %v9010, %v3580
  %v9075 = vmul.f32 %v9011, %v3581
  %v9076 = vmul.f32 %v9012, %v3582
  %v9077 = vmul.f32 %v9013, %v3583
  %9142 = vrot.lane.b32.xlu0 %v9014, 64
  %v9143 = vpop.permute.xlu0 %9142
  %9144 = vrot.lane.b32.xlu0 %v9015, 64
  %v9145 = vpop.permute.xlu0 %9144
  %9146 = vrot.lane.b32.xlu0 %v9016, 64
  %v9147 = vpop.permute.xlu0 %9146
  %9148 = vrot.lane.b32.xlu0 %v9017, 64
  %v9149 = vpop.permute.xlu0 %9148
  %9150 = vrot.lane.b32.xlu0 %v9018, 64
  %v9151 = vpop.permute.xlu0 %9150
  %9152 = vrot.lane.b32.xlu0 %v9019, 64
  %v9153 = vpop.permute.xlu0 %9152
  %9154 = vrot.lane.b32.xlu0 %v9020, 64
  %v9155 = vpop.permute.xlu0 %9154
  %9156 = vrot.lane.b32.xlu0 %v9021, 64
  %v9157 = vpop.permute.xlu0 %9156
  %9158 = vrot.lane.b32.xlu0 %v9022, 64
  %v9159 = vpop.permute.xlu0 %9158
  %9160 = vrot.lane.b32.xlu0 %v9023, 64
  %v9161 = vpop.permute.xlu0 %9160
  %9162 = vrot.lane.b32.xlu0 %v9024, 64
  %v9163 = vpop.permute.xlu0 %9162
  %9164 = vrot.lane.b32.xlu0 %v9025, 64
  %v9165 = vpop.permute.xlu0 %9164
  %9166 = vrot.lane.b32.xlu0 %v9026, 64
  %v9167 = vpop.permute.xlu0 %9166
  %9168 = vrot.lane.b32.xlu0 %v9027, 64
  %v9169 = vpop.permute.xlu0 %9168
  %9170 = vrot.lane.b32.xlu0 %v9028, 64
  %v9171 = vpop.permute.xlu0 %9170
  %9172 = vrot.lane.b32.xlu0 %v9029, 64
  %v9173 = vpop.permute.xlu0 %9172
  %9174 = vrot.lane.b32.xlu0 %v9030, 64
  %v9175 = vpop.permute.xlu0 %9174
  %9176 = vrot.lane.b32.xlu0 %v9031, 64
  %v9177 = vpop.permute.xlu0 %9176
  %9178 = vrot.lane.b32.xlu0 %v9032, 64
  %v9179 = vpop.permute.xlu0 %9178
  %9180 = vrot.lane.b32.xlu0 %v9033, 64
  %v9181 = vpop.permute.xlu0 %9180
  %9182 = vrot.lane.b32.xlu0 %v9034, 64
  %v9183 = vpop.permute.xlu0 %9182
  %9184 = vrot.lane.b32.xlu0 %v9035, 64
  %v9185 = vpop.permute.xlu0 %9184
  %9186 = vrot.lane.b32.xlu0 %v9036, 64
  %v9187 = vpop.permute.xlu0 %9186
  %9188 = vrot.lane.b32.xlu0 %v9037, 64
  %v9189 = vpop.permute.xlu0 %9188
  %9190 = vrot.lane.b32.xlu0 %v9038, 64
  %v9191 = vpop.permute.xlu0 %9190
  %9192 = vrot.lane.b32.xlu0 %v9039, 64
  %v9193 = vpop.permute.xlu0 %9192
  %9194 = vrot.lane.b32.xlu0 %v9040, 64
  %v9195 = vpop.permute.xlu0 %9194
  %9196 = vrot.lane.b32.xlu0 %v9041, 64
  %v9197 = vpop.permute.xlu0 %9196
  %9198 = vrot.lane.b32.xlu0 %v9042, 64
  %v9199 = vpop.permute.xlu0 %9198
  %9200 = vrot.lane.b32.xlu0 %v9043, 64
  %v9201 = vpop.permute.xlu0 %9200
  %9202 = vrot.lane.b32.xlu0 %v9044, 64
  %v9203 = vpop.permute.xlu0 %9202
  %9204 = vrot.lane.b32.xlu0 %v9045, 64
  %v9205 = vpop.permute.xlu0 %9204
  %9206 = vrot.lane.b32.xlu0 %v9046, 64
  %v9207 = vpop.permute.xlu0 %9206
  %9208 = vrot.lane.b32.xlu0 %v9047, 64
  %v9209 = vpop.permute.xlu0 %9208
  %9210 = vrot.lane.b32.xlu0 %v9048, 64
  %v9211 = vpop.permute.xlu0 %9210
  %9212 = vrot.lane.b32.xlu0 %v9049, 64
  %v9213 = vpop.permute.xlu0 %9212
  %9214 = vrot.lane.b32.xlu0 %v9050, 64
  %v9215 = vpop.permute.xlu0 %9214
  %9216 = vrot.lane.b32.xlu0 %v9051, 64
  %v9217 = vpop.permute.xlu0 %9216
  %9218 = vrot.lane.b32.xlu0 %v9052, 64
  %v9219 = vpop.permute.xlu0 %9218
  %9220 = vrot.lane.b32.xlu0 %v9053, 64
  %v9221 = vpop.permute.xlu0 %9220
  %9222 = vrot.lane.b32.xlu0 %v9054, 64
  %v9223 = vpop.permute.xlu0 %9222
  %9224 = vrot.lane.b32.xlu0 %v9055, 64
  %v9225 = vpop.permute.xlu0 %9224
  %9226 = vrot.lane.b32.xlu0 %v9056, 64
  %v9227 = vpop.permute.xlu0 %9226
  %9228 = vrot.lane.b32.xlu0 %v9057, 64
  %v9229 = vpop.permute.xlu0 %9228
  %9230 = vrot.lane.b32.xlu0 %v9058, 64
  %v9231 = vpop.permute.xlu0 %9230
  %9232 = vrot.lane.b32.xlu0 %v9059, 64
  %v9233 = vpop.permute.xlu0 %9232
  %9234 = vrot.lane.b32.xlu0 %v9060, 64
  %v9235 = vpop.permute.xlu0 %9234
  %9236 = vrot.lane.b32.xlu0 %v9061, 64
  %v9237 = vpop.permute.xlu0 %9236
  %9238 = vrot.lane.b32.xlu0 %v9062, 64
  %v9239 = vpop.permute.xlu0 %9238
  %9240 = vrot.lane.b32.xlu0 %v9063, 64
  %v9241 = vpop.permute.xlu0 %9240
  %9242 = vrot.lane.b32.xlu0 %v9064, 64
  %v9243 = vpop.permute.xlu0 %9242
  %9244 = vrot.lane.b32.xlu0 %v9065, 64
  %v9245 = vpop.permute.xlu0 %9244
  %9246 = vrot.lane.b32.xlu0 %v9066, 64
  %v9247 = vpop.permute.xlu0 %9246
  %9248 = vrot.lane.b32.xlu0 %v9067, 64
  %v9249 = vpop.permute.xlu0 %9248
  %9250 = vrot.lane.b32.xlu0 %v9068, 64
  %v9251 = vpop.permute.xlu0 %9250
  %9252 = vrot.lane.b32.xlu0 %v9069, 64
  %v9253 = vpop.permute.xlu0 %9252
  %9254 = vrot.lane.b32.xlu0 %v9070, 64
  %v9255 = vpop.permute.xlu0 %9254
  %9256 = vrot.lane.b32.xlu0 %v9071, 64
  %v9257 = vpop.permute.xlu0 %9256
  %9258 = vrot.lane.b32.xlu0 %v9072, 64
  %v9259 = vpop.permute.xlu0 %9258
  %9260 = vrot.lane.b32.xlu0 %v9073, 64
  %v9261 = vpop.permute.xlu0 %9260
  %9262 = vrot.lane.b32.xlu0 %v9074, 64
  %v9263 = vpop.permute.xlu0 %9262
  %9264 = vrot.lane.b32.xlu0 %v9075, 64
  %v9265 = vpop.permute.xlu0 %9264
  %9266 = vrot.lane.b32.xlu0 %v9076, 64
  %v9267 = vpop.permute.xlu0 %9266
  %9268 = vrot.lane.b32.xlu0 %v9077, 64
  %v9269 = vpop.permute.xlu0 %9268
  %v9334 = vadd.f32 %v8373, %v9143
  %v9335 = vadd.f32 %v8374, %v9145
  %v9336 = vadd.f32 %v8375, %v9147
  %v9337 = vadd.f32 %v8376, %v9149
  %v9338 = vadd.f32 %v8377, %v9151
  %v9339 = vadd.f32 %v8378, %v9153
  %v9340 = vadd.f32 %v8379, %v9155
  %v9341 = vadd.f32 %v8380, %v9157
  %v9342 = vadd.f32 %v8381, %v9159
  %v9343 = vadd.f32 %v8382, %v9161
  %v9344 = vadd.f32 %v8383, %v9163
  %v9345 = vadd.f32 %v8384, %v9165
  %v9346 = vadd.f32 %v8385, %v9167
  %v9347 = vadd.f32 %v8386, %v9169
  %v9348 = vadd.f32 %v8387, %v9171
  %v9349 = vadd.f32 %v8388, %v9173
  %v9350 = vadd.f32 %v8389, %v9175
  %v9351 = vadd.f32 %v8390, %v9177
  %v9352 = vadd.f32 %v8391, %v9179
  %v9353 = vadd.f32 %v8392, %v9181
  %v9354 = vadd.f32 %v8393, %v9183
  %v9355 = vadd.f32 %v8394, %v9185
  %v9356 = vadd.f32 %v8395, %v9187
  %v9357 = vadd.f32 %v8396, %v9189
  %v9358 = vadd.f32 %v8397, %v9191
  %v9359 = vadd.f32 %v8398, %v9193
  %v9360 = vadd.f32 %v8399, %v9195
  %v9361 = vadd.f32 %v8400, %v9197
  %v9362 = vadd.f32 %v8401, %v9199
  %v9363 = vadd.f32 %v8402, %v9201
  %v9364 = vadd.f32 %v8403, %v9203
  %v9365 = vadd.f32 %v8404, %v9205
  %v9366 = vadd.f32 %v8405, %v9207
  %v9367 = vadd.f32 %v8406, %v9209
  %v9368 = vadd.f32 %v8407, %v9211
  %v9369 = vadd.f32 %v8408, %v9213
  %v9370 = vadd.f32 %v8409, %v9215
  %v9371 = vadd.f32 %v8410, %v9217
  %v9372 = vadd.f32 %v8411, %v9219
  %v9373 = vadd.f32 %v8412, %v9221
  %v9374 = vadd.f32 %v8413, %v9223
  %v9375 = vadd.f32 %v8414, %v9225
  %v9376 = vadd.f32 %v8415, %v9227
  %v9377 = vadd.f32 %v8416, %v9229
  %v9378 = vadd.f32 %v8417, %v9231
  %v9379 = vadd.f32 %v8418, %v9233
  %v9380 = vadd.f32 %v8419, %v9235
  %v9381 = vadd.f32 %v8420, %v9237
  %v9382 = vadd.f32 %v8421, %v9239
  %v9383 = vadd.f32 %v8422, %v9241
  %v9384 = vadd.f32 %v8423, %v9243
  %v9385 = vadd.f32 %v8424, %v9245
  %v9386 = vadd.f32 %v8425, %v9247
  %v9387 = vadd.f32 %v8426, %v9249
  %v9388 = vadd.f32 %v8427, %v9251
  %v9389 = vadd.f32 %v8428, %v9253
  %v9390 = vadd.f32 %v8429, %v9255
  %v9391 = vadd.f32 %v8430, %v9257
  %v9392 = vadd.f32 %v8431, %v9259
  %v9393 = vadd.f32 %v8432, %v9261
  %v9394 = vadd.f32 %v8433, %v9263
  %v9395 = vadd.f32 %v8434, %v9265
  %v9396 = vadd.f32 %v8435, %v9267
  %v9397 = vadd.f32 %v8436, %v9269
  %v9398 = vmul.f32 %v8950, %v3640
  %v9399 = vmul.f32 %v8951, %v3641
  %v9400 = vmul.f32 %v8952, %v3642
  %v9401 = vmul.f32 %v8953, %v3643
  %v9402 = vmul.f32 %v8954, %v3644
  %v9403 = vmul.f32 %v8955, %v3645
  %v9404 = vmul.f32 %v8956, %v3646
  %v9405 = vmul.f32 %v8957, %v3647
  %v9406 = vmul.f32 %v8958, %v3640
  %v9407 = vmul.f32 %v8959, %v3641
  %v9408 = vmul.f32 %v8960, %v3642
  %v9409 = vmul.f32 %v8961, %v3643
  %v9410 = vmul.f32 %v8962, %v3644
  %v9411 = vmul.f32 %v8963, %v3645
  %v9412 = vmul.f32 %v8964, %v3646
  %v9413 = vmul.f32 %v8965, %v3647
  %v9414 = vmul.f32 %v8966, %v3640
  %v9415 = vmul.f32 %v8967, %v3641
  %v9416 = vmul.f32 %v8968, %v3642
  %v9417 = vmul.f32 %v8969, %v3643
  %v9418 = vmul.f32 %v8970, %v3644
  %v9419 = vmul.f32 %v8971, %v3645
  %v9420 = vmul.f32 %v8972, %v3646
  %v9421 = vmul.f32 %v8973, %v3647
  %v9422 = vmul.f32 %v8974, %v3640
  %v9423 = vmul.f32 %v8975, %v3641
  %v9424 = vmul.f32 %v8976, %v3642
  %v9425 = vmul.f32 %v8977, %v3643
  %v9426 = vmul.f32 %v8978, %v3644
  %v9427 = vmul.f32 %v8979, %v3645
  %v9428 = vmul.f32 %v8980, %v3646
  %v9429 = vmul.f32 %v8981, %v3647
  %v9430 = vmul.f32 %v8982, %v3640
  %v9431 = vmul.f32 %v8983, %v3641
  %v9432 = vmul.f32 %v8984, %v3642
  %v9433 = vmul.f32 %v8985, %v3643
  %v9434 = vmul.f32 %v8986, %v3644
  %v9435 = vmul.f32 %v8987, %v3645
  %v9436 = vmul.f32 %v8988, %v3646
  %v9437 = vmul.f32 %v8989, %v3647
  %v9438 = vmul.f32 %v8990, %v3640
  %v9439 = vmul.f32 %v8991, %v3641
  %v9440 = vmul.f32 %v8992, %v3642
  %v9441 = vmul.f32 %v8993, %v3643
  %v9442 = vmul.f32 %v8994, %v3644
  %v9443 = vmul.f32 %v8995, %v3645
  %v9444 = vmul.f32 %v8996, %v3646
  %v9445 = vmul.f32 %v8997, %v3647
  %v9446 = vmul.f32 %v8998, %v3640
  %v9447 = vmul.f32 %v8999, %v3641
  %v9448 = vmul.f32 %v9000, %v3642
  %v9449 = vmul.f32 %v9001, %v3643
  %v9450 = vmul.f32 %v9002, %v3644
  %v9451 = vmul.f32 %v9003, %v3645
  %v9452 = vmul.f32 %v9004, %v3646
  %v9453 = vmul.f32 %v9005, %v3647
  %v9454 = vmul.f32 %v9006, %v3640
  %v9455 = vmul.f32 %v9007, %v3641
  %v9456 = vmul.f32 %v9008, %v3642
  %v9457 = vmul.f32 %v9009, %v3643
  %v9458 = vmul.f32 %v9010, %v3644
  %v9459 = vmul.f32 %v9011, %v3645
  %v9460 = vmul.f32 %v9012, %v3646
  %v9461 = vmul.f32 %v9013, %v3647
  %v9462 = vadd.f32 %v8501, %v9398
  %v9463 = vadd.f32 %v8502, %v9399
  %v9464 = vadd.f32 %v8503, %v9400
  %v9465 = vadd.f32 %v8504, %v9401
  %v9466 = vadd.f32 %v8505, %v9402
  %v9467 = vadd.f32 %v8506, %v9403
  %v9468 = vadd.f32 %v8507, %v9404
  %v9469 = vadd.f32 %v8508, %v9405
  %v9470 = vadd.f32 %v8509, %v9406
  %v9471 = vadd.f32 %v8510, %v9407
  %v9472 = vadd.f32 %v8511, %v9408
  %v9473 = vadd.f32 %v8512, %v9409
  %v9474 = vadd.f32 %v8513, %v9410
  %v9475 = vadd.f32 %v8514, %v9411
  %v9476 = vadd.f32 %v8515, %v9412
  %v9477 = vadd.f32 %v8516, %v9413
  %v9478 = vadd.f32 %v8517, %v9414
  %v9479 = vadd.f32 %v8518, %v9415
  %v9480 = vadd.f32 %v8519, %v9416
  %v9481 = vadd.f32 %v8520, %v9417
  %v9482 = vadd.f32 %v8521, %v9418
  %v9483 = vadd.f32 %v8522, %v9419
  %v9484 = vadd.f32 %v8523, %v9420
  %v9485 = vadd.f32 %v8524, %v9421
  %v9486 = vadd.f32 %v8525, %v9422
  %v9487 = vadd.f32 %v8526, %v9423
  %v9488 = vadd.f32 %v8527, %v9424
  %v9489 = vadd.f32 %v8528, %v9425
  %v9490 = vadd.f32 %v8529, %v9426
  %v9491 = vadd.f32 %v8530, %v9427
  %v9492 = vadd.f32 %v8531, %v9428
  %v9493 = vadd.f32 %v8532, %v9429
  %v9494 = vadd.f32 %v8533, %v9430
  %v9495 = vadd.f32 %v8534, %v9431
  %v9496 = vadd.f32 %v8535, %v9432
  %v9497 = vadd.f32 %v8536, %v9433
  %v9498 = vadd.f32 %v8537, %v9434
  %v9499 = vadd.f32 %v8538, %v9435
  %v9500 = vadd.f32 %v8539, %v9436
  %v9501 = vadd.f32 %v8540, %v9437
  %v9502 = vadd.f32 %v8541, %v9438
  %v9503 = vadd.f32 %v8542, %v9439
  %v9504 = vadd.f32 %v8543, %v9440
  %v9505 = vadd.f32 %v8544, %v9441
  %v9506 = vadd.f32 %v8545, %v9442
  %v9507 = vadd.f32 %v8546, %v9443
  %v9508 = vadd.f32 %v8547, %v9444
  %v9509 = vadd.f32 %v8548, %v9445
  %v9510 = vadd.f32 %v8549, %v9446
  %v9511 = vadd.f32 %v8550, %v9447
  %v9512 = vadd.f32 %v8551, %v9448
  %v9513 = vadd.f32 %v8552, %v9449
  %v9514 = vadd.f32 %v8553, %v9450
  %v9515 = vadd.f32 %v8554, %v9451
  %v9516 = vadd.f32 %v8555, %v9452
  %v9517 = vadd.f32 %v8556, %v9453
  %v9518 = vadd.f32 %v8557, %v9454
  %v9519 = vadd.f32 %v8558, %v9455
  %v9520 = vadd.f32 %v8559, %v9456
  %v9521 = vadd.f32 %v8560, %v9457
  %v9522 = vadd.f32 %v8561, %v9458
  %v9523 = vadd.f32 %v8562, %v9459
  %v9524 = vadd.f32 %v8563, %v9460
  %v9525 = vadd.f32 %v8564, %v9461
  %9526 = vrot.lane.b32.xlu0 %v312, 56
  %v9527 = vpop.permute.xlu0 %9526
  %9528 = vrot.lane.b32.xlu0 %v315, 56
  %v9529 = vpop.permute.xlu0 %9528
  %9530 = vrot.lane.b32.xlu0 %v318, 56
  %v9531 = vpop.permute.xlu0 %9530
  %9532 = vrot.lane.b32.xlu0 %v321, 56
  %v9533 = vpop.permute.xlu0 %9532
  %9534 = vrot.lane.b32.xlu0 %v324, 56
  %v9535 = vpop.permute.xlu0 %9534
  %9536 = vrot.lane.b32.xlu0 %v327, 56
  %v9537 = vpop.permute.xlu0 %9536
  %9538 = vrot.lane.b32.xlu0 %v330, 56
  %v9539 = vpop.permute.xlu0 %9538
  %9540 = vrot.lane.b32.xlu0 %v333, 56
  %v9541 = vpop.permute.xlu0 %9540
  %9542 = vrot.lane.b32.xlu0 %v336, 56
  %v9543 = vpop.permute.xlu0 %9542
  %9544 = vrot.lane.b32.xlu0 %v339, 56
  %v9545 = vpop.permute.xlu0 %9544
  %9546 = vrot.lane.b32.xlu0 %v342, 56
  %v9547 = vpop.permute.xlu0 %9546
  %9548 = vrot.lane.b32.xlu0 %v345, 56
  %v9549 = vpop.permute.xlu0 %9548
  %9550 = vrot.lane.b32.xlu0 %v348, 56
  %v9551 = vpop.permute.xlu0 %9550
  %9552 = vrot.lane.b32.xlu0 %v351, 56
  %v9553 = vpop.permute.xlu0 %9552
  %9554 = vrot.lane.b32.xlu0 %v354, 56
  %v9555 = vpop.permute.xlu0 %9554
  %9556 = vrot.lane.b32.xlu0 %v357, 56
  %v9557 = vpop.permute.xlu0 %9556
  %9558 = vrot.lane.b32.xlu0 %v360, 56
  %v9559 = vpop.permute.xlu0 %9558
  %9560 = vrot.lane.b32.xlu0 %v363, 56
  %v9561 = vpop.permute.xlu0 %9560
  %9562 = vrot.lane.b32.xlu0 %v366, 56
  %v9563 = vpop.permute.xlu0 %9562
  %9564 = vrot.lane.b32.xlu0 %v369, 56
  %v9565 = vpop.permute.xlu0 %9564
  %9566 = vrot.lane.b32.xlu0 %v372, 56
  %v9567 = vpop.permute.xlu0 %9566
  %9568 = vrot.lane.b32.xlu0 %v375, 56
  %v9569 = vpop.permute.xlu0 %9568
  %9570 = vrot.lane.b32.xlu0 %v378, 56
  %v9571 = vpop.permute.xlu0 %9570
  %9572 = vrot.lane.b32.xlu0 %v381, 56
  %v9573 = vpop.permute.xlu0 %9572
  %9574 = vrot.lane.b32.xlu0 %v384, 56
  %v9575 = vpop.permute.xlu0 %9574
  %9576 = vrot.lane.b32.xlu0 %v387, 56
  %v9577 = vpop.permute.xlu0 %9576
  %9578 = vrot.lane.b32.xlu0 %v390, 56
  %v9579 = vpop.permute.xlu0 %9578
  %9580 = vrot.lane.b32.xlu0 %v393, 56
  %v9581 = vpop.permute.xlu0 %9580
  %9582 = vrot.lane.b32.xlu0 %v396, 56
  %v9583 = vpop.permute.xlu0 %9582
  %9584 = vrot.lane.b32.xlu0 %v399, 56
  %v9585 = vpop.permute.xlu0 %9584
  %9586 = vrot.lane.b32.xlu0 %v402, 56
  %v9587 = vpop.permute.xlu0 %9586
  %9588 = vrot.lane.b32.xlu0 %v405, 56
  %v9589 = vpop.permute.xlu0 %9588
  %9590 = vrot.lane.b32.xlu0 %v408, 56
  %v9591 = vpop.permute.xlu0 %9590
  %9592 = vrot.lane.b32.xlu0 %v411, 56
  %v9593 = vpop.permute.xlu0 %9592
  %9594 = vrot.lane.b32.xlu0 %v414, 56
  %v9595 = vpop.permute.xlu0 %9594
  %9596 = vrot.lane.b32.xlu0 %v417, 56
  %v9597 = vpop.permute.xlu0 %9596
  %9598 = vrot.lane.b32.xlu0 %v420, 56
  %v9599 = vpop.permute.xlu0 %9598
  %9600 = vrot.lane.b32.xlu0 %v423, 56
  %v9601 = vpop.permute.xlu0 %9600
  %9602 = vrot.lane.b32.xlu0 %v426, 56
  %v9603 = vpop.permute.xlu0 %9602
  %9604 = vrot.lane.b32.xlu0 %v429, 56
  %v9605 = vpop.permute.xlu0 %9604
  %9606 = vrot.lane.b32.xlu0 %v432, 56
  %v9607 = vpop.permute.xlu0 %9606
  %9608 = vrot.lane.b32.xlu0 %v435, 56
  %v9609 = vpop.permute.xlu0 %9608
  %9610 = vrot.lane.b32.xlu0 %v438, 56
  %v9611 = vpop.permute.xlu0 %9610
  %9612 = vrot.lane.b32.xlu0 %v441, 56
  %v9613 = vpop.permute.xlu0 %9612
  %9614 = vrot.lane.b32.xlu0 %v444, 56
  %v9615 = vpop.permute.xlu0 %9614
  %9616 = vrot.lane.b32.xlu0 %v447, 56
  %v9617 = vpop.permute.xlu0 %9616
  %9618 = vrot.lane.b32.xlu0 %v450, 56
  %v9619 = vpop.permute.xlu0 %9618
  %9620 = vrot.lane.b32.xlu0 %v453, 56
  %v9621 = vpop.permute.xlu0 %9620
  %9622 = vrot.lane.b32.xlu0 %v456, 56
  %v9623 = vpop.permute.xlu0 %9622
  %9624 = vrot.lane.b32.xlu0 %v459, 56
  %v9625 = vpop.permute.xlu0 %9624
  %9626 = vrot.lane.b32.xlu0 %v462, 56
  %v9627 = vpop.permute.xlu0 %9626
  %9628 = vrot.lane.b32.xlu0 %v465, 56
  %v9629 = vpop.permute.xlu0 %9628
  %9630 = vrot.lane.b32.xlu0 %v468, 56
  %v9631 = vpop.permute.xlu0 %9630
  %9632 = vrot.lane.b32.xlu0 %v471, 56
  %v9633 = vpop.permute.xlu0 %9632
  %9634 = vrot.lane.b32.xlu0 %v474, 56
  %v9635 = vpop.permute.xlu0 %9634
  %9636 = vrot.lane.b32.xlu0 %v477, 56
  %v9637 = vpop.permute.xlu0 %9636
  %9638 = vrot.lane.b32.xlu0 %v480, 56
  %v9639 = vpop.permute.xlu0 %9638
  %9640 = vrot.lane.b32.xlu0 %v483, 56
  %v9641 = vpop.permute.xlu0 %9640
  %9642 = vrot.lane.b32.xlu0 %v486, 56
  %v9643 = vpop.permute.xlu0 %9642
  %9644 = vrot.lane.b32.xlu0 %v489, 56
  %v9645 = vpop.permute.xlu0 %9644
  %9646 = vrot.lane.b32.xlu0 %v492, 56
  %v9647 = vpop.permute.xlu0 %9646
  %9648 = vrot.lane.b32.xlu0 %v495, 56
  %v9649 = vpop.permute.xlu0 %9648
  %9650 = vrot.lane.b32.xlu0 %v498, 56
  %v9651 = vpop.permute.xlu0 %9650
  %9652 = vrot.lane.b32.xlu0 %v501, 56
  %v9653 = vpop.permute.xlu0 %9652
  %9718 = vrot.lane.b32.xlu0 %v312, 88
  %v9719 = vpop.permute.xlu0 %9718
  %9720 = vrot.lane.b32.xlu0 %v315, 88
  %v9721 = vpop.permute.xlu0 %9720
  %9722 = vrot.lane.b32.xlu0 %v318, 88
  %v9723 = vpop.permute.xlu0 %9722
  %9724 = vrot.lane.b32.xlu0 %v321, 88
  %v9725 = vpop.permute.xlu0 %9724
  %9726 = vrot.lane.b32.xlu0 %v324, 88
  %v9727 = vpop.permute.xlu0 %9726
  %9728 = vrot.lane.b32.xlu0 %v327, 88
  %v9729 = vpop.permute.xlu0 %9728
  %9730 = vrot.lane.b32.xlu0 %v330, 88
  %v9731 = vpop.permute.xlu0 %9730
  %9732 = vrot.lane.b32.xlu0 %v333, 88
  %v9733 = vpop.permute.xlu0 %9732
  %9734 = vrot.lane.b32.xlu0 %v336, 88
  %v9735 = vpop.permute.xlu0 %9734
  %9736 = vrot.lane.b32.xlu0 %v339, 88
  %v9737 = vpop.permute.xlu0 %9736
  %9738 = vrot.lane.b32.xlu0 %v342, 88
  %v9739 = vpop.permute.xlu0 %9738
  %9740 = vrot.lane.b32.xlu0 %v345, 88
  %v9741 = vpop.permute.xlu0 %9740
  %9742 = vrot.lane.b32.xlu0 %v348, 88
  %v9743 = vpop.permute.xlu0 %9742
  %9744 = vrot.lane.b32.xlu0 %v351, 88
  %v9745 = vpop.permute.xlu0 %9744
  %9746 = vrot.lane.b32.xlu0 %v354, 88
  %v9747 = vpop.permute.xlu0 %9746
  %9748 = vrot.lane.b32.xlu0 %v357, 88
  %v9749 = vpop.permute.xlu0 %9748
  %9750 = vrot.lane.b32.xlu0 %v360, 88
  %v9751 = vpop.permute.xlu0 %9750
  %9752 = vrot.lane.b32.xlu0 %v363, 88
  %v9753 = vpop.permute.xlu0 %9752
  %9754 = vrot.lane.b32.xlu0 %v366, 88
  %v9755 = vpop.permute.xlu0 %9754
  %9756 = vrot.lane.b32.xlu0 %v369, 88
  %v9757 = vpop.permute.xlu0 %9756
  %9758 = vrot.lane.b32.xlu0 %v372, 88
  %v9759 = vpop.permute.xlu0 %9758
  %9760 = vrot.lane.b32.xlu0 %v375, 88
  %v9761 = vpop.permute.xlu0 %9760
  %9762 = vrot.lane.b32.xlu0 %v378, 88
  %v9763 = vpop.permute.xlu0 %9762
  %9764 = vrot.lane.b32.xlu0 %v381, 88
  %v9765 = vpop.permute.xlu0 %9764
  %9766 = vrot.lane.b32.xlu0 %v384, 88
  %v9767 = vpop.permute.xlu0 %9766
  %9768 = vrot.lane.b32.xlu0 %v387, 88
  %v9769 = vpop.permute.xlu0 %9768
  %9770 = vrot.lane.b32.xlu0 %v390, 88
  %v9771 = vpop.permute.xlu0 %9770
  %9772 = vrot.lane.b32.xlu0 %v393, 88
  %v9773 = vpop.permute.xlu0 %9772
  %9774 = vrot.lane.b32.xlu0 %v396, 88
  %v9775 = vpop.permute.xlu0 %9774
  %9776 = vrot.lane.b32.xlu0 %v399, 88
  %v9777 = vpop.permute.xlu0 %9776
  %9778 = vrot.lane.b32.xlu0 %v402, 88
  %v9779 = vpop.permute.xlu0 %9778
  %9780 = vrot.lane.b32.xlu0 %v405, 88
  %v9781 = vpop.permute.xlu0 %9780
  %9782 = vrot.lane.b32.xlu0 %v408, 88
  %v9783 = vpop.permute.xlu0 %9782
  %9784 = vrot.lane.b32.xlu0 %v411, 88
  %v9785 = vpop.permute.xlu0 %9784
  %9786 = vrot.lane.b32.xlu0 %v414, 88
  %v9787 = vpop.permute.xlu0 %9786
  %9788 = vrot.lane.b32.xlu0 %v417, 88
  %v9789 = vpop.permute.xlu0 %9788
  %9790 = vrot.lane.b32.xlu0 %v420, 88
  %v9791 = vpop.permute.xlu0 %9790
  %9792 = vrot.lane.b32.xlu0 %v423, 88
  %v9793 = vpop.permute.xlu0 %9792
  %9794 = vrot.lane.b32.xlu0 %v426, 88
  %v9795 = vpop.permute.xlu0 %9794
  %9796 = vrot.lane.b32.xlu0 %v429, 88
  %v9797 = vpop.permute.xlu0 %9796
  %9798 = vrot.lane.b32.xlu0 %v432, 88
  %v9799 = vpop.permute.xlu0 %9798
  %9800 = vrot.lane.b32.xlu0 %v435, 88
  %v9801 = vpop.permute.xlu0 %9800
  %9802 = vrot.lane.b32.xlu0 %v438, 88
  %v9803 = vpop.permute.xlu0 %9802
  %9804 = vrot.lane.b32.xlu0 %v441, 88
  %v9805 = vpop.permute.xlu0 %9804
  %9806 = vrot.lane.b32.xlu0 %v444, 88
  %v9807 = vpop.permute.xlu0 %9806
  %9808 = vrot.lane.b32.xlu0 %v447, 88
  %v9809 = vpop.permute.xlu0 %9808
  %9810 = vrot.lane.b32.xlu0 %v450, 88
  %v9811 = vpop.permute.xlu0 %9810
  %9812 = vrot.lane.b32.xlu0 %v453, 88
  %v9813 = vpop.permute.xlu0 %9812
  %9814 = vrot.lane.b32.xlu0 %v456, 88
  %v9815 = vpop.permute.xlu0 %9814
  %9816 = vrot.lane.b32.xlu0 %v459, 88
  %v9817 = vpop.permute.xlu0 %9816
  %9818 = vrot.lane.b32.xlu0 %v462, 88
  %v9819 = vpop.permute.xlu0 %9818
  %9820 = vrot.lane.b32.xlu0 %v465, 88
  %v9821 = vpop.permute.xlu0 %9820
  %9822 = vrot.lane.b32.xlu0 %v468, 88
  %v9823 = vpop.permute.xlu0 %9822
  %9824 = vrot.lane.b32.xlu0 %v471, 88
  %v9825 = vpop.permute.xlu0 %9824
  %9826 = vrot.lane.b32.xlu0 %v474, 88
  %v9827 = vpop.permute.xlu0 %9826
  %9828 = vrot.lane.b32.xlu0 %v477, 88
  %v9829 = vpop.permute.xlu0 %9828
  %9830 = vrot.lane.b32.xlu0 %v480, 88
  %v9831 = vpop.permute.xlu0 %9830
  %9832 = vrot.lane.b32.xlu0 %v483, 88
  %v9833 = vpop.permute.xlu0 %9832
  %9834 = vrot.lane.b32.xlu0 %v486, 88
  %v9835 = vpop.permute.xlu0 %9834
  %9836 = vrot.lane.b32.xlu0 %v489, 88
  %v9837 = vpop.permute.xlu0 %9836
  %9838 = vrot.lane.b32.xlu0 %v492, 88
  %v9839 = vpop.permute.xlu0 %9838
  %9840 = vrot.lane.b32.xlu0 %v495, 88
  %v9841 = vpop.permute.xlu0 %9840
  %9842 = vrot.lane.b32.xlu0 %v498, 88
  %v9843 = vpop.permute.xlu0 %9842
  %9844 = vrot.lane.b32.xlu0 %v501, 88
  %v9845 = vpop.permute.xlu0 %9844
  %vm9910 = vcmask 195584
  %v9911 = vsel %vm9910, %v9527, %v9719
  %v9912 = vsel %vm9910, %v9529, %v9721
  %v9913 = vsel %vm9910, %v9531, %v9723
  %v9914 = vsel %vm9910, %v9533, %v9725
  %v9915 = vsel %vm9910, %v9535, %v9727
  %v9916 = vsel %vm9910, %v9537, %v9729
  %v9917 = vsel %vm9910, %v9539, %v9731
  %v9918 = vsel %vm9910, %v9541, %v9733
  %v9919 = vsel %vm9910, %v9543, %v9735
  %v9920 = vsel %vm9910, %v9545, %v9737
  %v9921 = vsel %vm9910, %v9547, %v9739
  %v9922 = vsel %vm9910, %v9549, %v9741
  %v9923 = vsel %vm9910, %v9551, %v9743
  %v9924 = vsel %vm9910, %v9553, %v9745
  %v9925 = vsel %vm9910, %v9555, %v9747
  %v9926 = vsel %vm9910, %v9557, %v9749
  %v9927 = vsel %vm9910, %v9559, %v9751
  %v9928 = vsel %vm9910, %v9561, %v9753
  %v9929 = vsel %vm9910, %v9563, %v9755
  %v9930 = vsel %vm9910, %v9565, %v9757
  %v9931 = vsel %vm9910, %v9567, %v9759
  %v9932 = vsel %vm9910, %v9569, %v9761
  %v9933 = vsel %vm9910, %v9571, %v9763
  %v9934 = vsel %vm9910, %v9573, %v9765
  %v9935 = vsel %vm9910, %v9575, %v9767
  %v9936 = vsel %vm9910, %v9577, %v9769
  %v9937 = vsel %vm9910, %v9579, %v9771
  %v9938 = vsel %vm9910, %v9581, %v9773
  %v9939 = vsel %vm9910, %v9583, %v9775
  %v9940 = vsel %vm9910, %v9585, %v9777
  %v9941 = vsel %vm9910, %v9587, %v9779
  %v9942 = vsel %vm9910, %v9589, %v9781
  %v9943 = vsel %vm9910, %v9591, %v9783
  %v9944 = vsel %vm9910, %v9593, %v9785
  %v9945 = vsel %vm9910, %v9595, %v9787
  %v9946 = vsel %vm9910, %v9597, %v9789
  %v9947 = vsel %vm9910, %v9599, %v9791
  %v9948 = vsel %vm9910, %v9601, %v9793
  %v9949 = vsel %vm9910, %v9603, %v9795
  %v9950 = vsel %vm9910, %v9605, %v9797
  %v9951 = vsel %vm9910, %v9607, %v9799
  %v9952 = vsel %vm9910, %v9609, %v9801
  %v9953 = vsel %vm9910, %v9611, %v9803
  %v9954 = vsel %vm9910, %v9613, %v9805
  %v9955 = vsel %vm9910, %v9615, %v9807
  %v9956 = vsel %vm9910, %v9617, %v9809
  %v9957 = vsel %vm9910, %v9619, %v9811
  %v9958 = vsel %vm9910, %v9621, %v9813
  %v9959 = vsel %vm9910, %v9623, %v9815
  %v9960 = vsel %vm9910, %v9625, %v9817
  %v9961 = vsel %vm9910, %v9627, %v9819
  %v9962 = vsel %vm9910, %v9629, %v9821
  %v9963 = vsel %vm9910, %v9631, %v9823
  %v9964 = vsel %vm9910, %v9633, %v9825
  %v9965 = vsel %vm9910, %v9635, %v9827
  %v9966 = vsel %vm9910, %v9637, %v9829
  %v9967 = vsel %vm9910, %v9639, %v9831
  %v9968 = vsel %vm9910, %v9641, %v9833
  %v9969 = vsel %vm9910, %v9643, %v9835
  %v9970 = vsel %vm9910, %v9645, %v9837
  %v9971 = vsel %vm9910, %v9647, %v9839
  %v9972 = vsel %vm9910, %v9649, %v9841
  %v9973 = vsel %vm9910, %v9651, %v9843
  %v9974 = vsel %vm9910, %v9653, %v9845
  %v9975 = vmul.f32 %v9911, %v3584
  %v9976 = vmul.f32 %v9912, %v3585
  %v9977 = vmul.f32 %v9913, %v3586
  %v9978 = vmul.f32 %v9914, %v3587
  %v9979 = vmul.f32 %v9915, %v3588
  %v9980 = vmul.f32 %v9916, %v3589
  %v9981 = vmul.f32 %v9917, %v3590
  %v9982 = vmul.f32 %v9918, %v3591
  %v9983 = vmul.f32 %v9919, %v3584
  %v9984 = vmul.f32 %v9920, %v3585
  %v9985 = vmul.f32 %v9921, %v3586
  %v9986 = vmul.f32 %v9922, %v3587
  %v9987 = vmul.f32 %v9923, %v3588
  %v9988 = vmul.f32 %v9924, %v3589
  %v9989 = vmul.f32 %v9925, %v3590
  %v9990 = vmul.f32 %v9926, %v3591
  %v9991 = vmul.f32 %v9927, %v3584
  %v9992 = vmul.f32 %v9928, %v3585
  %v9993 = vmul.f32 %v9929, %v3586
  %v9994 = vmul.f32 %v9930, %v3587
  %v9995 = vmul.f32 %v9931, %v3588
  %v9996 = vmul.f32 %v9932, %v3589
  %v9997 = vmul.f32 %v9933, %v3590
  %v9998 = vmul.f32 %v9934, %v3591
  %v9999 = vmul.f32 %v9935, %v3584
  %v10000 = vmul.f32 %v9936, %v3585
  %v10001 = vmul.f32 %v9937, %v3586
  %v10002 = vmul.f32 %v9938, %v3587
  %v10003 = vmul.f32 %v9939, %v3588
  %v10004 = vmul.f32 %v9940, %v3589
  %v10005 = vmul.f32 %v9941, %v3590
  %v10006 = vmul.f32 %v9942, %v3591
  %v10007 = vmul.f32 %v9943, %v3584
  %v10008 = vmul.f32 %v9944, %v3585
  %v10009 = vmul.f32 %v9945, %v3586
  %v10010 = vmul.f32 %v9946, %v3587
  %v10011 = vmul.f32 %v9947, %v3588
  %v10012 = vmul.f32 %v9948, %v3589
  %v10013 = vmul.f32 %v9949, %v3590
  %v10014 = vmul.f32 %v9950, %v3591
  %v10015 = vmul.f32 %v9951, %v3584
  %v10016 = vmul.f32 %v9952, %v3585
  %v10017 = vmul.f32 %v9953, %v3586
  %v10018 = vmul.f32 %v9954, %v3587
  %v10019 = vmul.f32 %v9955, %v3588
  %v10020 = vmul.f32 %v9956, %v3589
  %v10021 = vmul.f32 %v9957, %v3590
  %v10022 = vmul.f32 %v9958, %v3591
  %v10023 = vmul.f32 %v9959, %v3584
  %v10024 = vmul.f32 %v9960, %v3585
  %v10025 = vmul.f32 %v9961, %v3586
  %v10026 = vmul.f32 %v9962, %v3587
  %v10027 = vmul.f32 %v9963, %v3588
  %v10028 = vmul.f32 %v9964, %v3589
  %v10029 = vmul.f32 %v9965, %v3590
  %v10030 = vmul.f32 %v9966, %v3591
  %v10031 = vmul.f32 %v9967, %v3584
  %v10032 = vmul.f32 %v9968, %v3585
  %v10033 = vmul.f32 %v9969, %v3586
  %v10034 = vmul.f32 %v9970, %v3587
  %v10035 = vmul.f32 %v9971, %v3588
  %v10036 = vmul.f32 %v9972, %v3589
  %v10037 = vmul.f32 %v9973, %v3590
  %v10038 = vmul.f32 %v9974, %v3591
  %10103 = vrot.lane.b32.xlu0 %v9975, 64
  %v10104 = vpop.permute.xlu0 %10103
  %10105 = vrot.lane.b32.xlu0 %v9976, 64
  %v10106 = vpop.permute.xlu0 %10105
  %10107 = vrot.lane.b32.xlu0 %v9977, 64
  %v10108 = vpop.permute.xlu0 %10107
  %10109 = vrot.lane.b32.xlu0 %v9978, 64
  %v10110 = vpop.permute.xlu0 %10109
  %10111 = vrot.lane.b32.xlu0 %v9979, 64
  %v10112 = vpop.permute.xlu0 %10111
  %10113 = vrot.lane.b32.xlu0 %v9980, 64
  %v10114 = vpop.permute.xlu0 %10113
  %10115 = vrot.lane.b32.xlu0 %v9981, 64
  %v10116 = vpop.permute.xlu0 %10115
  %10117 = vrot.lane.b32.xlu0 %v9982, 64
  %v10118 = vpop.permute.xlu0 %10117
  %10119 = vrot.lane.b32.xlu0 %v9983, 64
  %v10120 = vpop.permute.xlu0 %10119
  %10121 = vrot.lane.b32.xlu0 %v9984, 64
  %v10122 = vpop.permute.xlu0 %10121
  %10123 = vrot.lane.b32.xlu0 %v9985, 64
  %v10124 = vpop.permute.xlu0 %10123
  %10125 = vrot.lane.b32.xlu0 %v9986, 64
  %v10126 = vpop.permute.xlu0 %10125
  %10127 = vrot.lane.b32.xlu0 %v9987, 64
  %v10128 = vpop.permute.xlu0 %10127
  %10129 = vrot.lane.b32.xlu0 %v9988, 64
  %v10130 = vpop.permute.xlu0 %10129
  %10131 = vrot.lane.b32.xlu0 %v9989, 64
  %v10132 = vpop.permute.xlu0 %10131
  %10133 = vrot.lane.b32.xlu0 %v9990, 64
  %v10134 = vpop.permute.xlu0 %10133
  %10135 = vrot.lane.b32.xlu0 %v9991, 64
  %v10136 = vpop.permute.xlu0 %10135
  %10137 = vrot.lane.b32.xlu0 %v9992, 64
  %v10138 = vpop.permute.xlu0 %10137
  %10139 = vrot.lane.b32.xlu0 %v9993, 64
  %v10140 = vpop.permute.xlu0 %10139
  %10141 = vrot.lane.b32.xlu0 %v9994, 64
  %v10142 = vpop.permute.xlu0 %10141
  %10143 = vrot.lane.b32.xlu0 %v9995, 64
  %v10144 = vpop.permute.xlu0 %10143
  %10145 = vrot.lane.b32.xlu0 %v9996, 64
  %v10146 = vpop.permute.xlu0 %10145
  %10147 = vrot.lane.b32.xlu0 %v9997, 64
  %v10148 = vpop.permute.xlu0 %10147
  %10149 = vrot.lane.b32.xlu0 %v9998, 64
  %v10150 = vpop.permute.xlu0 %10149
  %10151 = vrot.lane.b32.xlu0 %v9999, 64
  %v10152 = vpop.permute.xlu0 %10151
  %10153 = vrot.lane.b32.xlu0 %v10000, 64
  %v10154 = vpop.permute.xlu0 %10153
  %10155 = vrot.lane.b32.xlu0 %v10001, 64
  %v10156 = vpop.permute.xlu0 %10155
  %10157 = vrot.lane.b32.xlu0 %v10002, 64
  %v10158 = vpop.permute.xlu0 %10157
  %10159 = vrot.lane.b32.xlu0 %v10003, 64
  %v10160 = vpop.permute.xlu0 %10159
  %10161 = vrot.lane.b32.xlu0 %v10004, 64
  %v10162 = vpop.permute.xlu0 %10161
  %10163 = vrot.lane.b32.xlu0 %v10005, 64
  %v10164 = vpop.permute.xlu0 %10163
  %10165 = vrot.lane.b32.xlu0 %v10006, 64
  %v10166 = vpop.permute.xlu0 %10165
  %10167 = vrot.lane.b32.xlu0 %v10007, 64
  %v10168 = vpop.permute.xlu0 %10167
  %10169 = vrot.lane.b32.xlu0 %v10008, 64
  %v10170 = vpop.permute.xlu0 %10169
  %10171 = vrot.lane.b32.xlu0 %v10009, 64
  %v10172 = vpop.permute.xlu0 %10171
  %10173 = vrot.lane.b32.xlu0 %v10010, 64
  %v10174 = vpop.permute.xlu0 %10173
  %10175 = vrot.lane.b32.xlu0 %v10011, 64
  %v10176 = vpop.permute.xlu0 %10175
  %10177 = vrot.lane.b32.xlu0 %v10012, 64
  %v10178 = vpop.permute.xlu0 %10177
  %10179 = vrot.lane.b32.xlu0 %v10013, 64
  %v10180 = vpop.permute.xlu0 %10179
  %10181 = vrot.lane.b32.xlu0 %v10014, 64
  %v10182 = vpop.permute.xlu0 %10181
  %10183 = vrot.lane.b32.xlu0 %v10015, 64
  %v10184 = vpop.permute.xlu0 %10183
  %10185 = vrot.lane.b32.xlu0 %v10016, 64
  %v10186 = vpop.permute.xlu0 %10185
  %10187 = vrot.lane.b32.xlu0 %v10017, 64
  %v10188 = vpop.permute.xlu0 %10187
  %10189 = vrot.lane.b32.xlu0 %v10018, 64
  %v10190 = vpop.permute.xlu0 %10189
  %10191 = vrot.lane.b32.xlu0 %v10019, 64
  %v10192 = vpop.permute.xlu0 %10191
  %10193 = vrot.lane.b32.xlu0 %v10020, 64
  %v10194 = vpop.permute.xlu0 %10193
  %10195 = vrot.lane.b32.xlu0 %v10021, 64
  %v10196 = vpop.permute.xlu0 %10195
  %10197 = vrot.lane.b32.xlu0 %v10022, 64
  %v10198 = vpop.permute.xlu0 %10197
  %10199 = vrot.lane.b32.xlu0 %v10023, 64
  %v10200 = vpop.permute.xlu0 %10199
  %10201 = vrot.lane.b32.xlu0 %v10024, 64
  %v10202 = vpop.permute.xlu0 %10201
  %10203 = vrot.lane.b32.xlu0 %v10025, 64
  %v10204 = vpop.permute.xlu0 %10203
  %10205 = vrot.lane.b32.xlu0 %v10026, 64
  %v10206 = vpop.permute.xlu0 %10205
  %10207 = vrot.lane.b32.xlu0 %v10027, 64
  %v10208 = vpop.permute.xlu0 %10207
  %10209 = vrot.lane.b32.xlu0 %v10028, 64
  %v10210 = vpop.permute.xlu0 %10209
  %10211 = vrot.lane.b32.xlu0 %v10029, 64
  %v10212 = vpop.permute.xlu0 %10211
  %10213 = vrot.lane.b32.xlu0 %v10030, 64
  %v10214 = vpop.permute.xlu0 %10213
  %10215 = vrot.lane.b32.xlu0 %v10031, 64
  %v10216 = vpop.permute.xlu0 %10215
  %10217 = vrot.lane.b32.xlu0 %v10032, 64
  %v10218 = vpop.permute.xlu0 %10217
  %10219 = vrot.lane.b32.xlu0 %v10033, 64
  %v10220 = vpop.permute.xlu0 %10219
  %10221 = vrot.lane.b32.xlu0 %v10034, 64
  %v10222 = vpop.permute.xlu0 %10221
  %10223 = vrot.lane.b32.xlu0 %v10035, 64
  %v10224 = vpop.permute.xlu0 %10223
  %10225 = vrot.lane.b32.xlu0 %v10036, 64
  %v10226 = vpop.permute.xlu0 %10225
  %10227 = vrot.lane.b32.xlu0 %v10037, 64
  %v10228 = vpop.permute.xlu0 %10227
  %10229 = vrot.lane.b32.xlu0 %v10038, 64
  %v10230 = vpop.permute.xlu0 %10229
  %v10295 = vadd.f32 %v9334, %v10104
  %v10296 = vadd.f32 %v9335, %v10106
  %v10297 = vadd.f32 %v9336, %v10108
  %v10298 = vadd.f32 %v9337, %v10110
  %v10299 = vadd.f32 %v9338, %v10112
  %v10300 = vadd.f32 %v9339, %v10114
  %v10301 = vadd.f32 %v9340, %v10116
  %v10302 = vadd.f32 %v9341, %v10118
  %v10303 = vadd.f32 %v9342, %v10120
  %v10304 = vadd.f32 %v9343, %v10122
  %v10305 = vadd.f32 %v9344, %v10124
  %v10306 = vadd.f32 %v9345, %v10126
  %v10307 = vadd.f32 %v9346, %v10128
  %v10308 = vadd.f32 %v9347, %v10130
  %v10309 = vadd.f32 %v9348, %v10132
  %v10310 = vadd.f32 %v9349, %v10134
  %v10311 = vadd.f32 %v9350, %v10136
  %v10312 = vadd.f32 %v9351, %v10138
  %v10313 = vadd.f32 %v9352, %v10140
  %v10314 = vadd.f32 %v9353, %v10142
  %v10315 = vadd.f32 %v9354, %v10144
  %v10316 = vadd.f32 %v9355, %v10146
  %v10317 = vadd.f32 %v9356, %v10148
  %v10318 = vadd.f32 %v9357, %v10150
  %v10319 = vadd.f32 %v9358, %v10152
  %v10320 = vadd.f32 %v9359, %v10154
  %v10321 = vadd.f32 %v9360, %v10156
  %v10322 = vadd.f32 %v9361, %v10158
  %v10323 = vadd.f32 %v9362, %v10160
  %v10324 = vadd.f32 %v9363, %v10162
  %v10325 = vadd.f32 %v9364, %v10164
  %v10326 = vadd.f32 %v9365, %v10166
  %v10327 = vadd.f32 %v9366, %v10168
  %v10328 = vadd.f32 %v9367, %v10170
  %v10329 = vadd.f32 %v9368, %v10172
  %v10330 = vadd.f32 %v9369, %v10174
  %v10331 = vadd.f32 %v9370, %v10176
  %v10332 = vadd.f32 %v9371, %v10178
  %v10333 = vadd.f32 %v9372, %v10180
  %v10334 = vadd.f32 %v9373, %v10182
  %v10335 = vadd.f32 %v9374, %v10184
  %v10336 = vadd.f32 %v9375, %v10186
  %v10337 = vadd.f32 %v9376, %v10188
  %v10338 = vadd.f32 %v9377, %v10190
  %v10339 = vadd.f32 %v9378, %v10192
  %v10340 = vadd.f32 %v9379, %v10194
  %v10341 = vadd.f32 %v9380, %v10196
  %v10342 = vadd.f32 %v9381, %v10198
  %v10343 = vadd.f32 %v9382, %v10200
  %v10344 = vadd.f32 %v9383, %v10202
  %v10345 = vadd.f32 %v9384, %v10204
  %v10346 = vadd.f32 %v9385, %v10206
  %v10347 = vadd.f32 %v9386, %v10208
  %v10348 = vadd.f32 %v9387, %v10210
  %v10349 = vadd.f32 %v9388, %v10212
  %v10350 = vadd.f32 %v9389, %v10214
  %v10351 = vadd.f32 %v9390, %v10216
  %v10352 = vadd.f32 %v9391, %v10218
  %v10353 = vadd.f32 %v9392, %v10220
  %v10354 = vadd.f32 %v9393, %v10222
  %v10355 = vadd.f32 %v9394, %v10224
  %v10356 = vadd.f32 %v9395, %v10226
  %v10357 = vadd.f32 %v9396, %v10228
  %v10358 = vadd.f32 %v9397, %v10230
  %v10359 = vmul.f32 %v9911, %v3648
  %v10360 = vmul.f32 %v9912, %v3649
  %v10361 = vmul.f32 %v9913, %v3650
  %v10362 = vmul.f32 %v9914, %v3651
  %v10363 = vmul.f32 %v9915, %v3652
  %v10364 = vmul.f32 %v9916, %v3653
  %v10365 = vmul.f32 %v9917, %v3654
  %v10366 = vmul.f32 %v9918, %v3655
  %v10367 = vmul.f32 %v9919, %v3648
  %v10368 = vmul.f32 %v9920, %v3649
  %v10369 = vmul.f32 %v9921, %v3650
  %v10370 = vmul.f32 %v9922, %v3651
  %v10371 = vmul.f32 %v9923, %v3652
  %v10372 = vmul.f32 %v9924, %v3653
  %v10373 = vmul.f32 %v9925, %v3654
  %v10374 = vmul.f32 %v9926, %v3655
  %v10375 = vmul.f32 %v9927, %v3648
  %v10376 = vmul.f32 %v9928, %v3649
  %v10377 = vmul.f32 %v9929, %v3650
  %v10378 = vmul.f32 %v9930, %v3651
  %v10379 = vmul.f32 %v9931, %v3652
  %v10380 = vmul.f32 %v9932, %v3653
  %v10381 = vmul.f32 %v9933, %v3654
  %v10382 = vmul.f32 %v9934, %v3655
  %v10383 = vmul.f32 %v9935, %v3648
  %v10384 = vmul.f32 %v9936, %v3649
  %v10385 = vmul.f32 %v9937, %v3650
  %v10386 = vmul.f32 %v9938, %v3651
  %v10387 = vmul.f32 %v9939, %v3652
  %v10388 = vmul.f32 %v9940, %v3653
  %v10389 = vmul.f32 %v9941, %v3654
  %v10390 = vmul.f32 %v9942, %v3655
  %v10391 = vmul.f32 %v9943, %v3648
  %v10392 = vmul.f32 %v9944, %v3649
  %v10393 = vmul.f32 %v9945, %v3650
  %v10394 = vmul.f32 %v9946, %v3651
  %v10395 = vmul.f32 %v9947, %v3652
  %v10396 = vmul.f32 %v9948, %v3653
  %v10397 = vmul.f32 %v9949, %v3654
  %v10398 = vmul.f32 %v9950, %v3655
  %v10399 = vmul.f32 %v9951, %v3648
  %v10400 = vmul.f32 %v9952, %v3649
  %v10401 = vmul.f32 %v9953, %v3650
  %v10402 = vmul.f32 %v9954, %v3651
  %v10403 = vmul.f32 %v9955, %v3652
  %v10404 = vmul.f32 %v9956, %v3653
  %v10405 = vmul.f32 %v9957, %v3654
  %v10406 = vmul.f32 %v9958, %v3655
  %v10407 = vmul.f32 %v9959, %v3648
  %v10408 = vmul.f32 %v9960, %v3649
  %v10409 = vmul.f32 %v9961, %v3650
  %v10410 = vmul.f32 %v9962, %v3651
  %v10411 = vmul.f32 %v9963, %v3652
  %v10412 = vmul.f32 %v9964, %v3653
  %v10413 = vmul.f32 %v9965, %v3654
  %v10414 = vmul.f32 %v9966, %v3655
  %v10415 = vmul.f32 %v9967, %v3648
  %v10416 = vmul.f32 %v9968, %v3649
  %v10417 = vmul.f32 %v9969, %v3650
  %v10418 = vmul.f32 %v9970, %v3651
  %v10419 = vmul.f32 %v9971, %v3652
  %v10420 = vmul.f32 %v9972, %v3653
  %v10421 = vmul.f32 %v9973, %v3654
  %v10422 = vmul.f32 %v9974, %v3655
  %v10423 = vadd.f32 %v9462, %v10359
  %v10424 = vadd.f32 %v9463, %v10360
  %v10425 = vadd.f32 %v9464, %v10361
  %v10426 = vadd.f32 %v9465, %v10362
  %v10427 = vadd.f32 %v9466, %v10363
  %v10428 = vadd.f32 %v9467, %v10364
  %v10429 = vadd.f32 %v9468, %v10365
  %v10430 = vadd.f32 %v9469, %v10366
  %v10431 = vadd.f32 %v9470, %v10367
  %v10432 = vadd.f32 %v9471, %v10368
  %v10433 = vadd.f32 %v9472, %v10369
  %v10434 = vadd.f32 %v9473, %v10370
  %v10435 = vadd.f32 %v9474, %v10371
  %v10436 = vadd.f32 %v9475, %v10372
  %v10437 = vadd.f32 %v9476, %v10373
  %v10438 = vadd.f32 %v9477, %v10374
  %v10439 = vadd.f32 %v9478, %v10375
  %v10440 = vadd.f32 %v9479, %v10376
  %v10441 = vadd.f32 %v9480, %v10377
  %v10442 = vadd.f32 %v9481, %v10378
  %v10443 = vadd.f32 %v9482, %v10379
  %v10444 = vadd.f32 %v9483, %v10380
  %v10445 = vadd.f32 %v9484, %v10381
  %v10446 = vadd.f32 %v9485, %v10382
  %v10447 = vadd.f32 %v9486, %v10383
  %v10448 = vadd.f32 %v9487, %v10384
  %v10449 = vadd.f32 %v9488, %v10385
  %v10450 = vadd.f32 %v9489, %v10386
  %v10451 = vadd.f32 %v9490, %v10387
  %v10452 = vadd.f32 %v9491, %v10388
  %v10453 = vadd.f32 %v9492, %v10389
  %v10454 = vadd.f32 %v9493, %v10390
  %v10455 = vadd.f32 %v9494, %v10391
  %v10456 = vadd.f32 %v9495, %v10392
  %v10457 = vadd.f32 %v9496, %v10393
  %v10458 = vadd.f32 %v9497, %v10394
  %v10459 = vadd.f32 %v9498, %v10395
  %v10460 = vadd.f32 %v9499, %v10396
  %v10461 = vadd.f32 %v9500, %v10397
  %v10462 = vadd.f32 %v9501, %v10398
  %v10463 = vadd.f32 %v9502, %v10399
  %v10464 = vadd.f32 %v9503, %v10400
  %v10465 = vadd.f32 %v9504, %v10401
  %v10466 = vadd.f32 %v9505, %v10402
  %v10467 = vadd.f32 %v9506, %v10403
  %v10468 = vadd.f32 %v9507, %v10404
  %v10469 = vadd.f32 %v9508, %v10405
  %v10470 = vadd.f32 %v9509, %v10406
  %v10471 = vadd.f32 %v9510, %v10407
  %v10472 = vadd.f32 %v9511, %v10408
  %v10473 = vadd.f32 %v9512, %v10409
  %v10474 = vadd.f32 %v9513, %v10410
  %v10475 = vadd.f32 %v9514, %v10411
  %v10476 = vadd.f32 %v9515, %v10412
  %v10477 = vadd.f32 %v9516, %v10413
  %v10478 = vadd.f32 %v9517, %v10414
  %v10479 = vadd.f32 %v9518, %v10415
  %v10480 = vadd.f32 %v9519, %v10416
  %v10481 = vadd.f32 %v9520, %v10417
  %v10482 = vadd.f32 %v9521, %v10418
  %v10483 = vadd.f32 %v9522, %v10419
  %v10484 = vadd.f32 %v9523, %v10420
  %v10485 = vadd.f32 %v9524, %v10421
  %v10486 = vadd.f32 %v9525, %v10422
  %10487 = vrot.lane.b32.xlu0 %v312, 55
  %v10488 = vpop.permute.xlu0 %10487
  %10489 = vrot.lane.b32.xlu0 %v315, 55
  %v10490 = vpop.permute.xlu0 %10489
  %10491 = vrot.lane.b32.xlu0 %v318, 55
  %v10492 = vpop.permute.xlu0 %10491
  %10493 = vrot.lane.b32.xlu0 %v321, 55
  %v10494 = vpop.permute.xlu0 %10493
  %10495 = vrot.lane.b32.xlu0 %v324, 55
  %v10496 = vpop.permute.xlu0 %10495
  %10497 = vrot.lane.b32.xlu0 %v327, 55
  %v10498 = vpop.permute.xlu0 %10497
  %10499 = vrot.lane.b32.xlu0 %v330, 55
  %v10500 = vpop.permute.xlu0 %10499
  %10501 = vrot.lane.b32.xlu0 %v333, 55
  %v10502 = vpop.permute.xlu0 %10501
  %10503 = vrot.lane.b32.xlu0 %v336, 55
  %v10504 = vpop.permute.xlu0 %10503
  %10505 = vrot.lane.b32.xlu0 %v339, 55
  %v10506 = vpop.permute.xlu0 %10505
  %10507 = vrot.lane.b32.xlu0 %v342, 55
  %v10508 = vpop.permute.xlu0 %10507
  %10509 = vrot.lane.b32.xlu0 %v345, 55
  %v10510 = vpop.permute.xlu0 %10509
  %10511 = vrot.lane.b32.xlu0 %v348, 55
  %v10512 = vpop.permute.xlu0 %10511
  %10513 = vrot.lane.b32.xlu0 %v351, 55
  %v10514 = vpop.permute.xlu0 %10513
  %10515 = vrot.lane.b32.xlu0 %v354, 55
  %v10516 = vpop.permute.xlu0 %10515
  %10517 = vrot.lane.b32.xlu0 %v357, 55
  %v10518 = vpop.permute.xlu0 %10517
  %10519 = vrot.lane.b32.xlu0 %v360, 55
  %v10520 = vpop.permute.xlu0 %10519
  %10521 = vrot.lane.b32.xlu0 %v363, 55
  %v10522 = vpop.permute.xlu0 %10521
  %10523 = vrot.lane.b32.xlu0 %v366, 55
  %v10524 = vpop.permute.xlu0 %10523
  %10525 = vrot.lane.b32.xlu0 %v369, 55
  %v10526 = vpop.permute.xlu0 %10525
  %10527 = vrot.lane.b32.xlu0 %v372, 55
  %v10528 = vpop.permute.xlu0 %10527
  %10529 = vrot.lane.b32.xlu0 %v375, 55
  %v10530 = vpop.permute.xlu0 %10529
  %10531 = vrot.lane.b32.xlu0 %v378, 55
  %v10532 = vpop.permute.xlu0 %10531
  %10533 = vrot.lane.b32.xlu0 %v381, 55
  %v10534 = vpop.permute.xlu0 %10533
  %10535 = vrot.lane.b32.xlu0 %v384, 55
  %v10536 = vpop.permute.xlu0 %10535
  %10537 = vrot.lane.b32.xlu0 %v387, 55
  %v10538 = vpop.permute.xlu0 %10537
  %10539 = vrot.lane.b32.xlu0 %v390, 55
  %v10540 = vpop.permute.xlu0 %10539
  %10541 = vrot.lane.b32.xlu0 %v393, 55
  %v10542 = vpop.permute.xlu0 %10541
  %10543 = vrot.lane.b32.xlu0 %v396, 55
  %v10544 = vpop.permute.xlu0 %10543
  %10545 = vrot.lane.b32.xlu0 %v399, 55
  %v10546 = vpop.permute.xlu0 %10545
  %10547 = vrot.lane.b32.xlu0 %v402, 55
  %v10548 = vpop.permute.xlu0 %10547
  %10549 = vrot.lane.b32.xlu0 %v405, 55
  %v10550 = vpop.permute.xlu0 %10549
  %10551 = vrot.lane.b32.xlu0 %v408, 55
  %v10552 = vpop.permute.xlu0 %10551
  %10553 = vrot.lane.b32.xlu0 %v411, 55
  %v10554 = vpop.permute.xlu0 %10553
  %10555 = vrot.lane.b32.xlu0 %v414, 55
  %v10556 = vpop.permute.xlu0 %10555
  %10557 = vrot.lane.b32.xlu0 %v417, 55
  %v10558 = vpop.permute.xlu0 %10557
  %10559 = vrot.lane.b32.xlu0 %v420, 55
  %v10560 = vpop.permute.xlu0 %10559
  %10561 = vrot.lane.b32.xlu0 %v423, 55
  %v10562 = vpop.permute.xlu0 %10561
  %10563 = vrot.lane.b32.xlu0 %v426, 55
  %v10564 = vpop.permute.xlu0 %10563
  %10565 = vrot.lane.b32.xlu0 %v429, 55
  %v10566 = vpop.permute.xlu0 %10565
  %10567 = vrot.lane.b32.xlu0 %v432, 55
  %v10568 = vpop.permute.xlu0 %10567
  %10569 = vrot.lane.b32.xlu0 %v435, 55
  %v10570 = vpop.permute.xlu0 %10569
  %10571 = vrot.lane.b32.xlu0 %v438, 55
  %v10572 = vpop.permute.xlu0 %10571
  %10573 = vrot.lane.b32.xlu0 %v441, 55
  %v10574 = vpop.permute.xlu0 %10573
  %10575 = vrot.lane.b32.xlu0 %v444, 55
  %v10576 = vpop.permute.xlu0 %10575
  %10577 = vrot.lane.b32.xlu0 %v447, 55
  %v10578 = vpop.permute.xlu0 %10577
  %10579 = vrot.lane.b32.xlu0 %v450, 55
  %v10580 = vpop.permute.xlu0 %10579
  %10581 = vrot.lane.b32.xlu0 %v453, 55
  %v10582 = vpop.permute.xlu0 %10581
  %10583 = vrot.lane.b32.xlu0 %v456, 55
  %v10584 = vpop.permute.xlu0 %10583
  %10585 = vrot.lane.b32.xlu0 %v459, 55
  %v10586 = vpop.permute.xlu0 %10585
  %10587 = vrot.lane.b32.xlu0 %v462, 55
  %v10588 = vpop.permute.xlu0 %10587
  %10589 = vrot.lane.b32.xlu0 %v465, 55
  %v10590 = vpop.permute.xlu0 %10589
  %10591 = vrot.lane.b32.xlu0 %v468, 55
  %v10592 = vpop.permute.xlu0 %10591
  %10593 = vrot.lane.b32.xlu0 %v471, 55
  %v10594 = vpop.permute.xlu0 %10593
  %10595 = vrot.lane.b32.xlu0 %v474, 55
  %v10596 = vpop.permute.xlu0 %10595
  %10597 = vrot.lane.b32.xlu0 %v477, 55
  %v10598 = vpop.permute.xlu0 %10597
  %10599 = vrot.lane.b32.xlu0 %v480, 55
  %v10600 = vpop.permute.xlu0 %10599
  %10601 = vrot.lane.b32.xlu0 %v483, 55
  %v10602 = vpop.permute.xlu0 %10601
  %10603 = vrot.lane.b32.xlu0 %v486, 55
  %v10604 = vpop.permute.xlu0 %10603
  %10605 = vrot.lane.b32.xlu0 %v489, 55
  %v10606 = vpop.permute.xlu0 %10605
  %10607 = vrot.lane.b32.xlu0 %v492, 55
  %v10608 = vpop.permute.xlu0 %10607
  %10609 = vrot.lane.b32.xlu0 %v495, 55
  %v10610 = vpop.permute.xlu0 %10609
  %10611 = vrot.lane.b32.xlu0 %v498, 55
  %v10612 = vpop.permute.xlu0 %10611
  %10613 = vrot.lane.b32.xlu0 %v501, 55
  %v10614 = vpop.permute.xlu0 %10613
  %10679 = vrot.lane.b32.xlu0 %v312, 87
  %v10680 = vpop.permute.xlu0 %10679
  %10681 = vrot.lane.b32.xlu0 %v315, 87
  %v10682 = vpop.permute.xlu0 %10681
  %10683 = vrot.lane.b32.xlu0 %v318, 87
  %v10684 = vpop.permute.xlu0 %10683
  %10685 = vrot.lane.b32.xlu0 %v321, 87
  %v10686 = vpop.permute.xlu0 %10685
  %10687 = vrot.lane.b32.xlu0 %v324, 87
  %v10688 = vpop.permute.xlu0 %10687
  %10689 = vrot.lane.b32.xlu0 %v327, 87
  %v10690 = vpop.permute.xlu0 %10689
  %10691 = vrot.lane.b32.xlu0 %v330, 87
  %v10692 = vpop.permute.xlu0 %10691
  %10693 = vrot.lane.b32.xlu0 %v333, 87
  %v10694 = vpop.permute.xlu0 %10693
  %10695 = vrot.lane.b32.xlu0 %v336, 87
  %v10696 = vpop.permute.xlu0 %10695
  %10697 = vrot.lane.b32.xlu0 %v339, 87
  %v10698 = vpop.permute.xlu0 %10697
  %10699 = vrot.lane.b32.xlu0 %v342, 87
  %v10700 = vpop.permute.xlu0 %10699
  %10701 = vrot.lane.b32.xlu0 %v345, 87
  %v10702 = vpop.permute.xlu0 %10701
  %10703 = vrot.lane.b32.xlu0 %v348, 87
  %v10704 = vpop.permute.xlu0 %10703
  %10705 = vrot.lane.b32.xlu0 %v351, 87
  %v10706 = vpop.permute.xlu0 %10705
  %10707 = vrot.lane.b32.xlu0 %v354, 87
  %v10708 = vpop.permute.xlu0 %10707
  %10709 = vrot.lane.b32.xlu0 %v357, 87
  %v10710 = vpop.permute.xlu0 %10709
  %10711 = vrot.lane.b32.xlu0 %v360, 87
  %v10712 = vpop.permute.xlu0 %10711
  %10713 = vrot.lane.b32.xlu0 %v363, 87
  %v10714 = vpop.permute.xlu0 %10713
  %10715 = vrot.lane.b32.xlu0 %v366, 87
  %v10716 = vpop.permute.xlu0 %10715
  %10717 = vrot.lane.b32.xlu0 %v369, 87
  %v10718 = vpop.permute.xlu0 %10717
  %10719 = vrot.lane.b32.xlu0 %v372, 87
  %v10720 = vpop.permute.xlu0 %10719
  %10721 = vrot.lane.b32.xlu0 %v375, 87
  %v10722 = vpop.permute.xlu0 %10721
  %10723 = vrot.lane.b32.xlu0 %v378, 87
  %v10724 = vpop.permute.xlu0 %10723
  %10725 = vrot.lane.b32.xlu0 %v381, 87
  %v10726 = vpop.permute.xlu0 %10725
  %10727 = vrot.lane.b32.xlu0 %v384, 87
  %v10728 = vpop.permute.xlu0 %10727
  %10729 = vrot.lane.b32.xlu0 %v387, 87
  %v10730 = vpop.permute.xlu0 %10729
  %10731 = vrot.lane.b32.xlu0 %v390, 87
  %v10732 = vpop.permute.xlu0 %10731
  %10733 = vrot.lane.b32.xlu0 %v393, 87
  %v10734 = vpop.permute.xlu0 %10733
  %10735 = vrot.lane.b32.xlu0 %v396, 87
  %v10736 = vpop.permute.xlu0 %10735
  %10737 = vrot.lane.b32.xlu0 %v399, 87
  %v10738 = vpop.permute.xlu0 %10737
  %10739 = vrot.lane.b32.xlu0 %v402, 87
  %v10740 = vpop.permute.xlu0 %10739
  %10741 = vrot.lane.b32.xlu0 %v405, 87
  %v10742 = vpop.permute.xlu0 %10741
  %10743 = vrot.lane.b32.xlu0 %v408, 87
  %v10744 = vpop.permute.xlu0 %10743
  %10745 = vrot.lane.b32.xlu0 %v411, 87
  %v10746 = vpop.permute.xlu0 %10745
  %10747 = vrot.lane.b32.xlu0 %v414, 87
  %v10748 = vpop.permute.xlu0 %10747
  %10749 = vrot.lane.b32.xlu0 %v417, 87
  %v10750 = vpop.permute.xlu0 %10749
  %10751 = vrot.lane.b32.xlu0 %v420, 87
  %v10752 = vpop.permute.xlu0 %10751
  %10753 = vrot.lane.b32.xlu0 %v423, 87
  %v10754 = vpop.permute.xlu0 %10753
  %10755 = vrot.lane.b32.xlu0 %v426, 87
  %v10756 = vpop.permute.xlu0 %10755
  %10757 = vrot.lane.b32.xlu0 %v429, 87
  %v10758 = vpop.permute.xlu0 %10757
  %10759 = vrot.lane.b32.xlu0 %v432, 87
  %v10760 = vpop.permute.xlu0 %10759
  %10761 = vrot.lane.b32.xlu0 %v435, 87
  %v10762 = vpop.permute.xlu0 %10761
  %10763 = vrot.lane.b32.xlu0 %v438, 87
  %v10764 = vpop.permute.xlu0 %10763
  %10765 = vrot.lane.b32.xlu0 %v441, 87
  %v10766 = vpop.permute.xlu0 %10765
  %10767 = vrot.lane.b32.xlu0 %v444, 87
  %v10768 = vpop.permute.xlu0 %10767
  %10769 = vrot.lane.b32.xlu0 %v447, 87
  %v10770 = vpop.permute.xlu0 %10769
  %10771 = vrot.lane.b32.xlu0 %v450, 87
  %v10772 = vpop.permute.xlu0 %10771
  %10773 = vrot.lane.b32.xlu0 %v453, 87
  %v10774 = vpop.permute.xlu0 %10773
  %10775 = vrot.lane.b32.xlu0 %v456, 87
  %v10776 = vpop.permute.xlu0 %10775
  %10777 = vrot.lane.b32.xlu0 %v459, 87
  %v10778 = vpop.permute.xlu0 %10777
  %10779 = vrot.lane.b32.xlu0 %v462, 87
  %v10780 = vpop.permute.xlu0 %10779
  %10781 = vrot.lane.b32.xlu0 %v465, 87
  %v10782 = vpop.permute.xlu0 %10781
  %10783 = vrot.lane.b32.xlu0 %v468, 87
  %v10784 = vpop.permute.xlu0 %10783
  %10785 = vrot.lane.b32.xlu0 %v471, 87
  %v10786 = vpop.permute.xlu0 %10785
  %10787 = vrot.lane.b32.xlu0 %v474, 87
  %v10788 = vpop.permute.xlu0 %10787
  %10789 = vrot.lane.b32.xlu0 %v477, 87
  %v10790 = vpop.permute.xlu0 %10789
  %10791 = vrot.lane.b32.xlu0 %v480, 87
  %v10792 = vpop.permute.xlu0 %10791
  %10793 = vrot.lane.b32.xlu0 %v483, 87
  %v10794 = vpop.permute.xlu0 %10793
  %10795 = vrot.lane.b32.xlu0 %v486, 87
  %v10796 = vpop.permute.xlu0 %10795
  %10797 = vrot.lane.b32.xlu0 %v489, 87
  %v10798 = vpop.permute.xlu0 %10797
  %10799 = vrot.lane.b32.xlu0 %v492, 87
  %v10800 = vpop.permute.xlu0 %10799
  %10801 = vrot.lane.b32.xlu0 %v495, 87
  %v10802 = vpop.permute.xlu0 %10801
  %10803 = vrot.lane.b32.xlu0 %v498, 87
  %v10804 = vpop.permute.xlu0 %10803
  %10805 = vrot.lane.b32.xlu0 %v501, 87
  %v10806 = vpop.permute.xlu0 %10805
  %vm10871 = vcmask 187392
  %v10872 = vsel %vm10871, %v10488, %v10680
  %v10873 = vsel %vm10871, %v10490, %v10682
  %v10874 = vsel %vm10871, %v10492, %v10684
  %v10875 = vsel %vm10871, %v10494, %v10686
  %v10876 = vsel %vm10871, %v10496, %v10688
  %v10877 = vsel %vm10871, %v10498, %v10690
  %v10878 = vsel %vm10871, %v10500, %v10692
  %v10879 = vsel %vm10871, %v10502, %v10694
  %v10880 = vsel %vm10871, %v10504, %v10696
  %v10881 = vsel %vm10871, %v10506, %v10698
  %v10882 = vsel %vm10871, %v10508, %v10700
  %v10883 = vsel %vm10871, %v10510, %v10702
  %v10884 = vsel %vm10871, %v10512, %v10704
  %v10885 = vsel %vm10871, %v10514, %v10706
  %v10886 = vsel %vm10871, %v10516, %v10708
  %v10887 = vsel %vm10871, %v10518, %v10710
  %v10888 = vsel %vm10871, %v10520, %v10712
  %v10889 = vsel %vm10871, %v10522, %v10714
  %v10890 = vsel %vm10871, %v10524, %v10716
  %v10891 = vsel %vm10871, %v10526, %v10718
  %v10892 = vsel %vm10871, %v10528, %v10720
  %v10893 = vsel %vm10871, %v10530, %v10722
  %v10894 = vsel %vm10871, %v10532, %v10724
  %v10895 = vsel %vm10871, %v10534, %v10726
  %v10896 = vsel %vm10871, %v10536, %v10728
  %v10897 = vsel %vm10871, %v10538, %v10730
  %v10898 = vsel %vm10871, %v10540, %v10732
  %v10899 = vsel %vm10871, %v10542, %v10734
  %v10900 = vsel %vm10871, %v10544, %v10736
  %v10901 = vsel %vm10871, %v10546, %v10738
  %v10902 = vsel %vm10871, %v10548, %v10740
  %v10903 = vsel %vm10871, %v10550, %v10742
  %v10904 = vsel %vm10871, %v10552, %v10744
  %v10905 = vsel %vm10871, %v10554, %v10746
  %v10906 = vsel %vm10871, %v10556, %v10748
  %v10907 = vsel %vm10871, %v10558, %v10750
  %v10908 = vsel %vm10871, %v10560, %v10752
  %v10909 = vsel %vm10871, %v10562, %v10754
  %v10910 = vsel %vm10871, %v10564, %v10756
  %v10911 = vsel %vm10871, %v10566, %v10758
  %v10912 = vsel %vm10871, %v10568, %v10760
  %v10913 = vsel %vm10871, %v10570, %v10762
  %v10914 = vsel %vm10871, %v10572, %v10764
  %v10915 = vsel %vm10871, %v10574, %v10766
  %v10916 = vsel %vm10871, %v10576, %v10768
  %v10917 = vsel %vm10871, %v10578, %v10770
  %v10918 = vsel %vm10871, %v10580, %v10772
  %v10919 = vsel %vm10871, %v10582, %v10774
  %v10920 = vsel %vm10871, %v10584, %v10776
  %v10921 = vsel %vm10871, %v10586, %v10778
  %v10922 = vsel %vm10871, %v10588, %v10780
  %v10923 = vsel %vm10871, %v10590, %v10782
  %v10924 = vsel %vm10871, %v10592, %v10784
  %v10925 = vsel %vm10871, %v10594, %v10786
  %v10926 = vsel %vm10871, %v10596, %v10788
  %v10927 = vsel %vm10871, %v10598, %v10790
  %v10928 = vsel %vm10871, %v10600, %v10792
  %v10929 = vsel %vm10871, %v10602, %v10794
  %v10930 = vsel %vm10871, %v10604, %v10796
  %v10931 = vsel %vm10871, %v10606, %v10798
  %v10932 = vsel %vm10871, %v10608, %v10800
  %v10933 = vsel %vm10871, %v10610, %v10802
  %v10934 = vsel %vm10871, %v10612, %v10804
  %v10935 = vsel %vm10871, %v10614, %v10806
  %v10936 = vmul.f32 %v10872, %v3592
  %v10937 = vmul.f32 %v10873, %v3593
  %v10938 = vmul.f32 %v10874, %v3594
  %v10939 = vmul.f32 %v10875, %v3595
  %v10940 = vmul.f32 %v10876, %v3596
  %v10941 = vmul.f32 %v10877, %v3597
  %v10942 = vmul.f32 %v10878, %v3598
  %v10943 = vmul.f32 %v10879, %v3599
  %v10944 = vmul.f32 %v10880, %v3592
  %v10945 = vmul.f32 %v10881, %v3593
  %v10946 = vmul.f32 %v10882, %v3594
  %v10947 = vmul.f32 %v10883, %v3595
  %v10948 = vmul.f32 %v10884, %v3596
  %v10949 = vmul.f32 %v10885, %v3597
  %v10950 = vmul.f32 %v10886, %v3598
  %v10951 = vmul.f32 %v10887, %v3599
  %v10952 = vmul.f32 %v10888, %v3592
  %v10953 = vmul.f32 %v10889, %v3593
  %v10954 = vmul.f32 %v10890, %v3594
  %v10955 = vmul.f32 %v10891, %v3595
  %v10956 = vmul.f32 %v10892, %v3596
  %v10957 = vmul.f32 %v10893, %v3597
  %v10958 = vmul.f32 %v10894, %v3598
  %v10959 = vmul.f32 %v10895, %v3599
  %v10960 = vmul.f32 %v10896, %v3592
  %v10961 = vmul.f32 %v10897, %v3593
  %v10962 = vmul.f32 %v10898, %v3594
  %v10963 = vmul.f32 %v10899, %v3595
  %v10964 = vmul.f32 %v10900, %v3596
  %v10965 = vmul.f32 %v10901, %v3597
  %v10966 = vmul.f32 %v10902, %v3598
  %v10967 = vmul.f32 %v10903, %v3599
  %v10968 = vmul.f32 %v10904, %v3592
  %v10969 = vmul.f32 %v10905, %v3593
  %v10970 = vmul.f32 %v10906, %v3594
  %v10971 = vmul.f32 %v10907, %v3595
  %v10972 = vmul.f32 %v10908, %v3596
  %v10973 = vmul.f32 %v10909, %v3597
  %v10974 = vmul.f32 %v10910, %v3598
  %v10975 = vmul.f32 %v10911, %v3599
  %v10976 = vmul.f32 %v10912, %v3592
  %v10977 = vmul.f32 %v10913, %v3593
  %v10978 = vmul.f32 %v10914, %v3594
  %v10979 = vmul.f32 %v10915, %v3595
  %v10980 = vmul.f32 %v10916, %v3596
  %v10981 = vmul.f32 %v10917, %v3597
  %v10982 = vmul.f32 %v10918, %v3598
  %v10983 = vmul.f32 %v10919, %v3599
  %v10984 = vmul.f32 %v10920, %v3592
  %v10985 = vmul.f32 %v10921, %v3593
  %v10986 = vmul.f32 %v10922, %v3594
  %v10987 = vmul.f32 %v10923, %v3595
  %v10988 = vmul.f32 %v10924, %v3596
  %v10989 = vmul.f32 %v10925, %v3597
  %v10990 = vmul.f32 %v10926, %v3598
  %v10991 = vmul.f32 %v10927, %v3599
  %v10992 = vmul.f32 %v10928, %v3592
  %v10993 = vmul.f32 %v10929, %v3593
  %v10994 = vmul.f32 %v10930, %v3594
  %v10995 = vmul.f32 %v10931, %v3595
  %v10996 = vmul.f32 %v10932, %v3596
  %v10997 = vmul.f32 %v10933, %v3597
  %v10998 = vmul.f32 %v10934, %v3598
  %v10999 = vmul.f32 %v10935, %v3599
  %11064 = vrot.lane.b32.xlu0 %v10936, 64
  %v11065 = vpop.permute.xlu0 %11064
  %11066 = vrot.lane.b32.xlu0 %v10937, 64
  %v11067 = vpop.permute.xlu0 %11066
  %11068 = vrot.lane.b32.xlu0 %v10938, 64
  %v11069 = vpop.permute.xlu0 %11068
  %11070 = vrot.lane.b32.xlu0 %v10939, 64
  %v11071 = vpop.permute.xlu0 %11070
  %11072 = vrot.lane.b32.xlu0 %v10940, 64
  %v11073 = vpop.permute.xlu0 %11072
  %11074 = vrot.lane.b32.xlu0 %v10941, 64
  %v11075 = vpop.permute.xlu0 %11074
  %11076 = vrot.lane.b32.xlu0 %v10942, 64
  %v11077 = vpop.permute.xlu0 %11076
  %11078 = vrot.lane.b32.xlu0 %v10943, 64
  %v11079 = vpop.permute.xlu0 %11078
  %11080 = vrot.lane.b32.xlu0 %v10944, 64
  %v11081 = vpop.permute.xlu0 %11080
  %11082 = vrot.lane.b32.xlu0 %v10945, 64
  %v11083 = vpop.permute.xlu0 %11082
  %11084 = vrot.lane.b32.xlu0 %v10946, 64
  %v11085 = vpop.permute.xlu0 %11084
  %11086 = vrot.lane.b32.xlu0 %v10947, 64
  %v11087 = vpop.permute.xlu0 %11086
  %11088 = vrot.lane.b32.xlu0 %v10948, 64
  %v11089 = vpop.permute.xlu0 %11088
  %11090 = vrot.lane.b32.xlu0 %v10949, 64
  %v11091 = vpop.permute.xlu0 %11090
  %11092 = vrot.lane.b32.xlu0 %v10950, 64
  %v11093 = vpop.permute.xlu0 %11092
  %11094 = vrot.lane.b32.xlu0 %v10951, 64
  %v11095 = vpop.permute.xlu0 %11094
  %11096 = vrot.lane.b32.xlu0 %v10952, 64
  %v11097 = vpop.permute.xlu0 %11096
  %11098 = vrot.lane.b32.xlu0 %v10953, 64
  %v11099 = vpop.permute.xlu0 %11098
  %11100 = vrot.lane.b32.xlu0 %v10954, 64
  %v11101 = vpop.permute.xlu0 %11100
  %11102 = vrot.lane.b32.xlu0 %v10955, 64
  %v11103 = vpop.permute.xlu0 %11102
  %11104 = vrot.lane.b32.xlu0 %v10956, 64
  %v11105 = vpop.permute.xlu0 %11104
  %11106 = vrot.lane.b32.xlu0 %v10957, 64
  %v11107 = vpop.permute.xlu0 %11106
  %11108 = vrot.lane.b32.xlu0 %v10958, 64
  %v11109 = vpop.permute.xlu0 %11108
  %11110 = vrot.lane.b32.xlu0 %v10959, 64
  %v11111 = vpop.permute.xlu0 %11110
  %11112 = vrot.lane.b32.xlu0 %v10960, 64
  %v11113 = vpop.permute.xlu0 %11112
  %11114 = vrot.lane.b32.xlu0 %v10961, 64
  %v11115 = vpop.permute.xlu0 %11114
  %11116 = vrot.lane.b32.xlu0 %v10962, 64
  %v11117 = vpop.permute.xlu0 %11116
  %11118 = vrot.lane.b32.xlu0 %v10963, 64
  %v11119 = vpop.permute.xlu0 %11118
  %11120 = vrot.lane.b32.xlu0 %v10964, 64
  %v11121 = vpop.permute.xlu0 %11120
  %11122 = vrot.lane.b32.xlu0 %v10965, 64
  %v11123 = vpop.permute.xlu0 %11122
  %11124 = vrot.lane.b32.xlu0 %v10966, 64
  %v11125 = vpop.permute.xlu0 %11124
  %11126 = vrot.lane.b32.xlu0 %v10967, 64
  %v11127 = vpop.permute.xlu0 %11126
  %11128 = vrot.lane.b32.xlu0 %v10968, 64
  %v11129 = vpop.permute.xlu0 %11128
  %11130 = vrot.lane.b32.xlu0 %v10969, 64
  %v11131 = vpop.permute.xlu0 %11130
  %11132 = vrot.lane.b32.xlu0 %v10970, 64
  %v11133 = vpop.permute.xlu0 %11132
  %11134 = vrot.lane.b32.xlu0 %v10971, 64
  %v11135 = vpop.permute.xlu0 %11134
  %11136 = vrot.lane.b32.xlu0 %v10972, 64
  %v11137 = vpop.permute.xlu0 %11136
  %11138 = vrot.lane.b32.xlu0 %v10973, 64
  %v11139 = vpop.permute.xlu0 %11138
  %11140 = vrot.lane.b32.xlu0 %v10974, 64
  %v11141 = vpop.permute.xlu0 %11140
  %11142 = vrot.lane.b32.xlu0 %v10975, 64
  %v11143 = vpop.permute.xlu0 %11142
  %11144 = vrot.lane.b32.xlu0 %v10976, 64
  %v11145 = vpop.permute.xlu0 %11144
  %11146 = vrot.lane.b32.xlu0 %v10977, 64
  %v11147 = vpop.permute.xlu0 %11146
  %11148 = vrot.lane.b32.xlu0 %v10978, 64
  %v11149 = vpop.permute.xlu0 %11148
  %11150 = vrot.lane.b32.xlu0 %v10979, 64
  %v11151 = vpop.permute.xlu0 %11150
  %11152 = vrot.lane.b32.xlu0 %v10980, 64
  %v11153 = vpop.permute.xlu0 %11152
  %11154 = vrot.lane.b32.xlu0 %v10981, 64
  %v11155 = vpop.permute.xlu0 %11154
  %11156 = vrot.lane.b32.xlu0 %v10982, 64
  %v11157 = vpop.permute.xlu0 %11156
  %11158 = vrot.lane.b32.xlu0 %v10983, 64
  %v11159 = vpop.permute.xlu0 %11158
  %11160 = vrot.lane.b32.xlu0 %v10984, 64
  %v11161 = vpop.permute.xlu0 %11160
  %11162 = vrot.lane.b32.xlu0 %v10985, 64
  %v11163 = vpop.permute.xlu0 %11162
  %11164 = vrot.lane.b32.xlu0 %v10986, 64
  %v11165 = vpop.permute.xlu0 %11164
  %11166 = vrot.lane.b32.xlu0 %v10987, 64
  %v11167 = vpop.permute.xlu0 %11166
  %11168 = vrot.lane.b32.xlu0 %v10988, 64
  %v11169 = vpop.permute.xlu0 %11168
  %11170 = vrot.lane.b32.xlu0 %v10989, 64
  %v11171 = vpop.permute.xlu0 %11170
  %11172 = vrot.lane.b32.xlu0 %v10990, 64
  %v11173 = vpop.permute.xlu0 %11172
  %11174 = vrot.lane.b32.xlu0 %v10991, 64
  %v11175 = vpop.permute.xlu0 %11174
  %11176 = vrot.lane.b32.xlu0 %v10992, 64
  %v11177 = vpop.permute.xlu0 %11176
  %11178 = vrot.lane.b32.xlu0 %v10993, 64
  %v11179 = vpop.permute.xlu0 %11178
  %11180 = vrot.lane.b32.xlu0 %v10994, 64
  %v11181 = vpop.permute.xlu0 %11180
  %11182 = vrot.lane.b32.xlu0 %v10995, 64
  %v11183 = vpop.permute.xlu0 %11182
  %11184 = vrot.lane.b32.xlu0 %v10996, 64
  %v11185 = vpop.permute.xlu0 %11184
  %11186 = vrot.lane.b32.xlu0 %v10997, 64
  %v11187 = vpop.permute.xlu0 %11186
  %11188 = vrot.lane.b32.xlu0 %v10998, 64
  %v11189 = vpop.permute.xlu0 %11188
  %11190 = vrot.lane.b32.xlu0 %v10999, 64
  %v11191 = vpop.permute.xlu0 %11190
  %v11256 = vadd.f32 %v10295, %v11065
  %v11257 = vadd.f32 %v10296, %v11067
  %v11258 = vadd.f32 %v10297, %v11069
  %v11259 = vadd.f32 %v10298, %v11071
  %v11260 = vadd.f32 %v10299, %v11073
  %v11261 = vadd.f32 %v10300, %v11075
  %v11262 = vadd.f32 %v10301, %v11077
  %v11263 = vadd.f32 %v10302, %v11079
  %v11264 = vadd.f32 %v10303, %v11081
  %v11265 = vadd.f32 %v10304, %v11083
  %v11266 = vadd.f32 %v10305, %v11085
  %v11267 = vadd.f32 %v10306, %v11087
  %v11268 = vadd.f32 %v10307, %v11089
  %v11269 = vadd.f32 %v10308, %v11091
  %v11270 = vadd.f32 %v10309, %v11093
  %v11271 = vadd.f32 %v10310, %v11095
  %v11272 = vadd.f32 %v10311, %v11097
  %v11273 = vadd.f32 %v10312, %v11099
  %v11274 = vadd.f32 %v10313, %v11101
  %v11275 = vadd.f32 %v10314, %v11103
  %v11276 = vadd.f32 %v10315, %v11105
  %v11277 = vadd.f32 %v10316, %v11107
  %v11278 = vadd.f32 %v10317, %v11109
  %v11279 = vadd.f32 %v10318, %v11111
  %v11280 = vadd.f32 %v10319, %v11113
  %v11281 = vadd.f32 %v10320, %v11115
  %v11282 = vadd.f32 %v10321, %v11117
  %v11283 = vadd.f32 %v10322, %v11119
  %v11284 = vadd.f32 %v10323, %v11121
  %v11285 = vadd.f32 %v10324, %v11123
  %v11286 = vadd.f32 %v10325, %v11125
  %v11287 = vadd.f32 %v10326, %v11127
  %v11288 = vadd.f32 %v10327, %v11129
  %v11289 = vadd.f32 %v10328, %v11131
  %v11290 = vadd.f32 %v10329, %v11133
  %v11291 = vadd.f32 %v10330, %v11135
  %v11292 = vadd.f32 %v10331, %v11137
  %v11293 = vadd.f32 %v10332, %v11139
  %v11294 = vadd.f32 %v10333, %v11141
  %v11295 = vadd.f32 %v10334, %v11143
  %v11296 = vadd.f32 %v10335, %v11145
  %v11297 = vadd.f32 %v10336, %v11147
  %v11298 = vadd.f32 %v10337, %v11149
  %v11299 = vadd.f32 %v10338, %v11151
  %v11300 = vadd.f32 %v10339, %v11153
  %v11301 = vadd.f32 %v10340, %v11155
  %v11302 = vadd.f32 %v10341, %v11157
  %v11303 = vadd.f32 %v10342, %v11159
  %v11304 = vadd.f32 %v10343, %v11161
  %v11305 = vadd.f32 %v10344, %v11163
  %v11306 = vadd.f32 %v10345, %v11165
  %v11307 = vadd.f32 %v10346, %v11167
  %v11308 = vadd.f32 %v10347, %v11169
  %v11309 = vadd.f32 %v10348, %v11171
  %v11310 = vadd.f32 %v10349, %v11173
  %v11311 = vadd.f32 %v10350, %v11175
  %v11312 = vadd.f32 %v10351, %v11177
  %v11313 = vadd.f32 %v10352, %v11179
  %v11314 = vadd.f32 %v10353, %v11181
  %v11315 = vadd.f32 %v10354, %v11183
  %v11316 = vadd.f32 %v10355, %v11185
  %v11317 = vadd.f32 %v10356, %v11187
  %v11318 = vadd.f32 %v10357, %v11189
  %v11319 = vadd.f32 %v10358, %v11191
  %v11320 = vmul.f32 %v10872, %v3656
  %v11321 = vmul.f32 %v10873, %v3657
  %v11322 = vmul.f32 %v10874, %v3658
  %v11323 = vmul.f32 %v10875, %v3659
  %v11324 = vmul.f32 %v10876, %v3660
  %v11325 = vmul.f32 %v10877, %v3661
  %v11326 = vmul.f32 %v10878, %v3662
  %v11327 = vmul.f32 %v10879, %v3663
  %v11328 = vmul.f32 %v10880, %v3656
  %v11329 = vmul.f32 %v10881, %v3657
  %v11330 = vmul.f32 %v10882, %v3658
  %v11331 = vmul.f32 %v10883, %v3659
  %v11332 = vmul.f32 %v10884, %v3660
  %v11333 = vmul.f32 %v10885, %v3661
  %v11334 = vmul.f32 %v10886, %v3662
  %v11335 = vmul.f32 %v10887, %v3663
  %v11336 = vmul.f32 %v10888, %v3656
  %v11337 = vmul.f32 %v10889, %v3657
  %v11338 = vmul.f32 %v10890, %v3658
  %v11339 = vmul.f32 %v10891, %v3659
  %v11340 = vmul.f32 %v10892, %v3660
  %v11341 = vmul.f32 %v10893, %v3661
  %v11342 = vmul.f32 %v10894, %v3662
  %v11343 = vmul.f32 %v10895, %v3663
  %v11344 = vmul.f32 %v10896, %v3656
  %v11345 = vmul.f32 %v10897, %v3657
  %v11346 = vmul.f32 %v10898, %v3658
  %v11347 = vmul.f32 %v10899, %v3659
  %v11348 = vmul.f32 %v10900, %v3660
  %v11349 = vmul.f32 %v10901, %v3661
  %v11350 = vmul.f32 %v10902, %v3662
  %v11351 = vmul.f32 %v10903, %v3663
  %v11352 = vmul.f32 %v10904, %v3656
  %v11353 = vmul.f32 %v10905, %v3657
  %v11354 = vmul.f32 %v10906, %v3658
  %v11355 = vmul.f32 %v10907, %v3659
  %v11356 = vmul.f32 %v10908, %v3660
  %v11357 = vmul.f32 %v10909, %v3661
  %v11358 = vmul.f32 %v10910, %v3662
  %v11359 = vmul.f32 %v10911, %v3663
  %v11360 = vmul.f32 %v10912, %v3656
  %v11361 = vmul.f32 %v10913, %v3657
  %v11362 = vmul.f32 %v10914, %v3658
  %v11363 = vmul.f32 %v10915, %v3659
  %v11364 = vmul.f32 %v10916, %v3660
  %v11365 = vmul.f32 %v10917, %v3661
  %v11366 = vmul.f32 %v10918, %v3662
  %v11367 = vmul.f32 %v10919, %v3663
  %v11368 = vmul.f32 %v10920, %v3656
  %v11369 = vmul.f32 %v10921, %v3657
  %v11370 = vmul.f32 %v10922, %v3658
  %v11371 = vmul.f32 %v10923, %v3659
  %v11372 = vmul.f32 %v10924, %v3660
  %v11373 = vmul.f32 %v10925, %v3661
  %v11374 = vmul.f32 %v10926, %v3662
  %v11375 = vmul.f32 %v10927, %v3663
  %v11376 = vmul.f32 %v10928, %v3656
  %v11377 = vmul.f32 %v10929, %v3657
  %v11378 = vmul.f32 %v10930, %v3658
  %v11379 = vmul.f32 %v10931, %v3659
  %v11380 = vmul.f32 %v10932, %v3660
  %v11381 = vmul.f32 %v10933, %v3661
  %v11382 = vmul.f32 %v10934, %v3662
  %v11383 = vmul.f32 %v10935, %v3663
  %v11384 = vadd.f32 %v10423, %v11320
  %v11385 = vadd.f32 %v10424, %v11321
  %v11386 = vadd.f32 %v10425, %v11322
  %v11387 = vadd.f32 %v10426, %v11323
  %v11388 = vadd.f32 %v10427, %v11324
  %v11389 = vadd.f32 %v10428, %v11325
  %v11390 = vadd.f32 %v10429, %v11326
  %v11391 = vadd.f32 %v10430, %v11327
  %v11392 = vadd.f32 %v10431, %v11328
  %v11393 = vadd.f32 %v10432, %v11329
  %v11394 = vadd.f32 %v10433, %v11330
  %v11395 = vadd.f32 %v10434, %v11331
  %v11396 = vadd.f32 %v10435, %v11332
  %v11397 = vadd.f32 %v10436, %v11333
  %v11398 = vadd.f32 %v10437, %v11334
  %v11399 = vadd.f32 %v10438, %v11335
  %v11400 = vadd.f32 %v10439, %v11336
  %v11401 = vadd.f32 %v10440, %v11337
  %v11402 = vadd.f32 %v10441, %v11338
  %v11403 = vadd.f32 %v10442, %v11339
  %v11404 = vadd.f32 %v10443, %v11340
  %v11405 = vadd.f32 %v10444, %v11341
  %v11406 = vadd.f32 %v10445, %v11342
  %v11407 = vadd.f32 %v10446, %v11343
  %v11408 = vadd.f32 %v10447, %v11344
  %v11409 = vadd.f32 %v10448, %v11345
  %v11410 = vadd.f32 %v10449, %v11346
  %v11411 = vadd.f32 %v10450, %v11347
  %v11412 = vadd.f32 %v10451, %v11348
  %v11413 = vadd.f32 %v10452, %v11349
  %v11414 = vadd.f32 %v10453, %v11350
  %v11415 = vadd.f32 %v10454, %v11351
  %v11416 = vadd.f32 %v10455, %v11352
  %v11417 = vadd.f32 %v10456, %v11353
  %v11418 = vadd.f32 %v10457, %v11354
  %v11419 = vadd.f32 %v10458, %v11355
  %v11420 = vadd.f32 %v10459, %v11356
  %v11421 = vadd.f32 %v10460, %v11357
  %v11422 = vadd.f32 %v10461, %v11358
  %v11423 = vadd.f32 %v10462, %v11359
  %v11424 = vadd.f32 %v10463, %v11360
  %v11425 = vadd.f32 %v10464, %v11361
  %v11426 = vadd.f32 %v10465, %v11362
  %v11427 = vadd.f32 %v10466, %v11363
  %v11428 = vadd.f32 %v10467, %v11364
  %v11429 = vadd.f32 %v10468, %v11365
  %v11430 = vadd.f32 %v10469, %v11366
  %v11431 = vadd.f32 %v10470, %v11367
  %v11432 = vadd.f32 %v10471, %v11368
  %v11433 = vadd.f32 %v10472, %v11369
  %v11434 = vadd.f32 %v10473, %v11370
  %v11435 = vadd.f32 %v10474, %v11371
  %v11436 = vadd.f32 %v10475, %v11372
  %v11437 = vadd.f32 %v10476, %v11373
  %v11438 = vadd.f32 %v10477, %v11374
  %v11439 = vadd.f32 %v10478, %v11375
  %v11440 = vadd.f32 %v10479, %v11376
  %v11441 = vadd.f32 %v10480, %v11377
  %v11442 = vadd.f32 %v10481, %v11378
  %v11443 = vadd.f32 %v10482, %v11379
  %v11444 = vadd.f32 %v10483, %v11380
  %v11445 = vadd.f32 %v10484, %v11381
  %v11446 = vadd.f32 %v10485, %v11382
  %v11447 = vadd.f32 %v10486, %v11383
  %vm11512 = vcmask 1046528
  %v11513 = vrot.slane %v11384, 1
  %v11514 = vrot.slane %v11385, 1
  %v11515 = vsel %vm11512, %v11513, %v11514
  %v11516 = vrot.slane %v11386, 1
  %v11517 = vsel %vm11512, %v11514, %v11516
  %v11518 = vrot.slane %v11387, 1
  %v11519 = vsel %vm11512, %v11516, %v11518
  %v11520 = vrot.slane %v11388, 1
  %v11521 = vsel %vm11512, %v11518, %v11520
  %v11522 = vrot.slane %v11389, 1
  %v11523 = vsel %vm11512, %v11520, %v11522
  %v11524 = vrot.slane %v11390, 1
  %v11525 = vsel %vm11512, %v11522, %v11524
  %v11526 = vrot.slane %v11391, 1
  %v11527 = vsel %vm11512, %v11524, %v11526
  %v11528 = vrot.slane %v11392, 1
  %v11529 = vrot.slane %v11393, 1
  %v11530 = vsel %vm11512, %v11528, %v11529
  %v11531 = vrot.slane %v11394, 1
  %v11532 = vsel %vm11512, %v11529, %v11531
  %v11533 = vrot.slane %v11395, 1
  %v11534 = vsel %vm11512, %v11531, %v11533
  %v11535 = vrot.slane %v11396, 1
  %v11536 = vsel %vm11512, %v11533, %v11535
  %v11537 = vrot.slane %v11397, 1
  %v11538 = vsel %vm11512, %v11535, %v11537
  %v11539 = vrot.slane %v11398, 1
  %v11540 = vsel %vm11512, %v11537, %v11539
  %v11541 = vrot.slane %v11399, 1
  %v11542 = vsel %vm11512, %v11539, %v11541
  %v11543 = vrot.slane %v11400, 1
  %v11544 = vrot.slane %v11401, 1
  %v11545 = vsel %vm11512, %v11543, %v11544
  %v11546 = vrot.slane %v11402, 1
  %v11547 = vsel %vm11512, %v11544, %v11546
  %v11548 = vrot.slane %v11403, 1
  %v11549 = vsel %vm11512, %v11546, %v11548
  %v11550 = vrot.slane %v11404, 1
  %v11551 = vsel %vm11512, %v11548, %v11550
  %v11552 = vrot.slane %v11405, 1
  %v11553 = vsel %vm11512, %v11550, %v11552
  %v11554 = vrot.slane %v11406, 1
  %v11555 = vsel %vm11512, %v11552, %v11554
  %v11556 = vrot.slane %v11407, 1
  %v11557 = vsel %vm11512, %v11554, %v11556
  %v11558 = vrot.slane %v11408, 1
  %v11559 = vrot.slane %v11409, 1
  %v11560 = vsel %vm11512, %v11558, %v11559
  %v11561 = vrot.slane %v11410, 1
  %v11562 = vsel %vm11512, %v11559, %v11561
  %v11563 = vrot.slane %v11411, 1
  %v11564 = vsel %vm11512, %v11561, %v11563
  %v11565 = vrot.slane %v11412, 1
  %v11566 = vsel %vm11512, %v11563, %v11565
  %v11567 = vrot.slane %v11413, 1
  %v11568 = vsel %vm11512, %v11565, %v11567
  %v11569 = vrot.slane %v11414, 1
  %v11570 = vsel %vm11512, %v11567, %v11569
  %v11571 = vrot.slane %v11415, 1
  %v11572 = vsel %vm11512, %v11569, %v11571
  %v11573 = vrot.slane %v11416, 1
  %v11574 = vrot.slane %v11417, 1
  %v11575 = vsel %vm11512, %v11573, %v11574
  %v11576 = vrot.slane %v11418, 1
  %v11577 = vsel %vm11512, %v11574, %v11576
  %v11578 = vrot.slane %v11419, 1
  %v11579 = vsel %vm11512, %v11576, %v11578
  %v11580 = vrot.slane %v11420, 1
  %v11581 = vsel %vm11512, %v11578, %v11580
  %v11582 = vrot.slane %v11421, 1
  %v11583 = vsel %vm11512, %v11580, %v11582
  %v11584 = vrot.slane %v11422, 1
  %v11585 = vsel %vm11512, %v11582, %v11584
  %v11586 = vrot.slane %v11423, 1
  %v11587 = vsel %vm11512, %v11584, %v11586
  %v11588 = vrot.slane %v11424, 1
  %v11589 = vrot.slane %v11425, 1
  %v11590 = vsel %vm11512, %v11588, %v11589
  %v11591 = vrot.slane %v11426, 1
  %v11592 = vsel %vm11512, %v11589, %v11591
  %v11593 = vrot.slane %v11427, 1
  %v11594 = vsel %vm11512, %v11591, %v11593
  %v11595 = vrot.slane %v11428, 1
  %v11596 = vsel %vm11512, %v11593, %v11595
  %v11597 = vrot.slane %v11429, 1
  %v11598 = vsel %vm11512, %v11595, %v11597
  %v11599 = vrot.slane %v11430, 1
  %v11600 = vsel %vm11512, %v11597, %v11599
  %v11601 = vrot.slane %v11431, 1
  %v11602 = vsel %vm11512, %v11599, %v11601
  %v11603 = vrot.slane %v11432, 1
  %v11604 = vrot.slane %v11433, 1
  %v11605 = vsel %vm11512, %v11603, %v11604
  %v11606 = vrot.slane %v11434, 1
  %v11607 = vsel %vm11512, %v11604, %v11606
  %v11608 = vrot.slane %v11435, 1
  %v11609 = vsel %vm11512, %v11606, %v11608
  %v11610 = vrot.slane %v11436, 1
  %v11611 = vsel %vm11512, %v11608, %v11610
  %v11612 = vrot.slane %v11437, 1
  %v11613 = vsel %vm11512, %v11610, %v11612
  %v11614 = vrot.slane %v11438, 1
  %v11615 = vsel %vm11512, %v11612, %v11614
  %v11616 = vrot.slane %v11439, 1
  %v11617 = vsel %vm11512, %v11614, %v11616
  %v11618 = vrot.slane %v11440, 1
  %v11619 = vrot.slane %v11441, 1
  %v11620 = vsel %vm11512, %v11618, %v11619
  %v11621 = vrot.slane %v11442, 1
  %v11622 = vsel %vm11512, %v11619, %v11621
  %v11623 = vrot.slane %v11443, 1
  %v11624 = vsel %vm11512, %v11621, %v11623
  %v11625 = vrot.slane %v11444, 1
  %v11626 = vsel %vm11512, %v11623, %v11625
  %v11627 = vrot.slane %v11445, 1
  %v11628 = vsel %vm11512, %v11625, %v11627
  %v11629 = vrot.slane %v11446, 1
  %v11630 = vsel %vm11512, %v11627, %v11629
  %v11631 = vrot.slane %v11447, 1
  %v11632 = vsel %vm11512, %v11629, %v11631
  %v11649 = vsel %vm11512, %v11526, %v11513
  %v11650 = vsel %vm11512, %v11541, %v11528
  %v11651 = vsel %vm11512, %v11556, %v11543
  %v11652 = vsel %vm11512, %v11571, %v11558
  %v11653 = vsel %vm11512, %v11586, %v11573
  %v11654 = vsel %vm11512, %v11601, %v11588
  %v11655 = vsel %vm11512, %v11616, %v11603
  %v11656 = vsel %vm11512, %v11631, %v11618
  %11665 = vrot.lane.b32.xlu0 %v11515, 64
  %v11666 = vpop.permute.xlu0 %11665
  %11667 = vrot.lane.b32.xlu0 %v11517, 64
  %v11668 = vpop.permute.xlu0 %11667
  %11669 = vrot.lane.b32.xlu0 %v11519, 64
  %v11670 = vpop.permute.xlu0 %11669
  %11671 = vrot.lane.b32.xlu0 %v11521, 64
  %v11672 = vpop.permute.xlu0 %11671
  %11673 = vrot.lane.b32.xlu0 %v11523, 64
  %v11674 = vpop.permute.xlu0 %11673
  %11675 = vrot.lane.b32.xlu0 %v11525, 64
  %v11676 = vpop.permute.xlu0 %11675
  %11677 = vrot.lane.b32.xlu0 %v11527, 64
  %v11678 = vpop.permute.xlu0 %11677
  %11679 = vrot.lane.b32.xlu0 %v11649, 64
  %v11680 = vpop.permute.xlu0 %11679
  %11681 = vrot.lane.b32.xlu0 %v11530, 64
  %v11682 = vpop.permute.xlu0 %11681
  %11683 = vrot.lane.b32.xlu0 %v11532, 64
  %v11684 = vpop.permute.xlu0 %11683
  %11685 = vrot.lane.b32.xlu0 %v11534, 64
  %v11686 = vpop.permute.xlu0 %11685
  %11687 = vrot.lane.b32.xlu0 %v11536, 64
  %v11688 = vpop.permute.xlu0 %11687
  %11689 = vrot.lane.b32.xlu0 %v11538, 64
  %v11690 = vpop.permute.xlu0 %11689
  %11691 = vrot.lane.b32.xlu0 %v11540, 64
  %v11692 = vpop.permute.xlu0 %11691
  %11693 = vrot.lane.b32.xlu0 %v11542, 64
  %v11694 = vpop.permute.xlu0 %11693
  %11695 = vrot.lane.b32.xlu0 %v11650, 64
  %v11696 = vpop.permute.xlu0 %11695
  %11697 = vrot.lane.b32.xlu0 %v11545, 64
  %v11698 = vpop.permute.xlu0 %11697
  %11699 = vrot.lane.b32.xlu0 %v11547, 64
  %v11700 = vpop.permute.xlu0 %11699
  %11701 = vrot.lane.b32.xlu0 %v11549, 64
  %v11702 = vpop.permute.xlu0 %11701
  %11703 = vrot.lane.b32.xlu0 %v11551, 64
  %v11704 = vpop.permute.xlu0 %11703
  %11705 = vrot.lane.b32.xlu0 %v11553, 64
  %v11706 = vpop.permute.xlu0 %11705
  %11707 = vrot.lane.b32.xlu0 %v11555, 64
  %v11708 = vpop.permute.xlu0 %11707
  %11709 = vrot.lane.b32.xlu0 %v11557, 64
  %v11710 = vpop.permute.xlu0 %11709
  %11711 = vrot.lane.b32.xlu0 %v11651, 64
  %v11712 = vpop.permute.xlu0 %11711
  %11713 = vrot.lane.b32.xlu0 %v11560, 64
  %v11714 = vpop.permute.xlu0 %11713
  %11715 = vrot.lane.b32.xlu0 %v11562, 64
  %v11716 = vpop.permute.xlu0 %11715
  %11717 = vrot.lane.b32.xlu0 %v11564, 64
  %v11718 = vpop.permute.xlu0 %11717
  %11719 = vrot.lane.b32.xlu0 %v11566, 64
  %v11720 = vpop.permute.xlu0 %11719
  %11721 = vrot.lane.b32.xlu0 %v11568, 64
  %v11722 = vpop.permute.xlu0 %11721
  %11723 = vrot.lane.b32.xlu0 %v11570, 64
  %v11724 = vpop.permute.xlu0 %11723
  %11725 = vrot.lane.b32.xlu0 %v11572, 64
  %v11726 = vpop.permute.xlu0 %11725
  %11727 = vrot.lane.b32.xlu0 %v11652, 64
  %v11728 = vpop.permute.xlu0 %11727
  %11729 = vrot.lane.b32.xlu0 %v11575, 64
  %v11730 = vpop.permute.xlu0 %11729
  %11731 = vrot.lane.b32.xlu0 %v11577, 64
  %v11732 = vpop.permute.xlu0 %11731
  %11733 = vrot.lane.b32.xlu0 %v11579, 64
  %v11734 = vpop.permute.xlu0 %11733
  %11735 = vrot.lane.b32.xlu0 %v11581, 64
  %v11736 = vpop.permute.xlu0 %11735
  %11737 = vrot.lane.b32.xlu0 %v11583, 64
  %v11738 = vpop.permute.xlu0 %11737
  %11739 = vrot.lane.b32.xlu0 %v11585, 64
  %v11740 = vpop.permute.xlu0 %11739
  %11741 = vrot.lane.b32.xlu0 %v11587, 64
  %v11742 = vpop.permute.xlu0 %11741
  %11743 = vrot.lane.b32.xlu0 %v11653, 64
  %v11744 = vpop.permute.xlu0 %11743
  %11745 = vrot.lane.b32.xlu0 %v11590, 64
  %v11746 = vpop.permute.xlu0 %11745
  %11747 = vrot.lane.b32.xlu0 %v11592, 64
  %v11748 = vpop.permute.xlu0 %11747
  %11749 = vrot.lane.b32.xlu0 %v11594, 64
  %v11750 = vpop.permute.xlu0 %11749
  %11751 = vrot.lane.b32.xlu0 %v11596, 64
  %v11752 = vpop.permute.xlu0 %11751
  %11753 = vrot.lane.b32.xlu0 %v11598, 64
  %v11754 = vpop.permute.xlu0 %11753
  %11755 = vrot.lane.b32.xlu0 %v11600, 64
  %v11756 = vpop.permute.xlu0 %11755
  %11757 = vrot.lane.b32.xlu0 %v11602, 64
  %v11758 = vpop.permute.xlu0 %11757
  %11759 = vrot.lane.b32.xlu0 %v11654, 64
  %v11760 = vpop.permute.xlu0 %11759
  %11761 = vrot.lane.b32.xlu0 %v11605, 64
  %v11762 = vpop.permute.xlu0 %11761
  %11763 = vrot.lane.b32.xlu0 %v11607, 64
  %v11764 = vpop.permute.xlu0 %11763
  %11765 = vrot.lane.b32.xlu0 %v11609, 64
  %v11766 = vpop.permute.xlu0 %11765
  %11767 = vrot.lane.b32.xlu0 %v11611, 64
  %v11768 = vpop.permute.xlu0 %11767
  %11769 = vrot.lane.b32.xlu0 %v11613, 64
  %v11770 = vpop.permute.xlu0 %11769
  %11771 = vrot.lane.b32.xlu0 %v11615, 64
  %v11772 = vpop.permute.xlu0 %11771
  %11773 = vrot.lane.b32.xlu0 %v11617, 64
  %v11774 = vpop.permute.xlu0 %11773
  %11775 = vrot.lane.b32.xlu0 %v11655, 64
  %v11776 = vpop.permute.xlu0 %11775
  %11777 = vrot.lane.b32.xlu0 %v11620, 64
  %v11778 = vpop.permute.xlu0 %11777
  %11779 = vrot.lane.b32.xlu0 %v11622, 64
  %v11780 = vpop.permute.xlu0 %11779
  %11781 = vrot.lane.b32.xlu0 %v11624, 64
  %v11782 = vpop.permute.xlu0 %11781
  %11783 = vrot.lane.b32.xlu0 %v11626, 64
  %v11784 = vpop.permute.xlu0 %11783
  %11785 = vrot.lane.b32.xlu0 %v11628, 64
  %v11786 = vpop.permute.xlu0 %11785
  %11787 = vrot.lane.b32.xlu0 %v11630, 64
  %v11788 = vpop.permute.xlu0 %11787
  %11789 = vrot.lane.b32.xlu0 %v11632, 64
  %v11790 = vpop.permute.xlu0 %11789
  %11791 = vrot.lane.b32.xlu0 %v11656, 64
  %v11792 = vpop.permute.xlu0 %11791
  %v11857 = vadd.f32 %v11256, %v11666
  %v11858 = vadd.f32 %v11257, %v11668
  %v11859 = vadd.f32 %v11258, %v11670
  %v11860 = vadd.f32 %v11259, %v11672
  %v11861 = vadd.f32 %v11260, %v11674
  %v11862 = vadd.f32 %v11261, %v11676
  %v11863 = vadd.f32 %v11262, %v11678
  %v11864 = vadd.f32 %v11263, %v11680
  %v11865 = vadd.f32 %v11264, %v11682
  %v11866 = vadd.f32 %v11265, %v11684
  %v11867 = vadd.f32 %v11266, %v11686
  %v11868 = vadd.f32 %v11267, %v11688
  %v11869 = vadd.f32 %v11268, %v11690
  %v11870 = vadd.f32 %v11269, %v11692
  %v11871 = vadd.f32 %v11270, %v11694
  %v11872 = vadd.f32 %v11271, %v11696
  %v11873 = vadd.f32 %v11272, %v11698
  %v11874 = vadd.f32 %v11273, %v11700
  %v11875 = vadd.f32 %v11274, %v11702
  %v11876 = vadd.f32 %v11275, %v11704
  %v11877 = vadd.f32 %v11276, %v11706
  %v11878 = vadd.f32 %v11277, %v11708
  %v11879 = vadd.f32 %v11278, %v11710
  %v11880 = vadd.f32 %v11279, %v11712
  %v11881 = vadd.f32 %v11280, %v11714
  %v11882 = vadd.f32 %v11281, %v11716
  %v11883 = vadd.f32 %v11282, %v11718
  %v11884 = vadd.f32 %v11283, %v11720
  %v11885 = vadd.f32 %v11284, %v11722
  %v11886 = vadd.f32 %v11285, %v11724
  %v11887 = vadd.f32 %v11286, %v11726
  %v11888 = vadd.f32 %v11287, %v11728
  %v11889 = vadd.f32 %v11288, %v11730
  %v11890 = vadd.f32 %v11289, %v11732
  %v11891 = vadd.f32 %v11290, %v11734
  %v11892 = vadd.f32 %v11291, %v11736
  %v11893 = vadd.f32 %v11292, %v11738
  %v11894 = vadd.f32 %v11293, %v11740
  %v11895 = vadd.f32 %v11294, %v11742
  %v11896 = vadd.f32 %v11295, %v11744
  %v11897 = vadd.f32 %v11296, %v11746
  %v11898 = vadd.f32 %v11297, %v11748
  %v11899 = vadd.f32 %v11298, %v11750
  %v11900 = vadd.f32 %v11299, %v11752
  %v11901 = vadd.f32 %v11300, %v11754
  %v11902 = vadd.f32 %v11301, %v11756
  %v11903 = vadd.f32 %v11302, %v11758
  %v11904 = vadd.f32 %v11303, %v11760
  %v11905 = vadd.f32 %v11304, %v11762
  %v11906 = vadd.f32 %v11305, %v11764
  %v11907 = vadd.f32 %v11306, %v11766
  %v11908 = vadd.f32 %v11307, %v11768
  %v11909 = vadd.f32 %v11308, %v11770
  %v11910 = vadd.f32 %v11309, %v11772
  %v11911 = vadd.f32 %v11310, %v11774
  %v11912 = vadd.f32 %v11311, %v11776
  %v11913 = vadd.f32 %v11312, %v11778
  %v11914 = vadd.f32 %v11313, %v11780
  %v11915 = vadd.f32 %v11314, %v11782
  %v11916 = vadd.f32 %v11315, %v11784
  %v11917 = vadd.f32 %v11316, %v11786
  %v11918 = vadd.f32 %v11317, %v11788
  %v11919 = vadd.f32 %v11318, %v11790
  %v11920 = vadd.f32 %v11319, %v11792
  %v11929 = vrot.slane %v7547, 7
  %v11930 = vrot.slane %v7555, 7
  %v11931 = vrot.slane %v7563, 7
  %v11932 = vrot.slane %v7571, 7
  %v11933 = vrot.slane %v7579, 7
  %v11934 = vrot.slane %v7587, 7
  %v11935 = vrot.slane %v7595, 7
  %v11936 = vrot.slane %v7603, 7
  %vm12001 = vcmask 1040384
  %v12002 = vrot.slane %v7540, 7
  %v12003 = vrot.slane %v7541, 7
  %v12004 = vsel %vm12001, %v12002, %v12003
  %v12005 = vrot.slane %v7542, 7
  %v12006 = vsel %vm12001, %v12003, %v12005
  %v12007 = vrot.slane %v7543, 7
  %v12008 = vsel %vm12001, %v12005, %v12007
  %v12009 = vrot.slane %v7544, 7
  %v12010 = vsel %vm12001, %v12007, %v12009
  %v12011 = vrot.slane %v7545, 7
  %v12012 = vsel %vm12001, %v12009, %v12011
  %v12013 = vrot.slane %v7546, 7
  %v12014 = vsel %vm12001, %v12011, %v12013
  %v12015 = vsel %vm12001, %v12013, %v11929
  %v12016 = vrot.slane %v7548, 7
  %v12017 = vrot.slane %v7549, 7
  %v12018 = vsel %vm12001, %v12016, %v12017
  %v12019 = vrot.slane %v7550, 7
  %v12020 = vsel %vm12001, %v12017, %v12019
  %v12021 = vrot.slane %v7551, 7
  %v12022 = vsel %vm12001, %v12019, %v12021
  %v12023 = vrot.slane %v7552, 7
  %v12024 = vsel %vm12001, %v12021, %v12023
  %v12025 = vrot.slane %v7553, 7
  %v12026 = vsel %vm12001, %v12023, %v12025
  %v12027 = vrot.slane %v7554, 7
  %v12028 = vsel %vm12001, %v12025, %v12027
  %v12029 = vsel %vm12001, %v12027, %v11930
  %v12030 = vrot.slane %v7556, 7
  %v12031 = vrot.slane %v7557, 7
  %v12032 = vsel %vm12001, %v12030, %v12031
  %v12033 = vrot.slane %v7558, 7
  %v12034 = vsel %vm12001, %v12031, %v12033
  %v12035 = vrot.slane %v7559, 7
  %v12036 = vsel %vm12001, %v12033, %v12035
  %v12037 = vrot.slane %v7560, 7
  %v12038 = vsel %vm12001, %v12035, %v12037
  %v12039 = vrot.slane %v7561, 7
  %v12040 = vsel %vm12001, %v12037, %v12039
  %v12041 = vrot.slane %v7562, 7
  %v12042 = vsel %vm12001, %v12039, %v12041
  %v12043 = vsel %vm12001, %v12041, %v11931
  %v12044 = vrot.slane %v7564, 7
  %v12045 = vrot.slane %v7565, 7
  %v12046 = vsel %vm12001, %v12044, %v12045
  %v12047 = vrot.slane %v7566, 7
  %v12048 = vsel %vm12001, %v12045, %v12047
  %v12049 = vrot.slane %v7567, 7
  %v12050 = vsel %vm12001, %v12047, %v12049
  %v12051 = vrot.slane %v7568, 7
  %v12052 = vsel %vm12001, %v12049, %v12051
  %v12053 = vrot.slane %v7569, 7
  %v12054 = vsel %vm12001, %v12051, %v12053
  %v12055 = vrot.slane %v7570, 7
  %v12056 = vsel %vm12001, %v12053, %v12055
  %v12057 = vsel %vm12001, %v12055, %v11932
  %v12058 = vrot.slane %v7572, 7
  %v12059 = vrot.slane %v7573, 7
  %v12060 = vsel %vm12001, %v12058, %v12059
  %v12061 = vrot.slane %v7574, 7
  %v12062 = vsel %vm12001, %v12059, %v12061
  %v12063 = vrot.slane %v7575, 7
  %v12064 = vsel %vm12001, %v12061, %v12063
  %v12065 = vrot.slane %v7576, 7
  %v12066 = vsel %vm12001, %v12063, %v12065
  %v12067 = vrot.slane %v7577, 7
  %v12068 = vsel %vm12001, %v12065, %v12067
  %v12069 = vrot.slane %v7578, 7
  %v12070 = vsel %vm12001, %v12067, %v12069
  %v12071 = vsel %vm12001, %v12069, %v11933
  %v12072 = vrot.slane %v7580, 7
  %v12073 = vrot.slane %v7581, 7
  %v12074 = vsel %vm12001, %v12072, %v12073
  %v12075 = vrot.slane %v7582, 7
  %v12076 = vsel %vm12001, %v12073, %v12075
  %v12077 = vrot.slane %v7583, 7
  %v12078 = vsel %vm12001, %v12075, %v12077
  %v12079 = vrot.slane %v7584, 7
  %v12080 = vsel %vm12001, %v12077, %v12079
  %v12081 = vrot.slane %v7585, 7
  %v12082 = vsel %vm12001, %v12079, %v12081
  %v12083 = vrot.slane %v7586, 7
  %v12084 = vsel %vm12001, %v12081, %v12083
  %v12085 = vsel %vm12001, %v12083, %v11934
  %v12086 = vrot.slane %v7588, 7
  %v12087 = vrot.slane %v7589, 7
  %v12088 = vsel %vm12001, %v12086, %v12087
  %v12089 = vrot.slane %v7590, 7
  %v12090 = vsel %vm12001, %v12087, %v12089
  %v12091 = vrot.slane %v7591, 7
  %v12092 = vsel %vm12001, %v12089, %v12091
  %v12093 = vrot.slane %v7592, 7
  %v12094 = vsel %vm12001, %v12091, %v12093
  %v12095 = vrot.slane %v7593, 7
  %v12096 = vsel %vm12001, %v12093, %v12095
  %v12097 = vrot.slane %v7594, 7
  %v12098 = vsel %vm12001, %v12095, %v12097
  %v12099 = vsel %vm12001, %v12097, %v11935
  %v12100 = vrot.slane %v7596, 7
  %v12101 = vrot.slane %v7597, 7
  %v12102 = vsel %vm12001, %v12100, %v12101
  %v12103 = vrot.slane %v7598, 7
  %v12104 = vsel %vm12001, %v12101, %v12103
  %v12105 = vrot.slane %v7599, 7
  %v12106 = vsel %vm12001, %v12103, %v12105
  %v12107 = vrot.slane %v7600, 7
  %v12108 = vsel %vm12001, %v12105, %v12107
  %v12109 = vrot.slane %v7601, 7
  %v12110 = vsel %vm12001, %v12107, %v12109
  %v12111 = vrot.slane %v7602, 7
  %v12112 = vsel %vm12001, %v12109, %v12111
  %v12113 = vsel %vm12001, %v12111, %v11936
  %v12122 = vsel %vm12001, %v11929, %v12002
  %v12123 = vsel %vm12001, %v11930, %v12016
  %v12124 = vsel %vm12001, %v11931, %v12030
  %v12125 = vsel %vm12001, %v11932, %v12044
  %v12126 = vsel %vm12001, %v11933, %v12058
  %v12127 = vsel %vm12001, %v11934, %v12072
  %v12128 = vsel %vm12001, %v11935, %v12086
  %v12129 = vsel %vm12001, %v11936, %v12100
  %12138 = vrot.lane.b32.xlu0 %v12122, 64
  %v12139 = vpop.permute.xlu0 %12138
  %12140 = vrot.lane.b32.xlu0 %v12004, 64
  %v12141 = vpop.permute.xlu0 %12140
  %12142 = vrot.lane.b32.xlu0 %v12006, 64
  %v12143 = vpop.permute.xlu0 %12142
  %12144 = vrot.lane.b32.xlu0 %v12008, 64
  %v12145 = vpop.permute.xlu0 %12144
  %12146 = vrot.lane.b32.xlu0 %v12010, 64
  %v12147 = vpop.permute.xlu0 %12146
  %12148 = vrot.lane.b32.xlu0 %v12012, 64
  %v12149 = vpop.permute.xlu0 %12148
  %12150 = vrot.lane.b32.xlu0 %v12014, 64
  %v12151 = vpop.permute.xlu0 %12150
  %12152 = vrot.lane.b32.xlu0 %v12015, 64
  %v12153 = vpop.permute.xlu0 %12152
  %12154 = vrot.lane.b32.xlu0 %v12123, 64
  %v12155 = vpop.permute.xlu0 %12154
  %12156 = vrot.lane.b32.xlu0 %v12018, 64
  %v12157 = vpop.permute.xlu0 %12156
  %12158 = vrot.lane.b32.xlu0 %v12020, 64
  %v12159 = vpop.permute.xlu0 %12158
  %12160 = vrot.lane.b32.xlu0 %v12022, 64
  %v12161 = vpop.permute.xlu0 %12160
  %12162 = vrot.lane.b32.xlu0 %v12024, 64
  %v12163 = vpop.permute.xlu0 %12162
  %12164 = vrot.lane.b32.xlu0 %v12026, 64
  %v12165 = vpop.permute.xlu0 %12164
  %12166 = vrot.lane.b32.xlu0 %v12028, 64
  %v12167 = vpop.permute.xlu0 %12166
  %12168 = vrot.lane.b32.xlu0 %v12029, 64
  %v12169 = vpop.permute.xlu0 %12168
  %12170 = vrot.lane.b32.xlu0 %v12124, 64
  %v12171 = vpop.permute.xlu0 %12170
  %12172 = vrot.lane.b32.xlu0 %v12032, 64
  %v12173 = vpop.permute.xlu0 %12172
  %12174 = vrot.lane.b32.xlu0 %v12034, 64
  %v12175 = vpop.permute.xlu0 %12174
  %12176 = vrot.lane.b32.xlu0 %v12036, 64
  %v12177 = vpop.permute.xlu0 %12176
  %12178 = vrot.lane.b32.xlu0 %v12038, 64
  %v12179 = vpop.permute.xlu0 %12178
  %12180 = vrot.lane.b32.xlu0 %v12040, 64
  %v12181 = vpop.permute.xlu0 %12180
  %12182 = vrot.lane.b32.xlu0 %v12042, 64
  %v12183 = vpop.permute.xlu0 %12182
  %12184 = vrot.lane.b32.xlu0 %v12043, 64
  %v12185 = vpop.permute.xlu0 %12184
  %12186 = vrot.lane.b32.xlu0 %v12125, 64
  %v12187 = vpop.permute.xlu0 %12186
  %12188 = vrot.lane.b32.xlu0 %v12046, 64
  %v12189 = vpop.permute.xlu0 %12188
  %12190 = vrot.lane.b32.xlu0 %v12048, 64
  %v12191 = vpop.permute.xlu0 %12190
  %12192 = vrot.lane.b32.xlu0 %v12050, 64
  %v12193 = vpop.permute.xlu0 %12192
  %12194 = vrot.lane.b32.xlu0 %v12052, 64
  %v12195 = vpop.permute.xlu0 %12194
  %12196 = vrot.lane.b32.xlu0 %v12054, 64
  %v12197 = vpop.permute.xlu0 %12196
  %12198 = vrot.lane.b32.xlu0 %v12056, 64
  %v12199 = vpop.permute.xlu0 %12198
  %12200 = vrot.lane.b32.xlu0 %v12057, 64
  %v12201 = vpop.permute.xlu0 %12200
  %12202 = vrot.lane.b32.xlu0 %v12126, 64
  %v12203 = vpop.permute.xlu0 %12202
  %12204 = vrot.lane.b32.xlu0 %v12060, 64
  %v12205 = vpop.permute.xlu0 %12204
  %12206 = vrot.lane.b32.xlu0 %v12062, 64
  %v12207 = vpop.permute.xlu0 %12206
  %12208 = vrot.lane.b32.xlu0 %v12064, 64
  %v12209 = vpop.permute.xlu0 %12208
  %12210 = vrot.lane.b32.xlu0 %v12066, 64
  %v12211 = vpop.permute.xlu0 %12210
  %12212 = vrot.lane.b32.xlu0 %v12068, 64
  %v12213 = vpop.permute.xlu0 %12212
  %12214 = vrot.lane.b32.xlu0 %v12070, 64
  %v12215 = vpop.permute.xlu0 %12214
  %12216 = vrot.lane.b32.xlu0 %v12071, 64
  %v12217 = vpop.permute.xlu0 %12216
  %12218 = vrot.lane.b32.xlu0 %v12127, 64
  %v12219 = vpop.permute.xlu0 %12218
  %12220 = vrot.lane.b32.xlu0 %v12074, 64
  %v12221 = vpop.permute.xlu0 %12220
  %12222 = vrot.lane.b32.xlu0 %v12076, 64
  %v12223 = vpop.permute.xlu0 %12222
  %12224 = vrot.lane.b32.xlu0 %v12078, 64
  %v12225 = vpop.permute.xlu0 %12224
  %12226 = vrot.lane.b32.xlu0 %v12080, 64
  %v12227 = vpop.permute.xlu0 %12226
  %12228 = vrot.lane.b32.xlu0 %v12082, 64
  %v12229 = vpop.permute.xlu0 %12228
  %12230 = vrot.lane.b32.xlu0 %v12084, 64
  %v12231 = vpop.permute.xlu0 %12230
  %12232 = vrot.lane.b32.xlu0 %v12085, 64
  %v12233 = vpop.permute.xlu0 %12232
  %12234 = vrot.lane.b32.xlu0 %v12128, 64
  %v12235 = vpop.permute.xlu0 %12234
  %12236 = vrot.lane.b32.xlu0 %v12088, 64
  %v12237 = vpop.permute.xlu0 %12236
  %12238 = vrot.lane.b32.xlu0 %v12090, 64
  %v12239 = vpop.permute.xlu0 %12238
  %12240 = vrot.lane.b32.xlu0 %v12092, 64
  %v12241 = vpop.permute.xlu0 %12240
  %12242 = vrot.lane.b32.xlu0 %v12094, 64
  %v12243 = vpop.permute.xlu0 %12242
  %12244 = vrot.lane.b32.xlu0 %v12096, 64
  %v12245 = vpop.permute.xlu0 %12244
  %12246 = vrot.lane.b32.xlu0 %v12098, 64
  %v12247 = vpop.permute.xlu0 %12246
  %12248 = vrot.lane.b32.xlu0 %v12099, 64
  %v12249 = vpop.permute.xlu0 %12248
  %12250 = vrot.lane.b32.xlu0 %v12129, 64
  %v12251 = vpop.permute.xlu0 %12250
  %12252 = vrot.lane.b32.xlu0 %v12102, 64
  %v12253 = vpop.permute.xlu0 %12252
  %12254 = vrot.lane.b32.xlu0 %v12104, 64
  %v12255 = vpop.permute.xlu0 %12254
  %12256 = vrot.lane.b32.xlu0 %v12106, 64
  %v12257 = vpop.permute.xlu0 %12256
  %12258 = vrot.lane.b32.xlu0 %v12108, 64
  %v12259 = vpop.permute.xlu0 %12258
  %12260 = vrot.lane.b32.xlu0 %v12110, 64
  %v12261 = vpop.permute.xlu0 %12260
  %12262 = vrot.lane.b32.xlu0 %v12112, 64
  %v12263 = vpop.permute.xlu0 %12262
  %12264 = vrot.lane.b32.xlu0 %v12113, 64
  %v12265 = vpop.permute.xlu0 %12264
  %v12330 = vadd.f32 %v11857, %v12139
  %v12331 = vadd.f32 %v11858, %v12141
  %v12332 = vadd.f32 %v11859, %v12143
  %v12333 = vadd.f32 %v11860, %v12145
  %v12334 = vadd.f32 %v11861, %v12147
  %v12335 = vadd.f32 %v11862, %v12149
  %v12336 = vadd.f32 %v11863, %v12151
  %v12337 = vadd.f32 %v11864, %v12153
  %v12338 = vadd.f32 %v11865, %v12155
  %v12339 = vadd.f32 %v11866, %v12157
  %v12340 = vadd.f32 %v11867, %v12159
  %v12341 = vadd.f32 %v11868, %v12161
  %v12342 = vadd.f32 %v11869, %v12163
  %v12343 = vadd.f32 %v11870, %v12165
  %v12344 = vadd.f32 %v11871, %v12167
  %v12345 = vadd.f32 %v11872, %v12169
  %v12346 = vadd.f32 %v11873, %v12171
  %v12347 = vadd.f32 %v11874, %v12173
  %v12348 = vadd.f32 %v11875, %v12175
  %v12349 = vadd.f32 %v11876, %v12177
  %v12350 = vadd.f32 %v11877, %v12179
  %v12351 = vadd.f32 %v11878, %v12181
  %v12352 = vadd.f32 %v11879, %v12183
  %v12353 = vadd.f32 %v11880, %v12185
  %v12354 = vadd.f32 %v11881, %v12187
  %v12355 = vadd.f32 %v11882, %v12189
  %v12356 = vadd.f32 %v11883, %v12191
  %v12357 = vadd.f32 %v11884, %v12193
  %v12358 = vadd.f32 %v11885, %v12195
  %v12359 = vadd.f32 %v11886, %v12197
  %v12360 = vadd.f32 %v11887, %v12199
  %v12361 = vadd.f32 %v11888, %v12201
  %v12362 = vadd.f32 %v11889, %v12203
  %v12363 = vadd.f32 %v11890, %v12205
  %v12364 = vadd.f32 %v11891, %v12207
  %v12365 = vadd.f32 %v11892, %v12209
  %v12366 = vadd.f32 %v11893, %v12211
  %v12367 = vadd.f32 %v11894, %v12213
  %v12368 = vadd.f32 %v11895, %v12215
  %v12369 = vadd.f32 %v11896, %v12217
  %v12370 = vadd.f32 %v11897, %v12219
  %v12371 = vadd.f32 %v11898, %v12221
  %v12372 = vadd.f32 %v11899, %v12223
  %v12373 = vadd.f32 %v11900, %v12225
  %v12374 = vadd.f32 %v11901, %v12227
  %v12375 = vadd.f32 %v11902, %v12229
  %v12376 = vadd.f32 %v11903, %v12231
  %v12377 = vadd.f32 %v11904, %v12233
  %v12378 = vadd.f32 %v11905, %v12235
  %v12379 = vadd.f32 %v11906, %v12237
  %v12380 = vadd.f32 %v11907, %v12239
  %v12381 = vadd.f32 %v11908, %v12241
  %v12382 = vadd.f32 %v11909, %v12243
  %v12383 = vadd.f32 %v11910, %v12245
  %v12384 = vadd.f32 %v11911, %v12247
  %v12385 = vadd.f32 %v11912, %v12249
  %v12386 = vadd.f32 %v11913, %v12251
  %v12387 = vadd.f32 %v11914, %v12253
  %v12388 = vadd.f32 %v11915, %v12255
  %v12389 = vadd.f32 %v11916, %v12257
  %v12390 = vadd.f32 %v11917, %v12259
  %v12391 = vadd.f32 %v11918, %v12261
  %v12392 = vadd.f32 %v11919, %v12263
  %v12393 = vadd.f32 %v11920, %v12265
  %v12394 = vld [vmem:[%s5] sm:$0xff]
  %v12395 = vld [vmem:[%s5 + $0x8] sm:$0xff]
  %v12396 = vld [vmem:[%s5 + $0x10] sm:$0xff]
  %v12397 = vld [vmem:[%s5 + $0x18] sm:$0xff]
  %v12398 = vld [vmem:[%s5 + $0x20] sm:$0xff]
  %v12399 = vld [vmem:[%s5 + $0x28] sm:$0xff]
  %v12400 = vld [vmem:[%s5 + $0x30] sm:$0xff]
  %v12401 = vld [vmem:[%s5 + $0x38] sm:$0xff]
  %12410 = vrot.lane.b32.xlu0 %v12394, 64
  %v12411 = vpop.permute.xlu0 %12410
  %12412 = vrot.lane.b32.xlu0 %v12395, 64
  %v12413 = vpop.permute.xlu0 %12412
  %12414 = vrot.lane.b32.xlu0 %v12396, 64
  %v12415 = vpop.permute.xlu0 %12414
  %12416 = vrot.lane.b32.xlu0 %v12397, 64
  %v12417 = vpop.permute.xlu0 %12416
  %12418 = vrot.lane.b32.xlu0 %v12398, 64
  %v12419 = vpop.permute.xlu0 %12418
  %12420 = vrot.lane.b32.xlu0 %v12399, 64
  %v12421 = vpop.permute.xlu0 %12420
  %12422 = vrot.lane.b32.xlu0 %v12400, 64
  %v12423 = vpop.permute.xlu0 %12422
  %12424 = vrot.lane.b32.xlu0 %v12401, 64
  %v12425 = vpop.permute.xlu0 %12424
  %v12434 = vadd.f32 %v12330, %v12411
  %v12435 = vadd.f32 %v12331, %v12413
  %v12436 = vadd.f32 %v12332, %v12415
  %v12437 = vadd.f32 %v12333, %v12417
  %v12438 = vadd.f32 %v12334, %v12419
  %v12439 = vadd.f32 %v12335, %v12421
  %v12440 = vadd.f32 %v12336, %v12423
  %v12441 = vadd.f32 %v12337, %v12425
  %v12442 = vadd.f32 %v12338, %v12411
  %v12443 = vadd.f32 %v12339, %v12413
  %v12444 = vadd.f32 %v12340, %v12415
  %v12445 = vadd.f32 %v12341, %v12417
  %v12446 = vadd.f32 %v12342, %v12419
  %v12447 = vadd.f32 %v12343, %v12421
  %v12448 = vadd.f32 %v12344, %v12423
  %v12449 = vadd.f32 %v12345, %v12425
  %v12450 = vadd.f32 %v12346, %v12411
  %v12451 = vadd.f32 %v12347, %v12413
  %v12452 = vadd.f32 %v12348, %v12415
  %v12453 = vadd.f32 %v12349, %v12417
  %v12454 = vadd.f32 %v12350, %v12419
  %v12455 = vadd.f32 %v12351, %v12421
  %v12456 = vadd.f32 %v12352, %v12423
  %v12457 = vadd.f32 %v12353, %v12425
  %v12458 = vadd.f32 %v12354, %v12411
  %v12459 = vadd.f32 %v12355, %v12413
  %v12460 = vadd.f32 %v12356, %v12415
  %v12461 = vadd.f32 %v12357, %v12417
  %v12462 = vadd.f32 %v12358, %v12419
  %v12463 = vadd.f32 %v12359, %v12421
  %v12464 = vadd.f32 %v12360, %v12423
  %v12465 = vadd.f32 %v12361, %v12425
  %v12466 = vadd.f32 %v12362, %v12411
  %v12467 = vadd.f32 %v12363, %v12413
  %v12468 = vadd.f32 %v12364, %v12415
  %v12469 = vadd.f32 %v12365, %v12417
  %v12470 = vadd.f32 %v12366, %v12419
  %v12471 = vadd.f32 %v12367, %v12421
  %v12472 = vadd.f32 %v12368, %v12423
  %v12473 = vadd.f32 %v12369, %v12425
  %v12474 = vadd.f32 %v12370, %v12411
  %v12475 = vadd.f32 %v12371, %v12413
  %v12476 = vadd.f32 %v12372, %v12415
  %v12477 = vadd.f32 %v12373, %v12417
  %v12478 = vadd.f32 %v12374, %v12419
  %v12479 = vadd.f32 %v12375, %v12421
  %v12480 = vadd.f32 %v12376, %v12423
  %v12481 = vadd.f32 %v12377, %v12425
  %v12482 = vadd.f32 %v12378, %v12411
  %v12483 = vadd.f32 %v12379, %v12413
  %v12484 = vadd.f32 %v12380, %v12415
  %v12485 = vadd.f32 %v12381, %v12417
  %v12486 = vadd.f32 %v12382, %v12419
  %v12487 = vadd.f32 %v12383, %v12421
  %v12488 = vadd.f32 %v12384, %v12423
  %v12489 = vadd.f32 %v12385, %v12425
  %v12490 = vadd.f32 %v12386, %v12411
  %v12491 = vadd.f32 %v12387, %v12413
  %v12492 = vadd.f32 %v12388, %v12415
  %v12493 = vadd.f32 %v12389, %v12417
  %v12494 = vadd.f32 %v12390, %v12419
  %v12495 = vadd.f32 %v12391, %v12421
  %v12496 = vadd.f32 %v12392, %v12423
  %v12497 = vadd.f32 %v12393, %v12425
  %12562 = vrot.lane.b32.xlu0 %v12434, 64
  %v12563 = vpop.permute.xlu0 %12562
  %12564 = vrot.lane.b32.xlu0 %v12435, 64
  %v12565 = vpop.permute.xlu0 %12564
  %12566 = vrot.lane.b32.xlu0 %v12436, 64
  %v12567 = vpop.permute.xlu0 %12566
  %12568 = vrot.lane.b32.xlu0 %v12437, 64
  %v12569 = vpop.permute.xlu0 %12568
  %12570 = vrot.lane.b32.xlu0 %v12438, 64
  %v12571 = vpop.permute.xlu0 %12570
  %12572 = vrot.lane.b32.xlu0 %v12439, 64
  %v12573 = vpop.permute.xlu0 %12572
  %12574 = vrot.lane.b32.xlu0 %v12440, 64
  %v12575 = vpop.permute.xlu0 %12574
  %12576 = vrot.lane.b32.xlu0 %v12441, 64
  %v12577 = vpop.permute.xlu0 %12576
  %12578 = vrot.lane.b32.xlu0 %v12442, 64
  %v12579 = vpop.permute.xlu0 %12578
  %12580 = vrot.lane.b32.xlu0 %v12443, 64
  %v12581 = vpop.permute.xlu0 %12580
  %12582 = vrot.lane.b32.xlu0 %v12444, 64
  %v12583 = vpop.permute.xlu0 %12582
  %12584 = vrot.lane.b32.xlu0 %v12445, 64
  %v12585 = vpop.permute.xlu0 %12584
  %12586 = vrot.lane.b32.xlu0 %v12446, 64
  %v12587 = vpop.permute.xlu0 %12586
  %12588 = vrot.lane.b32.xlu0 %v12447, 64
  %v12589 = vpop.permute.xlu0 %12588
  %12590 = vrot.lane.b32.xlu0 %v12448, 64
  %v12591 = vpop.permute.xlu0 %12590
  %12592 = vrot.lane.b32.xlu0 %v12449, 64
  %v12593 = vpop.permute.xlu0 %12592
  %12594 = vrot.lane.b32.xlu0 %v12450, 64
  %v12595 = vpop.permute.xlu0 %12594
  %12596 = vrot.lane.b32.xlu0 %v12451, 64
  %v12597 = vpop.permute.xlu0 %12596
  %12598 = vrot.lane.b32.xlu0 %v12452, 64
  %v12599 = vpop.permute.xlu0 %12598
  %12600 = vrot.lane.b32.xlu0 %v12453, 64
  %v12601 = vpop.permute.xlu0 %12600
  %12602 = vrot.lane.b32.xlu0 %v12454, 64
  %v12603 = vpop.permute.xlu0 %12602
  %12604 = vrot.lane.b32.xlu0 %v12455, 64
  %v12605 = vpop.permute.xlu0 %12604
  %12606 = vrot.lane.b32.xlu0 %v12456, 64
  %v12607 = vpop.permute.xlu0 %12606
  %12608 = vrot.lane.b32.xlu0 %v12457, 64
  %v12609 = vpop.permute.xlu0 %12608
  %12610 = vrot.lane.b32.xlu0 %v12458, 64
  %v12611 = vpop.permute.xlu0 %12610
  %12612 = vrot.lane.b32.xlu0 %v12459, 64
  %v12613 = vpop.permute.xlu0 %12612
  %12614 = vrot.lane.b32.xlu0 %v12460, 64
  %v12615 = vpop.permute.xlu0 %12614
  %12616 = vrot.lane.b32.xlu0 %v12461, 64
  %v12617 = vpop.permute.xlu0 %12616
  %12618 = vrot.lane.b32.xlu0 %v12462, 64
  %v12619 = vpop.permute.xlu0 %12618
  %12620 = vrot.lane.b32.xlu0 %v12463, 64
  %v12621 = vpop.permute.xlu0 %12620
  %12622 = vrot.lane.b32.xlu0 %v12464, 64
  %v12623 = vpop.permute.xlu0 %12622
  %12624 = vrot.lane.b32.xlu0 %v12465, 64
  %v12625 = vpop.permute.xlu0 %12624
  %12626 = vrot.lane.b32.xlu0 %v12466, 64
  %v12627 = vpop.permute.xlu0 %12626
  %12628 = vrot.lane.b32.xlu0 %v12467, 64
  %v12629 = vpop.permute.xlu0 %12628
  %12630 = vrot.lane.b32.xlu0 %v12468, 64
  %v12631 = vpop.permute.xlu0 %12630
  %12632 = vrot.lane.b32.xlu0 %v12469, 64
  %v12633 = vpop.permute.xlu0 %12632
  %12634 = vrot.lane.b32.xlu0 %v12470, 64
  %v12635 = vpop.permute.xlu0 %12634
  %12636 = vrot.lane.b32.xlu0 %v12471, 64
  %v12637 = vpop.permute.xlu0 %12636
  %12638 = vrot.lane.b32.xlu0 %v12472, 64
  %v12639 = vpop.permute.xlu0 %12638
  %12640 = vrot.lane.b32.xlu0 %v12473, 64
  %v12641 = vpop.permute.xlu0 %12640
  %12642 = vrot.lane.b32.xlu0 %v12474, 64
  %v12643 = vpop.permute.xlu0 %12642
  %12644 = vrot.lane.b32.xlu0 %v12475, 64
  %v12645 = vpop.permute.xlu0 %12644
  %12646 = vrot.lane.b32.xlu0 %v12476, 64
  %v12647 = vpop.permute.xlu0 %12646
  %12648 = vrot.lane.b32.xlu0 %v12477, 64
  %v12649 = vpop.permute.xlu0 %12648
  %12650 = vrot.lane.b32.xlu0 %v12478, 64
  %v12651 = vpop.permute.xlu0 %12650
  %12652 = vrot.lane.b32.xlu0 %v12479, 64
  %v12653 = vpop.permute.xlu0 %12652
  %12654 = vrot.lane.b32.xlu0 %v12480, 64
  %v12655 = vpop.permute.xlu0 %12654
  %12656 = vrot.lane.b32.xlu0 %v12481, 64
  %v12657 = vpop.permute.xlu0 %12656
  %12658 = vrot.lane.b32.xlu0 %v12482, 64
  %v12659 = vpop.permute.xlu0 %12658
  %12660 = vrot.lane.b32.xlu0 %v12483, 64
  %v12661 = vpop.permute.xlu0 %12660
  %12662 = vrot.lane.b32.xlu0 %v12484, 64
  %v12663 = vpop.permute.xlu0 %12662
  %12664 = vrot.lane.b32.xlu0 %v12485, 64
  %v12665 = vpop.permute.xlu0 %12664
  %12666 = vrot.lane.b32.xlu0 %v12486, 64
  %v12667 = vpop.permute.xlu0 %12666
  %12668 = vrot.lane.b32.xlu0 %v12487, 64
  %v12669 = vpop.permute.xlu0 %12668
  %12670 = vrot.lane.b32.xlu0 %v12488, 64
  %v12671 = vpop.permute.xlu0 %12670
  %12672 = vrot.lane.b32.xlu0 %v12489, 64
  %v12673 = vpop.permute.xlu0 %12672
  %12674 = vrot.lane.b32.xlu0 %v12490, 64
  %v12675 = vpop.permute.xlu0 %12674
  %12676 = vrot.lane.b32.xlu0 %v12491, 64
  %v12677 = vpop.permute.xlu0 %12676
  %12678 = vrot.lane.b32.xlu0 %v12492, 64
  %v12679 = vpop.permute.xlu0 %12678
  %12680 = vrot.lane.b32.xlu0 %v12493, 64
  %v12681 = vpop.permute.xlu0 %12680
  %12682 = vrot.lane.b32.xlu0 %v12494, 64
  %v12683 = vpop.permute.xlu0 %12682
  %12684 = vrot.lane.b32.xlu0 %v12495, 64
  %v12685 = vpop.permute.xlu0 %12684
  %12686 = vrot.lane.b32.xlu0 %v12496, 64
  %v12687 = vpop.permute.xlu0 %12686
  %12688 = vrot.lane.b32.xlu0 %v12497, 64
  %v12689 = vpop.permute.xlu0 %12688
  %v12754 = vadd.f32 %v2582, %v12563
  %v12755 = vadd.f32 %v2597, %v12565
  %v12756 = vadd.f32 %v2612, %v12567
  %v12757 = vadd.f32 %v2627, %v12569
  %v12758 = vadd.f32 %v2642, %v12571
  %v12759 = vadd.f32 %v2657, %v12573
  %v12760 = vadd.f32 %v2672, %v12575
  %v12761 = vadd.f32 %v2687, %v12577
  %v12762 = vadd.f32 %v2702, %v12579
  %v12763 = vadd.f32 %v2717, %v12581
  %v12764 = vadd.f32 %v2732, %v12583
  %v12765 = vadd.f32 %v2747, %v12585
  %v12766 = vadd.f32 %v2762, %v12587
  %v12767 = vadd.f32 %v2777, %v12589
  %v12768 = vadd.f32 %v2792, %v12591
  %v12769 = vadd.f32 %v2807, %v12593
  %v12770 = vadd.f32 %v2822, %v12595
  %v12771 = vadd.f32 %v2837, %v12597
  %v12772 = vadd.f32 %v2852, %v12599
  %v12773 = vadd.f32 %v2867, %v12601
  %v12774 = vadd.f32 %v2882, %v12603
  %v12775 = vadd.f32 %v2897, %v12605
  %v12776 = vadd.f32 %v2912, %v12607
  %v12777 = vadd.f32 %v2927, %v12609
  %v12778 = vadd.f32 %v2942, %v12611
  %v12779 = vadd.f32 %v2957, %v12613
  %v12780 = vadd.f32 %v2972, %v12615
  %v12781 = vadd.f32 %v2987, %v12617
  %v12782 = vadd.f32 %v3002, %v12619
  %v12783 = vadd.f32 %v3017, %v12621
  %v12784 = vadd.f32 %v3032, %v12623
  %v12785 = vadd.f32 %v3047, %v12625
  %v12786 = vadd.f32 %v3062, %v12627
  %v12787 = vadd.f32 %v3077, %v12629
  %v12788 = vadd.f32 %v3092, %v12631
  %v12789 = vadd.f32 %v3107, %v12633
  %v12790 = vadd.f32 %v3122, %v12635
  %v12791 = vadd.f32 %v3137, %v12637
  %v12792 = vadd.f32 %v3152, %v12639
  %v12793 = vadd.f32 %v3167, %v12641
  %v12794 = vadd.f32 %v3182, %v12643
  %v12795 = vadd.f32 %v3197, %v12645
  %v12796 = vadd.f32 %v3212, %v12647
  %v12797 = vadd.f32 %v3227, %v12649
  %v12798 = vadd.f32 %v3242, %v12651
  %v12799 = vadd.f32 %v3257, %v12653
  %v12800 = vadd.f32 %v3272, %v12655
  %v12801 = vadd.f32 %v3287, %v12657
  %v12802 = vadd.f32 %v3302, %v12659
  %v12803 = vadd.f32 %v3317, %v12661
  %v12804 = vadd.f32 %v3332, %v12663
  %v12805 = vadd.f32 %v3347, %v12665
  %v12806 = vadd.f32 %v3362, %v12667
  %v12807 = vadd.f32 %v3377, %v12669
  %v12808 = vadd.f32 %v3392, %v12671
  %v12809 = vadd.f32 %v3407, %v12673
  %v12810 = vadd.f32 %v3422, %v12675
  %v12811 = vadd.f32 %v3437, %v12677
  %v12812 = vadd.f32 %v3452, %v12679
  %v12813 = vadd.f32 %v3467, %v12681
  %v12814 = vadd.f32 %v3482, %v12683
  %v12815 = vadd.f32 %v3497, %v12685
  %v12816 = vadd.f32 %v3512, %v12687
  %v12817 = vadd.f32 %v3527, %v12689
  %v12818 = vld [vmem:[%s6] sm:$0xff]
  %v12819 = vld [vmem:[%s6 + $0x8] sm:$0xff]
  %v12820 = vld [vmem:[%s6 + $0x10] sm:$0xff]
  %v12821 = vld [vmem:[%s6 + $0x18] sm:$0xff]
  %v12822 = vld [vmem:[%s7] sm:$0x1]
  %v12824 = vperm.slane %v12822, 0
  %v12827 = vsel %vm101, %v12754, 0
  %v12830 = vsel %vm101, %v12755, 0
  %v12833 = vsel %vm101, %v12756, 0
  %v12836 = vsel %vm101, %v12757, 0
  %v12839 = vsel %vm101, %v12758, 0
  %v12842 = vsel %vm101, %v12759, 0
  %v12845 = vsel %vm101, %v12760, 0
  %v12848 = vsel %vm101, %v12761, 0
  %v12851 = vsel %vm101, %v12762, 0
  %v12854 = vsel %vm101, %v12763, 0
  %v12857 = vsel %vm101, %v12764, 0
  %v12860 = vsel %vm101, %v12765, 0
  %v12863 = vsel %vm101, %v12766, 0
  %v12866 = vsel %vm101, %v12767, 0
  %v12869 = vsel %vm101, %v12768, 0
  %v12872 = vsel %vm101, %v12769, 0
  %v12875 = vsel %vm101, %v12770, 0
  %v12878 = vsel %vm101, %v12771, 0
  %v12881 = vsel %vm101, %v12772, 0
  %v12884 = vsel %vm101, %v12773, 0
  %v12887 = vsel %vm101, %v12774, 0
  %v12890 = vsel %vm101, %v12775, 0
  %v12893 = vsel %vm101, %v12776, 0
  %v12896 = vsel %vm101, %v12777, 0
  %v12899 = vsel %vm101, %v12778, 0
  %v12902 = vsel %vm101, %v12779, 0
  %v12905 = vsel %vm101, %v12780, 0
  %v12908 = vsel %vm101, %v12781, 0
  %v12911 = vsel %vm101, %v12782, 0
  %v12914 = vsel %vm101, %v12783, 0
  %v12917 = vsel %vm101, %v12784, 0
  %v12920 = vsel %vm101, %v12785, 0
  %v12923 = vsel %vm101, %v12786, 0
  %v12926 = vsel %vm101, %v12787, 0
  %v12929 = vsel %vm101, %v12788, 0
  %v12932 = vsel %vm101, %v12789, 0
  %v12935 = vsel %vm101, %v12790, 0
  %v12938 = vsel %vm101, %v12791, 0
  %v12941 = vsel %vm101, %v12792, 0
  %v12944 = vsel %vm101, %v12793, 0
  %v12947 = vsel %vm101, %v12794, 0
  %v12950 = vsel %vm101, %v12795, 0
  %v12953 = vsel %vm101, %v12796, 0
  %v12956 = vsel %vm101, %v12797, 0
  %v12959 = vsel %vm101, %v12798, 0
  %v12962 = vsel %vm101, %v12799, 0
  %v12965 = vsel %vm101, %v12800, 0
  %v12968 = vsel %vm101, %v12801, 0
  %v12971 = vsel %vm101, %v12802, 0
  %v12974 = vsel %vm101, %v12803, 0
  %v12977 = vsel %vm101, %v12804, 0
  %v12980 = vsel %vm101, %v12805, 0
  %v12983 = vsel %vm101, %v12806, 0
  %v12986 = vsel %vm101, %v12807, 0
  %v12989 = vsel %vm101, %v12808, 0
  %v12992 = vsel %vm101, %v12809, 0
  %v12995 = vsel %vm101, %v12810, 0
  %v12998 = vsel %vm101, %v12811, 0
  %v13001 = vsel %vm101, %v12812, 0
  %v13004 = vsel %vm101, %v12813, 0
  %v13007 = vsel %vm101, %v12814, 0
  %v13010 = vsel %vm101, %v12815, 0
  %v13013 = vsel %vm101, %v12816, 0
  %v13016 = vsel %vm101, %v12817, 0
  %13018 = vmatpush.msra.mxu0 0.0
  %13019 = vmatpush.msra.mxu0 0.0
  %13020 = vmatpush.msra.mxu0 0.0
  %13021 = vmatpush.msra.mxu0 0.0
  %13022 = vmatpush.msra.mxu0 0.0
  %13023 = vmatpush.msra.mxu0 0.0
  %13024 = vmatpush.msra.mxu0 0.0
  %13025 = vmatpush.msra.mxu0 0.0
  %13026 = vmatpush.msra.mxu0 0.0
  %13027 = vmatpush.msra.mxu0 0.0
  %13028 = vmatpush.msra.mxu0 0.0
  %13029 = vmatpush.msra.mxu0 0.0
  %13030 = vmatpush.msra.mxu0 %v12821
  %13031 = vmatpush.msra.mxu0 %v12820
  %13032 = vmatpush.msra.mxu0 %v12819
  %13033 = vmatpush.msra.mxu0 %v12818
  %13034 = vmatmul.f32.gmra.mxu0 %v12827
  %v13035 = vpop.f32.mrf.mxu0
  %v13036 = vadd.f32 %v12824, %v13035
  %13037 = vmatmul.f32.gmra.mxu0 %v12830
  %v13038 = vpop.f32.mrf.mxu0
  %v13039 = vadd.f32 %v12824, %v13038
  %13040 = vmatmul.f32.gmra.mxu0 %v12833
  %v13041 = vpop.f32.mrf.mxu0
  %v13042 = vadd.f32 %v12824, %v13041
  %13043 = vmatmul.f32.gmra.mxu0 %v12836
  %v13044 = vpop.f32.mrf.mxu0
  %v13045 = vadd.f32 %v12824, %v13044
  %13046 = vmatmul.f32.gmra.mxu0 %v12839
  %v13047 = vpop.f32.mrf.mxu0
  %v13048 = vadd.f32 %v12824, %v13047
  %13049 = vmatmul.f32.gmra.mxu0 %v12842
  %v13050 = vpop.f32.mrf.mxu0
  %v13051 = vadd.f32 %v12824, %v13050
  %13052 = vmatmul.f32.gmra.mxu0 %v12845
  %v13053 = vpop.f32.mrf.mxu0
  %v13054 = vadd.f32 %v12824, %v13053
  %13055 = vmatmul.f32.gmra.mxu0 %v12848
  %v13056 = vpop.f32.mrf.mxu0
  %v13057 = vadd.f32 %v12824, %v13056
  %13058 = vmatmul.f32.gmra.mxu0 %v12851
  %v13059 = vpop.f32.mrf.mxu0
  %v13060 = vadd.f32 %v12824, %v13059
  %13061 = vmatmul.f32.gmra.mxu0 %v12854
  %v13062 = vpop.f32.mrf.mxu0
  %v13063 = vadd.f32 %v12824, %v13062
  %13064 = vmatmul.f32.gmra.mxu0 %v12857
  %v13065 = vpop.f32.mrf.mxu0
  %v13066 = vadd.f32 %v12824, %v13065
  %13067 = vmatmul.f32.gmra.mxu0 %v12860
  %v13068 = vpop.f32.mrf.mxu0
  %v13069 = vadd.f32 %v12824, %v13068
  %13070 = vmatmul.f32.gmra.mxu0 %v12863
  %v13071 = vpop.f32.mrf.mxu0
  %v13072 = vadd.f32 %v12824, %v13071
  %13073 = vmatmul.f32.gmra.mxu0 %v12866
  %v13074 = vpop.f32.mrf.mxu0
  %v13075 = vadd.f32 %v12824, %v13074
  %13076 = vmatmul.f32.gmra.mxu0 %v12869
  %v13077 = vpop.f32.mrf.mxu0
  %v13078 = vadd.f32 %v12824, %v13077
  %13079 = vmatmul.f32.gmra.mxu0 %v12872
  %v13080 = vpop.f32.mrf.mxu0
  %v13081 = vadd.f32 %v12824, %v13080
  %13082 = vmatmul.f32.gmra.mxu0 %v12875
  %v13083 = vpop.f32.mrf.mxu0
  %v13084 = vadd.f32 %v12824, %v13083
  %13085 = vmatmul.f32.gmra.mxu0 %v12878
  %v13086 = vpop.f32.mrf.mxu0
  %v13087 = vadd.f32 %v12824, %v13086
  %13088 = vmatmul.f32.gmra.mxu0 %v12881
  %v13089 = vpop.f32.mrf.mxu0
  %v13090 = vadd.f32 %v12824, %v13089
  %13091 = vmatmul.f32.gmra.mxu0 %v12884
  %v13092 = vpop.f32.mrf.mxu0
  %v13093 = vadd.f32 %v12824, %v13092
  %13094 = vmatmul.f32.gmra.mxu0 %v12887
  %v13095 = vpop.f32.mrf.mxu0
  %v13096 = vadd.f32 %v12824, %v13095
  %13097 = vmatmul.f32.gmra.mxu0 %v12890
  %v13098 = vpop.f32.mrf.mxu0
  %v13099 = vadd.f32 %v12824, %v13098
  %13100 = vmatmul.f32.gmra.mxu0 %v12893
  %v13101 = vpop.f32.mrf.mxu0
  %v13102 = vadd.f32 %v12824, %v13101
  %13103 = vmatmul.f32.gmra.mxu0 %v12896
  %v13104 = vpop.f32.mrf.mxu0
  %v13105 = vadd.f32 %v12824, %v13104
  %13106 = vmatmul.f32.gmra.mxu0 %v12899
  %v13107 = vpop.f32.mrf.mxu0
  %v13108 = vadd.f32 %v12824, %v13107
  %13109 = vmatmul.f32.gmra.mxu0 %v12902
  %v13110 = vpop.f32.mrf.mxu0
  %v13111 = vadd.f32 %v12824, %v13110
  %13112 = vmatmul.f32.gmra.mxu0 %v12905
  %v13113 = vpop.f32.mrf.mxu0
  %v13114 = vadd.f32 %v12824, %v13113
  %13115 = vmatmul.f32.gmra.mxu0 %v12908
  %v13116 = vpop.f32.mrf.mxu0
  %v13117 = vadd.f32 %v12824, %v13116
  %13118 = vmatmul.f32.gmra.mxu0 %v12911
  %v13119 = vpop.f32.mrf.mxu0
  %v13120 = vadd.f32 %v12824, %v13119
  %13121 = vmatmul.f32.gmra.mxu0 %v12914
  %v13122 = vpop.f32.mrf.mxu0
  %v13123 = vadd.f32 %v12824, %v13122
  %13124 = vmatmul.f32.gmra.mxu0 %v12917
  %v13125 = vpop.f32.mrf.mxu0
  %v13126 = vadd.f32 %v12824, %v13125
  %13127 = vmatmul.f32.gmra.mxu0 %v12920
  %v13128 = vpop.f32.mrf.mxu0
  %v13129 = vadd.f32 %v12824, %v13128
  %13130 = vmatmul.f32.gmra.mxu0 %v12923
  %v13131 = vpop.f32.mrf.mxu0
  %v13132 = vadd.f32 %v12824, %v13131
  %13133 = vmatmul.f32.gmra.mxu0 %v12926
  %v13134 = vpop.f32.mrf.mxu0
  %v13135 = vadd.f32 %v12824, %v13134
  %13136 = vmatmul.f32.gmra.mxu0 %v12929
  %v13137 = vpop.f32.mrf.mxu0
  %v13138 = vadd.f32 %v12824, %v13137
  %13139 = vmatmul.f32.gmra.mxu0 %v12932
  %v13140 = vpop.f32.mrf.mxu0
  %v13141 = vadd.f32 %v12824, %v13140
  %13142 = vmatmul.f32.gmra.mxu0 %v12935
  %v13143 = vpop.f32.mrf.mxu0
  %v13144 = vadd.f32 %v12824, %v13143
  %13145 = vmatmul.f32.gmra.mxu0 %v12938
  %v13146 = vpop.f32.mrf.mxu0
  %v13147 = vadd.f32 %v12824, %v13146
  %13148 = vmatmul.f32.gmra.mxu0 %v12941
  %v13149 = vpop.f32.mrf.mxu0
  %v13150 = vadd.f32 %v12824, %v13149
  %13151 = vmatmul.f32.gmra.mxu0 %v12944
  %v13152 = vpop.f32.mrf.mxu0
  %v13153 = vadd.f32 %v12824, %v13152
  %13154 = vmatmul.f32.gmra.mxu0 %v12947
  %v13155 = vpop.f32.mrf.mxu0
  %v13156 = vadd.f32 %v12824, %v13155
  %13157 = vmatmul.f32.gmra.mxu0 %v12950
  %v13158 = vpop.f32.mrf.mxu0
  %v13159 = vadd.f32 %v12824, %v13158
  %13160 = vmatmul.f32.gmra.mxu0 %v12953
  %v13161 = vpop.f32.mrf.mxu0
  %v13162 = vadd.f32 %v12824, %v13161
  %13163 = vmatmul.f32.gmra.mxu0 %v12956
  %v13164 = vpop.f32.mrf.mxu0
  %v13165 = vadd.f32 %v12824, %v13164
  %13166 = vmatmul.f32.gmra.mxu0 %v12959
  %v13167 = vpop.f32.mrf.mxu0
  %v13168 = vadd.f32 %v12824, %v13167
  %13169 = vmatmul.f32.gmra.mxu0 %v12962
  %v13170 = vpop.f32.mrf.mxu0
  %v13171 = vadd.f32 %v12824, %v13170
  %13172 = vmatmul.f32.gmra.mxu0 %v12965
  %v13173 = vpop.f32.mrf.mxu0
  %v13174 = vadd.f32 %v12824, %v13173
  %13175 = vmatmul.f32.gmra.mxu0 %v12968
  %v13176 = vpop.f32.mrf.mxu0
  %v13177 = vadd.f32 %v12824, %v13176
  %13178 = vmatmul.f32.gmra.mxu0 %v12971
  %v13179 = vpop.f32.mrf.mxu0
  %v13180 = vadd.f32 %v12824, %v13179
  %13181 = vmatmul.f32.gmra.mxu0 %v12974
  %v13182 = vpop.f32.mrf.mxu0
  %v13183 = vadd.f32 %v12824, %v13182
  %13184 = vmatmul.f32.gmra.mxu0 %v12977
  %v13185 = vpop.f32.mrf.mxu0
  %v13186 = vadd.f32 %v12824, %v13185
  %13187 = vmatmul.f32.gmra.mxu0 %v12980
  %v13188 = vpop.f32.mrf.mxu0
  %v13189 = vadd.f32 %v12824, %v13188
  %13190 = vmatmul.f32.gmra.mxu0 %v12983
  %v13191 = vpop.f32.mrf.mxu0
  %v13192 = vadd.f32 %v12824, %v13191
  %13193 = vmatmul.f32.gmra.mxu0 %v12986
  %v13194 = vpop.f32.mrf.mxu0
  %v13195 = vadd.f32 %v12824, %v13194
  %13196 = vmatmul.f32.gmra.mxu0 %v12989
  %v13197 = vpop.f32.mrf.mxu0
  %v13198 = vadd.f32 %v12824, %v13197
  %13199 = vmatmul.f32.gmra.mxu0 %v12992
  %v13200 = vpop.f32.mrf.mxu0
  %v13201 = vadd.f32 %v12824, %v13200
  %13202 = vmatmul.f32.gmra.mxu0 %v12995
  %v13203 = vpop.f32.mrf.mxu0
  %v13204 = vadd.f32 %v12824, %v13203
  %13205 = vmatmul.f32.gmra.mxu0 %v12998
  %v13206 = vpop.f32.mrf.mxu0
  %v13207 = vadd.f32 %v12824, %v13206
  %13208 = vmatmul.f32.gmra.mxu0 %v13001
  %v13209 = vpop.f32.mrf.mxu0
  %v13210 = vadd.f32 %v12824, %v13209
  %13211 = vmatmul.f32.gmra.mxu0 %v13004
  %v13212 = vpop.f32.mrf.mxu0
  %v13213 = vadd.f32 %v12824, %v13212
  %13214 = vmatmul.f32.gmra.mxu0 %v13007
  %v13215 = vpop.f32.mrf.mxu0
  %v13216 = vadd.f32 %v12824, %v13215
  %13217 = vmatmul.f32.gmra.mxu0 %v13010
  %v13218 = vpop.f32.mrf.mxu0
  %v13219 = vadd.f32 %v12824, %v13218
  %13220 = vmatmul.f32.gmra.mxu0 %v13013
  %v13221 = vpop.f32.mrf.mxu0
  %v13222 = vadd.f32 %v12824, %v13221
  %13223 = vmatmul.f32.gmra.mxu0 %v13016
  %v13224 = vpop.f32.mrf.mxu0
  %v13225 = vadd.f32 %v12824, %v13224
  %13226 = vdwg.mxu0
  %13227 = vst.msk [vmem:[%s8] sm:$0xff] %vm101, %v13036
  %13228 = vst.msk [vmem:[%s8 + $0x8] sm:$0xff] %vm101, %v13039
  %13229 = vst.msk [vmem:[%s8 + $0x10] sm:$0xff] %vm101, %v13042
  %13230 = vst.msk [vmem:[%s8 + $0x18] sm:$0xff] %vm101, %v13045
  %13231 = vst.msk [vmem:[%s8 + $0x20] sm:$0xff] %vm101, %v13048
  %13232 = vst.msk [vmem:[%s8 + $0x28] sm:$0xff] %vm101, %v13051
  %13233 = vst.msk [vmem:[%s8 + $0x30] sm:$0xff] %vm101, %v13054
  %13234 = vst.msk [vmem:[%s8 + $0x38] sm:$0xff] %vm101, %v13057
  %13235 = vst.msk [vmem:[%s8 + $0x40] sm:$0xff] %vm101, %v13060
  %13236 = vst.msk [vmem:[%s8 + $0x48] sm:$0xff] %vm101, %v13063
  %13237 = vst.msk [vmem:[%s8 + $0x50] sm:$0xff] %vm101, %v13066
  %13238 = vst.msk [vmem:[%s8 + $0x58] sm:$0xff] %vm101, %v13069
  %13239 = vst.msk [vmem:[%s8 + $0x60] sm:$0xff] %vm101, %v13072
  %13240 = vst.msk [vmem:[%s8 + $0x68] sm:$0xff] %vm101, %v13075
  %13241 = vst.msk [vmem:[%s8 + $0x70] sm:$0xff] %vm101, %v13078
  %13242 = vst.msk [vmem:[%s8 + $0x78] sm:$0xff] %vm101, %v13081
  %13243 = vst.msk [vmem:[%s8 + $0x80] sm:$0xff] %vm101, %v13084
  %13244 = vst.msk [vmem:[%s8 + $0x88] sm:$0xff] %vm101, %v13087
  %13245 = vst.msk [vmem:[%s8 + $0x90] sm:$0xff] %vm101, %v13090
  %13246 = vst.msk [vmem:[%s8 + $0x98] sm:$0xff] %vm101, %v13093
  %13247 = vst.msk [vmem:[%s8 + $0xa0] sm:$0xff] %vm101, %v13096
  %13248 = vst.msk [vmem:[%s8 + $0xa8] sm:$0xff] %vm101, %v13099
  %13249 = vst.msk [vmem:[%s8 + $0xb0] sm:$0xff] %vm101, %v13102
  %13250 = vst.msk [vmem:[%s8 + $0xb8] sm:$0xff] %vm101, %v13105
  %13251 = vst.msk [vmem:[%s8 + $0xc0] sm:$0xff] %vm101, %v13108
  %13252 = vst.msk [vmem:[%s8 + $0xc8] sm:$0xff] %vm101, %v13111
  %13253 = vst.msk [vmem:[%s8 + $0xd0] sm:$0xff] %vm101, %v13114
  %13254 = vst.msk [vmem:[%s8 + $0xd8] sm:$0xff] %vm101, %v13117
  %13255 = vst.msk [vmem:[%s8 + $0xe0] sm:$0xff] %vm101, %v13120
  %13256 = vst.msk [vmem:[%s8 + $0xe8] sm:$0xff] %vm101, %v13123
  %13257 = vst.msk [vmem:[%s8 + $0xf0] sm:$0xff] %vm101, %v13126
  %13258 = vst.msk [vmem:[%s8 + $0xf8] sm:$0xff] %vm101, %v13129
  %13259 = vst.msk [vmem:[%s8 + $0x100] sm:$0xff] %vm101, %v13132
  %13260 = vst.msk [vmem:[%s8 + $0x108] sm:$0xff] %vm101, %v13135
  %13261 = vst.msk [vmem:[%s8 + $0x110] sm:$0xff] %vm101, %v13138
  %13262 = vst.msk [vmem:[%s8 + $0x118] sm:$0xff] %vm101, %v13141
  %13263 = vst.msk [vmem:[%s8 + $0x120] sm:$0xff] %vm101, %v13144
  %13264 = vst.msk [vmem:[%s8 + $0x128] sm:$0xff] %vm101, %v13147
  %13265 = vst.msk [vmem:[%s8 + $0x130] sm:$0xff] %vm101, %v13150
  %13266 = vst.msk [vmem:[%s8 + $0x138] sm:$0xff] %vm101, %v13153
  %13267 = vst.msk [vmem:[%s8 + $0x140] sm:$0xff] %vm101, %v13156
  %13268 = vst.msk [vmem:[%s8 + $0x148] sm:$0xff] %vm101, %v13159
  %13269 = vst.msk [vmem:[%s8 + $0x150] sm:$0xff] %vm101, %v13162
  %13270 = vst.msk [vmem:[%s8 + $0x158] sm:$0xff] %vm101, %v13165
  %13271 = vst.msk [vmem:[%s8 + $0x160] sm:$0xff] %vm101, %v13168
  %13272 = vst.msk [vmem:[%s8 + $0x168] sm:$0xff] %vm101, %v13171
  %13273 = vst.msk [vmem:[%s8 + $0x170] sm:$0xff] %vm101, %v13174
  %13274 = vst.msk [vmem:[%s8 + $0x178] sm:$0xff] %vm101, %v13177
  %13275 = vst.msk [vmem:[%s8 + $0x180] sm:$0xff] %vm101, %v13180
  %13276 = vst.msk [vmem:[%s8 + $0x188] sm:$0xff] %vm101, %v13183
  %13277 = vst.msk [vmem:[%s8 + $0x190] sm:$0xff] %vm101, %v13186
  %13278 = vst.msk [vmem:[%s8 + $0x198] sm:$0xff] %vm101, %v13189
  %13279 = vst.msk [vmem:[%s8 + $0x1a0] sm:$0xff] %vm101, %v13192
  %13280 = vst.msk [vmem:[%s8 + $0x1a8] sm:$0xff] %vm101, %v13195
  %13281 = vst.msk [vmem:[%s8 + $0x1b0] sm:$0xff] %vm101, %v13198
  %13282 = vst.msk [vmem:[%s8 + $0x1b8] sm:$0xff] %vm101, %v13201
  %13283 = vst.msk [vmem:[%s8 + $0x1c0] sm:$0xff] %vm101, %v13204
  %13284 = vst.msk [vmem:[%s8 + $0x1c8] sm:$0xff] %vm101, %v13207
  %13285 = vst.msk [vmem:[%s8 + $0x1d0] sm:$0xff] %vm101, %v13210
  %13286 = vst.msk [vmem:[%s8 + $0x1d8] sm:$0xff] %vm101, %v13213
  %13287 = vst.msk [vmem:[%s8 + $0x1e0] sm:$0xff] %vm101, %v13216
  %13288 = vst.msk [vmem:[%s8 + $0x1e8] sm:$0xff] %vm101, %v13219
  %13289 = vst.msk [vmem:[%s8 + $0x1f0] sm:$0xff] %vm101, %v13222
  %13290 = vst.msk [vmem:[%s8 + $0x1f8] sm:$0xff] %vm101, %v13225
  // Predicated region
  $region34: #{tpu_custom_call.1} parent=0 // pred_check
    _
  $region35: #{tpu_custom_call.1} parent=0 // pred_check_branch
    %13292 = sbr.rel (0) target = $region37
  $region36: #{tpu_custom_call.1} parent=0 // pred_region
    _
  $region37: #{tpu_custom_call.1} parent=0 // pred_fallthru
    _
  // Predicated region
  $region38: #{tpu_custom_call.1} parent=0 // pred_check
    _
  $region39: #{tpu_custom_call.1} parent=0 // pred_check_branch
    %13294 = sbr.rel (0) target = $region41
  $region40: #{tpu_custom_call.1} parent=0 // pred_region
    _
  $region41: #{tpu_custom_call.1} parent=0 // pred_fallthru
    _

</llo_original>
